<compile_context>
chip_gen: v7x
topology: tpu7x:2x2x1
jax: 0.10.0
libtpu: 0.0.40
codegen_flags: <defaults>
</compile_context>

<pallas_src>
import functools

import jax
import jax.numpy as jnp
import numpy as np
from jax.experimental import pallas as pl
from jax.experimental.pallas import tpu as pltpu

LIST_OBSERVATIONS = [2, 3, 4, 5, 6, 7, 8, 9, 10, 12, 13, 14, 15, 16, 20, 21,
                     25, 34, 245, 246, 100, 101, 102, 103, 104, 105, 106, 107,
                     108, 109, 110, 111, 112, 113, 114, 115, 116, 117, 118, 119]
PROJECTION_SIZE = 8
_NOBS = len(LIST_OBSERVATIONS)          # 40
_COMPUTE_DT = jnp.bfloat16              # MXU operand dtype (f32 accumulation)


# ------------------------------ fused kernel ------------------------------- #
def _dqn_kernel(ids_ref, extra_ref,
                vocab_ref, wblk_ref, b1_ref, gsum_ref,
                w2s_ref, b2_ref, w3s_ref, b3_ref,
                w1_ref, w1e_ref, b1av_ref,
                w2a_ref, b2a_ref, w2v_ref, b2v_ref,
                o_ref, *, cin, bch):
    cdt = _COMPUTE_DT
    c8 = PROJECTION_SIZE * cin           # conv1 output channels per pixel
    cp = 16 * c8                         # packed lane width (= 128 * cin)

    ids = ids_ref[0]                     # (36*bch, 16*cin) int32
    vocab = vocab_ref[...]               # (1, 128) int32

    # ---- conv1 (1x1 over the 40*cin binary planes) as ONE matmul -----------
    # One-hot of every pixel id, K-concatenated over (phase, input channel).
    # Each piece is a full 128-lane tile so the concat is tile-aligned/cheap.
    onehot = jnp.concatenate(
        [(ids[:, j:j + 1] == vocab).astype(cdt) for j in range(16 * cin)],
        axis=-1)                                           # (36*bch, 2048*cin)
    z1 = jnp.dot(onehot, wblk_ref[...],
                 preferred_element_type=jnp.float32)       # (36*bch, cp)
    z1 = z1 + b1_ref[...]

    # ---- per-pixel softmax over c8 channels, lane-dense ---------------------
    # Lanes pack 16 pixels (phases) x c8 channels.  Subtracting the full-row
    # max (a per-group constant) keeps softmax exact; per-pixel denominators
    # come from one matmul with a block-ones matrix, already broadcast across
    # each group's lanes.
    z1 = z1 - jnp.max(z1, axis=-1, keepdims=True)
    e1 = jnp.exp(z1)
    denom = jnp.dot(e1, gsum_ref[...], preferred_element_type=jnp.float32)
    denom = jnp.maximum(denom, 1e-30)
    y1 = (e1 * pl.reciprocal(denom, approx=True)).astype(cdt)
    y1 = y1.reshape(6, 6, bch, cp)       # lanes = (hr*4 + wr)*c8 + channel

    # ---- conv2 (4x4 / stride 2): 4 shift matmuls, K = cp --------------------
    # Output lanes = 4 parities (sh*2+sw) x 64 channels; weights were built on
    # the host with zero rows for phases that do not use a given shift.
    z2 = jnp.zeros((25 * bch, 256), jnp.float32)
    for ah in range(2):
        for aw in range(2):
            rows = y1[ah:ah + 5, aw:aw + 5, :, :].reshape(25 * bch, cp)
            z2 = z2 + jnp.dot(rows, w2s_ref[ah * 2 + aw],
                              preferred_element_type=jnp.float32)
    y2 = jnp.maximum(z2 + b2_ref[...], 0.0).astype(cdt)
    y2 = y2.reshape(5, 5, bch, 256)      # lanes = (sh*2+sw)*64 + channel

    # ---- conv3 (4x4 / stride 2): 4 shift matmuls, K = 256 (no waste) --------
    z3 = jnp.zeros((16 * bch, 64), jnp.float32)
    for ch in range(2):
        for cw in range(2):
            rows = y2[ch:ch + 4, cw:cw + 4, :, :].reshape(16 * bch, 256)
            z3 = z3 + jnp.dot(rows, w3s_ref[ch * 2 + cw],
                              preferred_element_type=jnp.float32)
    y3 = jnp.maximum(z3 + b3_ref[...], 0.0).astype(cdt)   # row = pos*bch + b

    # ---- dueling head: one K=1024 matmul for fc1_a|fc1_v --------------------
    xcat = jnp.concatenate([y3[j * bch:(j + 1) * bch, :] for j in range(16)],
                           axis=-1)                        # (bch, 1024) bf16
    h = jnp.dot(xcat, w1_ref[...], preferred_element_type=jnp.float32)
    h = h + jnp.dot(extra_ref[0].astype(cdt), w1e_ref[...],
                    preferred_element_type=jnp.float32)
    h = jnp.maximum(h + b1av_ref[...], 0.0)                # (bch, 512)
    a = jnp.maximum(jnp.dot(h[:, 0:256].astype(cdt), w2a_ref[...],
                            preferred_element_type=jnp.float32) + b2a_ref[...],
                    0.0)
    v = jnp.maximum(jnp.dot(h[:, 256:512].astype(cdt), w2v_ref[...],
                            preferred_element_type=jnp.float32) + b2v_ref[...],
                    0.0)
    o_ref[0] = v + a - jnp.mean(a, axis=-1, keepdims=True)


# ------------------------------ host packing ------------------------------- #
def _pack_input(x, cin, bp, bch):
    """(B, cin, 22, 22) int -> (num_chunks, 36*bch, 16*cin) int32.

    Row = (coarse cell hq*6+wq)*bch + b; column = (hr*4+wr)*cin + c.
    22 -> 24 spatial padding uses id 0 (matches no observation) and those
    phases only ever meet zero conv2 weight rows; padded batch rows are
    sliced off at the end.
    """
    b, c, h, w = x.shape
    assert (h, w) == (22, 22) and c == cin and bp % bch == 0
    nc = bp // bch
    xp = jnp.pad(x.astype(jnp.int32),
                 ((0, bp - b), (0, 0), (0, 24 - h), (0, 24 - w)))
    xp = xp.reshape(nc, bch, cin, 6, 4, 6, 4)      # (nc, b, c, hq, hr, wq, wr)
    xp = xp.transpose(0, 3, 5, 1, 4, 6, 2)         # (nc, hq, wq, b, hr, wr, c)
    return xp.reshape(nc, 36 * bch, 16 * cin)


def prepare_params(params, in_channels):
    """One-time repack of the PyTorch-layout parameters (all transposes,
    phase/parity packing, zero padding and the NCHW-flatten permutation of the
    fc1 weights are hoisted here)."""
    cin = in_channels
    c8 = PROJECTION_SIZE * cin
    cp = 16 * c8
    cdt = _COMPUTE_DT
    p = {k: np.asarray(v, np.float32) for k, v in params.items()}

    vocab = np.full((1, 128), -1, np.int32)
    vocab[0, :_NOBS] = np.asarray(LIST_OBSERVATIONS, np.int32)

    # conv1: block "embedding" matrix.  binaryWorldMaker channel order is
    # obs-major (in_ch = obs_idx*cin + c).
    w1 = p['w_conv1'].reshape(c8, _NOBS, cin)              # [out, obs, c]
    wblk = np.zeros((16 * cin, 128, 16, c8), np.float32)   # [j, vocab, phase, out]
    for ph in range(16):
        for c in range(cin):
            wblk[ph * cin + c, :_NOBS, ph, :] = w1[:, :, c].T
    wblk = wblk.reshape(16 * cin * 128, cp)
    b1p = np.tile(p['b_conv1'].reshape(1, c8), (1, 16))

    lane = np.arange(cp)
    gsum = (lane[:, None] // c8 == lane[None, :] // c8).astype(np.float32)

    # conv2: per-shift (ah, aw) weights, output parities concatenated on N,
    # zero rows where a phase does not use that shift.
    w2 = p['w_conv2']                                       # (64, c8, 4, 4)
    w2s = np.zeros((2, 2, 16, c8, 4, 64), np.float32)       # [ah,aw,phase,o,par,d]
    for sh in range(2):
        for sw in range(2):
            for kh in range(4):
                for kw in range(4):
                    hr, ah = (2 * sh + kh) % 4, (2 * sh + kh) // 4
                    wr, aw = (2 * sw + kw) % 4, (2 * sw + kw) // 4
                    w2s[ah, aw, hr * 4 + wr, :, sh * 2 + sw, :] = \
                        w2[:, :, kh, kw].T
    w2s = w2s.reshape(4, cp, 256)
    b2t = np.tile(p['b_conv2'].reshape(1, 64), (1, 4))

    # conv3: per-shift (ch, cw) weights over the parity-packed conv2 output.
    w3 = p['w_conv3']                                       # (64, 64, 4, 4)
    w3s = np.zeros((2, 2, 4, 64, 64), np.float32)           # [ch,cw,par,d_in,out]
    for ch in range(2):
        for cw in range(2):
            for sh in range(2):
                for sw in range(2):
                    w3s[ch, cw, sh * 2 + sw] = w3[:, :, 2 * ch + sh, 2 * cw + sw].T
    w3s = w3s.reshape(4, 256, 64)
    b3 = p['b_conv3'].reshape(1, 64)

    # dueling FC head: fc1_a | fc1_v fused on 512 output lanes; conv features
    # re-ordered to position-major (matches xcat) absorbing the NCHW flatten.
    nfeat = 16 * 64

    def pos_major(w):    # (256, nfeat+E) -> (nfeat, 256), row = pos*64 + c
        return w[:, :nfeat].reshape(256, 64, 4, 4).transpose(2, 3, 1, 0) \
                .reshape(nfeat, 256)

    w1flat = np.concatenate([pos_major(p['w_fc1a']), pos_major(p['w_fc1v'])], 1)
    w1e = np.concatenate([p['w_fc1a'][:, nfeat:].T, p['w_fc1v'][:, nfeat:].T], 1)
    b1av = np.concatenate([p['b_fc1a'], p['b_fc1v']]).reshape(1, 512)

    jf = lambda a: jnp.asarray(a, jnp.float32)
    jb = lambda a: jnp.asarray(a, cdt)
    return dict(
        vocab=jnp.asarray(vocab), wblk=jb(wblk), b1=jf(b1p), gsum=jf(gsum),
        w2s=jb(w2s), b2=jf(b2t), w3s=jb(w3s), b3=jf(b3),
        w1=jb(w1flat), w1e=jb(w1e), b1av=jf(b1av),
        w2a=jb(p['w_fc2a'].T), b2a=jf(p['b_fc2a'].reshape(1, -1)),
        w2v=jb(p['w_fc2v'].T), b2v=jf(p['b_fc2v'].reshape(1, -1)))


# ------------------------------- JAX wrapper -------------------------------- #
def dqn_forward(prep, x, extra_info, *, in_channels, num_actions,
                batch_chunk=None):
    cin = in_channels
    b = x.shape[0]
    # Batch chunk per grid step (multiple of 8, capped to keep the in-kernel
    # one-hot comfortably inside VMEM on v7x's smaller 64 MiB).
    bch = int(min(64, 8 * pl.cdiv(b, 8)) if batch_chunk is None else batch_chunk)
    nc = int(pl.cdiv(b, bch))
    bp = nc * bch

    ids = _pack_input(x, cin, bp, bch)                      # (nc, 36*bch, 16*cin)
    e = extra_info.reshape(b, -1).astype(jnp.float32)
    extra = jnp.zeros((bp, e.shape[-1]), jnp.float32).at[:b].set(e)
    extra = extra.reshape(nc, bch, -1)

    kernel = functools.partial(_dqn_kernel, cin=cin, bch=bch)

    def _wspec(arr):
        nd = arr.ndim
        return pl.BlockSpec(arr.shape, lambda i, _nd=nd: (0,) * _nd)

    weights = (prep['vocab'], prep['wblk'], prep['b1'], prep['gsum'],
               prep['w2s'], prep['b2'], prep['w3s'], prep['b3'],
               prep['w1'], prep['w1e'], prep['b1av'],
               prep['w2a'], prep['b2a'], prep['w2v'], prep['b2v'])

    out = pl.pallas_call(
        kernel,
        out_shape=jax.ShapeDtypeStruct((nc, bch, num_actions), jnp.float32),
        grid=(nc,),
        in_specs=[pl.BlockSpec((1, 36 * bch, 16 * cin), lambda i: (i, 0, 0)),
                  pl.BlockSpec((1, bch, extra.shape[-1]), lambda i: (i, 0, 0))]
                 + [_wspec(w) for w in weights],
        out_specs=pl.BlockSpec((1, bch, num_actions), lambda i: (i, 0, 0)),
        compiler_params=pltpu.CompilerParams(
            dimension_semantics=("parallel",),
            vmem_limit_bytes=32 * 1024 * 1024),
    )(ids, extra, *weights)
    return out.reshape(nc * bch, num_actions)[:b]


def init_params(key, in_channels, extra_latent_size, num_actions):
    # TODO(synk): count_parameters() / PrettyTable reporting is omitted
    # (host-side printout only, not part of the forward pass).
    c40 = in_channels * _NOBS
    c8 = in_channels * PROJECTION_SIZE
    feat = 4 * 4 * 64 + extra_latent_size
    shapes = {
        'w_conv1': (c8, c40, 1, 1), 'b_conv1': (c8,),
        'w_conv2': (64, c8, 4, 4), 'b_conv2': (64,),
        'w_conv3': (64, 64, 4, 4), 'b_conv3': (64,),
        'w_fc1a': (256, feat), 'b_fc1a': (256,),
        'w_fc2a': (num_actions, 256), 'b_fc2a': (num_actions,),
        'w_fc1v': (256, feat), 'b_fc1v': (256,),
        'w_fc2v': (num_actions, 256), 'b_fc2v': (num_actions,),
    }
    params = {}
    for k, (name, shp) in zip(jax.random.split(key, len(shapes)), shapes.items()):
        params[name] = jax.random.normal(k, shp, dtype=jnp.float32) * 0.05
    return params


if __name__ == "__main__":
    # fc1 in_features = 4*4*64 + extra  =>  the conv stack needs 22x22 input.
    B, IN_CHANNELS, H, W = 2, 1, 22, 22
    EXTRA_LATENT, NUM_ACTIONS = 8, 7

    key = jax.random.PRNGKey(0)
    k_p, k_x, k_e = jax.random.split(key, 3)

    params = init_params(k_p, IN_CHANNELS, EXTRA_LATENT, NUM_ACTIONS)
    prep = prepare_params(params, IN_CHANNELS)   # one-time repack (hoisted)

    # Integer observation grid: values drawn from listObservations (plus 0).
    vocab_ids = jnp.asarray([0] + LIST_OBSERVATIONS, dtype=jnp.int32)
    idx = jax.random.randint(k_x, (B, IN_CHANNELS, H, W), 0, vocab_ids.shape[0])
    x = vocab_ids[idx]
    extra_info = jax.random.normal(k_e, (B, EXTRA_LATENT), dtype=jnp.float32)

    fwd = jax.jit(functools.partial(dqn_forward, in_channels=IN_CHANNELS,
                                    num_actions=NUM_ACTIONS))
    out = jax.block_until_ready(fwd(prep, x, extra_info))
    assert out.shape == (B, NUM_ACTIONS) and out.dtype == jnp.float32
    assert bool(jnp.all(jnp.isfinite(out)))
    print("KERNEL_OK")
</pallas_src>

<mosaic_0001>
module attributes {stable_mosaic.version = 11 : i64} {
  func.func @_dqn_kernel(%arg0: i32, %arg1: memref<1x288x16xi32, #tpu.memory_space<vmem>>, %arg2: memref<1x8x8xf32, #tpu.memory_space<vmem>>, %arg3: memref<1x128xi32, #tpu.memory_space<vmem>>, %arg4: memref<2048x128xbf16, #tpu.memory_space<vmem>>, %arg5: memref<1x128xf32, #tpu.memory_space<vmem>>, %arg6: memref<128x128xf32, #tpu.memory_space<vmem>>, %arg7: memref<4x128x256xbf16, #tpu.memory_space<vmem>>, %arg8: memref<1x256xf32, #tpu.memory_space<vmem>>, %arg9: memref<4x256x64xbf16, #tpu.memory_space<vmem>>, %arg10: memref<1x64xf32, #tpu.memory_space<vmem>>, %arg11: memref<1024x512xbf16, #tpu.memory_space<vmem>>, %arg12: memref<8x512xbf16, #tpu.memory_space<vmem>>, %arg13: memref<1x512xf32, #tpu.memory_space<vmem>>, %arg14: memref<256x7xbf16, #tpu.memory_space<vmem>>, %arg15: memref<1x7xf32, #tpu.memory_space<vmem>>, %arg16: memref<256x7xbf16, #tpu.memory_space<vmem>>, %arg17: memref<1x7xf32, #tpu.memory_space<vmem>>, %arg18: memref<1x8x7xf32, #tpu.memory_space<vmem>>) attributes {dimension_semantics = [#tpu.dimension_semantics<parallel>], iteration_bounds = array<i64: 1>, scalar_prefetch = 0 : i64, scratch_operands = 0 : i64, tpu.core_type = #tpu.core_type<tc>, window_params = [{transform_indices = @transform_0, window_bounds = array<i64: 1, 288, 16>}, {transform_indices = @transform_1, window_bounds = array<i64: 1, 8, 8>}, {pipeline_mode = #tpu.pipeline_mode<synchronous>, transform_indices = @transform_2, window_bounds = array<i64: 1, 128>}, {pipeline_mode = #tpu.pipeline_mode<synchronous>, transform_indices = @transform_3, window_bounds = array<i64: 2048, 128>}, {pipeline_mode = #tpu.pipeline_mode<synchronous>, transform_indices = @transform_4, window_bounds = array<i64: 1, 128>}, {pipeline_mode = #tpu.pipeline_mode<synchronous>, transform_indices = @transform_5, window_bounds = array<i64: 128, 128>}, {pipeline_mode = #tpu.pipeline_mode<synchronous>, transform_indices = @transform_6, window_bounds = array<i64: 4, 128, 256>}, {pipeline_mode = #tpu.pipeline_mode<synchronous>, transform_indices = @transform_7, window_bounds = array<i64: 1, 256>}, {pipeline_mode = #tpu.pipeline_mode<synchronous>, transform_indices = @transform_8, window_bounds = array<i64: 4, 256, 64>}, {pipeline_mode = #tpu.pipeline_mode<synchronous>, transform_indices = @transform_9, window_bounds = array<i64: 1, 64>}, {pipeline_mode = #tpu.pipeline_mode<synchronous>, transform_indices = @transform_10, window_bounds = array<i64: 1024, 512>}, {pipeline_mode = #tpu.pipeline_mode<synchronous>, transform_indices = @transform_11, window_bounds = array<i64: 8, 512>}, {pipeline_mode = #tpu.pipeline_mode<synchronous>, transform_indices = @transform_12, window_bounds = array<i64: 1, 512>}, {pipeline_mode = #tpu.pipeline_mode<synchronous>, transform_indices = @transform_13, window_bounds = array<i64: 256, 7>}, {pipeline_mode = #tpu.pipeline_mode<synchronous>, transform_indices = @transform_14, window_bounds = array<i64: 1, 7>}, {pipeline_mode = #tpu.pipeline_mode<synchronous>, transform_indices = @transform_15, window_bounds = array<i64: 256, 7>}, {pipeline_mode = #tpu.pipeline_mode<synchronous>, transform_indices = @transform_16, window_bounds = array<i64: 1, 7>}, {transform_indices = @transform_17, window_bounds = array<i64: 1, 8, 7>}]} {
    %c0 = arith.constant 0 : index
    %c0_0 = arith.constant 0 : index
    %c0_1 = arith.constant 0 : index
    %0 = vector.load %arg1[%c0, %c0_0, %c0_1] : memref<1x288x16xi32, #tpu.memory_space<vmem>>, vector<1x288x16xi32>
    %1 = vector.shape_cast %0 : vector<1x288x16xi32> to vector<288x16xi32>
    %c0_2 = arith.constant 0 : index
    %c0_3 = arith.constant 0 : index
    %2 = vector.load %arg3[%c0_2, %c0_3] : memref<1x128xi32, #tpu.memory_space<vmem>>, vector<1x128xi32>
    %3 = vector.extract_strided_slice %1 {offsets = [0, 0], sizes = [288, 1], strides = [1, 1]} : vector<288x16xi32> to vector<288x1xi32>
    %4 = vector.broadcast %3 : vector<288x1xi32> to vector<288x128xi32>
    %5 = vector.broadcast %2 : vector<1x128xi32> to vector<288x128xi32>
    %6 = arith.cmpi eq, %4, %5 : vector<288x128xi32>
    %7 = arith.extui %6 : vector<288x128xi1> to vector<288x128xi32>
    %8 = arith.sitofp %7 : vector<288x128xi32> to vector<288x128xf32>
    %9 = arith.truncf %8 : vector<288x128xf32> to vector<288x128xbf16>
    %10 = vector.extract_strided_slice %1 {offsets = [0, 1], sizes = [288, 1], strides = [1, 1]} : vector<288x16xi32> to vector<288x1xi32>
    %11 = vector.broadcast %10 : vector<288x1xi32> to vector<288x128xi32>
    %12 = vector.broadcast %2 : vector<1x128xi32> to vector<288x128xi32>
    %13 = arith.cmpi eq, %11, %12 : vector<288x128xi32>
    %14 = arith.extui %13 : vector<288x128xi1> to vector<288x128xi32>
    %15 = arith.sitofp %14 : vector<288x128xi32> to vector<288x128xf32>
    %16 = arith.truncf %15 : vector<288x128xf32> to vector<288x128xbf16>
    %17 = vector.extract_strided_slice %1 {offsets = [0, 2], sizes = [288, 1], strides = [1, 1]} : vector<288x16xi32> to vector<288x1xi32>
    %18 = vector.broadcast %17 : vector<288x1xi32> to vector<288x128xi32>
    %19 = vector.broadcast %2 : vector<1x128xi32> to vector<288x128xi32>
    %20 = arith.cmpi eq, %18, %19 : vector<288x128xi32>
    %21 = arith.extui %20 : vector<288x128xi1> to vector<288x128xi32>
    %22 = arith.sitofp %21 : vector<288x128xi32> to vector<288x128xf32>
    %23 = arith.truncf %22 : vector<288x128xf32> to vector<288x128xbf16>
    %24 = vector.extract_strided_slice %1 {offsets = [0, 3], sizes = [288, 1], strides = [1, 1]} : vector<288x16xi32> to vector<288x1xi32>
    %25 = vector.broadcast %24 : vector<288x1xi32> to vector<288x128xi32>
    %26 = vector.broadcast %2 : vector<1x128xi32> to vector<288x128xi32>
    %27 = arith.cmpi eq, %25, %26 : vector<288x128xi32>
    %28 = arith.extui %27 : vector<288x128xi1> to vector<288x128xi32>
    %29 = arith.sitofp %28 : vector<288x128xi32> to vector<288x128xf32>
    %30 = arith.truncf %29 : vector<288x128xf32> to vector<288x128xbf16>
    %31 = vector.extract_strided_slice %1 {offsets = [0, 4], sizes = [288, 1], strides = [1, 1]} : vector<288x16xi32> to vector<288x1xi32>
    %32 = vector.broadcast %31 : vector<288x1xi32> to vector<288x128xi32>
    %33 = vector.broadcast %2 : vector<1x128xi32> to vector<288x128xi32>
    %34 = arith.cmpi eq, %32, %33 : vector<288x128xi32>
    %35 = arith.extui %34 : vector<288x128xi1> to vector<288x128xi32>
    %36 = arith.sitofp %35 : vector<288x128xi32> to vector<288x128xf32>
    %37 = arith.truncf %36 : vector<288x128xf32> to vector<288x128xbf16>
    %38 = vector.extract_strided_slice %1 {offsets = [0, 5], sizes = [288, 1], strides = [1, 1]} : vector<288x16xi32> to vector<288x1xi32>
    %39 = vector.broadcast %38 : vector<288x1xi32> to vector<288x128xi32>
    %40 = vector.broadcast %2 : vector<1x128xi32> to vector<288x128xi32>
    %41 = arith.cmpi eq, %39, %40 : vector<288x128xi32>
    %42 = arith.extui %41 : vector<288x128xi1> to vector<288x128xi32>
    %43 = arith.sitofp %42 : vector<288x128xi32> to vector<288x128xf32>
    %44 = arith.truncf %43 : vector<288x128xf32> to vector<288x128xbf16>
    %45 = vector.extract_strided_slice %1 {offsets = [0, 6], sizes = [288, 1], strides = [1, 1]} : vector<288x16xi32> to vector<288x1xi32>
    %46 = vector.broadcast %45 : vector<288x1xi32> to vector<288x128xi32>
    %47 = vector.broadcast %2 : vector<1x128xi32> to vector<288x128xi32>
    %48 = arith.cmpi eq, %46, %47 : vector<288x128xi32>
    %49 = arith.extui %48 : vector<288x128xi1> to vector<288x128xi32>
    %50 = arith.sitofp %49 : vector<288x128xi32> to vector<288x128xf32>
    %51 = arith.truncf %50 : vector<288x128xf32> to vector<288x128xbf16>
    %52 = vector.extract_strided_slice %1 {offsets = [0, 7], sizes = [288, 1], strides = [1, 1]} : vector<288x16xi32> to vector<288x1xi32>
    %53 = vector.broadcast %52 : vector<288x1xi32> to vector<288x128xi32>
    %54 = vector.broadcast %2 : vector<1x128xi32> to vector<288x128xi32>
    %55 = arith.cmpi eq, %53, %54 : vector<288x128xi32>
    %56 = arith.extui %55 : vector<288x128xi1> to vector<288x128xi32>
    %57 = arith.sitofp %56 : vector<288x128xi32> to vector<288x128xf32>
    %58 = arith.truncf %57 : vector<288x128xf32> to vector<288x128xbf16>
    %59 = vector.extract_strided_slice %1 {offsets = [0, 8], sizes = [288, 1], strides = [1, 1]} : vector<288x16xi32> to vector<288x1xi32>
    %60 = vector.broadcast %59 : vector<288x1xi32> to vector<288x128xi32>
    %61 = vector.broadcast %2 : vector<1x128xi32> to vector<288x128xi32>
    %62 = arith.cmpi eq, %60, %61 : vector<288x128xi32>
    %63 = arith.extui %62 : vector<288x128xi1> to vector<288x128xi32>
    %64 = arith.sitofp %63 : vector<288x128xi32> to vector<288x128xf32>
    %65 = arith.truncf %64 : vector<288x128xf32> to vector<288x128xbf16>
    %66 = vector.extract_strided_slice %1 {offsets = [0, 9], sizes = [288, 1], strides = [1, 1]} : vector<288x16xi32> to vector<288x1xi32>
    %67 = vector.broadcast %66 : vector<288x1xi32> to vector<288x128xi32>
    %68 = vector.broadcast %2 : vector<1x128xi32> to vector<288x128xi32>
    %69 = arith.cmpi eq, %67, %68 : vector<288x128xi32>
    %70 = arith.extui %69 : vector<288x128xi1> to vector<288x128xi32>
    %71 = arith.sitofp %70 : vector<288x128xi32> to vector<288x128xf32>
    %72 = arith.truncf %71 : vector<288x128xf32> to vector<288x128xbf16>
    %73 = vector.extract_strided_slice %1 {offsets = [0, 10], sizes = [288, 1], strides = [1, 1]} : vector<288x16xi32> to vector<288x1xi32>
    %74 = vector.broadcast %73 : vector<288x1xi32> to vector<288x128xi32>
    %75 = vector.broadcast %2 : vector<1x128xi32> to vector<288x128xi32>
    %76 = arith.cmpi eq, %74, %75 : vector<288x128xi32>
    %77 = arith.extui %76 : vector<288x128xi1> to vector<288x128xi32>
    %78 = arith.sitofp %77 : vector<288x128xi32> to vector<288x128xf32>
    %79 = arith.truncf %78 : vector<288x128xf32> to vector<288x128xbf16>
    %80 = vector.extract_strided_slice %1 {offsets = [0, 11], sizes = [288, 1], strides = [1, 1]} : vector<288x16xi32> to vector<288x1xi32>
    %81 = vector.broadcast %80 : vector<288x1xi32> to vector<288x128xi32>
    %82 = vector.broadcast %2 : vector<1x128xi32> to vector<288x128xi32>
    %83 = arith.cmpi eq, %81, %82 : vector<288x128xi32>
    %84 = arith.extui %83 : vector<288x128xi1> to vector<288x128xi32>
    %85 = arith.sitofp %84 : vector<288x128xi32> to vector<288x128xf32>
    %86 = arith.truncf %85 : vector<288x128xf32> to vector<288x128xbf16>
    %87 = vector.extract_strided_slice %1 {offsets = [0, 12], sizes = [288, 1], strides = [1, 1]} : vector<288x16xi32> to vector<288x1xi32>
    %88 = vector.broadcast %87 : vector<288x1xi32> to vector<288x128xi32>
    %89 = vector.broadcast %2 : vector<1x128xi32> to vector<288x128xi32>
    %90 = arith.cmpi eq, %88, %89 : vector<288x128xi32>
    %91 = arith.extui %90 : vector<288x128xi1> to vector<288x128xi32>
    %92 = arith.sitofp %91 : vector<288x128xi32> to vector<288x128xf32>
    %93 = arith.truncf %92 : vector<288x128xf32> to vector<288x128xbf16>
    %94 = vector.extract_strided_slice %1 {offsets = [0, 13], sizes = [288, 1], strides = [1, 1]} : vector<288x16xi32> to vector<288x1xi32>
    %95 = vector.broadcast %94 : vector<288x1xi32> to vector<288x128xi32>
    %96 = vector.broadcast %2 : vector<1x128xi32> to vector<288x128xi32>
    %97 = arith.cmpi eq, %95, %96 : vector<288x128xi32>
    %98 = arith.extui %97 : vector<288x128xi1> to vector<288x128xi32>
    %99 = arith.sitofp %98 : vector<288x128xi32> to vector<288x128xf32>
    %100 = arith.truncf %99 : vector<288x128xf32> to vector<288x128xbf16>
    %101 = vector.extract_strided_slice %1 {offsets = [0, 14], sizes = [288, 1], strides = [1, 1]} : vector<288x16xi32> to vector<288x1xi32>
    %102 = vector.broadcast %101 : vector<288x1xi32> to vector<288x128xi32>
    %103 = vector.broadcast %2 : vector<1x128xi32> to vector<288x128xi32>
    %104 = arith.cmpi eq, %102, %103 : vector<288x128xi32>
    %105 = arith.extui %104 : vector<288x128xi1> to vector<288x128xi32>
    %106 = arith.sitofp %105 : vector<288x128xi32> to vector<288x128xf32>
    %107 = arith.truncf %106 : vector<288x128xf32> to vector<288x128xbf16>
    %108 = vector.extract_strided_slice %1 {offsets = [0, 15], sizes = [288, 1], strides = [1, 1]} : vector<288x16xi32> to vector<288x1xi32>
    %109 = vector.broadcast %108 : vector<288x1xi32> to vector<288x128xi32>
    %110 = vector.broadcast %2 : vector<1x128xi32> to vector<288x128xi32>
    %111 = arith.cmpi eq, %109, %110 : vector<288x128xi32>
    %112 = arith.extui %111 : vector<288x128xi1> to vector<288x128xi32>
    %113 = arith.sitofp %112 : vector<288x128xi32> to vector<288x128xf32>
    %114 = arith.truncf %113 : vector<288x128xf32> to vector<288x128xbf16>
    %115 = tpu.concatenate %9, %16, %23, %30, %37, %44, %51, %58, %65, %72, %79, %86, %93, %100, %107, %114 in 1 : vector<288x128xbf16>, vector<288x128xbf16>, vector<288x128xbf16>, vector<288x128xbf16>, vector<288x128xbf16>, vector<288x128xbf16>, vector<288x128xbf16>, vector<288x128xbf16>, vector<288x128xbf16>, vector<288x128xbf16>, vector<288x128xbf16>, vector<288x128xbf16>, vector<288x128xbf16>, vector<288x128xbf16>, vector<288x128xbf16>, vector<288x128xbf16> -> vector<288x2048xbf16>
    %c0_4 = arith.constant 0 : index
    %c0_5 = arith.constant 0 : index
    %116 = vector.load %arg4[%c0_4, %c0_5] : memref<2048x128xbf16, #tpu.memory_space<vmem>>, vector<2048x128xbf16>
    %cst = arith.constant dense<0.000000e+00> : vector<288x128xf32>
    %117 = tpu.matmul %115, %116, %cst {dimension_numbers = #tpu.dot_dimension_numbers<[1], [0], [0], [1], [0, 0, 1, 1], [], []>} : vector<288x2048xbf16>, vector<2048x128xbf16>, vector<288x128xf32> -> vector<288x128xf32>
    %c0_6 = arith.constant 0 : index
    %c0_7 = arith.constant 0 : index
    %118 = vector.load %arg5[%c0_6, %c0_7] : memref<1x128xf32, #tpu.memory_space<vmem>>, vector<1x128xf32>
    %119 = vector.broadcast %118 : vector<1x128xf32> to vector<288x128xf32>
    %120 = arith.addf %117, %119 : vector<288x128xf32>
    %cst_8 = arith.constant dense<0xFF800000> : vector<288xf32>
    %121 = vector.multi_reduction <maximumf>, %120, %cst_8 [1] : vector<288x128xf32> to vector<288xf32>
    %122 = vector.shape_cast %121 : vector<288xf32> to vector<288x1xf32>
    %123 = vector.broadcast %122 : vector<288x1xf32> to vector<288x128xf32>
    %124 = arith.subf %120, %123 : vector<288x128xf32>
    %125 = math.exp %124 : vector<288x128xf32>
    %c0_9 = arith.constant 0 : index
    %c0_10 = arith.constant 0 : index
    %126 = vector.load %arg6[%c0_9, %c0_10] : memref<128x128xf32, #tpu.memory_space<vmem>>, vector<128x128xf32>
    %cst_11 = arith.constant dense<0.000000e+00> : vector<288x128xf32>
    %127 = tpu.matmul %125, %126, %cst_11 {dimension_numbers = #tpu.dot_dimension_numbers<[1], [0], [0], [1], [0, 0, 1, 1], [], []>} : vector<288x128xf32>, vector<128x128xf32>, vector<288x128xf32> -> vector<288x128xf32>
    %cst_12 = arith.constant 1.000000e-30 : f32
    %128 = vector.broadcast %cst_12 : f32 to vector<288x128xf32>
    %129 = arith.maximumf %127, %128 : vector<288x128xf32>
    %130 = tpu.reciprocal %129 {approx = true} : vector<288x128xf32> -> vector<288x128xf32>
    %131 = arith.mulf %125, %130 : vector<288x128xf32>
    %132 = arith.truncf %131 : vector<288x128xf32> to vector<288x128xbf16>
    %133 = vector.shape_cast %132 : vector<288x128xbf16> to vector<6x6x8x128xbf16>
    %cst_13 = arith.constant 0.000000e+00 : f32
    %134 = vector.broadcast %cst_13 : f32 to vector<200x256xf32>
    %135 = vector.extract_strided_slice %133 {offsets = [0, 0, 0, 0], sizes = [5, 5, 8, 128], strides = [1, 1, 1, 1]} : vector<6x6x8x128xbf16> to vector<5x5x8x128xbf16>
    %136 = vector.shape_cast %135 : vector<5x5x8x128xbf16> to vector<200x128xbf16>
    %c0_14 = arith.constant 0 : index
    %c0_15 = arith.constant 0 : index
    %c0_16 = arith.constant 0 : index
    %137 = vector.load %arg7[%c0_14, %c0_15, %c0_16] : memref<4x128x256xbf16, #tpu.memory_space<vmem>>, vector<1x128x256xbf16>
    %138 = vector.shape_cast %137 : vector<1x128x256xbf16> to vector<128x256xbf16>
    %cst_17 = arith.constant dense<0.000000e+00> : vector<200x256xf32>
    %139 = tpu.matmul %136, %138, %cst_17 {dimension_numbers = #tpu.dot_dimension_numbers<[1], [0], [0], [1], [0, 0, 1, 1], [], []>} : vector<200x128xbf16>, vector<128x256xbf16>, vector<200x256xf32> -> vector<200x256xf32>
    %140 = arith.addf %134, %139 : vector<200x256xf32>
    %141 = vector.extract_strided_slice %133 {offsets = [0, 1, 0, 0], sizes = [5, 5, 8, 128], strides = [1, 1, 1, 1]} : vector<6x6x8x128xbf16> to vector<5x5x8x128xbf16>
    %142 = vector.shape_cast %141 : vector<5x5x8x128xbf16> to vector<200x128xbf16>
    %c1 = arith.constant 1 : index
    %c0_18 = arith.constant 0 : index
    %c0_19 = arith.constant 0 : index
    %143 = vector.load %arg7[%c1, %c0_18, %c0_19] : memref<4x128x256xbf16, #tpu.memory_space<vmem>>, vector<1x128x256xbf16>
    %144 = vector.shape_cast %143 : vector<1x128x256xbf16> to vector<128x256xbf16>
    %cst_20 = arith.constant dense<0.000000e+00> : vector<200x256xf32>
    %145 = tpu.matmul %142, %144, %cst_20 {dimension_numbers = #tpu.dot_dimension_numbers<[1], [0], [0], [1], [0, 0, 1, 1], [], []>} : vector<200x128xbf16>, vector<128x256xbf16>, vector<200x256xf32> -> vector<200x256xf32>
    %146 = arith.addf %140, %145 : vector<200x256xf32>
    %147 = vector.extract_strided_slice %133 {offsets = [1, 0, 0, 0], sizes = [5, 5, 8, 128], strides = [1, 1, 1, 1]} : vector<6x6x8x128xbf16> to vector<5x5x8x128xbf16>
    %148 = vector.shape_cast %147 : vector<5x5x8x128xbf16> to vector<200x128xbf16>
    %c2 = arith.constant 2 : index
    %c0_21 = arith.constant 0 : index
    %c0_22 = arith.constant 0 : index
    %149 = vector.load %arg7[%c2, %c0_21, %c0_22] : memref<4x128x256xbf16, #tpu.memory_space<vmem>>, vector<1x128x256xbf16>
    %150 = vector.shape_cast %149 : vector<1x128x256xbf16> to vector<128x256xbf16>
    %cst_23 = arith.constant dense<0.000000e+00> : vector<200x256xf32>
    %151 = tpu.matmul %148, %150, %cst_23 {dimension_numbers = #tpu.dot_dimension_numbers<[1], [0], [0], [1], [0, 0, 1, 1], [], []>} : vector<200x128xbf16>, vector<128x256xbf16>, vector<200x256xf32> -> vector<200x256xf32>
    %152 = arith.addf %146, %151 : vector<200x256xf32>
    %153 = vector.extract_strided_slice %133 {offsets = [1, 1, 0, 0], sizes = [5, 5, 8, 128], strides = [1, 1, 1, 1]} : vector<6x6x8x128xbf16> to vector<5x5x8x128xbf16>
    %154 = vector.shape_cast %153 : vector<5x5x8x128xbf16> to vector<200x128xbf16>
    %c3 = arith.constant 3 : index
    %c0_24 = arith.constant 0 : index
    %c0_25 = arith.constant 0 : index
    %155 = vector.load %arg7[%c3, %c0_24, %c0_25] : memref<4x128x256xbf16, #tpu.memory_space<vmem>>, vector<1x128x256xbf16>
    %156 = vector.shape_cast %155 : vector<1x128x256xbf16> to vector<128x256xbf16>
    %cst_26 = arith.constant dense<0.000000e+00> : vector<200x256xf32>
    %157 = tpu.matmul %154, %156, %cst_26 {dimension_numbers = #tpu.dot_dimension_numbers<[1], [0], [0], [1], [0, 0, 1, 1], [], []>} : vector<200x128xbf16>, vector<128x256xbf16>, vector<200x256xf32> -> vector<200x256xf32>
    %158 = arith.addf %152, %157 : vector<200x256xf32>
    %c0_27 = arith.constant 0 : index
    %c0_28 = arith.constant 0 : index
    %159 = vector.load %arg8[%c0_27, %c0_28] : memref<1x256xf32, #tpu.memory_space<vmem>>, vector<1x256xf32>
    %160 = vector.broadcast %159 : vector<1x256xf32> to vector<200x256xf32>
    %161 = arith.addf %158, %160 : vector<200x256xf32>
    %cst_29 = arith.constant 0.000000e+00 : f32
    %162 = vector.broadcast %cst_29 : f32 to vector<200x256xf32>
    %163 = arith.maximumf %161, %162 : vector<200x256xf32>
    %164 = arith.truncf %163 : vector<200x256xf32> to vector<200x256xbf16>
    %165 = vector.shape_cast %164 : vector<200x256xbf16> to vector<5x5x8x256xbf16>
    %cst_30 = arith.constant 0.000000e+00 : f32
    %166 = vector.broadcast %cst_30 : f32 to vector<128x64xf32>
    %167 = vector.extract_strided_slice %165 {offsets = [0, 0, 0, 0], sizes = [4, 4, 8, 256], strides = [1, 1, 1, 1]} : vector<5x5x8x256xbf16> to vector<4x4x8x256xbf16>
    %168 = vector.shape_cast %167 : vector<4x4x8x256xbf16> to vector<128x256xbf16>
    %c0_31 = arith.constant 0 : index
    %c0_32 = arith.constant 0 : index
    %c0_33 = arith.constant 0 : index
    %169 = vector.load %arg9[%c0_31, %c0_32, %c0_33] : memref<4x256x64xbf16, #tpu.memory_space<vmem>>, vector<1x256x64xbf16>
    %170 = vector.shape_cast %169 : vector<1x256x64xbf16> to vector<256x64xbf16>
    %cst_34 = arith.constant dense<0.000000e+00> : vector<128x64xf32>
    %171 = tpu.matmul %168, %170, %cst_34 {dimension_numbers = #tpu.dot_dimension_numbers<[1], [0], [0], [1], [0, 0, 1, 1], [], []>} : vector<128x256xbf16>, vector<256x64xbf16>, vector<128x64xf32> -> vector<128x64xf32>
    %172 = arith.addf %166, %171 : vector<128x64xf32>
    %173 = vector.extract_strided_slice %165 {offsets = [0, 1, 0, 0], sizes = [4, 4, 8, 256], strides = [1, 1, 1, 1]} : vector<5x5x8x256xbf16> to vector<4x4x8x256xbf16>
    %174 = vector.shape_cast %173 : vector<4x4x8x256xbf16> to vector<128x256xbf16>
    %c1_35 = arith.constant 1 : index
    %c0_36 = arith.constant 0 : index
    %c0_37 = arith.constant 0 : index
    %175 = vector.load %arg9[%c1_35, %c0_36, %c0_37] : memref<4x256x64xbf16, #tpu.memory_space<vmem>>, vector<1x256x64xbf16>
    %176 = vector.shape_cast %175 : vector<1x256x64xbf16> to vector<256x64xbf16>
    %cst_38 = arith.constant dense<0.000000e+00> : vector<128x64xf32>
    %177 = tpu.matmul %174, %176, %cst_38 {dimension_numbers = #tpu.dot_dimension_numbers<[1], [0], [0], [1], [0, 0, 1, 1], [], []>} : vector<128x256xbf16>, vector<256x64xbf16>, vector<128x64xf32> -> vector<128x64xf32>
    %178 = arith.addf %172, %177 : vector<128x64xf32>
    %179 = vector.extract_strided_slice %165 {offsets = [1, 0, 0, 0], sizes = [4, 4, 8, 256], strides = [1, 1, 1, 1]} : vector<5x5x8x256xbf16> to vector<4x4x8x256xbf16>
    %180 = vector.shape_cast %179 : vector<4x4x8x256xbf16> to vector<128x256xbf16>
    %c2_39 = arith.constant 2 : index
    %c0_40 = arith.constant 0 : index
    %c0_41 = arith.constant 0 : index
    %181 = vector.load %arg9[%c2_39, %c0_40, %c0_41] : memref<4x256x64xbf16, #tpu.memory_space<vmem>>, vector<1x256x64xbf16>
    %182 = vector.shape_cast %181 : vector<1x256x64xbf16> to vector<256x64xbf16>
    %cst_42 = arith.constant dense<0.000000e+00> : vector<128x64xf32>
    %183 = tpu.matmul %180, %182, %cst_42 {dimension_numbers = #tpu.dot_dimension_numbers<[1], [0], [0], [1], [0, 0, 1, 1], [], []>} : vector<128x256xbf16>, vector<256x64xbf16>, vector<128x64xf32> -> vector<128x64xf32>
    %184 = arith.addf %178, %183 : vector<128x64xf32>
    %185 = vector.extract_strided_slice %165 {offsets = [1, 1, 0, 0], sizes = [4, 4, 8, 256], strides = [1, 1, 1, 1]} : vector<5x5x8x256xbf16> to vector<4x4x8x256xbf16>
    %186 = vector.shape_cast %185 : vector<4x4x8x256xbf16> to vector<128x256xbf16>
    %c3_43 = arith.constant 3 : index
    %c0_44 = arith.constant 0 : index
    %c0_45 = arith.constant 0 : index
    %187 = vector.load %arg9[%c3_43, %c0_44, %c0_45] : memref<4x256x64xbf16, #tpu.memory_space<vmem>>, vector<1x256x64xbf16>
    %188 = vector.shape_cast %187 : vector<1x256x64xbf16> to vector<256x64xbf16>
    %cst_46 = arith.constant dense<0.000000e+00> : vector<128x64xf32>
    %189 = tpu.matmul %186, %188, %cst_46 {dimension_numbers = #tpu.dot_dimension_numbers<[1], [0], [0], [1], [0, 0, 1, 1], [], []>} : vector<128x256xbf16>, vector<256x64xbf16>, vector<128x64xf32> -> vector<128x64xf32>
    %190 = arith.addf %184, %189 : vector<128x64xf32>
    %c0_47 = arith.constant 0 : index
    %c0_48 = arith.constant 0 : index
    %191 = vector.load %arg10[%c0_47, %c0_48] : memref<1x64xf32, #tpu.memory_space<vmem>>, vector<1x64xf32>
    %192 = vector.broadcast %191 : vector<1x64xf32> to vector<128x64xf32>
    %193 = arith.addf %190, %192 : vector<128x64xf32>
    %cst_49 = arith.constant 0.000000e+00 : f32
    %194 = vector.broadcast %cst_49 : f32 to vector<128x64xf32>
    %195 = arith.maximumf %193, %194 : vector<128x64xf32>
    %196 = arith.truncf %195 : vector<128x64xf32> to vector<128x64xbf16>
    %197 = vector.extract_strided_slice %196 {offsets = [0, 0], sizes = [8, 64], strides = [1, 1]} : vector<128x64xbf16> to vector<8x64xbf16>
    %198 = vector.extract_strided_slice %196 {offsets = [8, 0], sizes = [8, 64], strides = [1, 1]} : vector<128x64xbf16> to vector<8x64xbf16>
    %199 = vector.extract_strided_slice %196 {offsets = [16, 0], sizes = [8, 64], strides = [1, 1]} : vector<128x64xbf16> to vector<8x64xbf16>
    %200 = vector.extract_strided_slice %196 {offsets = [24, 0], sizes = [8, 64], strides = [1, 1]} : vector<128x64xbf16> to vector<8x64xbf16>
    %201 = vector.extract_strided_slice %196 {offsets = [32, 0], sizes = [8, 64], strides = [1, 1]} : vector<128x64xbf16> to vector<8x64xbf16>
    %202 = vector.extract_strided_slice %196 {offsets = [40, 0], sizes = [8, 64], strides = [1, 1]} : vector<128x64xbf16> to vector<8x64xbf16>
    %203 = vector.extract_strided_slice %196 {offsets = [48, 0], sizes = [8, 64], strides = [1, 1]} : vector<128x64xbf16> to vector<8x64xbf16>
    %204 = vector.extract_strided_slice %196 {offsets = [56, 0], sizes = [8, 64], strides = [1, 1]} : vector<128x64xbf16> to vector<8x64xbf16>
    %205 = vector.extract_strided_slice %196 {offsets = [64, 0], sizes = [8, 64], strides = [1, 1]} : vector<128x64xbf16> to vector<8x64xbf16>
    %206 = vector.extract_strided_slice %196 {offsets = [72, 0], sizes = [8, 64], strides = [1, 1]} : vector<128x64xbf16> to vector<8x64xbf16>
    %207 = vector.extract_strided_slice %196 {offsets = [80, 0], sizes = [8, 64], strides = [1, 1]} : vector<128x64xbf16> to vector<8x64xbf16>
    %208 = vector.extract_strided_slice %196 {offsets = [88, 0], sizes = [8, 64], strides = [1, 1]} : vector<128x64xbf16> to vector<8x64xbf16>
    %209 = vector.extract_strided_slice %196 {offsets = [96, 0], sizes = [8, 64], strides = [1, 1]} : vector<128x64xbf16> to vector<8x64xbf16>
    %210 = vector.extract_strided_slice %196 {offsets = [104, 0], sizes = [8, 64], strides = [1, 1]} : vector<128x64xbf16> to vector<8x64xbf16>
    %211 = vector.extract_strided_slice %196 {offsets = [112, 0], sizes = [8, 64], strides = [1, 1]} : vector<128x64xbf16> to vector<8x64xbf16>
    %212 = vector.extract_strided_slice %196 {offsets = [120, 0], sizes = [8, 64], strides = [1, 1]} : vector<128x64xbf16> to vector<8x64xbf16>
    %213 = tpu.concatenate %197, %198, %199, %200, %201, %202, %203, %204, %205, %206, %207, %208, %209, %210, %211, %212 in 1 : vector<8x64xbf16>, vector<8x64xbf16>, vector<8x64xbf16>, vector<8x64xbf16>, vector<8x64xbf16>, vector<8x64xbf16>, vector<8x64xbf16>, vector<8x64xbf16>, vector<8x64xbf16>, vector<8x64xbf16>, vector<8x64xbf16>, vector<8x64xbf16>, vector<8x64xbf16>, vector<8x64xbf16>, vector<8x64xbf16>, vector<8x64xbf16> -> vector<8x1024xbf16>
    %c0_50 = arith.constant 0 : index
    %c0_51 = arith.constant 0 : index
    %214 = vector.load %arg11[%c0_50, %c0_51] : memref<1024x512xbf16, #tpu.memory_space<vmem>>, vector<1024x512xbf16>
    %cst_52 = arith.constant dense<0.000000e+00> : vector<8x512xf32>
    %215 = tpu.matmul %213, %214, %cst_52 {dimension_numbers = #tpu.dot_dimension_numbers<[1], [0], [0], [1], [0, 0, 1, 1], [], []>} : vector<8x1024xbf16>, vector<1024x512xbf16>, vector<8x512xf32> -> vector<8x512xf32>
    %c0_53 = arith.constant 0 : index
    %c0_54 = arith.constant 0 : index
    %c0_55 = arith.constant 0 : index
    %216 = vector.load %arg2[%c0_53, %c0_54, %c0_55] : memref<1x8x8xf32, #tpu.memory_space<vmem>>, vector<1x8x8xf32>
    %217 = vector.shape_cast %216 : vector<1x8x8xf32> to vector<8x8xf32>
    %218 = arith.truncf %217 : vector<8x8xf32> to vector<8x8xbf16>
    %c0_56 = arith.constant 0 : index
    %c0_57 = arith.constant 0 : index
    %219 = vector.load %arg12[%c0_56, %c0_57] : memref<8x512xbf16, #tpu.memory_space<vmem>>, vector<8x512xbf16>
    %cst_58 = arith.constant dense<0.000000e+00> : vector<8x512xf32>
    %220 = tpu.matmul %218, %219, %cst_58 {dimension_numbers = #tpu.dot_dimension_numbers<[1], [0], [0], [1], [0, 0, 1, 1], [], []>} : vector<8x8xbf16>, vector<8x512xbf16>, vector<8x512xf32> -> vector<8x512xf32>
    %221 = arith.addf %215, %220 : vector<8x512xf32>
    %c0_59 = arith.constant 0 : index
    %c0_60 = arith.constant 0 : index
    %222 = vector.load %arg13[%c0_59, %c0_60] : memref<1x512xf32, #tpu.memory_space<vmem>>, vector<1x512xf32>
    %223 = vector.broadcast %222 : vector<1x512xf32> to vector<8x512xf32>
    %224 = arith.addf %221, %223 : vector<8x512xf32>
    %cst_61 = arith.constant 0.000000e+00 : f32
    %225 = vector.broadcast %cst_61 : f32 to vector<8x512xf32>
    %226 = arith.maximumf %224, %225 : vector<8x512xf32>
    %227 = vector.extract_strided_slice %226 {offsets = [0, 0], sizes = [8, 256], strides = [1, 1]} : vector<8x512xf32> to vector<8x256xf32>
    %228 = arith.truncf %227 : vector<8x256xf32> to vector<8x256xbf16>
    %c0_62 = arith.constant 0 : index
    %c0_63 = arith.constant 0 : index
    %229 = vector.load %arg14[%c0_62, %c0_63] : memref<256x7xbf16, #tpu.memory_space<vmem>>, vector<256x7xbf16>
    %cst_64 = arith.constant dense<0.000000e+00> : vector<8x7xf32>
    %230 = tpu.matmul %228, %229, %cst_64 {dimension_numbers = #tpu.dot_dimension_numbers<[1], [0], [0], [1], [0, 0, 1, 1], [], []>} : vector<8x256xbf16>, vector<256x7xbf16>, vector<8x7xf32> -> vector<8x7xf32>
    %c0_65 = arith.constant 0 : index
    %c0_66 = arith.constant 0 : index
    %231 = vector.load %arg15[%c0_65, %c0_66] : memref<1x7xf32, #tpu.memory_space<vmem>>, vector<1x7xf32>
    %232 = vector.broadcast %231 : vector<1x7xf32> to vector<8x7xf32>
    %233 = arith.addf %230, %232 : vector<8x7xf32>
    %cst_67 = arith.constant 0.000000e+00 : f32
    %234 = vector.broadcast %cst_67 : f32 to vector<8x7xf32>
    %235 = arith.maximumf %233, %234 : vector<8x7xf32>
    %236 = vector.extract_strided_slice %226 {offsets = [0, 256], sizes = [8, 256], strides = [1, 1]} : vector<8x512xf32> to vector<8x256xf32>
    %237 = arith.truncf %236 : vector<8x256xf32> to vector<8x256xbf16>
    %c0_68 = arith.constant 0 : index
    %c0_69 = arith.constant 0 : index
    %238 = vector.load %arg16[%c0_68, %c0_69] : memref<256x7xbf16, #tpu.memory_space<vmem>>, vector<256x7xbf16>
    %cst_70 = arith.constant dense<0.000000e+00> : vector<8x7xf32>
    %239 = tpu.matmul %237, %238, %cst_70 {dimension_numbers = #tpu.dot_dimension_numbers<[1], [0], [0], [1], [0, 0, 1, 1], [], []>} : vector<8x256xbf16>, vector<256x7xbf16>, vector<8x7xf32> -> vector<8x7xf32>
    %c0_71 = arith.constant 0 : index
    %c0_72 = arith.constant 0 : index
    %240 = vector.load %arg17[%c0_71, %c0_72] : memref<1x7xf32, #tpu.memory_space<vmem>>, vector<1x7xf32>
    %241 = vector.broadcast %240 : vector<1x7xf32> to vector<8x7xf32>
    %242 = arith.addf %239, %241 : vector<8x7xf32>
    %cst_73 = arith.constant 0.000000e+00 : f32
    %243 = vector.broadcast %cst_73 : f32 to vector<8x7xf32>
    %244 = arith.maximumf %242, %243 : vector<8x7xf32>
    %245 = arith.addf %244, %235 : vector<8x7xf32>
    %cst_74 = arith.constant dense<0.000000e+00> : vector<8xf32>
    %246 = vector.multi_reduction <add>, %235, %cst_74 [1] : vector<8x7xf32> to vector<8xf32>
    %247 = vector.shape_cast %246 : vector<8xf32> to vector<8x1xf32>
    %cst_75 = arith.constant 7.000000e+00 : f32
    %248 = vector.broadcast %cst_75 : f32 to vector<8x1xf32>
    %249 = arith.divf %247, %248 : vector<8x1xf32>
    %250 = vector.broadcast %249 : vector<8x1xf32> to vector<8x7xf32>
    %251 = arith.subf %245, %250 : vector<8x7xf32>
    %c0_76 = arith.constant 0 : index
    %c0_77 = arith.constant 0 : index
    %c0_78 = arith.constant 0 : index
    %252 = vector.load %arg18[%c0_76, %c0_77, %c0_78] : memref<1x8x7xf32, #tpu.memory_space<vmem>>, vector<1x8x7xf32>
    %253 = vector.shape_cast %252 : vector<1x8x7xf32> to vector<8x7xf32>
    %254 = vector.shape_cast %251 : vector<8x7xf32> to vector<1x8x7xf32>
    tpu.vector_store %arg18[%c0_76, %c0_77, %c0_78], %254 {strides = array<i32>} : memref<1x8x7xf32, #tpu.memory_space<vmem>>, vector<1x8x7xf32>,
    return
  }
  func.func @transform_0(%arg0: i32) -> (i32, i32, i32) {
    %c0_i32 = arith.constant 0 : i32
    %c0_i32_0 = arith.constant 0 : i32
    %c0_i32_1 = arith.constant 0 : i32
    return %arg0, %c0_i32, %c0_i32_0 : i32, i32, i32
  }
  func.func @transform_1(%arg0: i32) -> (i32, i32, i32) {
    %c0_i32 = arith.constant 0 : i32
    %c0_i32_0 = arith.constant 0 : i32
    %c0_i32_1 = arith.constant 0 : i32
    return %arg0, %c0_i32, %c0_i32_0 : i32, i32, i32
  }
  func.func @transform_2(%arg0: i32) -> (i32, i32) {
    %c0_i32 = arith.constant 0 : i32
    %c0_i32_0 = arith.constant 0 : i32
    %c0_i32_1 = arith.constant 0 : i32
    return %c0_i32, %c0_i32_0 : i32, i32
  }
  func.func @transform_3(%arg0: i32) -> (i32, i32) {
    %c0_i32 = arith.constant 0 : i32
    %c0_i32_0 = arith.constant 0 : i32
    %c0_i32_1 = arith.constant 0 : i32
    return %c0_i32, %c0_i32_0 : i32, i32
  }
  func.func @transform_4(%arg0: i32) -> (i32, i32) {
    %c0_i32 = arith.constant 0 : i32
    %c0_i32_0 = arith.constant 0 : i32
    %c0_i32_1 = arith.constant 0 : i32
    return %c0_i32, %c0_i32_0 : i32, i32
  }
  func.func @transform_5(%arg0: i32) -> (i32, i32) {
    %c0_i32 = arith.constant 0 : i32
    %c0_i32_0 = arith.constant 0 : i32
    %c0_i32_1 = arith.constant 0 : i32
    return %c0_i32, %c0_i32_0 : i32, i32
  }
  func.func @transform_6(%arg0: i32) -> (i32, i32, i32) {
    %c0_i32 = arith.constant 0 : i32
    %c0_i32_0 = arith.constant 0 : i32
    %c0_i32_1 = arith.constant 0 : i32
    %c0_i32_2 = arith.constant 0 : i32
    return %c0_i32, %c0_i32_0, %c0_i32_1 : i32, i32, i32
  }
  func.func @transform_7(%arg0: i32) -> (i32, i32) {
    %c0_i32 = arith.constant 0 : i32
    %c0_i32_0 = arith.constant 0 : i32
    %c0_i32_1 = arith.constant 0 : i32
    return %c0_i32, %c0_i32_0 : i32, i32
  }
  func.func @transform_8(%arg0: i32) -> (i32, i32, i32) {
    %c0_i32 = arith.constant 0 : i32
    %c0_i32_0 = arith.constant 0 : i32
    %c0_i32_1 = arith.constant 0 : i32
    %c0_i32_2 = arith.constant 0 : i32
    return %c0_i32, %c0_i32_0, %c0_i32_1 : i32, i32, i32
  }
  func.func @transform_9(%arg0: i32) -> (i32, i32) {
    %c0_i32 = arith.constant 0 : i32
    %c0_i32_0 = arith.constant 0 : i32
    %c0_i32_1 = arith.constant 0 : i32
    return %c0_i32, %c0_i32_0 : i32, i32
  }
  func.func @transform_10(%arg0: i32) -> (i32, i32) {
    %c0_i32 = arith.constant 0 : i32
    %c0_i32_0 = arith.constant 0 : i32
    %c0_i32_1 = arith.constant 0 : i32
    return %c0_i32, %c0_i32_0 : i32, i32
  }
  func.func @transform_11(%arg0: i32) -> (i32, i32) {
    %c0_i32 = arith.constant 0 : i32
    %c0_i32_0 = arith.constant 0 : i32
    %c0_i32_1 = arith.constant 0 : i32
    return %c0_i32, %c0_i32_0 : i32, i32
  }
  func.func @transform_12(%arg0: i32) -> (i32, i32) {
    %c0_i32 = arith.constant 0 : i32
    %c0_i32_0 = arith.constant 0 : i32
    %c0_i32_1 = arith.constant 0 : i32
    return %c0_i32, %c0_i32_0 : i32, i32
  }
  func.func @transform_13(%arg0: i32) -> (i32, i32) {
    %c0_i32 = arith.constant 0 : i32
    %c0_i32_0 = arith.constant 0 : i32
    %c0_i32_1 = arith.constant 0 : i32
    return %c0_i32, %c0_i32_0 : i32, i32
  }
  func.func @transform_14(%arg0: i32) -> (i32, i32) {
    %c0_i32 = arith.constant 0 : i32
    %c0_i32_0 = arith.constant 0 : i32
    %c0_i32_1 = arith.constant 0 : i32
    return %c0_i32, %c0_i32_0 : i32, i32
  }
  func.func @transform_15(%arg0: i32) -> (i32, i32) {
    %c0_i32 = arith.constant 0 : i32
    %c0_i32_0 = arith.constant 0 : i32
    %c0_i32_1 = arith.constant 0 : i32
    return %c0_i32, %c0_i32_0 : i32, i32
  }
  func.func @transform_16(%arg0: i32) -> (i32, i32) {
    %c0_i32 = arith.constant 0 : i32
    %c0_i32_0 = arith.constant 0 : i32
    %c0_i32_1 = arith.constant 0 : i32
    return %c0_i32, %c0_i32_0 : i32, i32
  }
  func.func @transform_17(%arg0: i32) -> (i32, i32, i32) {
    %c0_i32 = arith.constant 0 : i32
    %c0_i32_0 = arith.constant 0 : i32
    %c0_i32_1 = arith.constant 0 : i32
    return %arg0, %c0_i32, %c0_i32_0 : i32, i32, i32
  }
}

</mosaic_0001>

<llo_original>
// kernel: dqn_forward.1
$region0: #{dqn_forward.1}
  #allocation0 [shape = 'u32[]', space=smem, size = 0x4, offset = 0x4, fixed_abs, tag = 'smem constant byte address 0x4 - core index']
  #allocation1 [shape = 'u32[144,128]{1,0:T(1,128)}', space=vmem, size = 0x12000, scoped, tag = 'internal scratch']
  %s0 = inlined_call_operand.vmem [shape: s32[1,288,16], index: 0, kind: input, shape index: {}]
  %s1 = inlined_call_operand.vmem [shape: f32[1,8,8], index: 1, kind: input, shape index: {}]
  %s2 = inlined_call_operand.vmem [shape: s32[1,128], index: 2, kind: input, shape index: {}]
  %s3 = inlined_call_operand.vmem [shape: bf16[2048,128], index: 3, kind: input, shape index: {}]
  %s4 = inlined_call_operand.vmem [shape: f32[1,128], index: 4, kind: input, shape index: {}]
  %s5 = inlined_call_operand.vmem [shape: f32[128,128], index: 5, kind: input, shape index: {}]
  %s6 = inlined_call_operand.vmem [shape: bf16[4,128,256], index: 6, kind: input, shape index: {}]
  %s7 = inlined_call_operand.vmem [shape: f32[1,256], index: 7, kind: input, shape index: {}]
  %s8 = inlined_call_operand.vmem [shape: bf16[4,256,64], index: 8, kind: input, shape index: {}]
  %s9 = inlined_call_operand.vmem [shape: f32[1,64], index: 9, kind: input, shape index: {}]
  %s10 = inlined_call_operand.vmem [shape: bf16[1024,512], index: 10, kind: input, shape index: {}]
  %s11 = inlined_call_operand.vmem [shape: bf16[8,512], index: 11, kind: input, shape index: {}]
  %s12 = inlined_call_operand.vmem [shape: f32[1,512], index: 12, kind: input, shape index: {}]
  %s13 = inlined_call_operand.vmem [shape: bf16[256,7], index: 13, kind: input, shape index: {}]
  %s14 = inlined_call_operand.vmem [shape: f32[1,7], index: 14, kind: input, shape index: {}]
  %s15 = inlined_call_operand.vmem [shape: bf16[256,7], index: 15, kind: input, shape index: {}]
  %s16 = inlined_call_operand.vmem [shape: f32[1,7], index: 16, kind: input, shape index: {}]
  %s17 = inlined_call_operand.vmem [shape: f32[1,8,7], index: 17, kind: output, shape index: {}]
  %s18 = sld [smem:[#allocation0]]
  $region78: #{dqn_forward.1} parent=0
    _
  %s20 = ssub.s32 1, %s18
  %s21 = scalar_select 0, %s20, %s18
  // Predicated region
  $region2: #{dqn_forward.1} parent=0 // pred_check
    _
  $region3: #{dqn_forward.1} parent=0 // pred_check_branch
    %23 = sbr.rel (0) target = $region5
  $region4: #{dqn_forward.1} parent=0 // pred_region
    _
  $region5: #{dqn_forward.1} parent=0 // pred_fallthru
    _
  // Predicated region
  $region6: #{dqn_forward.1} parent=0 // pred_check
    _
  $region7: #{dqn_forward.1} parent=0 // pred_check_branch
    %25 = sbr.rel (0) target = $region9
  $region8: #{dqn_forward.1} parent=0 // pred_region
    _
  $region9: #{dqn_forward.1} parent=0 // pred_fallthru
    _
  // Predicated region
  $region10: #{dqn_forward.1} parent=0 // pred_check
    _
  $region11: #{dqn_forward.1} parent=0 // pred_check_branch
    %27 = sbr.rel (0) target = $region13
  $region12: #{dqn_forward.1} parent=0 // pred_region
    _
  $region13: #{dqn_forward.1} parent=0 // pred_fallthru
    _
  // Predicated region
  $region14: #{dqn_forward.1} parent=0 // pred_check
    _
  $region15: #{dqn_forward.1} parent=0 // pred_check_branch
    %29 = sbr.rel (0) target = $region17
  $region16: #{dqn_forward.1} parent=0 // pred_region
    _
  $region17: #{dqn_forward.1} parent=0 // pred_fallthru
    _
  // Predicated region
  $region18: #{dqn_forward.1} parent=0 // pred_check
    _
  $region19: #{dqn_forward.1} parent=0 // pred_check_branch
    %31 = sbr.rel (0) target = $region21
  $region20: #{dqn_forward.1} parent=0 // pred_region
    _
  $region21: #{dqn_forward.1} parent=0 // pred_fallthru
    _
  // Predicated region
  $region22: #{dqn_forward.1} parent=0 // pred_check
    _
  $region23: #{dqn_forward.1} parent=0 // pred_check_branch
    %33 = sbr.rel (0) target = $region25
  $region24: #{dqn_forward.1} parent=0 // pred_region
    _
  $region25: #{dqn_forward.1} parent=0 // pred_fallthru
    _
  // Predicated region
  $region26: #{dqn_forward.1} parent=0 // pred_check
    _
  $region27: #{dqn_forward.1} parent=0 // pred_check_branch
    %35 = sbr.rel (0) target = $region29
  $region28: #{dqn_forward.1} parent=0 // pred_region
    _
  $region29: #{dqn_forward.1} parent=0 // pred_fallthru
    _
  // Predicated region
  $region30: #{dqn_forward.1} parent=0 // pred_check
    _
  $region31: #{dqn_forward.1} parent=0 // pred_check_branch
    %37 = sbr.rel (0) target = $region33
  $region32: #{dqn_forward.1} parent=0 // pred_region
    _
  $region33: #{dqn_forward.1} parent=0 // pred_fallthru
    _
  // Predicated region
  $region34: #{dqn_forward.1} parent=0 // pred_check
    _
  $region35: #{dqn_forward.1} parent=0 // pred_check_branch
    %39 = sbr.rel (0) target = $region37
  $region36: #{dqn_forward.1} parent=0 // pred_region
    _
  $region37: #{dqn_forward.1} parent=0 // pred_fallthru
    _
  // Predicated region
  $region38: #{dqn_forward.1} parent=0 // pred_check
    _
  $region39: #{dqn_forward.1} parent=0 // pred_check_branch
    %41 = sbr.rel (0) target = $region41
  $region40: #{dqn_forward.1} parent=0 // pred_region
    _
  $region41: #{dqn_forward.1} parent=0 // pred_fallthru
    _
  // Predicated region
  $region42: #{dqn_forward.1} parent=0 // pred_check
    _
  $region43: #{dqn_forward.1} parent=0 // pred_check_branch
    %43 = sbr.rel (0) target = $region45
  $region44: #{dqn_forward.1} parent=0 // pred_region
    _
  $region45: #{dqn_forward.1} parent=0 // pred_fallthru
    _
  // Predicated region
  $region46: #{dqn_forward.1} parent=0 // pred_check
    _
  $region47: #{dqn_forward.1} parent=0 // pred_check_branch
    %45 = sbr.rel (0) target = $region49
  $region48: #{dqn_forward.1} parent=0 // pred_region
    _
  $region49: #{dqn_forward.1} parent=0 // pred_fallthru
    _
  // Predicated region
  $region50: #{dqn_forward.1} parent=0 // pred_check
    _
  $region51: #{dqn_forward.1} parent=0 // pred_check_branch
    %47 = sbr.rel (0) target = $region53
  $region52: #{dqn_forward.1} parent=0 // pred_region
    _
  $region53: #{dqn_forward.1} parent=0 // pred_fallthru
    _
  // Predicated region
  $region54: #{dqn_forward.1} parent=0 // pred_check
    _
  $region55: #{dqn_forward.1} parent=0 // pred_check_branch
    %49 = sbr.rel (0) target = $region57
  $region56: #{dqn_forward.1} parent=0 // pred_region
    _
  $region57: #{dqn_forward.1} parent=0 // pred_fallthru
    _
  // Predicated region
  $region58: #{dqn_forward.1} parent=0 // pred_check
    _
  $region59: #{dqn_forward.1} parent=0 // pred_check_branch
    %51 = sbr.rel (0) target = $region61
  $region60: #{dqn_forward.1} parent=0 // pred_region
    _
  $region61: #{dqn_forward.1} parent=0 // pred_fallthru
    _
  // Predicated region
  $region62: #{dqn_forward.1} parent=0 // pred_check
    _
  $region63: #{dqn_forward.1} parent=0 // pred_check_branch
    %53 = sbr.rel (0) target = $region65
  $region64: #{dqn_forward.1} parent=0 // pred_region
    _
  $region65: #{dqn_forward.1} parent=0 // pred_fallthru
    _
  // Predicated region
  $region66: #{dqn_forward.1} parent=0 // pred_check
    _
  $region67: #{dqn_forward.1} parent=0 // pred_check_branch
    %55 = sbr.rel (0) target = $region69
  $region68: #{dqn_forward.1} parent=0 // pred_region
    _
  $region69: #{dqn_forward.1} parent=0 // pred_fallthru
    _
  %v57 = vld [vmem:[%s0] sm:$0xff]
  %v58 = vld [vmem:[%s0 + $0x8] sm:$0xff]
  %v59 = vld [vmem:[%s0 + $0x10] sm:$0xff]
  %v60 = vld [vmem:[%s0 + $0x18] sm:$0xff]
  %v61 = vld [vmem:[%s0 + $0x20] sm:$0xff]
  %v62 = vld [vmem:[%s0 + $0x28] sm:$0xff]
  %v63 = vld [vmem:[%s0 + $0x30] sm:$0xff]
  %v64 = vld [vmem:[%s0 + $0x38] sm:$0xff]
  %v65 = vld [vmem:[%s0 + $0x40] sm:$0xff]
  %v66 = vld [vmem:[%s0 + $0x48] sm:$0xff]
  %v67 = vld [vmem:[%s0 + $0x50] sm:$0xff]
  %v68 = vld [vmem:[%s0 + $0x58] sm:$0xff]
  %v69 = vld [vmem:[%s0 + $0x60] sm:$0xff]
  %v70 = vld [vmem:[%s0 + $0x68] sm:$0xff]
  %v71 = vld [vmem:[%s0 + $0x70] sm:$0xff]
  %v72 = vld [vmem:[%s0 + $0x78] sm:$0xff]
  %v73 = vld [vmem:[%s0 + $0x80] sm:$0xff]
  %v74 = vld [vmem:[%s0 + $0x88] sm:$0xff]
  %v75 = vld [vmem:[%s0 + $0x90] sm:$0xff]
  %v76 = vld [vmem:[%s0 + $0x98] sm:$0xff]
  %v77 = vld [vmem:[%s0 + $0xa0] sm:$0xff]
  %v78 = vld [vmem:[%s0 + $0xa8] sm:$0xff]
  %v79 = vld [vmem:[%s0 + $0xb0] sm:$0xff]
  %v80 = vld [vmem:[%s0 + $0xb8] sm:$0xff]
  %v81 = vld [vmem:[%s0 + $0xc0] sm:$0xff]
  %v82 = vld [vmem:[%s0 + $0xc8] sm:$0xff]
  %v83 = vld [vmem:[%s0 + $0xd0] sm:$0xff]
  %v84 = vld [vmem:[%s0 + $0xd8] sm:$0xff]
  %v85 = vld [vmem:[%s0 + $0xe0] sm:$0xff]
  %v86 = vld [vmem:[%s0 + $0xe8] sm:$0xff]
  %v87 = vld [vmem:[%s0 + $0xf0] sm:$0xff]
  %v88 = vld [vmem:[%s0 + $0xf8] sm:$0xff]
  %v89 = vld [vmem:[%s0 + $0x100] sm:$0xff]
  %v90 = vld [vmem:[%s0 + $0x108] sm:$0xff]
  %v91 = vld [vmem:[%s0 + $0x110] sm:$0xff]
  %v92 = vld [vmem:[%s0 + $0x118] sm:$0xff]
  %v93 = vld [vmem:[%s2] sm:$0x1]
  %94 = vset.pattern.permute.xlu0 0
  %95 = vperm.xlu0 %94, %v57
  %v96 = vpop.permute.xlu0 %95
  %97 = vset.pattern.permute.xlu0 0
  %98 = vperm.xlu0 %97, %v58
  %v99 = vpop.permute.xlu0 %98
  %100 = vset.pattern.permute.xlu0 0
  %101 = vperm.xlu0 %100, %v59
  %v102 = vpop.permute.xlu0 %101
  %103 = vset.pattern.permute.xlu0 0
  %104 = vperm.xlu0 %103, %v60
  %v105 = vpop.permute.xlu0 %104
  %106 = vset.pattern.permute.xlu0 0
  %107 = vperm.xlu0 %106, %v61
  %v108 = vpop.permute.xlu0 %107
  %109 = vset.pattern.permute.xlu0 0
  %110 = vperm.xlu0 %109, %v62
  %v111 = vpop.permute.xlu0 %110
  %112 = vset.pattern.permute.xlu0 0
  %113 = vperm.xlu0 %112, %v63
  %v114 = vpop.permute.xlu0 %113
  %115 = vset.pattern.permute.xlu0 0
  %116 = vperm.xlu0 %115, %v64
  %v117 = vpop.permute.xlu0 %116
  %118 = vset.pattern.permute.xlu0 0
  %119 = vperm.xlu0 %118, %v65
  %v120 = vpop.permute.xlu0 %119
  %121 = vset.pattern.permute.xlu0 0
  %122 = vperm.xlu0 %121, %v66
  %v123 = vpop.permute.xlu0 %122
  %124 = vset.pattern.permute.xlu0 0
  %125 = vperm.xlu0 %124, %v67
  %v126 = vpop.permute.xlu0 %125
  %127 = vset.pattern.permute.xlu0 0
  %128 = vperm.xlu0 %127, %v68
  %v129 = vpop.permute.xlu0 %128
  %130 = vset.pattern.permute.xlu0 0
  %131 = vperm.xlu0 %130, %v69
  %v132 = vpop.permute.xlu0 %131
  %133 = vset.pattern.permute.xlu0 0
  %134 = vperm.xlu0 %133, %v70
  %v135 = vpop.permute.xlu0 %134
  %136 = vset.pattern.permute.xlu0 0
  %137 = vperm.xlu0 %136, %v71
  %v138 = vpop.permute.xlu0 %137
  %139 = vset.pattern.permute.xlu0 0
  %140 = vperm.xlu0 %139, %v72
  %v141 = vpop.permute.xlu0 %140
  %142 = vset.pattern.permute.xlu0 0
  %143 = vperm.xlu0 %142, %v73
  %v144 = vpop.permute.xlu0 %143
  %145 = vset.pattern.permute.xlu0 0
  %146 = vperm.xlu0 %145, %v74
  %v147 = vpop.permute.xlu0 %146
  %148 = vset.pattern.permute.xlu0 0
  %149 = vperm.xlu0 %148, %v75
  %v150 = vpop.permute.xlu0 %149
  %151 = vset.pattern.permute.xlu0 0
  %152 = vperm.xlu0 %151, %v76
  %v153 = vpop.permute.xlu0 %152
  %154 = vset.pattern.permute.xlu0 0
  %155 = vperm.xlu0 %154, %v77
  %v156 = vpop.permute.xlu0 %155
  %157 = vset.pattern.permute.xlu0 0
  %158 = vperm.xlu0 %157, %v78
  %v159 = vpop.permute.xlu0 %158
  %160 = vset.pattern.permute.xlu0 0
  %161 = vperm.xlu0 %160, %v79
  %v162 = vpop.permute.xlu0 %161
  %163 = vset.pattern.permute.xlu0 0
  %164 = vperm.xlu0 %163, %v80
  %v165 = vpop.permute.xlu0 %164
  %166 = vset.pattern.permute.xlu0 0
  %167 = vperm.xlu0 %166, %v81
  %v168 = vpop.permute.xlu0 %167
  %169 = vset.pattern.permute.xlu0 0
  %170 = vperm.xlu0 %169, %v82
  %v171 = vpop.permute.xlu0 %170
  %172 = vset.pattern.permute.xlu0 0
  %173 = vperm.xlu0 %172, %v83
  %v174 = vpop.permute.xlu0 %173
  %175 = vset.pattern.permute.xlu0 0
  %176 = vperm.xlu0 %175, %v84
  %v177 = vpop.permute.xlu0 %176
  %178 = vset.pattern.permute.xlu0 0
  %179 = vperm.xlu0 %178, %v85
  %v180 = vpop.permute.xlu0 %179
  %181 = vset.pattern.permute.xlu0 0
  %182 = vperm.xlu0 %181, %v86
  %v183 = vpop.permute.xlu0 %182
  %184 = vset.pattern.permute.xlu0 0
  %185 = vperm.xlu0 %184, %v87
  %v186 = vpop.permute.xlu0 %185
  %187 = vset.pattern.permute.xlu0 0
  %188 = vperm.xlu0 %187, %v88
  %v189 = vpop.permute.xlu0 %188
  %190 = vset.pattern.permute.xlu0 0
  %191 = vperm.xlu0 %190, %v89
  %v192 = vpop.permute.xlu0 %191
  %193 = vset.pattern.permute.xlu0 0
  %194 = vperm.xlu0 %193, %v90
  %v195 = vpop.permute.xlu0 %194
  %196 = vset.pattern.permute.xlu0 0
  %197 = vperm.xlu0 %196, %v91
  %v198 = vpop.permute.xlu0 %197
  %199 = vset.pattern.permute.xlu0 0
  %200 = vperm.xlu0 %199, %v92
  %v201 = vpop.permute.xlu0 %200
  %v202 = vlaneseq
  %v203 = vshrl.u32 %v202, 7
  %v204 = vsub.s32 0, %v203
  %v205 = vrot.slane %v93, %v204
  %vm206 = vcmp.eq.s32.totalorder %v96, %v205
  %vm207 = vcmp.eq.s32.totalorder %v99, %v205
  %vm208 = vcmp.eq.s32.totalorder %v102, %v205
  %vm209 = vcmp.eq.s32.totalorder %v105, %v205
  %vm210 = vcmp.eq.s32.totalorder %v108, %v205
  %vm211 = vcmp.eq.s32.totalorder %v111, %v205
  %vm212 = vcmp.eq.s32.totalorder %v114, %v205
  %vm213 = vcmp.eq.s32.totalorder %v117, %v205
  %vm214 = vcmp.eq.s32.totalorder %v120, %v205
  %vm215 = vcmp.eq.s32.totalorder %v123, %v205
  %vm216 = vcmp.eq.s32.totalorder %v126, %v205
  %vm217 = vcmp.eq.s32.totalorder %v129, %v205
  %vm218 = vcmp.eq.s32.totalorder %v132, %v205
  %vm219 = vcmp.eq.s32.totalorder %v135, %v205
  %vm220 = vcmp.eq.s32.totalorder %v138, %v205
  %vm221 = vcmp.eq.s32.totalorder %v141, %v205
  %vm222 = vcmp.eq.s32.totalorder %v144, %v205
  %vm223 = vcmp.eq.s32.totalorder %v147, %v205
  %vm224 = vcmp.eq.s32.totalorder %v150, %v205
  %vm225 = vcmp.eq.s32.totalorder %v153, %v205
  %vm226 = vcmp.eq.s32.totalorder %v156, %v205
  %vm227 = vcmp.eq.s32.totalorder %v159, %v205
  %vm228 = vcmp.eq.s32.totalorder %v162, %v205
  %vm229 = vcmp.eq.s32.totalorder %v165, %v205
  %vm230 = vcmp.eq.s32.totalorder %v168, %v205
  %vm231 = vcmp.eq.s32.totalorder %v171, %v205
  %vm232 = vcmp.eq.s32.totalorder %v174, %v205
  %vm233 = vcmp.eq.s32.totalorder %v177, %v205
  %vm234 = vcmp.eq.s32.totalorder %v180, %v205
  %vm235 = vcmp.eq.s32.totalorder %v183, %v205
  %vm236 = vcmp.eq.s32.totalorder %v186, %v205
  %vm237 = vcmp.eq.s32.totalorder %v189, %v205
  %vm238 = vcmp.eq.s32.totalorder %v192, %v205
  %vm239 = vcmp.eq.s32.totalorder %v195, %v205
  %vm240 = vcmp.eq.s32.totalorder %v198, %v205
  %vm241 = vcmp.eq.s32.totalorder %v201, %v205
  %v242 = vsel %vm206, 1, 0
  %v243 = vsel %vm207, 1, 0
  %v244 = vsel %vm208, 1, 0
  %v245 = vsel %vm209, 1, 0
  %v246 = vsel %vm210, 1, 0
  %v247 = vsel %vm211, 1, 0
  %v248 = vsel %vm212, 1, 0
  %v249 = vsel %vm213, 1, 0
  %v250 = vsel %vm214, 1, 0
  %v251 = vsel %vm215, 1, 0
  %v252 = vsel %vm216, 1, 0
  %v253 = vsel %vm217, 1, 0
  %v254 = vsel %vm218, 1, 0
  %v255 = vsel %vm219, 1, 0
  %v256 = vsel %vm220, 1, 0
  %v257 = vsel %vm221, 1, 0
  %v258 = vsel %vm222, 1, 0
  %v259 = vsel %vm223, 1, 0
  %v260 = vsel %vm224, 1, 0
  %v261 = vsel %vm225, 1, 0
  %v262 = vsel %vm226, 1, 0
  %v263 = vsel %vm227, 1, 0
  %v264 = vsel %vm228, 1, 0
  %v265 = vsel %vm229, 1, 0
  %v266 = vsel %vm230, 1, 0
  %v267 = vsel %vm231, 1, 0
  %v268 = vsel %vm232, 1, 0
  %v269 = vsel %vm233, 1, 0
  %v270 = vsel %vm234, 1, 0
  %v271 = vsel %vm235, 1, 0
  %v272 = vsel %vm236, 1, 0
  %v273 = vsel %vm237, 1, 0
  %v274 = vsel %vm238, 1, 0
  %v275 = vsel %vm239, 1, 0
  %v276 = vsel %vm240, 1, 0
  %v277 = vsel %vm241, 1, 0
  %v278 = vcvt.s32.f32 %v242
  %v279 = vcvt.s32.f32 %v243
  %v280 = vcvt.s32.f32 %v244
  %v281 = vcvt.s32.f32 %v245
  %v282 = vcvt.s32.f32 %v246
  %v283 = vcvt.s32.f32 %v247
  %v284 = vcvt.s32.f32 %v248
  %v285 = vcvt.s32.f32 %v249
  %v286 = vcvt.s32.f32 %v250
  %v287 = vcvt.s32.f32 %v251
  %v288 = vcvt.s32.f32 %v252
  %v289 = vcvt.s32.f32 %v253
  %v290 = vcvt.s32.f32 %v254
  %v291 = vcvt.s32.f32 %v255
  %v292 = vcvt.s32.f32 %v256
  %v293 = vcvt.s32.f32 %v257
  %v294 = vcvt.s32.f32 %v258
  %v295 = vcvt.s32.f32 %v259
  %v296 = vcvt.s32.f32 %v260
  %v297 = vcvt.s32.f32 %v261
  %v298 = vcvt.s32.f32 %v262
  %v299 = vcvt.s32.f32 %v263
  %v300 = vcvt.s32.f32 %v264
  %v301 = vcvt.s32.f32 %v265
  %v302 = vcvt.s32.f32 %v266
  %v303 = vcvt.s32.f32 %v267
  %v304 = vcvt.s32.f32 %v268
  %v305 = vcvt.s32.f32 %v269
  %v306 = vcvt.s32.f32 %v270
  %v307 = vcvt.s32.f32 %v271
  %v308 = vcvt.s32.f32 %v272
  %v309 = vcvt.s32.f32 %v273
  %v310 = vcvt.s32.f32 %v274
  %v311 = vcvt.s32.f32 %v275
  %v312 = vcvt.s32.f32 %v276
  %v313 = vcvt.s32.f32 %v277
  %v314 = vpack.c.bf16 %v279, %v278
  %v315 = vpack.c.bf16 %v281, %v280
  %v316 = vpack.c.bf16 %v283, %v282
  %v317 = vpack.c.bf16 %v285, %v284
  %v318 = vpack.c.bf16 %v287, %v286
  %v319 = vpack.c.bf16 %v289, %v288
  %v320 = vpack.c.bf16 %v291, %v290
  %v321 = vpack.c.bf16 %v293, %v292
  %v322 = vpack.c.bf16 %v295, %v294
  %v323 = vpack.c.bf16 %v297, %v296
  %v324 = vpack.c.bf16 %v299, %v298
  %v325 = vpack.c.bf16 %v301, %v300
  %v326 = vpack.c.bf16 %v303, %v302
  %v327 = vpack.c.bf16 %v305, %v304
  %v328 = vpack.c.bf16 %v307, %v306
  %v329 = vpack.c.bf16 %v309, %v308
  %v330 = vpack.c.bf16 %v311, %v310
  %v331 = vpack.c.bf16 %v313, %v312
  %332 = vset.pattern.permute.xlu0 1
  %333 = vperm.xlu0 %332, %v57
  %v334 = vpop.permute.xlu0 %333
  %335 = vset.pattern.permute.xlu0 1
  %336 = vperm.xlu0 %335, %v58
  %v337 = vpop.permute.xlu0 %336
  %338 = vset.pattern.permute.xlu0 1
  %339 = vperm.xlu0 %338, %v59
  %v340 = vpop.permute.xlu0 %339
  %341 = vset.pattern.permute.xlu0 1
  %342 = vperm.xlu0 %341, %v60
  %v343 = vpop.permute.xlu0 %342
  %344 = vset.pattern.permute.xlu0 1
  %345 = vperm.xlu0 %344, %v61
  %v346 = vpop.permute.xlu0 %345
  %347 = vset.pattern.permute.xlu0 1
  %348 = vperm.xlu0 %347, %v62
  %v349 = vpop.permute.xlu0 %348
  %350 = vset.pattern.permute.xlu0 1
  %351 = vperm.xlu0 %350, %v63
  %v352 = vpop.permute.xlu0 %351
  %353 = vset.pattern.permute.xlu0 1
  %354 = vperm.xlu0 %353, %v64
  %v355 = vpop.permute.xlu0 %354
  %356 = vset.pattern.permute.xlu0 1
  %357 = vperm.xlu0 %356, %v65
  %v358 = vpop.permute.xlu0 %357
  %359 = vset.pattern.permute.xlu0 1
  %360 = vperm.xlu0 %359, %v66
  %v361 = vpop.permute.xlu0 %360
  %362 = vset.pattern.permute.xlu0 1
  %363 = vperm.xlu0 %362, %v67
  %v364 = vpop.permute.xlu0 %363
  %365 = vset.pattern.permute.xlu0 1
  %366 = vperm.xlu0 %365, %v68
  %v367 = vpop.permute.xlu0 %366
  %368 = vset.pattern.permute.xlu0 1
  %369 = vperm.xlu0 %368, %v69
  %v370 = vpop.permute.xlu0 %369
  %371 = vset.pattern.permute.xlu0 1
  %372 = vperm.xlu0 %371, %v70
  %v373 = vpop.permute.xlu0 %372
  %374 = vset.pattern.permute.xlu0 1
  %375 = vperm.xlu0 %374, %v71
  %v376 = vpop.permute.xlu0 %375
  %377 = vset.pattern.permute.xlu0 1
  %378 = vperm.xlu0 %377, %v72
  %v379 = vpop.permute.xlu0 %378
  %380 = vset.pattern.permute.xlu0 1
  %381 = vperm.xlu0 %380, %v73
  %v382 = vpop.permute.xlu0 %381
  %383 = vset.pattern.permute.xlu0 1
  %384 = vperm.xlu0 %383, %v74
  %v385 = vpop.permute.xlu0 %384
  %386 = vset.pattern.permute.xlu0 1
  %387 = vperm.xlu0 %386, %v75
  %v388 = vpop.permute.xlu0 %387
  %389 = vset.pattern.permute.xlu0 1
  %390 = vperm.xlu0 %389, %v76
  %v391 = vpop.permute.xlu0 %390
  %392 = vset.pattern.permute.xlu0 1
  %393 = vperm.xlu0 %392, %v77
  %v394 = vpop.permute.xlu0 %393
  %395 = vset.pattern.permute.xlu0 1
  %396 = vperm.xlu0 %395, %v78
  %v397 = vpop.permute.xlu0 %396
  %398 = vset.pattern.permute.xlu0 1
  %399 = vperm.xlu0 %398, %v79
  %v400 = vpop.permute.xlu0 %399
  %401 = vset.pattern.permute.xlu0 1
  %402 = vperm.xlu0 %401, %v80
  %v403 = vpop.permute.xlu0 %402
  %404 = vset.pattern.permute.xlu0 1
  %405 = vperm.xlu0 %404, %v81
  %v406 = vpop.permute.xlu0 %405
  %407 = vset.pattern.permute.xlu0 1
  %408 = vperm.xlu0 %407, %v82
  %v409 = vpop.permute.xlu0 %408
  %410 = vset.pattern.permute.xlu0 1
  %411 = vperm.xlu0 %410, %v83
  %v412 = vpop.permute.xlu0 %411
  %413 = vset.pattern.permute.xlu0 1
  %414 = vperm.xlu0 %413, %v84
  %v415 = vpop.permute.xlu0 %414
  %416 = vset.pattern.permute.xlu0 1
  %417 = vperm.xlu0 %416, %v85
  %v418 = vpop.permute.xlu0 %417
  %419 = vset.pattern.permute.xlu0 1
  %420 = vperm.xlu0 %419, %v86
  %v421 = vpop.permute.xlu0 %420
  %422 = vset.pattern.permute.xlu0 1
  %423 = vperm.xlu0 %422, %v87
  %v424 = vpop.permute.xlu0 %423
  %425 = vset.pattern.permute.xlu0 1
  %426 = vperm.xlu0 %425, %v88
  %v427 = vpop.permute.xlu0 %426
  %428 = vset.pattern.permute.xlu0 1
  %429 = vperm.xlu0 %428, %v89
  %v430 = vpop.permute.xlu0 %429
  %431 = vset.pattern.permute.xlu0 1
  %432 = vperm.xlu0 %431, %v90
  %v433 = vpop.permute.xlu0 %432
  %434 = vset.pattern.permute.xlu0 1
  %435 = vperm.xlu0 %434, %v91
  %v436 = vpop.permute.xlu0 %435
  %437 = vset.pattern.permute.xlu0 1
  %438 = vperm.xlu0 %437, %v92
  %v439 = vpop.permute.xlu0 %438
  %vm440 = vcmp.eq.s32.totalorder %v334, %v205
  %vm441 = vcmp.eq.s32.totalorder %v337, %v205
  %vm442 = vcmp.eq.s32.totalorder %v340, %v205
  %vm443 = vcmp.eq.s32.totalorder %v343, %v205
  %vm444 = vcmp.eq.s32.totalorder %v346, %v205
  %vm445 = vcmp.eq.s32.totalorder %v349, %v205
  %vm446 = vcmp.eq.s32.totalorder %v352, %v205
  %vm447 = vcmp.eq.s32.totalorder %v355, %v205
  %vm448 = vcmp.eq.s32.totalorder %v358, %v205
  %vm449 = vcmp.eq.s32.totalorder %v361, %v205
  %vm450 = vcmp.eq.s32.totalorder %v364, %v205
  %vm451 = vcmp.eq.s32.totalorder %v367, %v205
  %vm452 = vcmp.eq.s32.totalorder %v370, %v205
  %vm453 = vcmp.eq.s32.totalorder %v373, %v205
  %vm454 = vcmp.eq.s32.totalorder %v376, %v205
  %vm455 = vcmp.eq.s32.totalorder %v379, %v205
  %vm456 = vcmp.eq.s32.totalorder %v382, %v205
  %vm457 = vcmp.eq.s32.totalorder %v385, %v205
  %vm458 = vcmp.eq.s32.totalorder %v388, %v205
  %vm459 = vcmp.eq.s32.totalorder %v391, %v205
  %vm460 = vcmp.eq.s32.totalorder %v394, %v205
  %vm461 = vcmp.eq.s32.totalorder %v397, %v205
  %vm462 = vcmp.eq.s32.totalorder %v400, %v205
  %vm463 = vcmp.eq.s32.totalorder %v403, %v205
  %vm464 = vcmp.eq.s32.totalorder %v406, %v205
  %vm465 = vcmp.eq.s32.totalorder %v409, %v205
  %vm466 = vcmp.eq.s32.totalorder %v412, %v205
  %vm467 = vcmp.eq.s32.totalorder %v415, %v205
  %vm468 = vcmp.eq.s32.totalorder %v418, %v205
  %vm469 = vcmp.eq.s32.totalorder %v421, %v205
  %vm470 = vcmp.eq.s32.totalorder %v424, %v205
  %vm471 = vcmp.eq.s32.totalorder %v427, %v205
  %vm472 = vcmp.eq.s32.totalorder %v430, %v205
  %vm473 = vcmp.eq.s32.totalorder %v433, %v205
  %vm474 = vcmp.eq.s32.totalorder %v436, %v205
  %vm475 = vcmp.eq.s32.totalorder %v439, %v205
  %v476 = vsel %vm440, 1, 0
  %v477 = vsel %vm441, 1, 0
  %v478 = vsel %vm442, 1, 0
  %v479 = vsel %vm443, 1, 0
  %v480 = vsel %vm444, 1, 0
  %v481 = vsel %vm445, 1, 0
  %v482 = vsel %vm446, 1, 0
  %v483 = vsel %vm447, 1, 0
  %v484 = vsel %vm448, 1, 0
  %v485 = vsel %vm449, 1, 0
  %v486 = vsel %vm450, 1, 0
  %v487 = vsel %vm451, 1, 0
  %v488 = vsel %vm452, 1, 0
  %v489 = vsel %vm453, 1, 0
  %v490 = vsel %vm454, 1, 0
  %v491 = vsel %vm455, 1, 0
  %v492 = vsel %vm456, 1, 0
  %v493 = vsel %vm457, 1, 0
  %v494 = vsel %vm458, 1, 0
  %v495 = vsel %vm459, 1, 0
  %v496 = vsel %vm460, 1, 0
  %v497 = vsel %vm461, 1, 0
  %v498 = vsel %vm462, 1, 0
  %v499 = vsel %vm463, 1, 0
  %v500 = vsel %vm464, 1, 0
  %v501 = vsel %vm465, 1, 0
  %v502 = vsel %vm466, 1, 0
  %v503 = vsel %vm467, 1, 0
  %v504 = vsel %vm468, 1, 0
  %v505 = vsel %vm469, 1, 0
  %v506 = vsel %vm470, 1, 0
  %v507 = vsel %vm471, 1, 0
  %v508 = vsel %vm472, 1, 0
  %v509 = vsel %vm473, 1, 0
  %v510 = vsel %vm474, 1, 0
  %v511 = vsel %vm475, 1, 0
  %v512 = vcvt.s32.f32 %v476
  %v513 = vcvt.s32.f32 %v477
  %v514 = vcvt.s32.f32 %v478
  %v515 = vcvt.s32.f32 %v479
  %v516 = vcvt.s32.f32 %v480
  %v517 = vcvt.s32.f32 %v481
  %v518 = vcvt.s32.f32 %v482
  %v519 = vcvt.s32.f32 %v483
  %v520 = vcvt.s32.f32 %v484
  %v521 = vcvt.s32.f32 %v485
  %v522 = vcvt.s32.f32 %v486
  %v523 = vcvt.s32.f32 %v487
  %v524 = vcvt.s32.f32 %v488
  %v525 = vcvt.s32.f32 %v489
  %v526 = vcvt.s32.f32 %v490
  %v527 = vcvt.s32.f32 %v491
  %v528 = vcvt.s32.f32 %v492
  %v529 = vcvt.s32.f32 %v493
  %v530 = vcvt.s32.f32 %v494
  %v531 = vcvt.s32.f32 %v495
  %v532 = vcvt.s32.f32 %v496
  %v533 = vcvt.s32.f32 %v497
  %v534 = vcvt.s32.f32 %v498
  %v535 = vcvt.s32.f32 %v499
  %v536 = vcvt.s32.f32 %v500
  %v537 = vcvt.s32.f32 %v501
  %v538 = vcvt.s32.f32 %v502
  %v539 = vcvt.s32.f32 %v503
  %v540 = vcvt.s32.f32 %v504
  %v541 = vcvt.s32.f32 %v505
  %v542 = vcvt.s32.f32 %v506
  %v543 = vcvt.s32.f32 %v507
  %v544 = vcvt.s32.f32 %v508
  %v545 = vcvt.s32.f32 %v509
  %v546 = vcvt.s32.f32 %v510
  %v547 = vcvt.s32.f32 %v511
  %v548 = vpack.c.bf16 %v513, %v512
  %v549 = vpack.c.bf16 %v515, %v514
  %v550 = vpack.c.bf16 %v517, %v516
  %v551 = vpack.c.bf16 %v519, %v518
  %v552 = vpack.c.bf16 %v521, %v520
  %v553 = vpack.c.bf16 %v523, %v522
  %v554 = vpack.c.bf16 %v525, %v524
  %v555 = vpack.c.bf16 %v527, %v526
  %v556 = vpack.c.bf16 %v529, %v528
  %v557 = vpack.c.bf16 %v531, %v530
  %v558 = vpack.c.bf16 %v533, %v532
  %v559 = vpack.c.bf16 %v535, %v534
  %v560 = vpack.c.bf16 %v537, %v536
  %v561 = vpack.c.bf16 %v539, %v538
  %v562 = vpack.c.bf16 %v541, %v540
  %v563 = vpack.c.bf16 %v543, %v542
  %v564 = vpack.c.bf16 %v545, %v544
  %v565 = vpack.c.bf16 %v547, %v546
  %566 = vset.pattern.permute.xlu0 2
  %567 = vperm.xlu0 %566, %v57
  %v568 = vpop.permute.xlu0 %567
  %569 = vset.pattern.permute.xlu0 2
  %570 = vperm.xlu0 %569, %v58
  %v571 = vpop.permute.xlu0 %570
  %572 = vset.pattern.permute.xlu0 2
  %573 = vperm.xlu0 %572, %v59
  %v574 = vpop.permute.xlu0 %573
  %575 = vset.pattern.permute.xlu0 2
  %576 = vperm.xlu0 %575, %v60
  %v577 = vpop.permute.xlu0 %576
  %578 = vset.pattern.permute.xlu0 2
  %579 = vperm.xlu0 %578, %v61
  %v580 = vpop.permute.xlu0 %579
  %581 = vset.pattern.permute.xlu0 2
  %582 = vperm.xlu0 %581, %v62
  %v583 = vpop.permute.xlu0 %582
  %584 = vset.pattern.permute.xlu0 2
  %585 = vperm.xlu0 %584, %v63
  %v586 = vpop.permute.xlu0 %585
  %587 = vset.pattern.permute.xlu0 2
  %588 = vperm.xlu0 %587, %v64
  %v589 = vpop.permute.xlu0 %588
  %590 = vset.pattern.permute.xlu0 2
  %591 = vperm.xlu0 %590, %v65
  %v592 = vpop.permute.xlu0 %591
  %593 = vset.pattern.permute.xlu0 2
  %594 = vperm.xlu0 %593, %v66
  %v595 = vpop.permute.xlu0 %594
  %596 = vset.pattern.permute.xlu0 2
  %597 = vperm.xlu0 %596, %v67
  %v598 = vpop.permute.xlu0 %597
  %599 = vset.pattern.permute.xlu0 2
  %600 = vperm.xlu0 %599, %v68
  %v601 = vpop.permute.xlu0 %600
  %602 = vset.pattern.permute.xlu0 2
  %603 = vperm.xlu0 %602, %v69
  %v604 = vpop.permute.xlu0 %603
  %605 = vset.pattern.permute.xlu0 2
  %606 = vperm.xlu0 %605, %v70
  %v607 = vpop.permute.xlu0 %606
  %608 = vset.pattern.permute.xlu0 2
  %609 = vperm.xlu0 %608, %v71
  %v610 = vpop.permute.xlu0 %609
  %611 = vset.pattern.permute.xlu0 2
  %612 = vperm.xlu0 %611, %v72
  %v613 = vpop.permute.xlu0 %612
  %614 = vset.pattern.permute.xlu0 2
  %615 = vperm.xlu0 %614, %v73
  %v616 = vpop.permute.xlu0 %615
  %617 = vset.pattern.permute.xlu0 2
  %618 = vperm.xlu0 %617, %v74
  %v619 = vpop.permute.xlu0 %618
  %620 = vset.pattern.permute.xlu0 2
  %621 = vperm.xlu0 %620, %v75
  %v622 = vpop.permute.xlu0 %621
  %623 = vset.pattern.permute.xlu0 2
  %624 = vperm.xlu0 %623, %v76
  %v625 = vpop.permute.xlu0 %624
  %626 = vset.pattern.permute.xlu0 2
  %627 = vperm.xlu0 %626, %v77
  %v628 = vpop.permute.xlu0 %627
  %629 = vset.pattern.permute.xlu0 2
  %630 = vperm.xlu0 %629, %v78
  %v631 = vpop.permute.xlu0 %630
  %632 = vset.pattern.permute.xlu0 2
  %633 = vperm.xlu0 %632, %v79
  %v634 = vpop.permute.xlu0 %633
  %635 = vset.pattern.permute.xlu0 2
  %636 = vperm.xlu0 %635, %v80
  %v637 = vpop.permute.xlu0 %636
  %638 = vset.pattern.permute.xlu0 2
  %639 = vperm.xlu0 %638, %v81
  %v640 = vpop.permute.xlu0 %639
  %641 = vset.pattern.permute.xlu0 2
  %642 = vperm.xlu0 %641, %v82
  %v643 = vpop.permute.xlu0 %642
  %644 = vset.pattern.permute.xlu0 2
  %645 = vperm.xlu0 %644, %v83
  %v646 = vpop.permute.xlu0 %645
  %647 = vset.pattern.permute.xlu0 2
  %648 = vperm.xlu0 %647, %v84
  %v649 = vpop.permute.xlu0 %648
  %650 = vset.pattern.permute.xlu0 2
  %651 = vperm.xlu0 %650, %v85
  %v652 = vpop.permute.xlu0 %651
  %653 = vset.pattern.permute.xlu0 2
  %654 = vperm.xlu0 %653, %v86
  %v655 = vpop.permute.xlu0 %654
  %656 = vset.pattern.permute.xlu0 2
  %657 = vperm.xlu0 %656, %v87
  %v658 = vpop.permute.xlu0 %657
  %659 = vset.pattern.permute.xlu0 2
  %660 = vperm.xlu0 %659, %v88
  %v661 = vpop.permute.xlu0 %660
  %662 = vset.pattern.permute.xlu0 2
  %663 = vperm.xlu0 %662, %v89
  %v664 = vpop.permute.xlu0 %663
  %665 = vset.pattern.permute.xlu0 2
  %666 = vperm.xlu0 %665, %v90
  %v667 = vpop.permute.xlu0 %666
  %668 = vset.pattern.permute.xlu0 2
  %669 = vperm.xlu0 %668, %v91
  %v670 = vpop.permute.xlu0 %669
  %671 = vset.pattern.permute.xlu0 2
  %672 = vperm.xlu0 %671, %v92
  %v673 = vpop.permute.xlu0 %672
  %vm674 = vcmp.eq.s32.totalorder %v568, %v205
  %vm675 = vcmp.eq.s32.totalorder %v571, %v205
  %vm676 = vcmp.eq.s32.totalorder %v574, %v205
  %vm677 = vcmp.eq.s32.totalorder %v577, %v205
  %vm678 = vcmp.eq.s32.totalorder %v580, %v205
  %vm679 = vcmp.eq.s32.totalorder %v583, %v205
  %vm680 = vcmp.eq.s32.totalorder %v586, %v205
  %vm681 = vcmp.eq.s32.totalorder %v589, %v205
  %vm682 = vcmp.eq.s32.totalorder %v592, %v205
  %vm683 = vcmp.eq.s32.totalorder %v595, %v205
  %vm684 = vcmp.eq.s32.totalorder %v598, %v205
  %vm685 = vcmp.eq.s32.totalorder %v601, %v205
  %vm686 = vcmp.eq.s32.totalorder %v604, %v205
  %vm687 = vcmp.eq.s32.totalorder %v607, %v205
  %vm688 = vcmp.eq.s32.totalorder %v610, %v205
  %vm689 = vcmp.eq.s32.totalorder %v613, %v205
  %vm690 = vcmp.eq.s32.totalorder %v616, %v205
  %vm691 = vcmp.eq.s32.totalorder %v619, %v205
  %vm692 = vcmp.eq.s32.totalorder %v622, %v205
  %vm693 = vcmp.eq.s32.totalorder %v625, %v205
  %vm694 = vcmp.eq.s32.totalorder %v628, %v205
  %vm695 = vcmp.eq.s32.totalorder %v631, %v205
  %vm696 = vcmp.eq.s32.totalorder %v634, %v205
  %vm697 = vcmp.eq.s32.totalorder %v637, %v205
  %vm698 = vcmp.eq.s32.totalorder %v640, %v205
  %vm699 = vcmp.eq.s32.totalorder %v643, %v205
  %vm700 = vcmp.eq.s32.totalorder %v646, %v205
  %vm701 = vcmp.eq.s32.totalorder %v649, %v205
  %vm702 = vcmp.eq.s32.totalorder %v652, %v205
  %vm703 = vcmp.eq.s32.totalorder %v655, %v205
  %vm704 = vcmp.eq.s32.totalorder %v658, %v205
  %vm705 = vcmp.eq.s32.totalorder %v661, %v205
  %vm706 = vcmp.eq.s32.totalorder %v664, %v205
  %vm707 = vcmp.eq.s32.totalorder %v667, %v205
  %vm708 = vcmp.eq.s32.totalorder %v670, %v205
  %vm709 = vcmp.eq.s32.totalorder %v673, %v205
  %v710 = vsel %vm674, 1, 0
  %v711 = vsel %vm675, 1, 0
  %v712 = vsel %vm676, 1, 0
  %v713 = vsel %vm677, 1, 0
  %v714 = vsel %vm678, 1, 0
  %v715 = vsel %vm679, 1, 0
  %v716 = vsel %vm680, 1, 0
  %v717 = vsel %vm681, 1, 0
  %v718 = vsel %vm682, 1, 0
  %v719 = vsel %vm683, 1, 0
  %v720 = vsel %vm684, 1, 0
  %v721 = vsel %vm685, 1, 0
  %v722 = vsel %vm686, 1, 0
  %v723 = vsel %vm687, 1, 0
  %v724 = vsel %vm688, 1, 0
  %v725 = vsel %vm689, 1, 0
  %v726 = vsel %vm690, 1, 0
  %v727 = vsel %vm691, 1, 0
  %v728 = vsel %vm692, 1, 0
  %v729 = vsel %vm693, 1, 0
  %v730 = vsel %vm694, 1, 0
  %v731 = vsel %vm695, 1, 0
  %v732 = vsel %vm696, 1, 0
  %v733 = vsel %vm697, 1, 0
  %v734 = vsel %vm698, 1, 0
  %v735 = vsel %vm699, 1, 0
  %v736 = vsel %vm700, 1, 0
  %v737 = vsel %vm701, 1, 0
  %v738 = vsel %vm702, 1, 0
  %v739 = vsel %vm703, 1, 0
  %v740 = vsel %vm704, 1, 0
  %v741 = vsel %vm705, 1, 0
  %v742 = vsel %vm706, 1, 0
  %v743 = vsel %vm707, 1, 0
  %v744 = vsel %vm708, 1, 0
  %v745 = vsel %vm709, 1, 0
  %v746 = vcvt.s32.f32 %v710
  %v747 = vcvt.s32.f32 %v711
  %v748 = vcvt.s32.f32 %v712
  %v749 = vcvt.s32.f32 %v713
  %v750 = vcvt.s32.f32 %v714
  %v751 = vcvt.s32.f32 %v715
  %v752 = vcvt.s32.f32 %v716
  %v753 = vcvt.s32.f32 %v717
  %v754 = vcvt.s32.f32 %v718
  %v755 = vcvt.s32.f32 %v719
  %v756 = vcvt.s32.f32 %v720
  %v757 = vcvt.s32.f32 %v721
  %v758 = vcvt.s32.f32 %v722
  %v759 = vcvt.s32.f32 %v723
  %v760 = vcvt.s32.f32 %v724
  %v761 = vcvt.s32.f32 %v725
  %v762 = vcvt.s32.f32 %v726
  %v763 = vcvt.s32.f32 %v727
  %v764 = vcvt.s32.f32 %v728
  %v765 = vcvt.s32.f32 %v729
  %v766 = vcvt.s32.f32 %v730
  %v767 = vcvt.s32.f32 %v731
  %v768 = vcvt.s32.f32 %v732
  %v769 = vcvt.s32.f32 %v733
  %v770 = vcvt.s32.f32 %v734
  %v771 = vcvt.s32.f32 %v735
  %v772 = vcvt.s32.f32 %v736
  %v773 = vcvt.s32.f32 %v737
  %v774 = vcvt.s32.f32 %v738
  %v775 = vcvt.s32.f32 %v739
  %v776 = vcvt.s32.f32 %v740
  %v777 = vcvt.s32.f32 %v741
  %v778 = vcvt.s32.f32 %v742
  %v779 = vcvt.s32.f32 %v743
  %v780 = vcvt.s32.f32 %v744
  %v781 = vcvt.s32.f32 %v745
  %v782 = vpack.c.bf16 %v747, %v746
  %v783 = vpack.c.bf16 %v749, %v748
  %v784 = vpack.c.bf16 %v751, %v750
  %v785 = vpack.c.bf16 %v753, %v752
  %v786 = vpack.c.bf16 %v755, %v754
  %v787 = vpack.c.bf16 %v757, %v756
  %v788 = vpack.c.bf16 %v759, %v758
  %v789 = vpack.c.bf16 %v761, %v760
  %v790 = vpack.c.bf16 %v763, %v762
  %v791 = vpack.c.bf16 %v765, %v764
  %v792 = vpack.c.bf16 %v767, %v766
  %v793 = vpack.c.bf16 %v769, %v768
  %v794 = vpack.c.bf16 %v771, %v770
  %v795 = vpack.c.bf16 %v773, %v772
  %v796 = vpack.c.bf16 %v775, %v774
  %v797 = vpack.c.bf16 %v777, %v776
  %v798 = vpack.c.bf16 %v779, %v778
  %v799 = vpack.c.bf16 %v781, %v780
  %800 = vset.pattern.permute.xlu0 3
  %801 = vperm.xlu0 %800, %v57
  %v802 = vpop.permute.xlu0 %801
  %803 = vset.pattern.permute.xlu0 3
  %804 = vperm.xlu0 %803, %v58
  %v805 = vpop.permute.xlu0 %804
  %806 = vset.pattern.permute.xlu0 3
  %807 = vperm.xlu0 %806, %v59
  %v808 = vpop.permute.xlu0 %807
  %809 = vset.pattern.permute.xlu0 3
  %810 = vperm.xlu0 %809, %v60
  %v811 = vpop.permute.xlu0 %810
  %812 = vset.pattern.permute.xlu0 3
  %813 = vperm.xlu0 %812, %v61
  %v814 = vpop.permute.xlu0 %813
  %815 = vset.pattern.permute.xlu0 3
  %816 = vperm.xlu0 %815, %v62
  %v817 = vpop.permute.xlu0 %816
  %818 = vset.pattern.permute.xlu0 3
  %819 = vperm.xlu0 %818, %v63
  %v820 = vpop.permute.xlu0 %819
  %821 = vset.pattern.permute.xlu0 3
  %822 = vperm.xlu0 %821, %v64
  %v823 = vpop.permute.xlu0 %822
  %824 = vset.pattern.permute.xlu0 3
  %825 = vperm.xlu0 %824, %v65
  %v826 = vpop.permute.xlu0 %825
  %827 = vset.pattern.permute.xlu0 3
  %828 = vperm.xlu0 %827, %v66
  %v829 = vpop.permute.xlu0 %828
  %830 = vset.pattern.permute.xlu0 3
  %831 = vperm.xlu0 %830, %v67
  %v832 = vpop.permute.xlu0 %831
  %833 = vset.pattern.permute.xlu0 3
  %834 = vperm.xlu0 %833, %v68
  %v835 = vpop.permute.xlu0 %834
  %836 = vset.pattern.permute.xlu0 3
  %837 = vperm.xlu0 %836, %v69
  %v838 = vpop.permute.xlu0 %837
  %839 = vset.pattern.permute.xlu0 3
  %840 = vperm.xlu0 %839, %v70
  %v841 = vpop.permute.xlu0 %840
  %842 = vset.pattern.permute.xlu0 3
  %843 = vperm.xlu0 %842, %v71
  %v844 = vpop.permute.xlu0 %843
  %845 = vset.pattern.permute.xlu0 3
  %846 = vperm.xlu0 %845, %v72
  %v847 = vpop.permute.xlu0 %846
  %848 = vset.pattern.permute.xlu0 3
  %849 = vperm.xlu0 %848, %v73
  %v850 = vpop.permute.xlu0 %849
  %851 = vset.pattern.permute.xlu0 3
  %852 = vperm.xlu0 %851, %v74
  %v853 = vpop.permute.xlu0 %852
  %854 = vset.pattern.permute.xlu0 3
  %855 = vperm.xlu0 %854, %v75
  %v856 = vpop.permute.xlu0 %855
  %857 = vset.pattern.permute.xlu0 3
  %858 = vperm.xlu0 %857, %v76
  %v859 = vpop.permute.xlu0 %858
  %860 = vset.pattern.permute.xlu0 3
  %861 = vperm.xlu0 %860, %v77
  %v862 = vpop.permute.xlu0 %861
  %863 = vset.pattern.permute.xlu0 3
  %864 = vperm.xlu0 %863, %v78
  %v865 = vpop.permute.xlu0 %864
  %866 = vset.pattern.permute.xlu0 3
  %867 = vperm.xlu0 %866, %v79
  %v868 = vpop.permute.xlu0 %867
  %869 = vset.pattern.permute.xlu0 3
  %870 = vperm.xlu0 %869, %v80
  %v871 = vpop.permute.xlu0 %870
  %872 = vset.pattern.permute.xlu0 3
  %873 = vperm.xlu0 %872, %v81
  %v874 = vpop.permute.xlu0 %873
  %875 = vset.pattern.permute.xlu0 3
  %876 = vperm.xlu0 %875, %v82
  %v877 = vpop.permute.xlu0 %876
  %878 = vset.pattern.permute.xlu0 3
  %879 = vperm.xlu0 %878, %v83
  %v880 = vpop.permute.xlu0 %879
  %881 = vset.pattern.permute.xlu0 3
  %882 = vperm.xlu0 %881, %v84
  %v883 = vpop.permute.xlu0 %882
  %884 = vset.pattern.permute.xlu0 3
  %885 = vperm.xlu0 %884, %v85
  %v886 = vpop.permute.xlu0 %885
  %887 = vset.pattern.permute.xlu0 3
  %888 = vperm.xlu0 %887, %v86
  %v889 = vpop.permute.xlu0 %888
  %890 = vset.pattern.permute.xlu0 3
  %891 = vperm.xlu0 %890, %v87
  %v892 = vpop.permute.xlu0 %891
  %893 = vset.pattern.permute.xlu0 3
  %894 = vperm.xlu0 %893, %v88
  %v895 = vpop.permute.xlu0 %894
  %896 = vset.pattern.permute.xlu0 3
  %897 = vperm.xlu0 %896, %v89
  %v898 = vpop.permute.xlu0 %897
  %899 = vset.pattern.permute.xlu0 3
  %900 = vperm.xlu0 %899, %v90
  %v901 = vpop.permute.xlu0 %900
  %902 = vset.pattern.permute.xlu0 3
  %903 = vperm.xlu0 %902, %v91
  %v904 = vpop.permute.xlu0 %903
  %905 = vset.pattern.permute.xlu0 3
  %906 = vperm.xlu0 %905, %v92
  %v907 = vpop.permute.xlu0 %906
  %vm908 = vcmp.eq.s32.totalorder %v802, %v205
  %vm909 = vcmp.eq.s32.totalorder %v805, %v205
  %vm910 = vcmp.eq.s32.totalorder %v808, %v205
  %vm911 = vcmp.eq.s32.totalorder %v811, %v205
  %vm912 = vcmp.eq.s32.totalorder %v814, %v205
  %vm913 = vcmp.eq.s32.totalorder %v817, %v205
  %vm914 = vcmp.eq.s32.totalorder %v820, %v205
  %vm915 = vcmp.eq.s32.totalorder %v823, %v205
  %vm916 = vcmp.eq.s32.totalorder %v826, %v205
  %vm917 = vcmp.eq.s32.totalorder %v829, %v205
  %vm918 = vcmp.eq.s32.totalorder %v832, %v205
  %vm919 = vcmp.eq.s32.totalorder %v835, %v205
  %vm920 = vcmp.eq.s32.totalorder %v838, %v205
  %vm921 = vcmp.eq.s32.totalorder %v841, %v205
  %vm922 = vcmp.eq.s32.totalorder %v844, %v205
  %vm923 = vcmp.eq.s32.totalorder %v847, %v205
  %vm924 = vcmp.eq.s32.totalorder %v850, %v205
  %vm925 = vcmp.eq.s32.totalorder %v853, %v205
  %vm926 = vcmp.eq.s32.totalorder %v856, %v205
  %vm927 = vcmp.eq.s32.totalorder %v859, %v205
  %vm928 = vcmp.eq.s32.totalorder %v862, %v205
  %vm929 = vcmp.eq.s32.totalorder %v865, %v205
  %vm930 = vcmp.eq.s32.totalorder %v868, %v205
  %vm931 = vcmp.eq.s32.totalorder %v871, %v205
  %vm932 = vcmp.eq.s32.totalorder %v874, %v205
  %vm933 = vcmp.eq.s32.totalorder %v877, %v205
  %vm934 = vcmp.eq.s32.totalorder %v880, %v205
  %vm935 = vcmp.eq.s32.totalorder %v883, %v205
  %vm936 = vcmp.eq.s32.totalorder %v886, %v205
  %vm937 = vcmp.eq.s32.totalorder %v889, %v205
  %vm938 = vcmp.eq.s32.totalorder %v892, %v205
  %vm939 = vcmp.eq.s32.totalorder %v895, %v205
  %vm940 = vcmp.eq.s32.totalorder %v898, %v205
  %vm941 = vcmp.eq.s32.totalorder %v901, %v205
  %vm942 = vcmp.eq.s32.totalorder %v904, %v205
  %vm943 = vcmp.eq.s32.totalorder %v907, %v205
  %v944 = vsel %vm908, 1, 0
  %v945 = vsel %vm909, 1, 0
  %v946 = vsel %vm910, 1, 0
  %v947 = vsel %vm911, 1, 0
  %v948 = vsel %vm912, 1, 0
  %v949 = vsel %vm913, 1, 0
  %v950 = vsel %vm914, 1, 0
  %v951 = vsel %vm915, 1, 0
  %v952 = vsel %vm916, 1, 0
  %v953 = vsel %vm917, 1, 0
  %v954 = vsel %vm918, 1, 0
  %v955 = vsel %vm919, 1, 0
  %v956 = vsel %vm920, 1, 0
  %v957 = vsel %vm921, 1, 0
  %v958 = vsel %vm922, 1, 0
  %v959 = vsel %vm923, 1, 0
  %v960 = vsel %vm924, 1, 0
  %v961 = vsel %vm925, 1, 0
  %v962 = vsel %vm926, 1, 0
  %v963 = vsel %vm927, 1, 0
  %v964 = vsel %vm928, 1, 0
  %v965 = vsel %vm929, 1, 0
  %v966 = vsel %vm930, 1, 0
  %v967 = vsel %vm931, 1, 0
  %v968 = vsel %vm932, 1, 0
  %v969 = vsel %vm933, 1, 0
  %v970 = vsel %vm934, 1, 0
  %v971 = vsel %vm935, 1, 0
  %v972 = vsel %vm936, 1, 0
  %v973 = vsel %vm937, 1, 0
  %v974 = vsel %vm938, 1, 0
  %v975 = vsel %vm939, 1, 0
  %v976 = vsel %vm940, 1, 0
  %v977 = vsel %vm941, 1, 0
  %v978 = vsel %vm942, 1, 0
  %v979 = vsel %vm943, 1, 0
  %v980 = vcvt.s32.f32 %v944
  %v981 = vcvt.s32.f32 %v945
  %v982 = vcvt.s32.f32 %v946
  %v983 = vcvt.s32.f32 %v947
  %v984 = vcvt.s32.f32 %v948
  %v985 = vcvt.s32.f32 %v949
  %v986 = vcvt.s32.f32 %v950
  %v987 = vcvt.s32.f32 %v951
  %v988 = vcvt.s32.f32 %v952
  %v989 = vcvt.s32.f32 %v953
  %v990 = vcvt.s32.f32 %v954
  %v991 = vcvt.s32.f32 %v955
  %v992 = vcvt.s32.f32 %v956
  %v993 = vcvt.s32.f32 %v957
  %v994 = vcvt.s32.f32 %v958
  %v995 = vcvt.s32.f32 %v959
  %v996 = vcvt.s32.f32 %v960
  %v997 = vcvt.s32.f32 %v961
  %v998 = vcvt.s32.f32 %v962
  %v999 = vcvt.s32.f32 %v963
  %v1000 = vcvt.s32.f32 %v964
  %v1001 = vcvt.s32.f32 %v965
  %v1002 = vcvt.s32.f32 %v966
  %v1003 = vcvt.s32.f32 %v967
  %v1004 = vcvt.s32.f32 %v968
  %v1005 = vcvt.s32.f32 %v969
  %v1006 = vcvt.s32.f32 %v970
  %v1007 = vcvt.s32.f32 %v971
  %v1008 = vcvt.s32.f32 %v972
  %v1009 = vcvt.s32.f32 %v973
  %v1010 = vcvt.s32.f32 %v974
  %v1011 = vcvt.s32.f32 %v975
  %v1012 = vcvt.s32.f32 %v976
  %v1013 = vcvt.s32.f32 %v977
  %v1014 = vcvt.s32.f32 %v978
  %v1015 = vcvt.s32.f32 %v979
  %v1016 = vpack.c.bf16 %v981, %v980
  %v1017 = vpack.c.bf16 %v983, %v982
  %v1018 = vpack.c.bf16 %v985, %v984
  %v1019 = vpack.c.bf16 %v987, %v986
  %v1020 = vpack.c.bf16 %v989, %v988
  %v1021 = vpack.c.bf16 %v991, %v990
  %v1022 = vpack.c.bf16 %v993, %v992
  %v1023 = vpack.c.bf16 %v995, %v994
  %v1024 = vpack.c.bf16 %v997, %v996
  %v1025 = vpack.c.bf16 %v999, %v998
  %v1026 = vpack.c.bf16 %v1001, %v1000
  %v1027 = vpack.c.bf16 %v1003, %v1002
  %v1028 = vpack.c.bf16 %v1005, %v1004
  %v1029 = vpack.c.bf16 %v1007, %v1006
  %v1030 = vpack.c.bf16 %v1009, %v1008
  %v1031 = vpack.c.bf16 %v1011, %v1010
  %v1032 = vpack.c.bf16 %v1013, %v1012
  %v1033 = vpack.c.bf16 %v1015, %v1014
  %1034 = vset.pattern.permute.xlu0 4
  %1035 = vperm.xlu0 %1034, %v57
  %v1036 = vpop.permute.xlu0 %1035
  %1037 = vset.pattern.permute.xlu0 4
  %1038 = vperm.xlu0 %1037, %v58
  %v1039 = vpop.permute.xlu0 %1038
  %1040 = vset.pattern.permute.xlu0 4
  %1041 = vperm.xlu0 %1040, %v59
  %v1042 = vpop.permute.xlu0 %1041
  %1043 = vset.pattern.permute.xlu0 4
  %1044 = vperm.xlu0 %1043, %v60
  %v1045 = vpop.permute.xlu0 %1044
  %1046 = vset.pattern.permute.xlu0 4
  %1047 = vperm.xlu0 %1046, %v61
  %v1048 = vpop.permute.xlu0 %1047
  %1049 = vset.pattern.permute.xlu0 4
  %1050 = vperm.xlu0 %1049, %v62
  %v1051 = vpop.permute.xlu0 %1050
  %1052 = vset.pattern.permute.xlu0 4
  %1053 = vperm.xlu0 %1052, %v63
  %v1054 = vpop.permute.xlu0 %1053
  %1055 = vset.pattern.permute.xlu0 4
  %1056 = vperm.xlu0 %1055, %v64
  %v1057 = vpop.permute.xlu0 %1056
  %1058 = vset.pattern.permute.xlu0 4
  %1059 = vperm.xlu0 %1058, %v65
  %v1060 = vpop.permute.xlu0 %1059
  %1061 = vset.pattern.permute.xlu0 4
  %1062 = vperm.xlu0 %1061, %v66
  %v1063 = vpop.permute.xlu0 %1062
  %1064 = vset.pattern.permute.xlu0 4
  %1065 = vperm.xlu0 %1064, %v67
  %v1066 = vpop.permute.xlu0 %1065
  %1067 = vset.pattern.permute.xlu0 4
  %1068 = vperm.xlu0 %1067, %v68
  %v1069 = vpop.permute.xlu0 %1068
  %1070 = vset.pattern.permute.xlu0 4
  %1071 = vperm.xlu0 %1070, %v69
  %v1072 = vpop.permute.xlu0 %1071
  %1073 = vset.pattern.permute.xlu0 4
  %1074 = vperm.xlu0 %1073, %v70
  %v1075 = vpop.permute.xlu0 %1074
  %1076 = vset.pattern.permute.xlu0 4
  %1077 = vperm.xlu0 %1076, %v71
  %v1078 = vpop.permute.xlu0 %1077
  %1079 = vset.pattern.permute.xlu0 4
  %1080 = vperm.xlu0 %1079, %v72
  %v1081 = vpop.permute.xlu0 %1080
  %1082 = vset.pattern.permute.xlu0 4
  %1083 = vperm.xlu0 %1082, %v73
  %v1084 = vpop.permute.xlu0 %1083
  %1085 = vset.pattern.permute.xlu0 4
  %1086 = vperm.xlu0 %1085, %v74
  %v1087 = vpop.permute.xlu0 %1086
  %1088 = vset.pattern.permute.xlu0 4
  %1089 = vperm.xlu0 %1088, %v75
  %v1090 = vpop.permute.xlu0 %1089
  %1091 = vset.pattern.permute.xlu0 4
  %1092 = vperm.xlu0 %1091, %v76
  %v1093 = vpop.permute.xlu0 %1092
  %1094 = vset.pattern.permute.xlu0 4
  %1095 = vperm.xlu0 %1094, %v77
  %v1096 = vpop.permute.xlu0 %1095
  %1097 = vset.pattern.permute.xlu0 4
  %1098 = vperm.xlu0 %1097, %v78
  %v1099 = vpop.permute.xlu0 %1098
  %1100 = vset.pattern.permute.xlu0 4
  %1101 = vperm.xlu0 %1100, %v79
  %v1102 = vpop.permute.xlu0 %1101
  %1103 = vset.pattern.permute.xlu0 4
  %1104 = vperm.xlu0 %1103, %v80
  %v1105 = vpop.permute.xlu0 %1104
  %1106 = vset.pattern.permute.xlu0 4
  %1107 = vperm.xlu0 %1106, %v81
  %v1108 = vpop.permute.xlu0 %1107
  %1109 = vset.pattern.permute.xlu0 4
  %1110 = vperm.xlu0 %1109, %v82
  %v1111 = vpop.permute.xlu0 %1110
  %1112 = vset.pattern.permute.xlu0 4
  %1113 = vperm.xlu0 %1112, %v83
  %v1114 = vpop.permute.xlu0 %1113
  %1115 = vset.pattern.permute.xlu0 4
  %1116 = vperm.xlu0 %1115, %v84
  %v1117 = vpop.permute.xlu0 %1116
  %1118 = vset.pattern.permute.xlu0 4
  %1119 = vperm.xlu0 %1118, %v85
  %v1120 = vpop.permute.xlu0 %1119
  %1121 = vset.pattern.permute.xlu0 4
  %1122 = vperm.xlu0 %1121, %v86
  %v1123 = vpop.permute.xlu0 %1122
  %1124 = vset.pattern.permute.xlu0 4
  %1125 = vperm.xlu0 %1124, %v87
  %v1126 = vpop.permute.xlu0 %1125
  %1127 = vset.pattern.permute.xlu0 4
  %1128 = vperm.xlu0 %1127, %v88
  %v1129 = vpop.permute.xlu0 %1128
  %1130 = vset.pattern.permute.xlu0 4
  %1131 = vperm.xlu0 %1130, %v89
  %v1132 = vpop.permute.xlu0 %1131
  %1133 = vset.pattern.permute.xlu0 4
  %1134 = vperm.xlu0 %1133, %v90
  %v1135 = vpop.permute.xlu0 %1134
  %1136 = vset.pattern.permute.xlu0 4
  %1137 = vperm.xlu0 %1136, %v91
  %v1138 = vpop.permute.xlu0 %1137
  %1139 = vset.pattern.permute.xlu0 4
  %1140 = vperm.xlu0 %1139, %v92
  %v1141 = vpop.permute.xlu0 %1140
  %vm1142 = vcmp.eq.s32.totalorder %v1036, %v205
  %vm1143 = vcmp.eq.s32.totalorder %v1039, %v205
  %vm1144 = vcmp.eq.s32.totalorder %v1042, %v205
  %vm1145 = vcmp.eq.s32.totalorder %v1045, %v205
  %vm1146 = vcmp.eq.s32.totalorder %v1048, %v205
  %vm1147 = vcmp.eq.s32.totalorder %v1051, %v205
  %vm1148 = vcmp.eq.s32.totalorder %v1054, %v205
  %vm1149 = vcmp.eq.s32.totalorder %v1057, %v205
  %vm1150 = vcmp.eq.s32.totalorder %v1060, %v205
  %vm1151 = vcmp.eq.s32.totalorder %v1063, %v205
  %vm1152 = vcmp.eq.s32.totalorder %v1066, %v205
  %vm1153 = vcmp.eq.s32.totalorder %v1069, %v205
  %vm1154 = vcmp.eq.s32.totalorder %v1072, %v205
  %vm1155 = vcmp.eq.s32.totalorder %v1075, %v205
  %vm1156 = vcmp.eq.s32.totalorder %v1078, %v205
  %vm1157 = vcmp.eq.s32.totalorder %v1081, %v205
  %vm1158 = vcmp.eq.s32.totalorder %v1084, %v205
  %vm1159 = vcmp.eq.s32.totalorder %v1087, %v205
  %vm1160 = vcmp.eq.s32.totalorder %v1090, %v205
  %vm1161 = vcmp.eq.s32.totalorder %v1093, %v205
  %vm1162 = vcmp.eq.s32.totalorder %v1096, %v205
  %vm1163 = vcmp.eq.s32.totalorder %v1099, %v205
  %vm1164 = vcmp.eq.s32.totalorder %v1102, %v205
  %vm1165 = vcmp.eq.s32.totalorder %v1105, %v205
  %vm1166 = vcmp.eq.s32.totalorder %v1108, %v205
  %vm1167 = vcmp.eq.s32.totalorder %v1111, %v205
  %vm1168 = vcmp.eq.s32.totalorder %v1114, %v205
  %vm1169 = vcmp.eq.s32.totalorder %v1117, %v205
  %vm1170 = vcmp.eq.s32.totalorder %v1120, %v205
  %vm1171 = vcmp.eq.s32.totalorder %v1123, %v205
  %vm1172 = vcmp.eq.s32.totalorder %v1126, %v205
  %vm1173 = vcmp.eq.s32.totalorder %v1129, %v205
  %vm1174 = vcmp.eq.s32.totalorder %v1132, %v205
  %vm1175 = vcmp.eq.s32.totalorder %v1135, %v205
  %vm1176 = vcmp.eq.s32.totalorder %v1138, %v205
  %vm1177 = vcmp.eq.s32.totalorder %v1141, %v205
  %v1178 = vsel %vm1142, 1, 0
  %v1179 = vsel %vm1143, 1, 0
  %v1180 = vsel %vm1144, 1, 0
  %v1181 = vsel %vm1145, 1, 0
  %v1182 = vsel %vm1146, 1, 0
  %v1183 = vsel %vm1147, 1, 0
  %v1184 = vsel %vm1148, 1, 0
  %v1185 = vsel %vm1149, 1, 0
  %v1186 = vsel %vm1150, 1, 0
  %v1187 = vsel %vm1151, 1, 0
  %v1188 = vsel %vm1152, 1, 0
  %v1189 = vsel %vm1153, 1, 0
  %v1190 = vsel %vm1154, 1, 0
  %v1191 = vsel %vm1155, 1, 0
  %v1192 = vsel %vm1156, 1, 0
  %v1193 = vsel %vm1157, 1, 0
  %v1194 = vsel %vm1158, 1, 0
  %v1195 = vsel %vm1159, 1, 0
  %v1196 = vsel %vm1160, 1, 0
  %v1197 = vsel %vm1161, 1, 0
  %v1198 = vsel %vm1162, 1, 0
  %v1199 = vsel %vm1163, 1, 0
  %v1200 = vsel %vm1164, 1, 0
  %v1201 = vsel %vm1165, 1, 0
  %v1202 = vsel %vm1166, 1, 0
  %v1203 = vsel %vm1167, 1, 0
  %v1204 = vsel %vm1168, 1, 0
  %v1205 = vsel %vm1169, 1, 0
  %v1206 = vsel %vm1170, 1, 0
  %v1207 = vsel %vm1171, 1, 0
  %v1208 = vsel %vm1172, 1, 0
  %v1209 = vsel %vm1173, 1, 0
  %v1210 = vsel %vm1174, 1, 0
  %v1211 = vsel %vm1175, 1, 0
  %v1212 = vsel %vm1176, 1, 0
  %v1213 = vsel %vm1177, 1, 0
  %v1214 = vcvt.s32.f32 %v1178
  %v1215 = vcvt.s32.f32 %v1179
  %v1216 = vcvt.s32.f32 %v1180
  %v1217 = vcvt.s32.f32 %v1181
  %v1218 = vcvt.s32.f32 %v1182
  %v1219 = vcvt.s32.f32 %v1183
  %v1220 = vcvt.s32.f32 %v1184
  %v1221 = vcvt.s32.f32 %v1185
  %v1222 = vcvt.s32.f32 %v1186
  %v1223 = vcvt.s32.f32 %v1187
  %v1224 = vcvt.s32.f32 %v1188
  %v1225 = vcvt.s32.f32 %v1189
  %v1226 = vcvt.s32.f32 %v1190
  %v1227 = vcvt.s32.f32 %v1191
  %v1228 = vcvt.s32.f32 %v1192
  %v1229 = vcvt.s32.f32 %v1193
  %v1230 = vcvt.s32.f32 %v1194
  %v1231 = vcvt.s32.f32 %v1195
  %v1232 = vcvt.s32.f32 %v1196
  %v1233 = vcvt.s32.f32 %v1197
  %v1234 = vcvt.s32.f32 %v1198
  %v1235 = vcvt.s32.f32 %v1199
  %v1236 = vcvt.s32.f32 %v1200
  %v1237 = vcvt.s32.f32 %v1201
  %v1238 = vcvt.s32.f32 %v1202
  %v1239 = vcvt.s32.f32 %v1203
  %v1240 = vcvt.s32.f32 %v1204
  %v1241 = vcvt.s32.f32 %v1205
  %v1242 = vcvt.s32.f32 %v1206
  %v1243 = vcvt.s32.f32 %v1207
  %v1244 = vcvt.s32.f32 %v1208
  %v1245 = vcvt.s32.f32 %v1209
  %v1246 = vcvt.s32.f32 %v1210
  %v1247 = vcvt.s32.f32 %v1211
  %v1248 = vcvt.s32.f32 %v1212
  %v1249 = vcvt.s32.f32 %v1213
  %v1250 = vpack.c.bf16 %v1215, %v1214
  %v1251 = vpack.c.bf16 %v1217, %v1216
  %v1252 = vpack.c.bf16 %v1219, %v1218
  %v1253 = vpack.c.bf16 %v1221, %v1220
  %v1254 = vpack.c.bf16 %v1223, %v1222
  %v1255 = vpack.c.bf16 %v1225, %v1224
  %v1256 = vpack.c.bf16 %v1227, %v1226
  %v1257 = vpack.c.bf16 %v1229, %v1228
  %v1258 = vpack.c.bf16 %v1231, %v1230
  %v1259 = vpack.c.bf16 %v1233, %v1232
  %v1260 = vpack.c.bf16 %v1235, %v1234
  %v1261 = vpack.c.bf16 %v1237, %v1236
  %v1262 = vpack.c.bf16 %v1239, %v1238
  %v1263 = vpack.c.bf16 %v1241, %v1240
  %v1264 = vpack.c.bf16 %v1243, %v1242
  %v1265 = vpack.c.bf16 %v1245, %v1244
  %v1266 = vpack.c.bf16 %v1247, %v1246
  %v1267 = vpack.c.bf16 %v1249, %v1248
  %1268 = vset.pattern.permute.xlu0 5
  %1269 = vperm.xlu0 %1268, %v57
  %v1270 = vpop.permute.xlu0 %1269
  %1271 = vset.pattern.permute.xlu0 5
  %1272 = vperm.xlu0 %1271, %v58
  %v1273 = vpop.permute.xlu0 %1272
  %1274 = vset.pattern.permute.xlu0 5
  %1275 = vperm.xlu0 %1274, %v59
  %v1276 = vpop.permute.xlu0 %1275
  %1277 = vset.pattern.permute.xlu0 5
  %1278 = vperm.xlu0 %1277, %v60
  %v1279 = vpop.permute.xlu0 %1278
  %1280 = vset.pattern.permute.xlu0 5
  %1281 = vperm.xlu0 %1280, %v61
  %v1282 = vpop.permute.xlu0 %1281
  %1283 = vset.pattern.permute.xlu0 5
  %1284 = vperm.xlu0 %1283, %v62
  %v1285 = vpop.permute.xlu0 %1284
  %1286 = vset.pattern.permute.xlu0 5
  %1287 = vperm.xlu0 %1286, %v63
  %v1288 = vpop.permute.xlu0 %1287
  %1289 = vset.pattern.permute.xlu0 5
  %1290 = vperm.xlu0 %1289, %v64
  %v1291 = vpop.permute.xlu0 %1290
  %1292 = vset.pattern.permute.xlu0 5
  %1293 = vperm.xlu0 %1292, %v65
  %v1294 = vpop.permute.xlu0 %1293
  %1295 = vset.pattern.permute.xlu0 5
  %1296 = vperm.xlu0 %1295, %v66
  %v1297 = vpop.permute.xlu0 %1296
  %1298 = vset.pattern.permute.xlu0 5
  %1299 = vperm.xlu0 %1298, %v67
  %v1300 = vpop.permute.xlu0 %1299
  %1301 = vset.pattern.permute.xlu0 5
  %1302 = vperm.xlu0 %1301, %v68
  %v1303 = vpop.permute.xlu0 %1302
  %1304 = vset.pattern.permute.xlu0 5
  %1305 = vperm.xlu0 %1304, %v69
  %v1306 = vpop.permute.xlu0 %1305
  %1307 = vset.pattern.permute.xlu0 5
  %1308 = vperm.xlu0 %1307, %v70
  %v1309 = vpop.permute.xlu0 %1308
  %1310 = vset.pattern.permute.xlu0 5
  %1311 = vperm.xlu0 %1310, %v71
  %v1312 = vpop.permute.xlu0 %1311
  %1313 = vset.pattern.permute.xlu0 5
  %1314 = vperm.xlu0 %1313, %v72
  %v1315 = vpop.permute.xlu0 %1314
  %1316 = vset.pattern.permute.xlu0 5
  %1317 = vperm.xlu0 %1316, %v73
  %v1318 = vpop.permute.xlu0 %1317
  %1319 = vset.pattern.permute.xlu0 5
  %1320 = vperm.xlu0 %1319, %v74
  %v1321 = vpop.permute.xlu0 %1320
  %1322 = vset.pattern.permute.xlu0 5
  %1323 = vperm.xlu0 %1322, %v75
  %v1324 = vpop.permute.xlu0 %1323
  %1325 = vset.pattern.permute.xlu0 5
  %1326 = vperm.xlu0 %1325, %v76
  %v1327 = vpop.permute.xlu0 %1326
  %1328 = vset.pattern.permute.xlu0 5
  %1329 = vperm.xlu0 %1328, %v77
  %v1330 = vpop.permute.xlu0 %1329
  %1331 = vset.pattern.permute.xlu0 5
  %1332 = vperm.xlu0 %1331, %v78
  %v1333 = vpop.permute.xlu0 %1332
  %1334 = vset.pattern.permute.xlu0 5
  %1335 = vperm.xlu0 %1334, %v79
  %v1336 = vpop.permute.xlu0 %1335
  %1337 = vset.pattern.permute.xlu0 5
  %1338 = vperm.xlu0 %1337, %v80
  %v1339 = vpop.permute.xlu0 %1338
  %1340 = vset.pattern.permute.xlu0 5
  %1341 = vperm.xlu0 %1340, %v81
  %v1342 = vpop.permute.xlu0 %1341
  %1343 = vset.pattern.permute.xlu0 5
  %1344 = vperm.xlu0 %1343, %v82
  %v1345 = vpop.permute.xlu0 %1344
  %1346 = vset.pattern.permute.xlu0 5
  %1347 = vperm.xlu0 %1346, %v83
  %v1348 = vpop.permute.xlu0 %1347
  %1349 = vset.pattern.permute.xlu0 5
  %1350 = vperm.xlu0 %1349, %v84
  %v1351 = vpop.permute.xlu0 %1350
  %1352 = vset.pattern.permute.xlu0 5
  %1353 = vperm.xlu0 %1352, %v85
  %v1354 = vpop.permute.xlu0 %1353
  %1355 = vset.pattern.permute.xlu0 5
  %1356 = vperm.xlu0 %1355, %v86
  %v1357 = vpop.permute.xlu0 %1356
  %1358 = vset.pattern.permute.xlu0 5
  %1359 = vperm.xlu0 %1358, %v87
  %v1360 = vpop.permute.xlu0 %1359
  %1361 = vset.pattern.permute.xlu0 5
  %1362 = vperm.xlu0 %1361, %v88
  %v1363 = vpop.permute.xlu0 %1362
  %1364 = vset.pattern.permute.xlu0 5
  %1365 = vperm.xlu0 %1364, %v89
  %v1366 = vpop.permute.xlu0 %1365
  %1367 = vset.pattern.permute.xlu0 5
  %1368 = vperm.xlu0 %1367, %v90
  %v1369 = vpop.permute.xlu0 %1368
  %1370 = vset.pattern.permute.xlu0 5
  %1371 = vperm.xlu0 %1370, %v91
  %v1372 = vpop.permute.xlu0 %1371
  %1373 = vset.pattern.permute.xlu0 5
  %1374 = vperm.xlu0 %1373, %v92
  %v1375 = vpop.permute.xlu0 %1374
  %vm1376 = vcmp.eq.s32.totalorder %v1270, %v205
  %vm1377 = vcmp.eq.s32.totalorder %v1273, %v205
  %vm1378 = vcmp.eq.s32.totalorder %v1276, %v205
  %vm1379 = vcmp.eq.s32.totalorder %v1279, %v205
  %vm1380 = vcmp.eq.s32.totalorder %v1282, %v205
  %vm1381 = vcmp.eq.s32.totalorder %v1285, %v205
  %vm1382 = vcmp.eq.s32.totalorder %v1288, %v205
  %vm1383 = vcmp.eq.s32.totalorder %v1291, %v205
  %vm1384 = vcmp.eq.s32.totalorder %v1294, %v205
  %vm1385 = vcmp.eq.s32.totalorder %v1297, %v205
  %vm1386 = vcmp.eq.s32.totalorder %v1300, %v205
  %vm1387 = vcmp.eq.s32.totalorder %v1303, %v205
  %vm1388 = vcmp.eq.s32.totalorder %v1306, %v205
  %vm1389 = vcmp.eq.s32.totalorder %v1309, %v205
  %vm1390 = vcmp.eq.s32.totalorder %v1312, %v205
  %vm1391 = vcmp.eq.s32.totalorder %v1315, %v205
  %vm1392 = vcmp.eq.s32.totalorder %v1318, %v205
  %vm1393 = vcmp.eq.s32.totalorder %v1321, %v205
  %vm1394 = vcmp.eq.s32.totalorder %v1324, %v205
  %vm1395 = vcmp.eq.s32.totalorder %v1327, %v205
  %vm1396 = vcmp.eq.s32.totalorder %v1330, %v205
  %vm1397 = vcmp.eq.s32.totalorder %v1333, %v205
  %vm1398 = vcmp.eq.s32.totalorder %v1336, %v205
  %vm1399 = vcmp.eq.s32.totalorder %v1339, %v205
  %vm1400 = vcmp.eq.s32.totalorder %v1342, %v205
  %vm1401 = vcmp.eq.s32.totalorder %v1345, %v205
  %vm1402 = vcmp.eq.s32.totalorder %v1348, %v205
  %vm1403 = vcmp.eq.s32.totalorder %v1351, %v205
  %vm1404 = vcmp.eq.s32.totalorder %v1354, %v205
  %vm1405 = vcmp.eq.s32.totalorder %v1357, %v205
  %vm1406 = vcmp.eq.s32.totalorder %v1360, %v205
  %vm1407 = vcmp.eq.s32.totalorder %v1363, %v205
  %vm1408 = vcmp.eq.s32.totalorder %v1366, %v205
  %vm1409 = vcmp.eq.s32.totalorder %v1369, %v205
  %vm1410 = vcmp.eq.s32.totalorder %v1372, %v205
  %vm1411 = vcmp.eq.s32.totalorder %v1375, %v205
  %v1412 = vsel %vm1376, 1, 0
  %v1413 = vsel %vm1377, 1, 0
  %v1414 = vsel %vm1378, 1, 0
  %v1415 = vsel %vm1379, 1, 0
  %v1416 = vsel %vm1380, 1, 0
  %v1417 = vsel %vm1381, 1, 0
  %v1418 = vsel %vm1382, 1, 0
  %v1419 = vsel %vm1383, 1, 0
  %v1420 = vsel %vm1384, 1, 0
  %v1421 = vsel %vm1385, 1, 0
  %v1422 = vsel %vm1386, 1, 0
  %v1423 = vsel %vm1387, 1, 0
  %v1424 = vsel %vm1388, 1, 0
  %v1425 = vsel %vm1389, 1, 0
  %v1426 = vsel %vm1390, 1, 0
  %v1427 = vsel %vm1391, 1, 0
  %v1428 = vsel %vm1392, 1, 0
  %v1429 = vsel %vm1393, 1, 0
  %v1430 = vsel %vm1394, 1, 0
  %v1431 = vsel %vm1395, 1, 0
  %v1432 = vsel %vm1396, 1, 0
  %v1433 = vsel %vm1397, 1, 0
  %v1434 = vsel %vm1398, 1, 0
  %v1435 = vsel %vm1399, 1, 0
  %v1436 = vsel %vm1400, 1, 0
  %v1437 = vsel %vm1401, 1, 0
  %v1438 = vsel %vm1402, 1, 0
  %v1439 = vsel %vm1403, 1, 0
  %v1440 = vsel %vm1404, 1, 0
  %v1441 = vsel %vm1405, 1, 0
  %v1442 = vsel %vm1406, 1, 0
  %v1443 = vsel %vm1407, 1, 0
  %v1444 = vsel %vm1408, 1, 0
  %v1445 = vsel %vm1409, 1, 0
  %v1446 = vsel %vm1410, 1, 0
  %v1447 = vsel %vm1411, 1, 0
  %v1448 = vcvt.s32.f32 %v1412
  %v1449 = vcvt.s32.f32 %v1413
  %v1450 = vcvt.s32.f32 %v1414
  %v1451 = vcvt.s32.f32 %v1415
  %v1452 = vcvt.s32.f32 %v1416
  %v1453 = vcvt.s32.f32 %v1417
  %v1454 = vcvt.s32.f32 %v1418
  %v1455 = vcvt.s32.f32 %v1419
  %v1456 = vcvt.s32.f32 %v1420
  %v1457 = vcvt.s32.f32 %v1421
  %v1458 = vcvt.s32.f32 %v1422
  %v1459 = vcvt.s32.f32 %v1423
  %v1460 = vcvt.s32.f32 %v1424
  %v1461 = vcvt.s32.f32 %v1425
  %v1462 = vcvt.s32.f32 %v1426
  %v1463 = vcvt.s32.f32 %v1427
  %v1464 = vcvt.s32.f32 %v1428
  %v1465 = vcvt.s32.f32 %v1429
  %v1466 = vcvt.s32.f32 %v1430
  %v1467 = vcvt.s32.f32 %v1431
  %v1468 = vcvt.s32.f32 %v1432
  %v1469 = vcvt.s32.f32 %v1433
  %v1470 = vcvt.s32.f32 %v1434
  %v1471 = vcvt.s32.f32 %v1435
  %v1472 = vcvt.s32.f32 %v1436
  %v1473 = vcvt.s32.f32 %v1437
  %v1474 = vcvt.s32.f32 %v1438
  %v1475 = vcvt.s32.f32 %v1439
  %v1476 = vcvt.s32.f32 %v1440
  %v1477 = vcvt.s32.f32 %v1441
  %v1478 = vcvt.s32.f32 %v1442
  %v1479 = vcvt.s32.f32 %v1443
  %v1480 = vcvt.s32.f32 %v1444
  %v1481 = vcvt.s32.f32 %v1445
  %v1482 = vcvt.s32.f32 %v1446
  %v1483 = vcvt.s32.f32 %v1447
  %v1484 = vpack.c.bf16 %v1449, %v1448
  %v1485 = vpack.c.bf16 %v1451, %v1450
  %v1486 = vpack.c.bf16 %v1453, %v1452
  %v1487 = vpack.c.bf16 %v1455, %v1454
  %v1488 = vpack.c.bf16 %v1457, %v1456
  %v1489 = vpack.c.bf16 %v1459, %v1458
  %v1490 = vpack.c.bf16 %v1461, %v1460
  %v1491 = vpack.c.bf16 %v1463, %v1462
  %v1492 = vpack.c.bf16 %v1465, %v1464
  %v1493 = vpack.c.bf16 %v1467, %v1466
  %v1494 = vpack.c.bf16 %v1469, %v1468
  %v1495 = vpack.c.bf16 %v1471, %v1470
  %v1496 = vpack.c.bf16 %v1473, %v1472
  %v1497 = vpack.c.bf16 %v1475, %v1474
  %v1498 = vpack.c.bf16 %v1477, %v1476
  %v1499 = vpack.c.bf16 %v1479, %v1478
  %v1500 = vpack.c.bf16 %v1481, %v1480
  %v1501 = vpack.c.bf16 %v1483, %v1482
  %1502 = vset.pattern.permute.xlu0 6
  %1503 = vperm.xlu0 %1502, %v57
  %v1504 = vpop.permute.xlu0 %1503
  %1505 = vset.pattern.permute.xlu0 6
  %1506 = vperm.xlu0 %1505, %v58
  %v1507 = vpop.permute.xlu0 %1506
  %1508 = vset.pattern.permute.xlu0 6
  %1509 = vperm.xlu0 %1508, %v59
  %v1510 = vpop.permute.xlu0 %1509
  %1511 = vset.pattern.permute.xlu0 6
  %1512 = vperm.xlu0 %1511, %v60
  %v1513 = vpop.permute.xlu0 %1512
  %1514 = vset.pattern.permute.xlu0 6
  %1515 = vperm.xlu0 %1514, %v61
  %v1516 = vpop.permute.xlu0 %1515
  %1517 = vset.pattern.permute.xlu0 6
  %1518 = vperm.xlu0 %1517, %v62
  %v1519 = vpop.permute.xlu0 %1518
  %1520 = vset.pattern.permute.xlu0 6
  %1521 = vperm.xlu0 %1520, %v63
  %v1522 = vpop.permute.xlu0 %1521
  %1523 = vset.pattern.permute.xlu0 6
  %1524 = vperm.xlu0 %1523, %v64
  %v1525 = vpop.permute.xlu0 %1524
  %1526 = vset.pattern.permute.xlu0 6
  %1527 = vperm.xlu0 %1526, %v65
  %v1528 = vpop.permute.xlu0 %1527
  %1529 = vset.pattern.permute.xlu0 6
  %1530 = vperm.xlu0 %1529, %v66
  %v1531 = vpop.permute.xlu0 %1530
  %1532 = vset.pattern.permute.xlu0 6
  %1533 = vperm.xlu0 %1532, %v67
  %v1534 = vpop.permute.xlu0 %1533
  %1535 = vset.pattern.permute.xlu0 6
  %1536 = vperm.xlu0 %1535, %v68
  %v1537 = vpop.permute.xlu0 %1536
  %1538 = vset.pattern.permute.xlu0 6
  %1539 = vperm.xlu0 %1538, %v69
  %v1540 = vpop.permute.xlu0 %1539
  %1541 = vset.pattern.permute.xlu0 6
  %1542 = vperm.xlu0 %1541, %v70
  %v1543 = vpop.permute.xlu0 %1542
  %1544 = vset.pattern.permute.xlu0 6
  %1545 = vperm.xlu0 %1544, %v71
  %v1546 = vpop.permute.xlu0 %1545
  %1547 = vset.pattern.permute.xlu0 6
  %1548 = vperm.xlu0 %1547, %v72
  %v1549 = vpop.permute.xlu0 %1548
  %1550 = vset.pattern.permute.xlu0 6
  %1551 = vperm.xlu0 %1550, %v73
  %v1552 = vpop.permute.xlu0 %1551
  %1553 = vset.pattern.permute.xlu0 6
  %1554 = vperm.xlu0 %1553, %v74
  %v1555 = vpop.permute.xlu0 %1554
  %1556 = vset.pattern.permute.xlu0 6
  %1557 = vperm.xlu0 %1556, %v75
  %v1558 = vpop.permute.xlu0 %1557
  %1559 = vset.pattern.permute.xlu0 6
  %1560 = vperm.xlu0 %1559, %v76
  %v1561 = vpop.permute.xlu0 %1560
  %1562 = vset.pattern.permute.xlu0 6
  %1563 = vperm.xlu0 %1562, %v77
  %v1564 = vpop.permute.xlu0 %1563
  %1565 = vset.pattern.permute.xlu0 6
  %1566 = vperm.xlu0 %1565, %v78
  %v1567 = vpop.permute.xlu0 %1566
  %1568 = vset.pattern.permute.xlu0 6
  %1569 = vperm.xlu0 %1568, %v79
  %v1570 = vpop.permute.xlu0 %1569
  %1571 = vset.pattern.permute.xlu0 6
  %1572 = vperm.xlu0 %1571, %v80
  %v1573 = vpop.permute.xlu0 %1572
  %1574 = vset.pattern.permute.xlu0 6
  %1575 = vperm.xlu0 %1574, %v81
  %v1576 = vpop.permute.xlu0 %1575
  %1577 = vset.pattern.permute.xlu0 6
  %1578 = vperm.xlu0 %1577, %v82
  %v1579 = vpop.permute.xlu0 %1578
  %1580 = vset.pattern.permute.xlu0 6
  %1581 = vperm.xlu0 %1580, %v83
  %v1582 = vpop.permute.xlu0 %1581
  %1583 = vset.pattern.permute.xlu0 6
  %1584 = vperm.xlu0 %1583, %v84
  %v1585 = vpop.permute.xlu0 %1584
  %1586 = vset.pattern.permute.xlu0 6
  %1587 = vperm.xlu0 %1586, %v85
  %v1588 = vpop.permute.xlu0 %1587
  %1589 = vset.pattern.permute.xlu0 6
  %1590 = vperm.xlu0 %1589, %v86
  %v1591 = vpop.permute.xlu0 %1590
  %1592 = vset.pattern.permute.xlu0 6
  %1593 = vperm.xlu0 %1592, %v87
  %v1594 = vpop.permute.xlu0 %1593
  %1595 = vset.pattern.permute.xlu0 6
  %1596 = vperm.xlu0 %1595, %v88
  %v1597 = vpop.permute.xlu0 %1596
  %1598 = vset.pattern.permute.xlu0 6
  %1599 = vperm.xlu0 %1598, %v89
  %v1600 = vpop.permute.xlu0 %1599
  %1601 = vset.pattern.permute.xlu0 6
  %1602 = vperm.xlu0 %1601, %v90
  %v1603 = vpop.permute.xlu0 %1602
  %1604 = vset.pattern.permute.xlu0 6
  %1605 = vperm.xlu0 %1604, %v91
  %v1606 = vpop.permute.xlu0 %1605
  %1607 = vset.pattern.permute.xlu0 6
  %1608 = vperm.xlu0 %1607, %v92
  %v1609 = vpop.permute.xlu0 %1608
  %vm1610 = vcmp.eq.s32.totalorder %v1504, %v205
  %vm1611 = vcmp.eq.s32.totalorder %v1507, %v205
  %vm1612 = vcmp.eq.s32.totalorder %v1510, %v205
  %vm1613 = vcmp.eq.s32.totalorder %v1513, %v205
  %vm1614 = vcmp.eq.s32.totalorder %v1516, %v205
  %vm1615 = vcmp.eq.s32.totalorder %v1519, %v205
  %vm1616 = vcmp.eq.s32.totalorder %v1522, %v205
  %vm1617 = vcmp.eq.s32.totalorder %v1525, %v205
  %vm1618 = vcmp.eq.s32.totalorder %v1528, %v205
  %vm1619 = vcmp.eq.s32.totalorder %v1531, %v205
  %vm1620 = vcmp.eq.s32.totalorder %v1534, %v205
  %vm1621 = vcmp.eq.s32.totalorder %v1537, %v205
  %vm1622 = vcmp.eq.s32.totalorder %v1540, %v205
  %vm1623 = vcmp.eq.s32.totalorder %v1543, %v205
  %vm1624 = vcmp.eq.s32.totalorder %v1546, %v205
  %vm1625 = vcmp.eq.s32.totalorder %v1549, %v205
  %vm1626 = vcmp.eq.s32.totalorder %v1552, %v205
  %vm1627 = vcmp.eq.s32.totalorder %v1555, %v205
  %vm1628 = vcmp.eq.s32.totalorder %v1558, %v205
  %vm1629 = vcmp.eq.s32.totalorder %v1561, %v205
  %vm1630 = vcmp.eq.s32.totalorder %v1564, %v205
  %vm1631 = vcmp.eq.s32.totalorder %v1567, %v205
  %vm1632 = vcmp.eq.s32.totalorder %v1570, %v205
  %vm1633 = vcmp.eq.s32.totalorder %v1573, %v205
  %vm1634 = vcmp.eq.s32.totalorder %v1576, %v205
  %vm1635 = vcmp.eq.s32.totalorder %v1579, %v205
  %vm1636 = vcmp.eq.s32.totalorder %v1582, %v205
  %vm1637 = vcmp.eq.s32.totalorder %v1585, %v205
  %vm1638 = vcmp.eq.s32.totalorder %v1588, %v205
  %vm1639 = vcmp.eq.s32.totalorder %v1591, %v205
  %vm1640 = vcmp.eq.s32.totalorder %v1594, %v205
  %vm1641 = vcmp.eq.s32.totalorder %v1597, %v205
  %vm1642 = vcmp.eq.s32.totalorder %v1600, %v205
  %vm1643 = vcmp.eq.s32.totalorder %v1603, %v205
  %vm1644 = vcmp.eq.s32.totalorder %v1606, %v205
  %vm1645 = vcmp.eq.s32.totalorder %v1609, %v205
  %v1646 = vsel %vm1610, 1, 0
  %v1647 = vsel %vm1611, 1, 0
  %v1648 = vsel %vm1612, 1, 0
  %v1649 = vsel %vm1613, 1, 0
  %v1650 = vsel %vm1614, 1, 0
  %v1651 = vsel %vm1615, 1, 0
  %v1652 = vsel %vm1616, 1, 0
  %v1653 = vsel %vm1617, 1, 0
  %v1654 = vsel %vm1618, 1, 0
  %v1655 = vsel %vm1619, 1, 0
  %v1656 = vsel %vm1620, 1, 0
  %v1657 = vsel %vm1621, 1, 0
  %v1658 = vsel %vm1622, 1, 0
  %v1659 = vsel %vm1623, 1, 0
  %v1660 = vsel %vm1624, 1, 0
  %v1661 = vsel %vm1625, 1, 0
  %v1662 = vsel %vm1626, 1, 0
  %v1663 = vsel %vm1627, 1, 0
  %v1664 = vsel %vm1628, 1, 0
  %v1665 = vsel %vm1629, 1, 0
  %v1666 = vsel %vm1630, 1, 0
  %v1667 = vsel %vm1631, 1, 0
  %v1668 = vsel %vm1632, 1, 0
  %v1669 = vsel %vm1633, 1, 0
  %v1670 = vsel %vm1634, 1, 0
  %v1671 = vsel %vm1635, 1, 0
  %v1672 = vsel %vm1636, 1, 0
  %v1673 = vsel %vm1637, 1, 0
  %v1674 = vsel %vm1638, 1, 0
  %v1675 = vsel %vm1639, 1, 0
  %v1676 = vsel %vm1640, 1, 0
  %v1677 = vsel %vm1641, 1, 0
  %v1678 = vsel %vm1642, 1, 0
  %v1679 = vsel %vm1643, 1, 0
  %v1680 = vsel %vm1644, 1, 0
  %v1681 = vsel %vm1645, 1, 0
  %v1682 = vcvt.s32.f32 %v1646
  %v1683 = vcvt.s32.f32 %v1647
  %v1684 = vcvt.s32.f32 %v1648
  %v1685 = vcvt.s32.f32 %v1649
  %v1686 = vcvt.s32.f32 %v1650
  %v1687 = vcvt.s32.f32 %v1651
  %v1688 = vcvt.s32.f32 %v1652
  %v1689 = vcvt.s32.f32 %v1653
  %v1690 = vcvt.s32.f32 %v1654
  %v1691 = vcvt.s32.f32 %v1655
  %v1692 = vcvt.s32.f32 %v1656
  %v1693 = vcvt.s32.f32 %v1657
  %v1694 = vcvt.s32.f32 %v1658
  %v1695 = vcvt.s32.f32 %v1659
  %v1696 = vcvt.s32.f32 %v1660
  %v1697 = vcvt.s32.f32 %v1661
  %v1698 = vcvt.s32.f32 %v1662
  %v1699 = vcvt.s32.f32 %v1663
  %v1700 = vcvt.s32.f32 %v1664
  %v1701 = vcvt.s32.f32 %v1665
  %v1702 = vcvt.s32.f32 %v1666
  %v1703 = vcvt.s32.f32 %v1667
  %v1704 = vcvt.s32.f32 %v1668
  %v1705 = vcvt.s32.f32 %v1669
  %v1706 = vcvt.s32.f32 %v1670
  %v1707 = vcvt.s32.f32 %v1671
  %v1708 = vcvt.s32.f32 %v1672
  %v1709 = vcvt.s32.f32 %v1673
  %v1710 = vcvt.s32.f32 %v1674
  %v1711 = vcvt.s32.f32 %v1675
  %v1712 = vcvt.s32.f32 %v1676
  %v1713 = vcvt.s32.f32 %v1677
  %v1714 = vcvt.s32.f32 %v1678
  %v1715 = vcvt.s32.f32 %v1679
  %v1716 = vcvt.s32.f32 %v1680
  %v1717 = vcvt.s32.f32 %v1681
  %v1718 = vpack.c.bf16 %v1683, %v1682
  %v1719 = vpack.c.bf16 %v1685, %v1684
  %v1720 = vpack.c.bf16 %v1687, %v1686
  %v1721 = vpack.c.bf16 %v1689, %v1688
  %v1722 = vpack.c.bf16 %v1691, %v1690
  %v1723 = vpack.c.bf16 %v1693, %v1692
  %v1724 = vpack.c.bf16 %v1695, %v1694
  %v1725 = vpack.c.bf16 %v1697, %v1696
  %v1726 = vpack.c.bf16 %v1699, %v1698
  %v1727 = vpack.c.bf16 %v1701, %v1700
  %v1728 = vpack.c.bf16 %v1703, %v1702
  %v1729 = vpack.c.bf16 %v1705, %v1704
  %v1730 = vpack.c.bf16 %v1707, %v1706
  %v1731 = vpack.c.bf16 %v1709, %v1708
  %v1732 = vpack.c.bf16 %v1711, %v1710
  %v1733 = vpack.c.bf16 %v1713, %v1712
  %v1734 = vpack.c.bf16 %v1715, %v1714
  %v1735 = vpack.c.bf16 %v1717, %v1716
  %1736 = vset.pattern.permute.xlu0 7
  %1737 = vperm.xlu0 %1736, %v57
  %v1738 = vpop.permute.xlu0 %1737
  %1739 = vset.pattern.permute.xlu0 7
  %1740 = vperm.xlu0 %1739, %v58
  %v1741 = vpop.permute.xlu0 %1740
  %1742 = vset.pattern.permute.xlu0 7
  %1743 = vperm.xlu0 %1742, %v59
  %v1744 = vpop.permute.xlu0 %1743
  %1745 = vset.pattern.permute.xlu0 7
  %1746 = vperm.xlu0 %1745, %v60
  %v1747 = vpop.permute.xlu0 %1746
  %1748 = vset.pattern.permute.xlu0 7
  %1749 = vperm.xlu0 %1748, %v61
  %v1750 = vpop.permute.xlu0 %1749
  %1751 = vset.pattern.permute.xlu0 7
  %1752 = vperm.xlu0 %1751, %v62
  %v1753 = vpop.permute.xlu0 %1752
  %1754 = vset.pattern.permute.xlu0 7
  %1755 = vperm.xlu0 %1754, %v63
  %v1756 = vpop.permute.xlu0 %1755
  %1757 = vset.pattern.permute.xlu0 7
  %1758 = vperm.xlu0 %1757, %v64
  %v1759 = vpop.permute.xlu0 %1758
  %1760 = vset.pattern.permute.xlu0 7
  %1761 = vperm.xlu0 %1760, %v65
  %v1762 = vpop.permute.xlu0 %1761
  %1763 = vset.pattern.permute.xlu0 7
  %1764 = vperm.xlu0 %1763, %v66
  %v1765 = vpop.permute.xlu0 %1764
  %1766 = vset.pattern.permute.xlu0 7
  %1767 = vperm.xlu0 %1766, %v67
  %v1768 = vpop.permute.xlu0 %1767
  %1769 = vset.pattern.permute.xlu0 7
  %1770 = vperm.xlu0 %1769, %v68
  %v1771 = vpop.permute.xlu0 %1770
  %1772 = vset.pattern.permute.xlu0 7
  %1773 = vperm.xlu0 %1772, %v69
  %v1774 = vpop.permute.xlu0 %1773
  %1775 = vset.pattern.permute.xlu0 7
  %1776 = vperm.xlu0 %1775, %v70
  %v1777 = vpop.permute.xlu0 %1776
  %1778 = vset.pattern.permute.xlu0 7
  %1779 = vperm.xlu0 %1778, %v71
  %v1780 = vpop.permute.xlu0 %1779
  %1781 = vset.pattern.permute.xlu0 7
  %1782 = vperm.xlu0 %1781, %v72
  %v1783 = vpop.permute.xlu0 %1782
  %1784 = vset.pattern.permute.xlu0 7
  %1785 = vperm.xlu0 %1784, %v73
  %v1786 = vpop.permute.xlu0 %1785
  %1787 = vset.pattern.permute.xlu0 7
  %1788 = vperm.xlu0 %1787, %v74
  %v1789 = vpop.permute.xlu0 %1788
  %1790 = vset.pattern.permute.xlu0 7
  %1791 = vperm.xlu0 %1790, %v75
  %v1792 = vpop.permute.xlu0 %1791
  %1793 = vset.pattern.permute.xlu0 7
  %1794 = vperm.xlu0 %1793, %v76
  %v1795 = vpop.permute.xlu0 %1794
  %1796 = vset.pattern.permute.xlu0 7
  %1797 = vperm.xlu0 %1796, %v77
  %v1798 = vpop.permute.xlu0 %1797
  %1799 = vset.pattern.permute.xlu0 7
  %1800 = vperm.xlu0 %1799, %v78
  %v1801 = vpop.permute.xlu0 %1800
  %1802 = vset.pattern.permute.xlu0 7
  %1803 = vperm.xlu0 %1802, %v79
  %v1804 = vpop.permute.xlu0 %1803
  %1805 = vset.pattern.permute.xlu0 7
  %1806 = vperm.xlu0 %1805, %v80
  %v1807 = vpop.permute.xlu0 %1806
  %1808 = vset.pattern.permute.xlu0 7
  %1809 = vperm.xlu0 %1808, %v81
  %v1810 = vpop.permute.xlu0 %1809
  %1811 = vset.pattern.permute.xlu0 7
  %1812 = vperm.xlu0 %1811, %v82
  %v1813 = vpop.permute.xlu0 %1812
  %1814 = vset.pattern.permute.xlu0 7
  %1815 = vperm.xlu0 %1814, %v83
  %v1816 = vpop.permute.xlu0 %1815
  %1817 = vset.pattern.permute.xlu0 7
  %1818 = vperm.xlu0 %1817, %v84
  %v1819 = vpop.permute.xlu0 %1818
  %1820 = vset.pattern.permute.xlu0 7
  %1821 = vperm.xlu0 %1820, %v85
  %v1822 = vpop.permute.xlu0 %1821
  %1823 = vset.pattern.permute.xlu0 7
  %1824 = vperm.xlu0 %1823, %v86
  %v1825 = vpop.permute.xlu0 %1824
  %1826 = vset.pattern.permute.xlu0 7
  %1827 = vperm.xlu0 %1826, %v87
  %v1828 = vpop.permute.xlu0 %1827
  %1829 = vset.pattern.permute.xlu0 7
  %1830 = vperm.xlu0 %1829, %v88
  %v1831 = vpop.permute.xlu0 %1830
  %1832 = vset.pattern.permute.xlu0 7
  %1833 = vperm.xlu0 %1832, %v89
  %v1834 = vpop.permute.xlu0 %1833
  %1835 = vset.pattern.permute.xlu0 7
  %1836 = vperm.xlu0 %1835, %v90
  %v1837 = vpop.permute.xlu0 %1836
  %1838 = vset.pattern.permute.xlu0 7
  %1839 = vperm.xlu0 %1838, %v91
  %v1840 = vpop.permute.xlu0 %1839
  %1841 = vset.pattern.permute.xlu0 7
  %1842 = vperm.xlu0 %1841, %v92
  %v1843 = vpop.permute.xlu0 %1842
  %vm1844 = vcmp.eq.s32.totalorder %v1738, %v205
  %vm1845 = vcmp.eq.s32.totalorder %v1741, %v205
  %vm1846 = vcmp.eq.s32.totalorder %v1744, %v205
  %vm1847 = vcmp.eq.s32.totalorder %v1747, %v205
  %vm1848 = vcmp.eq.s32.totalorder %v1750, %v205
  %vm1849 = vcmp.eq.s32.totalorder %v1753, %v205
  %vm1850 = vcmp.eq.s32.totalorder %v1756, %v205
  %vm1851 = vcmp.eq.s32.totalorder %v1759, %v205
  %vm1852 = vcmp.eq.s32.totalorder %v1762, %v205
  %vm1853 = vcmp.eq.s32.totalorder %v1765, %v205
  %vm1854 = vcmp.eq.s32.totalorder %v1768, %v205
  %vm1855 = vcmp.eq.s32.totalorder %v1771, %v205
  %vm1856 = vcmp.eq.s32.totalorder %v1774, %v205
  %vm1857 = vcmp.eq.s32.totalorder %v1777, %v205
  %vm1858 = vcmp.eq.s32.totalorder %v1780, %v205
  %vm1859 = vcmp.eq.s32.totalorder %v1783, %v205
  %vm1860 = vcmp.eq.s32.totalorder %v1786, %v205
  %vm1861 = vcmp.eq.s32.totalorder %v1789, %v205
  %vm1862 = vcmp.eq.s32.totalorder %v1792, %v205
  %vm1863 = vcmp.eq.s32.totalorder %v1795, %v205
  %vm1864 = vcmp.eq.s32.totalorder %v1798, %v205
  %vm1865 = vcmp.eq.s32.totalorder %v1801, %v205
  %vm1866 = vcmp.eq.s32.totalorder %v1804, %v205
  %vm1867 = vcmp.eq.s32.totalorder %v1807, %v205
  %vm1868 = vcmp.eq.s32.totalorder %v1810, %v205
  %vm1869 = vcmp.eq.s32.totalorder %v1813, %v205
  %vm1870 = vcmp.eq.s32.totalorder %v1816, %v205
  %vm1871 = vcmp.eq.s32.totalorder %v1819, %v205
  %vm1872 = vcmp.eq.s32.totalorder %v1822, %v205
  %vm1873 = vcmp.eq.s32.totalorder %v1825, %v205
  %vm1874 = vcmp.eq.s32.totalorder %v1828, %v205
  %vm1875 = vcmp.eq.s32.totalorder %v1831, %v205
  %vm1876 = vcmp.eq.s32.totalorder %v1834, %v205
  %vm1877 = vcmp.eq.s32.totalorder %v1837, %v205
  %vm1878 = vcmp.eq.s32.totalorder %v1840, %v205
  %vm1879 = vcmp.eq.s32.totalorder %v1843, %v205
  %v1880 = vsel %vm1844, 1, 0
  %v1881 = vsel %vm1845, 1, 0
  %v1882 = vsel %vm1846, 1, 0
  %v1883 = vsel %vm1847, 1, 0
  %v1884 = vsel %vm1848, 1, 0
  %v1885 = vsel %vm1849, 1, 0
  %v1886 = vsel %vm1850, 1, 0
  %v1887 = vsel %vm1851, 1, 0
  %v1888 = vsel %vm1852, 1, 0
  %v1889 = vsel %vm1853, 1, 0
  %v1890 = vsel %vm1854, 1, 0
  %v1891 = vsel %vm1855, 1, 0
  %v1892 = vsel %vm1856, 1, 0
  %v1893 = vsel %vm1857, 1, 0
  %v1894 = vsel %vm1858, 1, 0
  %v1895 = vsel %vm1859, 1, 0
  %v1896 = vsel %vm1860, 1, 0
  %v1897 = vsel %vm1861, 1, 0
  %v1898 = vsel %vm1862, 1, 0
  %v1899 = vsel %vm1863, 1, 0
  %v1900 = vsel %vm1864, 1, 0
  %v1901 = vsel %vm1865, 1, 0
  %v1902 = vsel %vm1866, 1, 0
  %v1903 = vsel %vm1867, 1, 0
  %v1904 = vsel %vm1868, 1, 0
  %v1905 = vsel %vm1869, 1, 0
  %v1906 = vsel %vm1870, 1, 0
  %v1907 = vsel %vm1871, 1, 0
  %v1908 = vsel %vm1872, 1, 0
  %v1909 = vsel %vm1873, 1, 0
  %v1910 = vsel %vm1874, 1, 0
  %v1911 = vsel %vm1875, 1, 0
  %v1912 = vsel %vm1876, 1, 0
  %v1913 = vsel %vm1877, 1, 0
  %v1914 = vsel %vm1878, 1, 0
  %v1915 = vsel %vm1879, 1, 0
  %v1916 = vcvt.s32.f32 %v1880
  %v1917 = vcvt.s32.f32 %v1881
  %v1918 = vcvt.s32.f32 %v1882
  %v1919 = vcvt.s32.f32 %v1883
  %v1920 = vcvt.s32.f32 %v1884
  %v1921 = vcvt.s32.f32 %v1885
  %v1922 = vcvt.s32.f32 %v1886
  %v1923 = vcvt.s32.f32 %v1887
  %v1924 = vcvt.s32.f32 %v1888
  %v1925 = vcvt.s32.f32 %v1889
  %v1926 = vcvt.s32.f32 %v1890
  %v1927 = vcvt.s32.f32 %v1891
  %v1928 = vcvt.s32.f32 %v1892
  %v1929 = vcvt.s32.f32 %v1893
  %v1930 = vcvt.s32.f32 %v1894
  %v1931 = vcvt.s32.f32 %v1895
  %v1932 = vcvt.s32.f32 %v1896
  %v1933 = vcvt.s32.f32 %v1897
  %v1934 = vcvt.s32.f32 %v1898
  %v1935 = vcvt.s32.f32 %v1899
  %v1936 = vcvt.s32.f32 %v1900
  %v1937 = vcvt.s32.f32 %v1901
  %v1938 = vcvt.s32.f32 %v1902
  %v1939 = vcvt.s32.f32 %v1903
  %v1940 = vcvt.s32.f32 %v1904
  %v1941 = vcvt.s32.f32 %v1905
  %v1942 = vcvt.s32.f32 %v1906
  %v1943 = vcvt.s32.f32 %v1907
  %v1944 = vcvt.s32.f32 %v1908
  %v1945 = vcvt.s32.f32 %v1909
  %v1946 = vcvt.s32.f32 %v1910
  %v1947 = vcvt.s32.f32 %v1911
  %v1948 = vcvt.s32.f32 %v1912
  %v1949 = vcvt.s32.f32 %v1913
  %v1950 = vcvt.s32.f32 %v1914
  %v1951 = vcvt.s32.f32 %v1915
  %v1952 = vpack.c.bf16 %v1917, %v1916
  %v1953 = vpack.c.bf16 %v1919, %v1918
  %v1954 = vpack.c.bf16 %v1921, %v1920
  %v1955 = vpack.c.bf16 %v1923, %v1922
  %v1956 = vpack.c.bf16 %v1925, %v1924
  %v1957 = vpack.c.bf16 %v1927, %v1926
  %v1958 = vpack.c.bf16 %v1929, %v1928
  %v1959 = vpack.c.bf16 %v1931, %v1930
  %v1960 = vpack.c.bf16 %v1933, %v1932
  %v1961 = vpack.c.bf16 %v1935, %v1934
  %v1962 = vpack.c.bf16 %v1937, %v1936
  %v1963 = vpack.c.bf16 %v1939, %v1938
  %v1964 = vpack.c.bf16 %v1941, %v1940
  %v1965 = vpack.c.bf16 %v1943, %v1942
  %v1966 = vpack.c.bf16 %v1945, %v1944
  %v1967 = vpack.c.bf16 %v1947, %v1946
  %v1968 = vpack.c.bf16 %v1949, %v1948
  %v1969 = vpack.c.bf16 %v1951, %v1950
  %1970 = vset.pattern.permute.xlu0 8
  %1971 = vperm.xlu0 %1970, %v57
  %v1972 = vpop.permute.xlu0 %1971
  %1973 = vset.pattern.permute.xlu0 8
  %1974 = vperm.xlu0 %1973, %v58
  %v1975 = vpop.permute.xlu0 %1974
  %1976 = vset.pattern.permute.xlu0 8
  %1977 = vperm.xlu0 %1976, %v59
  %v1978 = vpop.permute.xlu0 %1977
  %1979 = vset.pattern.permute.xlu0 8
  %1980 = vperm.xlu0 %1979, %v60
  %v1981 = vpop.permute.xlu0 %1980
  %1982 = vset.pattern.permute.xlu0 8
  %1983 = vperm.xlu0 %1982, %v61
  %v1984 = vpop.permute.xlu0 %1983
  %1985 = vset.pattern.permute.xlu0 8
  %1986 = vperm.xlu0 %1985, %v62
  %v1987 = vpop.permute.xlu0 %1986
  %1988 = vset.pattern.permute.xlu0 8
  %1989 = vperm.xlu0 %1988, %v63
  %v1990 = vpop.permute.xlu0 %1989
  %1991 = vset.pattern.permute.xlu0 8
  %1992 = vperm.xlu0 %1991, %v64
  %v1993 = vpop.permute.xlu0 %1992
  %1994 = vset.pattern.permute.xlu0 8
  %1995 = vperm.xlu0 %1994, %v65
  %v1996 = vpop.permute.xlu0 %1995
  %1997 = vset.pattern.permute.xlu0 8
  %1998 = vperm.xlu0 %1997, %v66
  %v1999 = vpop.permute.xlu0 %1998
  %2000 = vset.pattern.permute.xlu0 8
  %2001 = vperm.xlu0 %2000, %v67
  %v2002 = vpop.permute.xlu0 %2001
  %2003 = vset.pattern.permute.xlu0 8
  %2004 = vperm.xlu0 %2003, %v68
  %v2005 = vpop.permute.xlu0 %2004
  %2006 = vset.pattern.permute.xlu0 8
  %2007 = vperm.xlu0 %2006, %v69
  %v2008 = vpop.permute.xlu0 %2007
  %2009 = vset.pattern.permute.xlu0 8
  %2010 = vperm.xlu0 %2009, %v70
  %v2011 = vpop.permute.xlu0 %2010
  %2012 = vset.pattern.permute.xlu0 8
  %2013 = vperm.xlu0 %2012, %v71
  %v2014 = vpop.permute.xlu0 %2013
  %2015 = vset.pattern.permute.xlu0 8
  %2016 = vperm.xlu0 %2015, %v72
  %v2017 = vpop.permute.xlu0 %2016
  %2018 = vset.pattern.permute.xlu0 8
  %2019 = vperm.xlu0 %2018, %v73
  %v2020 = vpop.permute.xlu0 %2019
  %2021 = vset.pattern.permute.xlu0 8
  %2022 = vperm.xlu0 %2021, %v74
  %v2023 = vpop.permute.xlu0 %2022
  %2024 = vset.pattern.permute.xlu0 8
  %2025 = vperm.xlu0 %2024, %v75
  %v2026 = vpop.permute.xlu0 %2025
  %2027 = vset.pattern.permute.xlu0 8
  %2028 = vperm.xlu0 %2027, %v76
  %v2029 = vpop.permute.xlu0 %2028
  %2030 = vset.pattern.permute.xlu0 8
  %2031 = vperm.xlu0 %2030, %v77
  %v2032 = vpop.permute.xlu0 %2031
  %2033 = vset.pattern.permute.xlu0 8
  %2034 = vperm.xlu0 %2033, %v78
  %v2035 = vpop.permute.xlu0 %2034
  %2036 = vset.pattern.permute.xlu0 8
  %2037 = vperm.xlu0 %2036, %v79
  %v2038 = vpop.permute.xlu0 %2037
  %2039 = vset.pattern.permute.xlu0 8
  %2040 = vperm.xlu0 %2039, %v80
  %v2041 = vpop.permute.xlu0 %2040
  %2042 = vset.pattern.permute.xlu0 8
  %2043 = vperm.xlu0 %2042, %v81
  %v2044 = vpop.permute.xlu0 %2043
  %2045 = vset.pattern.permute.xlu0 8
  %2046 = vperm.xlu0 %2045, %v82
  %v2047 = vpop.permute.xlu0 %2046
  %2048 = vset.pattern.permute.xlu0 8
  %2049 = vperm.xlu0 %2048, %v83
  %v2050 = vpop.permute.xlu0 %2049
  %2051 = vset.pattern.permute.xlu0 8
  %2052 = vperm.xlu0 %2051, %v84
  %v2053 = vpop.permute.xlu0 %2052
  %2054 = vset.pattern.permute.xlu0 8
  %2055 = vperm.xlu0 %2054, %v85
  %v2056 = vpop.permute.xlu0 %2055
  %2057 = vset.pattern.permute.xlu0 8
  %2058 = vperm.xlu0 %2057, %v86
  %v2059 = vpop.permute.xlu0 %2058
  %2060 = vset.pattern.permute.xlu0 8
  %2061 = vperm.xlu0 %2060, %v87
  %v2062 = vpop.permute.xlu0 %2061
  %2063 = vset.pattern.permute.xlu0 8
  %2064 = vperm.xlu0 %2063, %v88
  %v2065 = vpop.permute.xlu0 %2064
  %2066 = vset.pattern.permute.xlu0 8
  %2067 = vperm.xlu0 %2066, %v89
  %v2068 = vpop.permute.xlu0 %2067
  %2069 = vset.pattern.permute.xlu0 8
  %2070 = vperm.xlu0 %2069, %v90
  %v2071 = vpop.permute.xlu0 %2070
  %2072 = vset.pattern.permute.xlu0 8
  %2073 = vperm.xlu0 %2072, %v91
  %v2074 = vpop.permute.xlu0 %2073
  %2075 = vset.pattern.permute.xlu0 8
  %2076 = vperm.xlu0 %2075, %v92
  %v2077 = vpop.permute.xlu0 %2076
  %vm2078 = vcmp.eq.s32.totalorder %v1972, %v205
  %vm2079 = vcmp.eq.s32.totalorder %v1975, %v205
  %vm2080 = vcmp.eq.s32.totalorder %v1978, %v205
  %vm2081 = vcmp.eq.s32.totalorder %v1981, %v205
  %vm2082 = vcmp.eq.s32.totalorder %v1984, %v205
  %vm2083 = vcmp.eq.s32.totalorder %v1987, %v205
  %vm2084 = vcmp.eq.s32.totalorder %v1990, %v205
  %vm2085 = vcmp.eq.s32.totalorder %v1993, %v205
  %vm2086 = vcmp.eq.s32.totalorder %v1996, %v205
  %vm2087 = vcmp.eq.s32.totalorder %v1999, %v205
  %vm2088 = vcmp.eq.s32.totalorder %v2002, %v205
  %vm2089 = vcmp.eq.s32.totalorder %v2005, %v205
  %vm2090 = vcmp.eq.s32.totalorder %v2008, %v205
  %vm2091 = vcmp.eq.s32.totalorder %v2011, %v205
  %vm2092 = vcmp.eq.s32.totalorder %v2014, %v205
  %vm2093 = vcmp.eq.s32.totalorder %v2017, %v205
  %vm2094 = vcmp.eq.s32.totalorder %v2020, %v205
  %vm2095 = vcmp.eq.s32.totalorder %v2023, %v205
  %vm2096 = vcmp.eq.s32.totalorder %v2026, %v205
  %vm2097 = vcmp.eq.s32.totalorder %v2029, %v205
  %vm2098 = vcmp.eq.s32.totalorder %v2032, %v205
  %vm2099 = vcmp.eq.s32.totalorder %v2035, %v205
  %vm2100 = vcmp.eq.s32.totalorder %v2038, %v205
  %vm2101 = vcmp.eq.s32.totalorder %v2041, %v205
  %vm2102 = vcmp.eq.s32.totalorder %v2044, %v205
  %vm2103 = vcmp.eq.s32.totalorder %v2047, %v205
  %vm2104 = vcmp.eq.s32.totalorder %v2050, %v205
  %vm2105 = vcmp.eq.s32.totalorder %v2053, %v205
  %vm2106 = vcmp.eq.s32.totalorder %v2056, %v205
  %vm2107 = vcmp.eq.s32.totalorder %v2059, %v205
  %vm2108 = vcmp.eq.s32.totalorder %v2062, %v205
  %vm2109 = vcmp.eq.s32.totalorder %v2065, %v205
  %vm2110 = vcmp.eq.s32.totalorder %v2068, %v205
  %vm2111 = vcmp.eq.s32.totalorder %v2071, %v205
  %vm2112 = vcmp.eq.s32.totalorder %v2074, %v205
  %vm2113 = vcmp.eq.s32.totalorder %v2077, %v205
  %v2114 = vsel %vm2078, 1, 0
  %v2115 = vsel %vm2079, 1, 0
  %v2116 = vsel %vm2080, 1, 0
  %v2117 = vsel %vm2081, 1, 0
  %v2118 = vsel %vm2082, 1, 0
  %v2119 = vsel %vm2083, 1, 0
  %v2120 = vsel %vm2084, 1, 0
  %v2121 = vsel %vm2085, 1, 0
  %v2122 = vsel %vm2086, 1, 0
  %v2123 = vsel %vm2087, 1, 0
  %v2124 = vsel %vm2088, 1, 0
  %v2125 = vsel %vm2089, 1, 0
  %v2126 = vsel %vm2090, 1, 0
  %v2127 = vsel %vm2091, 1, 0
  %v2128 = vsel %vm2092, 1, 0
  %v2129 = vsel %vm2093, 1, 0
  %v2130 = vsel %vm2094, 1, 0
  %v2131 = vsel %vm2095, 1, 0
  %v2132 = vsel %vm2096, 1, 0
  %v2133 = vsel %vm2097, 1, 0
  %v2134 = vsel %vm2098, 1, 0
  %v2135 = vsel %vm2099, 1, 0
  %v2136 = vsel %vm2100, 1, 0
  %v2137 = vsel %vm2101, 1, 0
  %v2138 = vsel %vm2102, 1, 0
  %v2139 = vsel %vm2103, 1, 0
  %v2140 = vsel %vm2104, 1, 0
  %v2141 = vsel %vm2105, 1, 0
  %v2142 = vsel %vm2106, 1, 0
  %v2143 = vsel %vm2107, 1, 0
  %v2144 = vsel %vm2108, 1, 0
  %v2145 = vsel %vm2109, 1, 0
  %v2146 = vsel %vm2110, 1, 0
  %v2147 = vsel %vm2111, 1, 0
  %v2148 = vsel %vm2112, 1, 0
  %v2149 = vsel %vm2113, 1, 0
  %v2150 = vcvt.s32.f32 %v2114
  %v2151 = vcvt.s32.f32 %v2115
  %v2152 = vcvt.s32.f32 %v2116
  %v2153 = vcvt.s32.f32 %v2117
  %v2154 = vcvt.s32.f32 %v2118
  %v2155 = vcvt.s32.f32 %v2119
  %v2156 = vcvt.s32.f32 %v2120
  %v2157 = vcvt.s32.f32 %v2121
  %v2158 = vcvt.s32.f32 %v2122
  %v2159 = vcvt.s32.f32 %v2123
  %v2160 = vcvt.s32.f32 %v2124
  %v2161 = vcvt.s32.f32 %v2125
  %v2162 = vcvt.s32.f32 %v2126
  %v2163 = vcvt.s32.f32 %v2127
  %v2164 = vcvt.s32.f32 %v2128
  %v2165 = vcvt.s32.f32 %v2129
  %v2166 = vcvt.s32.f32 %v2130
  %v2167 = vcvt.s32.f32 %v2131
  %v2168 = vcvt.s32.f32 %v2132
  %v2169 = vcvt.s32.f32 %v2133
  %v2170 = vcvt.s32.f32 %v2134
  %v2171 = vcvt.s32.f32 %v2135
  %v2172 = vcvt.s32.f32 %v2136
  %v2173 = vcvt.s32.f32 %v2137
  %v2174 = vcvt.s32.f32 %v2138
  %v2175 = vcvt.s32.f32 %v2139
  %v2176 = vcvt.s32.f32 %v2140
  %v2177 = vcvt.s32.f32 %v2141
  %v2178 = vcvt.s32.f32 %v2142
  %v2179 = vcvt.s32.f32 %v2143
  %v2180 = vcvt.s32.f32 %v2144
  %v2181 = vcvt.s32.f32 %v2145
  %v2182 = vcvt.s32.f32 %v2146
  %v2183 = vcvt.s32.f32 %v2147
  %v2184 = vcvt.s32.f32 %v2148
  %v2185 = vcvt.s32.f32 %v2149
  %v2186 = vpack.c.bf16 %v2151, %v2150
  %v2187 = vpack.c.bf16 %v2153, %v2152
  %v2188 = vpack.c.bf16 %v2155, %v2154
  %v2189 = vpack.c.bf16 %v2157, %v2156
  %v2190 = vpack.c.bf16 %v2159, %v2158
  %v2191 = vpack.c.bf16 %v2161, %v2160
  %v2192 = vpack.c.bf16 %v2163, %v2162
  %v2193 = vpack.c.bf16 %v2165, %v2164
  %v2194 = vpack.c.bf16 %v2167, %v2166
  %v2195 = vpack.c.bf16 %v2169, %v2168
  %v2196 = vpack.c.bf16 %v2171, %v2170
  %v2197 = vpack.c.bf16 %v2173, %v2172
  %v2198 = vpack.c.bf16 %v2175, %v2174
  %v2199 = vpack.c.bf16 %v2177, %v2176
  %v2200 = vpack.c.bf16 %v2179, %v2178
  %v2201 = vpack.c.bf16 %v2181, %v2180
  %v2202 = vpack.c.bf16 %v2183, %v2182
  %v2203 = vpack.c.bf16 %v2185, %v2184
  %2204 = vset.pattern.permute.xlu0 9
  %2205 = vperm.xlu0 %2204, %v57
  %v2206 = vpop.permute.xlu0 %2205
  %2207 = vset.pattern.permute.xlu0 9
  %2208 = vperm.xlu0 %2207, %v58
  %v2209 = vpop.permute.xlu0 %2208
  %2210 = vset.pattern.permute.xlu0 9
  %2211 = vperm.xlu0 %2210, %v59
  %v2212 = vpop.permute.xlu0 %2211
  %2213 = vset.pattern.permute.xlu0 9
  %2214 = vperm.xlu0 %2213, %v60
  %v2215 = vpop.permute.xlu0 %2214
  %2216 = vset.pattern.permute.xlu0 9
  %2217 = vperm.xlu0 %2216, %v61
  %v2218 = vpop.permute.xlu0 %2217
  %2219 = vset.pattern.permute.xlu0 9
  %2220 = vperm.xlu0 %2219, %v62
  %v2221 = vpop.permute.xlu0 %2220
  %2222 = vset.pattern.permute.xlu0 9
  %2223 = vperm.xlu0 %2222, %v63
  %v2224 = vpop.permute.xlu0 %2223
  %2225 = vset.pattern.permute.xlu0 9
  %2226 = vperm.xlu0 %2225, %v64
  %v2227 = vpop.permute.xlu0 %2226
  %2228 = vset.pattern.permute.xlu0 9
  %2229 = vperm.xlu0 %2228, %v65
  %v2230 = vpop.permute.xlu0 %2229
  %2231 = vset.pattern.permute.xlu0 9
  %2232 = vperm.xlu0 %2231, %v66
  %v2233 = vpop.permute.xlu0 %2232
  %2234 = vset.pattern.permute.xlu0 9
  %2235 = vperm.xlu0 %2234, %v67
  %v2236 = vpop.permute.xlu0 %2235
  %2237 = vset.pattern.permute.xlu0 9
  %2238 = vperm.xlu0 %2237, %v68
  %v2239 = vpop.permute.xlu0 %2238
  %2240 = vset.pattern.permute.xlu0 9
  %2241 = vperm.xlu0 %2240, %v69
  %v2242 = vpop.permute.xlu0 %2241
  %2243 = vset.pattern.permute.xlu0 9
  %2244 = vperm.xlu0 %2243, %v70
  %v2245 = vpop.permute.xlu0 %2244
  %2246 = vset.pattern.permute.xlu0 9
  %2247 = vperm.xlu0 %2246, %v71
  %v2248 = vpop.permute.xlu0 %2247
  %2249 = vset.pattern.permute.xlu0 9
  %2250 = vperm.xlu0 %2249, %v72
  %v2251 = vpop.permute.xlu0 %2250
  %2252 = vset.pattern.permute.xlu0 9
  %2253 = vperm.xlu0 %2252, %v73
  %v2254 = vpop.permute.xlu0 %2253
  %2255 = vset.pattern.permute.xlu0 9
  %2256 = vperm.xlu0 %2255, %v74
  %v2257 = vpop.permute.xlu0 %2256
  %2258 = vset.pattern.permute.xlu0 9
  %2259 = vperm.xlu0 %2258, %v75
  %v2260 = vpop.permute.xlu0 %2259
  %2261 = vset.pattern.permute.xlu0 9
  %2262 = vperm.xlu0 %2261, %v76
  %v2263 = vpop.permute.xlu0 %2262
  %2264 = vset.pattern.permute.xlu0 9
  %2265 = vperm.xlu0 %2264, %v77
  %v2266 = vpop.permute.xlu0 %2265
  %2267 = vset.pattern.permute.xlu0 9
  %2268 = vperm.xlu0 %2267, %v78
  %v2269 = vpop.permute.xlu0 %2268
  %2270 = vset.pattern.permute.xlu0 9
  %2271 = vperm.xlu0 %2270, %v79
  %v2272 = vpop.permute.xlu0 %2271
  %2273 = vset.pattern.permute.xlu0 9
  %2274 = vperm.xlu0 %2273, %v80
  %v2275 = vpop.permute.xlu0 %2274
  %2276 = vset.pattern.permute.xlu0 9
  %2277 = vperm.xlu0 %2276, %v81
  %v2278 = vpop.permute.xlu0 %2277
  %2279 = vset.pattern.permute.xlu0 9
  %2280 = vperm.xlu0 %2279, %v82
  %v2281 = vpop.permute.xlu0 %2280
  %2282 = vset.pattern.permute.xlu0 9
  %2283 = vperm.xlu0 %2282, %v83
  %v2284 = vpop.permute.xlu0 %2283
  %2285 = vset.pattern.permute.xlu0 9
  %2286 = vperm.xlu0 %2285, %v84
  %v2287 = vpop.permute.xlu0 %2286
  %2288 = vset.pattern.permute.xlu0 9
  %2289 = vperm.xlu0 %2288, %v85
  %v2290 = vpop.permute.xlu0 %2289
  %2291 = vset.pattern.permute.xlu0 9
  %2292 = vperm.xlu0 %2291, %v86
  %v2293 = vpop.permute.xlu0 %2292
  %2294 = vset.pattern.permute.xlu0 9
  %2295 = vperm.xlu0 %2294, %v87
  %v2296 = vpop.permute.xlu0 %2295
  %2297 = vset.pattern.permute.xlu0 9
  %2298 = vperm.xlu0 %2297, %v88
  %v2299 = vpop.permute.xlu0 %2298
  %2300 = vset.pattern.permute.xlu0 9
  %2301 = vperm.xlu0 %2300, %v89
  %v2302 = vpop.permute.xlu0 %2301
  %2303 = vset.pattern.permute.xlu0 9
  %2304 = vperm.xlu0 %2303, %v90
  %v2305 = vpop.permute.xlu0 %2304
  %2306 = vset.pattern.permute.xlu0 9
  %2307 = vperm.xlu0 %2306, %v91
  %v2308 = vpop.permute.xlu0 %2307
  %2309 = vset.pattern.permute.xlu0 9
  %2310 = vperm.xlu0 %2309, %v92
  %v2311 = vpop.permute.xlu0 %2310
  %vm2312 = vcmp.eq.s32.totalorder %v2206, %v205
  %vm2313 = vcmp.eq.s32.totalorder %v2209, %v205
  %vm2314 = vcmp.eq.s32.totalorder %v2212, %v205
  %vm2315 = vcmp.eq.s32.totalorder %v2215, %v205
  %vm2316 = vcmp.eq.s32.totalorder %v2218, %v205
  %vm2317 = vcmp.eq.s32.totalorder %v2221, %v205
  %vm2318 = vcmp.eq.s32.totalorder %v2224, %v205
  %vm2319 = vcmp.eq.s32.totalorder %v2227, %v205
  %vm2320 = vcmp.eq.s32.totalorder %v2230, %v205
  %vm2321 = vcmp.eq.s32.totalorder %v2233, %v205
  %vm2322 = vcmp.eq.s32.totalorder %v2236, %v205
  %vm2323 = vcmp.eq.s32.totalorder %v2239, %v205
  %vm2324 = vcmp.eq.s32.totalorder %v2242, %v205
  %vm2325 = vcmp.eq.s32.totalorder %v2245, %v205
  %vm2326 = vcmp.eq.s32.totalorder %v2248, %v205
  %vm2327 = vcmp.eq.s32.totalorder %v2251, %v205
  %vm2328 = vcmp.eq.s32.totalorder %v2254, %v205
  %vm2329 = vcmp.eq.s32.totalorder %v2257, %v205
  %vm2330 = vcmp.eq.s32.totalorder %v2260, %v205
  %vm2331 = vcmp.eq.s32.totalorder %v2263, %v205
  %vm2332 = vcmp.eq.s32.totalorder %v2266, %v205
  %vm2333 = vcmp.eq.s32.totalorder %v2269, %v205
  %vm2334 = vcmp.eq.s32.totalorder %v2272, %v205
  %vm2335 = vcmp.eq.s32.totalorder %v2275, %v205
  %vm2336 = vcmp.eq.s32.totalorder %v2278, %v205
  %vm2337 = vcmp.eq.s32.totalorder %v2281, %v205
  %vm2338 = vcmp.eq.s32.totalorder %v2284, %v205
  %vm2339 = vcmp.eq.s32.totalorder %v2287, %v205
  %vm2340 = vcmp.eq.s32.totalorder %v2290, %v205
  %vm2341 = vcmp.eq.s32.totalorder %v2293, %v205
  %vm2342 = vcmp.eq.s32.totalorder %v2296, %v205
  %vm2343 = vcmp.eq.s32.totalorder %v2299, %v205
  %vm2344 = vcmp.eq.s32.totalorder %v2302, %v205
  %vm2345 = vcmp.eq.s32.totalorder %v2305, %v205
  %vm2346 = vcmp.eq.s32.totalorder %v2308, %v205
  %vm2347 = vcmp.eq.s32.totalorder %v2311, %v205
  %v2348 = vsel %vm2312, 1, 0
  %v2349 = vsel %vm2313, 1, 0
  %v2350 = vsel %vm2314, 1, 0
  %v2351 = vsel %vm2315, 1, 0
  %v2352 = vsel %vm2316, 1, 0
  %v2353 = vsel %vm2317, 1, 0
  %v2354 = vsel %vm2318, 1, 0
  %v2355 = vsel %vm2319, 1, 0
  %v2356 = vsel %vm2320, 1, 0
  %v2357 = vsel %vm2321, 1, 0
  %v2358 = vsel %vm2322, 1, 0
  %v2359 = vsel %vm2323, 1, 0
  %v2360 = vsel %vm2324, 1, 0
  %v2361 = vsel %vm2325, 1, 0
  %v2362 = vsel %vm2326, 1, 0
  %v2363 = vsel %vm2327, 1, 0
  %v2364 = vsel %vm2328, 1, 0
  %v2365 = vsel %vm2329, 1, 0
  %v2366 = vsel %vm2330, 1, 0
  %v2367 = vsel %vm2331, 1, 0
  %v2368 = vsel %vm2332, 1, 0
  %v2369 = vsel %vm2333, 1, 0
  %v2370 = vsel %vm2334, 1, 0
  %v2371 = vsel %vm2335, 1, 0
  %v2372 = vsel %vm2336, 1, 0
  %v2373 = vsel %vm2337, 1, 0
  %v2374 = vsel %vm2338, 1, 0
  %v2375 = vsel %vm2339, 1, 0
  %v2376 = vsel %vm2340, 1, 0
  %v2377 = vsel %vm2341, 1, 0
  %v2378 = vsel %vm2342, 1, 0
  %v2379 = vsel %vm2343, 1, 0
  %v2380 = vsel %vm2344, 1, 0
  %v2381 = vsel %vm2345, 1, 0
  %v2382 = vsel %vm2346, 1, 0
  %v2383 = vsel %vm2347, 1, 0
  %v2384 = vcvt.s32.f32 %v2348
  %v2385 = vcvt.s32.f32 %v2349
  %v2386 = vcvt.s32.f32 %v2350
  %v2387 = vcvt.s32.f32 %v2351
  %v2388 = vcvt.s32.f32 %v2352
  %v2389 = vcvt.s32.f32 %v2353
  %v2390 = vcvt.s32.f32 %v2354
  %v2391 = vcvt.s32.f32 %v2355
  %v2392 = vcvt.s32.f32 %v2356
  %v2393 = vcvt.s32.f32 %v2357
  %v2394 = vcvt.s32.f32 %v2358
  %v2395 = vcvt.s32.f32 %v2359
  %v2396 = vcvt.s32.f32 %v2360
  %v2397 = vcvt.s32.f32 %v2361
  %v2398 = vcvt.s32.f32 %v2362
  %v2399 = vcvt.s32.f32 %v2363
  %v2400 = vcvt.s32.f32 %v2364
  %v2401 = vcvt.s32.f32 %v2365
  %v2402 = vcvt.s32.f32 %v2366
  %v2403 = vcvt.s32.f32 %v2367
  %v2404 = vcvt.s32.f32 %v2368
  %v2405 = vcvt.s32.f32 %v2369
  %v2406 = vcvt.s32.f32 %v2370
  %v2407 = vcvt.s32.f32 %v2371
  %v2408 = vcvt.s32.f32 %v2372
  %v2409 = vcvt.s32.f32 %v2373
  %v2410 = vcvt.s32.f32 %v2374
  %v2411 = vcvt.s32.f32 %v2375
  %v2412 = vcvt.s32.f32 %v2376
  %v2413 = vcvt.s32.f32 %v2377
  %v2414 = vcvt.s32.f32 %v2378
  %v2415 = vcvt.s32.f32 %v2379
  %v2416 = vcvt.s32.f32 %v2380
  %v2417 = vcvt.s32.f32 %v2381
  %v2418 = vcvt.s32.f32 %v2382
  %v2419 = vcvt.s32.f32 %v2383
  %v2420 = vpack.c.bf16 %v2385, %v2384
  %v2421 = vpack.c.bf16 %v2387, %v2386
  %v2422 = vpack.c.bf16 %v2389, %v2388
  %v2423 = vpack.c.bf16 %v2391, %v2390
  %v2424 = vpack.c.bf16 %v2393, %v2392
  %v2425 = vpack.c.bf16 %v2395, %v2394
  %v2426 = vpack.c.bf16 %v2397, %v2396
  %v2427 = vpack.c.bf16 %v2399, %v2398
  %v2428 = vpack.c.bf16 %v2401, %v2400
  %v2429 = vpack.c.bf16 %v2403, %v2402
  %v2430 = vpack.c.bf16 %v2405, %v2404
  %v2431 = vpack.c.bf16 %v2407, %v2406
  %v2432 = vpack.c.bf16 %v2409, %v2408
  %v2433 = vpack.c.bf16 %v2411, %v2410
  %v2434 = vpack.c.bf16 %v2413, %v2412
  %v2435 = vpack.c.bf16 %v2415, %v2414
  %v2436 = vpack.c.bf16 %v2417, %v2416
  %v2437 = vpack.c.bf16 %v2419, %v2418
  %2438 = vset.pattern.permute.xlu0 10
  %2439 = vperm.xlu0 %2438, %v57
  %v2440 = vpop.permute.xlu0 %2439
  %2441 = vset.pattern.permute.xlu0 10
  %2442 = vperm.xlu0 %2441, %v58
  %v2443 = vpop.permute.xlu0 %2442
  %2444 = vset.pattern.permute.xlu0 10
  %2445 = vperm.xlu0 %2444, %v59
  %v2446 = vpop.permute.xlu0 %2445
  %2447 = vset.pattern.permute.xlu0 10
  %2448 = vperm.xlu0 %2447, %v60
  %v2449 = vpop.permute.xlu0 %2448
  %2450 = vset.pattern.permute.xlu0 10
  %2451 = vperm.xlu0 %2450, %v61
  %v2452 = vpop.permute.xlu0 %2451
  %2453 = vset.pattern.permute.xlu0 10
  %2454 = vperm.xlu0 %2453, %v62
  %v2455 = vpop.permute.xlu0 %2454
  %2456 = vset.pattern.permute.xlu0 10
  %2457 = vperm.xlu0 %2456, %v63
  %v2458 = vpop.permute.xlu0 %2457
  %2459 = vset.pattern.permute.xlu0 10
  %2460 = vperm.xlu0 %2459, %v64
  %v2461 = vpop.permute.xlu0 %2460
  %2462 = vset.pattern.permute.xlu0 10
  %2463 = vperm.xlu0 %2462, %v65
  %v2464 = vpop.permute.xlu0 %2463
  %2465 = vset.pattern.permute.xlu0 10
  %2466 = vperm.xlu0 %2465, %v66
  %v2467 = vpop.permute.xlu0 %2466
  %2468 = vset.pattern.permute.xlu0 10
  %2469 = vperm.xlu0 %2468, %v67
  %v2470 = vpop.permute.xlu0 %2469
  %2471 = vset.pattern.permute.xlu0 10
  %2472 = vperm.xlu0 %2471, %v68
  %v2473 = vpop.permute.xlu0 %2472
  %2474 = vset.pattern.permute.xlu0 10
  %2475 = vperm.xlu0 %2474, %v69
  %v2476 = vpop.permute.xlu0 %2475
  %2477 = vset.pattern.permute.xlu0 10
  %2478 = vperm.xlu0 %2477, %v70
  %v2479 = vpop.permute.xlu0 %2478
  %2480 = vset.pattern.permute.xlu0 10
  %2481 = vperm.xlu0 %2480, %v71
  %v2482 = vpop.permute.xlu0 %2481
  %2483 = vset.pattern.permute.xlu0 10
  %2484 = vperm.xlu0 %2483, %v72
  %v2485 = vpop.permute.xlu0 %2484
  %2486 = vset.pattern.permute.xlu0 10
  %2487 = vperm.xlu0 %2486, %v73
  %v2488 = vpop.permute.xlu0 %2487
  %2489 = vset.pattern.permute.xlu0 10
  %2490 = vperm.xlu0 %2489, %v74
  %v2491 = vpop.permute.xlu0 %2490
  %2492 = vset.pattern.permute.xlu0 10
  %2493 = vperm.xlu0 %2492, %v75
  %v2494 = vpop.permute.xlu0 %2493
  %2495 = vset.pattern.permute.xlu0 10
  %2496 = vperm.xlu0 %2495, %v76
  %v2497 = vpop.permute.xlu0 %2496
  %2498 = vset.pattern.permute.xlu0 10
  %2499 = vperm.xlu0 %2498, %v77
  %v2500 = vpop.permute.xlu0 %2499
  %2501 = vset.pattern.permute.xlu0 10
  %2502 = vperm.xlu0 %2501, %v78
  %v2503 = vpop.permute.xlu0 %2502
  %2504 = vset.pattern.permute.xlu0 10
  %2505 = vperm.xlu0 %2504, %v79
  %v2506 = vpop.permute.xlu0 %2505
  %2507 = vset.pattern.permute.xlu0 10
  %2508 = vperm.xlu0 %2507, %v80
  %v2509 = vpop.permute.xlu0 %2508
  %2510 = vset.pattern.permute.xlu0 10
  %2511 = vperm.xlu0 %2510, %v81
  %v2512 = vpop.permute.xlu0 %2511
  %2513 = vset.pattern.permute.xlu0 10
  %2514 = vperm.xlu0 %2513, %v82
  %v2515 = vpop.permute.xlu0 %2514
  %2516 = vset.pattern.permute.xlu0 10
  %2517 = vperm.xlu0 %2516, %v83
  %v2518 = vpop.permute.xlu0 %2517
  %2519 = vset.pattern.permute.xlu0 10
  %2520 = vperm.xlu0 %2519, %v84
  %v2521 = vpop.permute.xlu0 %2520
  %2522 = vset.pattern.permute.xlu0 10
  %2523 = vperm.xlu0 %2522, %v85
  %v2524 = vpop.permute.xlu0 %2523
  %2525 = vset.pattern.permute.xlu0 10
  %2526 = vperm.xlu0 %2525, %v86
  %v2527 = vpop.permute.xlu0 %2526
  %2528 = vset.pattern.permute.xlu0 10
  %2529 = vperm.xlu0 %2528, %v87
  %v2530 = vpop.permute.xlu0 %2529
  %2531 = vset.pattern.permute.xlu0 10
  %2532 = vperm.xlu0 %2531, %v88
  %v2533 = vpop.permute.xlu0 %2532
  %2534 = vset.pattern.permute.xlu0 10
  %2535 = vperm.xlu0 %2534, %v89
  %v2536 = vpop.permute.xlu0 %2535
  %2537 = vset.pattern.permute.xlu0 10
  %2538 = vperm.xlu0 %2537, %v90
  %v2539 = vpop.permute.xlu0 %2538
  %2540 = vset.pattern.permute.xlu0 10
  %2541 = vperm.xlu0 %2540, %v91
  %v2542 = vpop.permute.xlu0 %2541
  %2543 = vset.pattern.permute.xlu0 10
  %2544 = vperm.xlu0 %2543, %v92
  %v2545 = vpop.permute.xlu0 %2544
  %vm2546 = vcmp.eq.s32.totalorder %v2440, %v205
  %vm2547 = vcmp.eq.s32.totalorder %v2443, %v205
  %vm2548 = vcmp.eq.s32.totalorder %v2446, %v205
  %vm2549 = vcmp.eq.s32.totalorder %v2449, %v205
  %vm2550 = vcmp.eq.s32.totalorder %v2452, %v205
  %vm2551 = vcmp.eq.s32.totalorder %v2455, %v205
  %vm2552 = vcmp.eq.s32.totalorder %v2458, %v205
  %vm2553 = vcmp.eq.s32.totalorder %v2461, %v205
  %vm2554 = vcmp.eq.s32.totalorder %v2464, %v205
  %vm2555 = vcmp.eq.s32.totalorder %v2467, %v205
  %vm2556 = vcmp.eq.s32.totalorder %v2470, %v205
  %vm2557 = vcmp.eq.s32.totalorder %v2473, %v205
  %vm2558 = vcmp.eq.s32.totalorder %v2476, %v205
  %vm2559 = vcmp.eq.s32.totalorder %v2479, %v205
  %vm2560 = vcmp.eq.s32.totalorder %v2482, %v205
  %vm2561 = vcmp.eq.s32.totalorder %v2485, %v205
  %vm2562 = vcmp.eq.s32.totalorder %v2488, %v205
  %vm2563 = vcmp.eq.s32.totalorder %v2491, %v205
  %vm2564 = vcmp.eq.s32.totalorder %v2494, %v205
  %vm2565 = vcmp.eq.s32.totalorder %v2497, %v205
  %vm2566 = vcmp.eq.s32.totalorder %v2500, %v205
  %vm2567 = vcmp.eq.s32.totalorder %v2503, %v205
  %vm2568 = vcmp.eq.s32.totalorder %v2506, %v205
  %vm2569 = vcmp.eq.s32.totalorder %v2509, %v205
  %vm2570 = vcmp.eq.s32.totalorder %v2512, %v205
  %vm2571 = vcmp.eq.s32.totalorder %v2515, %v205
  %vm2572 = vcmp.eq.s32.totalorder %v2518, %v205
  %vm2573 = vcmp.eq.s32.totalorder %v2521, %v205
  %vm2574 = vcmp.eq.s32.totalorder %v2524, %v205
  %vm2575 = vcmp.eq.s32.totalorder %v2527, %v205
  %vm2576 = vcmp.eq.s32.totalorder %v2530, %v205
  %vm2577 = vcmp.eq.s32.totalorder %v2533, %v205
  %vm2578 = vcmp.eq.s32.totalorder %v2536, %v205
  %vm2579 = vcmp.eq.s32.totalorder %v2539, %v205
  %vm2580 = vcmp.eq.s32.totalorder %v2542, %v205
  %vm2581 = vcmp.eq.s32.totalorder %v2545, %v205
  %v2582 = vsel %vm2546, 1, 0
  %v2583 = vsel %vm2547, 1, 0
  %v2584 = vsel %vm2548, 1, 0
  %v2585 = vsel %vm2549, 1, 0
  %v2586 = vsel %vm2550, 1, 0
  %v2587 = vsel %vm2551, 1, 0
  %v2588 = vsel %vm2552, 1, 0
  %v2589 = vsel %vm2553, 1, 0
  %v2590 = vsel %vm2554, 1, 0
  %v2591 = vsel %vm2555, 1, 0
  %v2592 = vsel %vm2556, 1, 0
  %v2593 = vsel %vm2557, 1, 0
  %v2594 = vsel %vm2558, 1, 0
  %v2595 = vsel %vm2559, 1, 0
  %v2596 = vsel %vm2560, 1, 0
  %v2597 = vsel %vm2561, 1, 0
  %v2598 = vsel %vm2562, 1, 0
  %v2599 = vsel %vm2563, 1, 0
  %v2600 = vsel %vm2564, 1, 0
  %v2601 = vsel %vm2565, 1, 0
  %v2602 = vsel %vm2566, 1, 0
  %v2603 = vsel %vm2567, 1, 0
  %v2604 = vsel %vm2568, 1, 0
  %v2605 = vsel %vm2569, 1, 0
  %v2606 = vsel %vm2570, 1, 0
  %v2607 = vsel %vm2571, 1, 0
  %v2608 = vsel %vm2572, 1, 0
  %v2609 = vsel %vm2573, 1, 0
  %v2610 = vsel %vm2574, 1, 0
  %v2611 = vsel %vm2575, 1, 0
  %v2612 = vsel %vm2576, 1, 0
  %v2613 = vsel %vm2577, 1, 0
  %v2614 = vsel %vm2578, 1, 0
  %v2615 = vsel %vm2579, 1, 0
  %v2616 = vsel %vm2580, 1, 0
  %v2617 = vsel %vm2581, 1, 0
  %v2618 = vcvt.s32.f32 %v2582
  %v2619 = vcvt.s32.f32 %v2583
  %v2620 = vcvt.s32.f32 %v2584
  %v2621 = vcvt.s32.f32 %v2585
  %v2622 = vcvt.s32.f32 %v2586
  %v2623 = vcvt.s32.f32 %v2587
  %v2624 = vcvt.s32.f32 %v2588
  %v2625 = vcvt.s32.f32 %v2589
  %v2626 = vcvt.s32.f32 %v2590
  %v2627 = vcvt.s32.f32 %v2591
  %v2628 = vcvt.s32.f32 %v2592
  %v2629 = vcvt.s32.f32 %v2593
  %v2630 = vcvt.s32.f32 %v2594
  %v2631 = vcvt.s32.f32 %v2595
  %v2632 = vcvt.s32.f32 %v2596
  %v2633 = vcvt.s32.f32 %v2597
  %v2634 = vcvt.s32.f32 %v2598
  %v2635 = vcvt.s32.f32 %v2599
  %v2636 = vcvt.s32.f32 %v2600
  %v2637 = vcvt.s32.f32 %v2601
  %v2638 = vcvt.s32.f32 %v2602
  %v2639 = vcvt.s32.f32 %v2603
  %v2640 = vcvt.s32.f32 %v2604
  %v2641 = vcvt.s32.f32 %v2605
  %v2642 = vcvt.s32.f32 %v2606
  %v2643 = vcvt.s32.f32 %v2607
  %v2644 = vcvt.s32.f32 %v2608
  %v2645 = vcvt.s32.f32 %v2609
  %v2646 = vcvt.s32.f32 %v2610
  %v2647 = vcvt.s32.f32 %v2611
  %v2648 = vcvt.s32.f32 %v2612
  %v2649 = vcvt.s32.f32 %v2613
  %v2650 = vcvt.s32.f32 %v2614
  %v2651 = vcvt.s32.f32 %v2615
  %v2652 = vcvt.s32.f32 %v2616
  %v2653 = vcvt.s32.f32 %v2617
  %v2654 = vpack.c.bf16 %v2619, %v2618
  %v2655 = vpack.c.bf16 %v2621, %v2620
  %v2656 = vpack.c.bf16 %v2623, %v2622
  %v2657 = vpack.c.bf16 %v2625, %v2624
  %v2658 = vpack.c.bf16 %v2627, %v2626
  %v2659 = vpack.c.bf16 %v2629, %v2628
  %v2660 = vpack.c.bf16 %v2631, %v2630
  %v2661 = vpack.c.bf16 %v2633, %v2632
  %v2662 = vpack.c.bf16 %v2635, %v2634
  %v2663 = vpack.c.bf16 %v2637, %v2636
  %v2664 = vpack.c.bf16 %v2639, %v2638
  %v2665 = vpack.c.bf16 %v2641, %v2640
  %v2666 = vpack.c.bf16 %v2643, %v2642
  %v2667 = vpack.c.bf16 %v2645, %v2644
  %v2668 = vpack.c.bf16 %v2647, %v2646
  %v2669 = vpack.c.bf16 %v2649, %v2648
  %v2670 = vpack.c.bf16 %v2651, %v2650
  %v2671 = vpack.c.bf16 %v2653, %v2652
  %2672 = vset.pattern.permute.xlu0 11
  %2673 = vperm.xlu0 %2672, %v57
  %v2674 = vpop.permute.xlu0 %2673
  %2675 = vset.pattern.permute.xlu0 11
  %2676 = vperm.xlu0 %2675, %v58
  %v2677 = vpop.permute.xlu0 %2676
  %2678 = vset.pattern.permute.xlu0 11
  %2679 = vperm.xlu0 %2678, %v59
  %v2680 = vpop.permute.xlu0 %2679
  %2681 = vset.pattern.permute.xlu0 11
  %2682 = vperm.xlu0 %2681, %v60
  %v2683 = vpop.permute.xlu0 %2682
  %2684 = vset.pattern.permute.xlu0 11
  %2685 = vperm.xlu0 %2684, %v61
  %v2686 = vpop.permute.xlu0 %2685
  %2687 = vset.pattern.permute.xlu0 11
  %2688 = vperm.xlu0 %2687, %v62
  %v2689 = vpop.permute.xlu0 %2688
  %2690 = vset.pattern.permute.xlu0 11
  %2691 = vperm.xlu0 %2690, %v63
  %v2692 = vpop.permute.xlu0 %2691
  %2693 = vset.pattern.permute.xlu0 11
  %2694 = vperm.xlu0 %2693, %v64
  %v2695 = vpop.permute.xlu0 %2694
  %2696 = vset.pattern.permute.xlu0 11
  %2697 = vperm.xlu0 %2696, %v65
  %v2698 = vpop.permute.xlu0 %2697
  %2699 = vset.pattern.permute.xlu0 11
  %2700 = vperm.xlu0 %2699, %v66
  %v2701 = vpop.permute.xlu0 %2700
  %2702 = vset.pattern.permute.xlu0 11
  %2703 = vperm.xlu0 %2702, %v67
  %v2704 = vpop.permute.xlu0 %2703
  %2705 = vset.pattern.permute.xlu0 11
  %2706 = vperm.xlu0 %2705, %v68
  %v2707 = vpop.permute.xlu0 %2706
  %2708 = vset.pattern.permute.xlu0 11
  %2709 = vperm.xlu0 %2708, %v69
  %v2710 = vpop.permute.xlu0 %2709
  %2711 = vset.pattern.permute.xlu0 11
  %2712 = vperm.xlu0 %2711, %v70
  %v2713 = vpop.permute.xlu0 %2712
  %2714 = vset.pattern.permute.xlu0 11
  %2715 = vperm.xlu0 %2714, %v71
  %v2716 = vpop.permute.xlu0 %2715
  %2717 = vset.pattern.permute.xlu0 11
  %2718 = vperm.xlu0 %2717, %v72
  %v2719 = vpop.permute.xlu0 %2718
  %2720 = vset.pattern.permute.xlu0 11
  %2721 = vperm.xlu0 %2720, %v73
  %v2722 = vpop.permute.xlu0 %2721
  %2723 = vset.pattern.permute.xlu0 11
  %2724 = vperm.xlu0 %2723, %v74
  %v2725 = vpop.permute.xlu0 %2724
  %2726 = vset.pattern.permute.xlu0 11
  %2727 = vperm.xlu0 %2726, %v75
  %v2728 = vpop.permute.xlu0 %2727
  %2729 = vset.pattern.permute.xlu0 11
  %2730 = vperm.xlu0 %2729, %v76
  %v2731 = vpop.permute.xlu0 %2730
  %2732 = vset.pattern.permute.xlu0 11
  %2733 = vperm.xlu0 %2732, %v77
  %v2734 = vpop.permute.xlu0 %2733
  %2735 = vset.pattern.permute.xlu0 11
  %2736 = vperm.xlu0 %2735, %v78
  %v2737 = vpop.permute.xlu0 %2736
  %2738 = vset.pattern.permute.xlu0 11
  %2739 = vperm.xlu0 %2738, %v79
  %v2740 = vpop.permute.xlu0 %2739
  %2741 = vset.pattern.permute.xlu0 11
  %2742 = vperm.xlu0 %2741, %v80
  %v2743 = vpop.permute.xlu0 %2742
  %2744 = vset.pattern.permute.xlu0 11
  %2745 = vperm.xlu0 %2744, %v81
  %v2746 = vpop.permute.xlu0 %2745
  %2747 = vset.pattern.permute.xlu0 11
  %2748 = vperm.xlu0 %2747, %v82
  %v2749 = vpop.permute.xlu0 %2748
  %2750 = vset.pattern.permute.xlu0 11
  %2751 = vperm.xlu0 %2750, %v83
  %v2752 = vpop.permute.xlu0 %2751
  %2753 = vset.pattern.permute.xlu0 11
  %2754 = vperm.xlu0 %2753, %v84
  %v2755 = vpop.permute.xlu0 %2754
  %2756 = vset.pattern.permute.xlu0 11
  %2757 = vperm.xlu0 %2756, %v85
  %v2758 = vpop.permute.xlu0 %2757
  %2759 = vset.pattern.permute.xlu0 11
  %2760 = vperm.xlu0 %2759, %v86
  %v2761 = vpop.permute.xlu0 %2760
  %2762 = vset.pattern.permute.xlu0 11
  %2763 = vperm.xlu0 %2762, %v87
  %v2764 = vpop.permute.xlu0 %2763
  %2765 = vset.pattern.permute.xlu0 11
  %2766 = vperm.xlu0 %2765, %v88
  %v2767 = vpop.permute.xlu0 %2766
  %2768 = vset.pattern.permute.xlu0 11
  %2769 = vperm.xlu0 %2768, %v89
  %v2770 = vpop.permute.xlu0 %2769
  %2771 = vset.pattern.permute.xlu0 11
  %2772 = vperm.xlu0 %2771, %v90
  %v2773 = vpop.permute.xlu0 %2772
  %2774 = vset.pattern.permute.xlu0 11
  %2775 = vperm.xlu0 %2774, %v91
  %v2776 = vpop.permute.xlu0 %2775
  %2777 = vset.pattern.permute.xlu0 11
  %2778 = vperm.xlu0 %2777, %v92
  %v2779 = vpop.permute.xlu0 %2778
  %vm2780 = vcmp.eq.s32.totalorder %v2674, %v205
  %vm2781 = vcmp.eq.s32.totalorder %v2677, %v205
  %vm2782 = vcmp.eq.s32.totalorder %v2680, %v205
  %vm2783 = vcmp.eq.s32.totalorder %v2683, %v205
  %vm2784 = vcmp.eq.s32.totalorder %v2686, %v205
  %vm2785 = vcmp.eq.s32.totalorder %v2689, %v205
  %vm2786 = vcmp.eq.s32.totalorder %v2692, %v205
  %vm2787 = vcmp.eq.s32.totalorder %v2695, %v205
  %vm2788 = vcmp.eq.s32.totalorder %v2698, %v205
  %vm2789 = vcmp.eq.s32.totalorder %v2701, %v205
  %vm2790 = vcmp.eq.s32.totalorder %v2704, %v205
  %vm2791 = vcmp.eq.s32.totalorder %v2707, %v205
  %vm2792 = vcmp.eq.s32.totalorder %v2710, %v205
  %vm2793 = vcmp.eq.s32.totalorder %v2713, %v205
  %vm2794 = vcmp.eq.s32.totalorder %v2716, %v205
  %vm2795 = vcmp.eq.s32.totalorder %v2719, %v205
  %vm2796 = vcmp.eq.s32.totalorder %v2722, %v205
  %vm2797 = vcmp.eq.s32.totalorder %v2725, %v205
  %vm2798 = vcmp.eq.s32.totalorder %v2728, %v205
  %vm2799 = vcmp.eq.s32.totalorder %v2731, %v205
  %vm2800 = vcmp.eq.s32.totalorder %v2734, %v205
  %vm2801 = vcmp.eq.s32.totalorder %v2737, %v205
  %vm2802 = vcmp.eq.s32.totalorder %v2740, %v205
  %vm2803 = vcmp.eq.s32.totalorder %v2743, %v205
  %vm2804 = vcmp.eq.s32.totalorder %v2746, %v205
  %vm2805 = vcmp.eq.s32.totalorder %v2749, %v205
  %vm2806 = vcmp.eq.s32.totalorder %v2752, %v205
  %vm2807 = vcmp.eq.s32.totalorder %v2755, %v205
  %vm2808 = vcmp.eq.s32.totalorder %v2758, %v205
  %vm2809 = vcmp.eq.s32.totalorder %v2761, %v205
  %vm2810 = vcmp.eq.s32.totalorder %v2764, %v205
  %vm2811 = vcmp.eq.s32.totalorder %v2767, %v205
  %vm2812 = vcmp.eq.s32.totalorder %v2770, %v205
  %vm2813 = vcmp.eq.s32.totalorder %v2773, %v205
  %vm2814 = vcmp.eq.s32.totalorder %v2776, %v205
  %vm2815 = vcmp.eq.s32.totalorder %v2779, %v205
  %v2816 = vsel %vm2780, 1, 0
  %v2817 = vsel %vm2781, 1, 0
  %v2818 = vsel %vm2782, 1, 0
  %v2819 = vsel %vm2783, 1, 0
  %v2820 = vsel %vm2784, 1, 0
  %v2821 = vsel %vm2785, 1, 0
  %v2822 = vsel %vm2786, 1, 0
  %v2823 = vsel %vm2787, 1, 0
  %v2824 = vsel %vm2788, 1, 0
  %v2825 = vsel %vm2789, 1, 0
  %v2826 = vsel %vm2790, 1, 0
  %v2827 = vsel %vm2791, 1, 0
  %v2828 = vsel %vm2792, 1, 0
  %v2829 = vsel %vm2793, 1, 0
  %v2830 = vsel %vm2794, 1, 0
  %v2831 = vsel %vm2795, 1, 0
  %v2832 = vsel %vm2796, 1, 0
  %v2833 = vsel %vm2797, 1, 0
  %v2834 = vsel %vm2798, 1, 0
  %v2835 = vsel %vm2799, 1, 0
  %v2836 = vsel %vm2800, 1, 0
  %v2837 = vsel %vm2801, 1, 0
  %v2838 = vsel %vm2802, 1, 0
  %v2839 = vsel %vm2803, 1, 0
  %v2840 = vsel %vm2804, 1, 0
  %v2841 = vsel %vm2805, 1, 0
  %v2842 = vsel %vm2806, 1, 0
  %v2843 = vsel %vm2807, 1, 0
  %v2844 = vsel %vm2808, 1, 0
  %v2845 = vsel %vm2809, 1, 0
  %v2846 = vsel %vm2810, 1, 0
  %v2847 = vsel %vm2811, 1, 0
  %v2848 = vsel %vm2812, 1, 0
  %v2849 = vsel %vm2813, 1, 0
  %v2850 = vsel %vm2814, 1, 0
  %v2851 = vsel %vm2815, 1, 0
  %v2852 = vcvt.s32.f32 %v2816
  %v2853 = vcvt.s32.f32 %v2817
  %v2854 = vcvt.s32.f32 %v2818
  %v2855 = vcvt.s32.f32 %v2819
  %v2856 = vcvt.s32.f32 %v2820
  %v2857 = vcvt.s32.f32 %v2821
  %v2858 = vcvt.s32.f32 %v2822
  %v2859 = vcvt.s32.f32 %v2823
  %v2860 = vcvt.s32.f32 %v2824
  %v2861 = vcvt.s32.f32 %v2825
  %v2862 = vcvt.s32.f32 %v2826
  %v2863 = vcvt.s32.f32 %v2827
  %v2864 = vcvt.s32.f32 %v2828
  %v2865 = vcvt.s32.f32 %v2829
  %v2866 = vcvt.s32.f32 %v2830
  %v2867 = vcvt.s32.f32 %v2831
  %v2868 = vcvt.s32.f32 %v2832
  %v2869 = vcvt.s32.f32 %v2833
  %v2870 = vcvt.s32.f32 %v2834
  %v2871 = vcvt.s32.f32 %v2835
  %v2872 = vcvt.s32.f32 %v2836
  %v2873 = vcvt.s32.f32 %v2837
  %v2874 = vcvt.s32.f32 %v2838
  %v2875 = vcvt.s32.f32 %v2839
  %v2876 = vcvt.s32.f32 %v2840
  %v2877 = vcvt.s32.f32 %v2841
  %v2878 = vcvt.s32.f32 %v2842
  %v2879 = vcvt.s32.f32 %v2843
  %v2880 = vcvt.s32.f32 %v2844
  %v2881 = vcvt.s32.f32 %v2845
  %v2882 = vcvt.s32.f32 %v2846
  %v2883 = vcvt.s32.f32 %v2847
  %v2884 = vcvt.s32.f32 %v2848
  %v2885 = vcvt.s32.f32 %v2849
  %v2886 = vcvt.s32.f32 %v2850
  %v2887 = vcvt.s32.f32 %v2851
  %v2888 = vpack.c.bf16 %v2853, %v2852
  %v2889 = vpack.c.bf16 %v2855, %v2854
  %v2890 = vpack.c.bf16 %v2857, %v2856
  %v2891 = vpack.c.bf16 %v2859, %v2858
  %v2892 = vpack.c.bf16 %v2861, %v2860
  %v2893 = vpack.c.bf16 %v2863, %v2862
  %v2894 = vpack.c.bf16 %v2865, %v2864
  %v2895 = vpack.c.bf16 %v2867, %v2866
  %v2896 = vpack.c.bf16 %v2869, %v2868
  %v2897 = vpack.c.bf16 %v2871, %v2870
  %v2898 = vpack.c.bf16 %v2873, %v2872
  %v2899 = vpack.c.bf16 %v2875, %v2874
  %v2900 = vpack.c.bf16 %v2877, %v2876
  %v2901 = vpack.c.bf16 %v2879, %v2878
  %v2902 = vpack.c.bf16 %v2881, %v2880
  %v2903 = vpack.c.bf16 %v2883, %v2882
  %v2904 = vpack.c.bf16 %v2885, %v2884
  %v2905 = vpack.c.bf16 %v2887, %v2886
  %2906 = vset.pattern.permute.xlu0 12
  %2907 = vperm.xlu0 %2906, %v57
  %v2908 = vpop.permute.xlu0 %2907
  %2909 = vset.pattern.permute.xlu0 12
  %2910 = vperm.xlu0 %2909, %v58
  %v2911 = vpop.permute.xlu0 %2910
  %2912 = vset.pattern.permute.xlu0 12
  %2913 = vperm.xlu0 %2912, %v59
  %v2914 = vpop.permute.xlu0 %2913
  %2915 = vset.pattern.permute.xlu0 12
  %2916 = vperm.xlu0 %2915, %v60
  %v2917 = vpop.permute.xlu0 %2916
  %2918 = vset.pattern.permute.xlu0 12
  %2919 = vperm.xlu0 %2918, %v61
  %v2920 = vpop.permute.xlu0 %2919
  %2921 = vset.pattern.permute.xlu0 12
  %2922 = vperm.xlu0 %2921, %v62
  %v2923 = vpop.permute.xlu0 %2922
  %2924 = vset.pattern.permute.xlu0 12
  %2925 = vperm.xlu0 %2924, %v63
  %v2926 = vpop.permute.xlu0 %2925
  %2927 = vset.pattern.permute.xlu0 12
  %2928 = vperm.xlu0 %2927, %v64
  %v2929 = vpop.permute.xlu0 %2928
  %2930 = vset.pattern.permute.xlu0 12
  %2931 = vperm.xlu0 %2930, %v65
  %v2932 = vpop.permute.xlu0 %2931
  %2933 = vset.pattern.permute.xlu0 12
  %2934 = vperm.xlu0 %2933, %v66
  %v2935 = vpop.permute.xlu0 %2934
  %2936 = vset.pattern.permute.xlu0 12
  %2937 = vperm.xlu0 %2936, %v67
  %v2938 = vpop.permute.xlu0 %2937
  %2939 = vset.pattern.permute.xlu0 12
  %2940 = vperm.xlu0 %2939, %v68
  %v2941 = vpop.permute.xlu0 %2940
  %2942 = vset.pattern.permute.xlu0 12
  %2943 = vperm.xlu0 %2942, %v69
  %v2944 = vpop.permute.xlu0 %2943
  %2945 = vset.pattern.permute.xlu0 12
  %2946 = vperm.xlu0 %2945, %v70
  %v2947 = vpop.permute.xlu0 %2946
  %2948 = vset.pattern.permute.xlu0 12
  %2949 = vperm.xlu0 %2948, %v71
  %v2950 = vpop.permute.xlu0 %2949
  %2951 = vset.pattern.permute.xlu0 12
  %2952 = vperm.xlu0 %2951, %v72
  %v2953 = vpop.permute.xlu0 %2952
  %2954 = vset.pattern.permute.xlu0 12
  %2955 = vperm.xlu0 %2954, %v73
  %v2956 = vpop.permute.xlu0 %2955
  %2957 = vset.pattern.permute.xlu0 12
  %2958 = vperm.xlu0 %2957, %v74
  %v2959 = vpop.permute.xlu0 %2958
  %2960 = vset.pattern.permute.xlu0 12
  %2961 = vperm.xlu0 %2960, %v75
  %v2962 = vpop.permute.xlu0 %2961
  %2963 = vset.pattern.permute.xlu0 12
  %2964 = vperm.xlu0 %2963, %v76
  %v2965 = vpop.permute.xlu0 %2964
  %2966 = vset.pattern.permute.xlu0 12
  %2967 = vperm.xlu0 %2966, %v77
  %v2968 = vpop.permute.xlu0 %2967
  %2969 = vset.pattern.permute.xlu0 12
  %2970 = vperm.xlu0 %2969, %v78
  %v2971 = vpop.permute.xlu0 %2970
  %2972 = vset.pattern.permute.xlu0 12
  %2973 = vperm.xlu0 %2972, %v79
  %v2974 = vpop.permute.xlu0 %2973
  %2975 = vset.pattern.permute.xlu0 12
  %2976 = vperm.xlu0 %2975, %v80
  %v2977 = vpop.permute.xlu0 %2976
  %2978 = vset.pattern.permute.xlu0 12
  %2979 = vperm.xlu0 %2978, %v81
  %v2980 = vpop.permute.xlu0 %2979
  %2981 = vset.pattern.permute.xlu0 12
  %2982 = vperm.xlu0 %2981, %v82
  %v2983 = vpop.permute.xlu0 %2982
  %2984 = vset.pattern.permute.xlu0 12
  %2985 = vperm.xlu0 %2984, %v83
  %v2986 = vpop.permute.xlu0 %2985
  %2987 = vset.pattern.permute.xlu0 12
  %2988 = vperm.xlu0 %2987, %v84
  %v2989 = vpop.permute.xlu0 %2988
  %2990 = vset.pattern.permute.xlu0 12
  %2991 = vperm.xlu0 %2990, %v85
  %v2992 = vpop.permute.xlu0 %2991
  %2993 = vset.pattern.permute.xlu0 12
  %2994 = vperm.xlu0 %2993, %v86
  %v2995 = vpop.permute.xlu0 %2994
  %2996 = vset.pattern.permute.xlu0 12
  %2997 = vperm.xlu0 %2996, %v87
  %v2998 = vpop.permute.xlu0 %2997
  %2999 = vset.pattern.permute.xlu0 12
  %3000 = vperm.xlu0 %2999, %v88
  %v3001 = vpop.permute.xlu0 %3000
  %3002 = vset.pattern.permute.xlu0 12
  %3003 = vperm.xlu0 %3002, %v89
  %v3004 = vpop.permute.xlu0 %3003
  %3005 = vset.pattern.permute.xlu0 12
  %3006 = vperm.xlu0 %3005, %v90
  %v3007 = vpop.permute.xlu0 %3006
  %3008 = vset.pattern.permute.xlu0 12
  %3009 = vperm.xlu0 %3008, %v91
  %v3010 = vpop.permute.xlu0 %3009
  %3011 = vset.pattern.permute.xlu0 12
  %3012 = vperm.xlu0 %3011, %v92
  %v3013 = vpop.permute.xlu0 %3012
  %vm3014 = vcmp.eq.s32.totalorder %v2908, %v205
  %vm3015 = vcmp.eq.s32.totalorder %v2911, %v205
  %vm3016 = vcmp.eq.s32.totalorder %v2914, %v205
  %vm3017 = vcmp.eq.s32.totalorder %v2917, %v205
  %vm3018 = vcmp.eq.s32.totalorder %v2920, %v205
  %vm3019 = vcmp.eq.s32.totalorder %v2923, %v205
  %vm3020 = vcmp.eq.s32.totalorder %v2926, %v205
  %vm3021 = vcmp.eq.s32.totalorder %v2929, %v205
  %vm3022 = vcmp.eq.s32.totalorder %v2932, %v205
  %vm3023 = vcmp.eq.s32.totalorder %v2935, %v205
  %vm3024 = vcmp.eq.s32.totalorder %v2938, %v205
  %vm3025 = vcmp.eq.s32.totalorder %v2941, %v205
  %vm3026 = vcmp.eq.s32.totalorder %v2944, %v205
  %vm3027 = vcmp.eq.s32.totalorder %v2947, %v205
  %vm3028 = vcmp.eq.s32.totalorder %v2950, %v205
  %vm3029 = vcmp.eq.s32.totalorder %v2953, %v205
  %vm3030 = vcmp.eq.s32.totalorder %v2956, %v205
  %vm3031 = vcmp.eq.s32.totalorder %v2959, %v205
  %vm3032 = vcmp.eq.s32.totalorder %v2962, %v205
  %vm3033 = vcmp.eq.s32.totalorder %v2965, %v205
  %vm3034 = vcmp.eq.s32.totalorder %v2968, %v205
  %vm3035 = vcmp.eq.s32.totalorder %v2971, %v205
  %vm3036 = vcmp.eq.s32.totalorder %v2974, %v205
  %vm3037 = vcmp.eq.s32.totalorder %v2977, %v205
  %vm3038 = vcmp.eq.s32.totalorder %v2980, %v205
  %vm3039 = vcmp.eq.s32.totalorder %v2983, %v205
  %vm3040 = vcmp.eq.s32.totalorder %v2986, %v205
  %vm3041 = vcmp.eq.s32.totalorder %v2989, %v205
  %vm3042 = vcmp.eq.s32.totalorder %v2992, %v205
  %vm3043 = vcmp.eq.s32.totalorder %v2995, %v205
  %vm3044 = vcmp.eq.s32.totalorder %v2998, %v205
  %vm3045 = vcmp.eq.s32.totalorder %v3001, %v205
  %vm3046 = vcmp.eq.s32.totalorder %v3004, %v205
  %vm3047 = vcmp.eq.s32.totalorder %v3007, %v205
  %vm3048 = vcmp.eq.s32.totalorder %v3010, %v205
  %vm3049 = vcmp.eq.s32.totalorder %v3013, %v205
  %v3050 = vsel %vm3014, 1, 0
  %v3051 = vsel %vm3015, 1, 0
  %v3052 = vsel %vm3016, 1, 0
  %v3053 = vsel %vm3017, 1, 0
  %v3054 = vsel %vm3018, 1, 0
  %v3055 = vsel %vm3019, 1, 0
  %v3056 = vsel %vm3020, 1, 0
  %v3057 = vsel %vm3021, 1, 0
  %v3058 = vsel %vm3022, 1, 0
  %v3059 = vsel %vm3023, 1, 0
  %v3060 = vsel %vm3024, 1, 0
  %v3061 = vsel %vm3025, 1, 0
  %v3062 = vsel %vm3026, 1, 0
  %v3063 = vsel %vm3027, 1, 0
  %v3064 = vsel %vm3028, 1, 0
  %v3065 = vsel %vm3029, 1, 0
  %v3066 = vsel %vm3030, 1, 0
  %v3067 = vsel %vm3031, 1, 0
  %v3068 = vsel %vm3032, 1, 0
  %v3069 = vsel %vm3033, 1, 0
  %v3070 = vsel %vm3034, 1, 0
  %v3071 = vsel %vm3035, 1, 0
  %v3072 = vsel %vm3036, 1, 0
  %v3073 = vsel %vm3037, 1, 0
  %v3074 = vsel %vm3038, 1, 0
  %v3075 = vsel %vm3039, 1, 0
  %v3076 = vsel %vm3040, 1, 0
  %v3077 = vsel %vm3041, 1, 0
  %v3078 = vsel %vm3042, 1, 0
  %v3079 = vsel %vm3043, 1, 0
  %v3080 = vsel %vm3044, 1, 0
  %v3081 = vsel %vm3045, 1, 0
  %v3082 = vsel %vm3046, 1, 0
  %v3083 = vsel %vm3047, 1, 0
  %v3084 = vsel %vm3048, 1, 0
  %v3085 = vsel %vm3049, 1, 0
  %v3086 = vcvt.s32.f32 %v3050
  %v3087 = vcvt.s32.f32 %v3051
  %v3088 = vcvt.s32.f32 %v3052
  %v3089 = vcvt.s32.f32 %v3053
  %v3090 = vcvt.s32.f32 %v3054
  %v3091 = vcvt.s32.f32 %v3055
  %v3092 = vcvt.s32.f32 %v3056
  %v3093 = vcvt.s32.f32 %v3057
  %v3094 = vcvt.s32.f32 %v3058
  %v3095 = vcvt.s32.f32 %v3059
  %v3096 = vcvt.s32.f32 %v3060
  %v3097 = vcvt.s32.f32 %v3061
  %v3098 = vcvt.s32.f32 %v3062
  %v3099 = vcvt.s32.f32 %v3063
  %v3100 = vcvt.s32.f32 %v3064
  %v3101 = vcvt.s32.f32 %v3065
  %v3102 = vcvt.s32.f32 %v3066
  %v3103 = vcvt.s32.f32 %v3067
  %v3104 = vcvt.s32.f32 %v3068
  %v3105 = vcvt.s32.f32 %v3069
  %v3106 = vcvt.s32.f32 %v3070
  %v3107 = vcvt.s32.f32 %v3071
  %v3108 = vcvt.s32.f32 %v3072
  %v3109 = vcvt.s32.f32 %v3073
  %v3110 = vcvt.s32.f32 %v3074
  %v3111 = vcvt.s32.f32 %v3075
  %v3112 = vcvt.s32.f32 %v3076
  %v3113 = vcvt.s32.f32 %v3077
  %v3114 = vcvt.s32.f32 %v3078
  %v3115 = vcvt.s32.f32 %v3079
  %v3116 = vcvt.s32.f32 %v3080
  %v3117 = vcvt.s32.f32 %v3081
  %v3118 = vcvt.s32.f32 %v3082
  %v3119 = vcvt.s32.f32 %v3083
  %v3120 = vcvt.s32.f32 %v3084
  %v3121 = vcvt.s32.f32 %v3085
  %v3122 = vpack.c.bf16 %v3087, %v3086
  %v3123 = vpack.c.bf16 %v3089, %v3088
  %v3124 = vpack.c.bf16 %v3091, %v3090
  %v3125 = vpack.c.bf16 %v3093, %v3092
  %v3126 = vpack.c.bf16 %v3095, %v3094
  %v3127 = vpack.c.bf16 %v3097, %v3096
  %v3128 = vpack.c.bf16 %v3099, %v3098
  %v3129 = vpack.c.bf16 %v3101, %v3100
  %v3130 = vpack.c.bf16 %v3103, %v3102
  %v3131 = vpack.c.bf16 %v3105, %v3104
  %v3132 = vpack.c.bf16 %v3107, %v3106
  %v3133 = vpack.c.bf16 %v3109, %v3108
  %v3134 = vpack.c.bf16 %v3111, %v3110
  %v3135 = vpack.c.bf16 %v3113, %v3112
  %v3136 = vpack.c.bf16 %v3115, %v3114
  %v3137 = vpack.c.bf16 %v3117, %v3116
  %v3138 = vpack.c.bf16 %v3119, %v3118
  %v3139 = vpack.c.bf16 %v3121, %v3120
  %3140 = vset.pattern.permute.xlu0 13
  %3141 = vperm.xlu0 %3140, %v57
  %v3142 = vpop.permute.xlu0 %3141
  %3143 = vset.pattern.permute.xlu0 13
  %3144 = vperm.xlu0 %3143, %v58
  %v3145 = vpop.permute.xlu0 %3144
  %3146 = vset.pattern.permute.xlu0 13
  %3147 = vperm.xlu0 %3146, %v59
  %v3148 = vpop.permute.xlu0 %3147
  %3149 = vset.pattern.permute.xlu0 13
  %3150 = vperm.xlu0 %3149, %v60
  %v3151 = vpop.permute.xlu0 %3150
  %3152 = vset.pattern.permute.xlu0 13
  %3153 = vperm.xlu0 %3152, %v61
  %v3154 = vpop.permute.xlu0 %3153
  %3155 = vset.pattern.permute.xlu0 13
  %3156 = vperm.xlu0 %3155, %v62
  %v3157 = vpop.permute.xlu0 %3156
  %3158 = vset.pattern.permute.xlu0 13
  %3159 = vperm.xlu0 %3158, %v63
  %v3160 = vpop.permute.xlu0 %3159
  %3161 = vset.pattern.permute.xlu0 13
  %3162 = vperm.xlu0 %3161, %v64
  %v3163 = vpop.permute.xlu0 %3162
  %3164 = vset.pattern.permute.xlu0 13
  %3165 = vperm.xlu0 %3164, %v65
  %v3166 = vpop.permute.xlu0 %3165
  %3167 = vset.pattern.permute.xlu0 13
  %3168 = vperm.xlu0 %3167, %v66
  %v3169 = vpop.permute.xlu0 %3168
  %3170 = vset.pattern.permute.xlu0 13
  %3171 = vperm.xlu0 %3170, %v67
  %v3172 = vpop.permute.xlu0 %3171
  %3173 = vset.pattern.permute.xlu0 13
  %3174 = vperm.xlu0 %3173, %v68
  %v3175 = vpop.permute.xlu0 %3174
  %3176 = vset.pattern.permute.xlu0 13
  %3177 = vperm.xlu0 %3176, %v69
  %v3178 = vpop.permute.xlu0 %3177
  %3179 = vset.pattern.permute.xlu0 13
  %3180 = vperm.xlu0 %3179, %v70
  %v3181 = vpop.permute.xlu0 %3180
  %3182 = vset.pattern.permute.xlu0 13
  %3183 = vperm.xlu0 %3182, %v71
  %v3184 = vpop.permute.xlu0 %3183
  %3185 = vset.pattern.permute.xlu0 13
  %3186 = vperm.xlu0 %3185, %v72
  %v3187 = vpop.permute.xlu0 %3186
  %3188 = vset.pattern.permute.xlu0 13
  %3189 = vperm.xlu0 %3188, %v73
  %v3190 = vpop.permute.xlu0 %3189
  %3191 = vset.pattern.permute.xlu0 13
  %3192 = vperm.xlu0 %3191, %v74
  %v3193 = vpop.permute.xlu0 %3192
  %3194 = vset.pattern.permute.xlu0 13
  %3195 = vperm.xlu0 %3194, %v75
  %v3196 = vpop.permute.xlu0 %3195
  %3197 = vset.pattern.permute.xlu0 13
  %3198 = vperm.xlu0 %3197, %v76
  %v3199 = vpop.permute.xlu0 %3198
  %3200 = vset.pattern.permute.xlu0 13
  %3201 = vperm.xlu0 %3200, %v77
  %v3202 = vpop.permute.xlu0 %3201
  %3203 = vset.pattern.permute.xlu0 13
  %3204 = vperm.xlu0 %3203, %v78
  %v3205 = vpop.permute.xlu0 %3204
  %3206 = vset.pattern.permute.xlu0 13
  %3207 = vperm.xlu0 %3206, %v79
  %v3208 = vpop.permute.xlu0 %3207
  %3209 = vset.pattern.permute.xlu0 13
  %3210 = vperm.xlu0 %3209, %v80
  %v3211 = vpop.permute.xlu0 %3210
  %3212 = vset.pattern.permute.xlu0 13
  %3213 = vperm.xlu0 %3212, %v81
  %v3214 = vpop.permute.xlu0 %3213
  %3215 = vset.pattern.permute.xlu0 13
  %3216 = vperm.xlu0 %3215, %v82
  %v3217 = vpop.permute.xlu0 %3216
  %3218 = vset.pattern.permute.xlu0 13
  %3219 = vperm.xlu0 %3218, %v83
  %v3220 = vpop.permute.xlu0 %3219
  %3221 = vset.pattern.permute.xlu0 13
  %3222 = vperm.xlu0 %3221, %v84
  %v3223 = vpop.permute.xlu0 %3222
  %3224 = vset.pattern.permute.xlu0 13
  %3225 = vperm.xlu0 %3224, %v85
  %v3226 = vpop.permute.xlu0 %3225
  %3227 = vset.pattern.permute.xlu0 13
  %3228 = vperm.xlu0 %3227, %v86
  %v3229 = vpop.permute.xlu0 %3228
  %3230 = vset.pattern.permute.xlu0 13
  %3231 = vperm.xlu0 %3230, %v87
  %v3232 = vpop.permute.xlu0 %3231
  %3233 = vset.pattern.permute.xlu0 13
  %3234 = vperm.xlu0 %3233, %v88
  %v3235 = vpop.permute.xlu0 %3234
  %3236 = vset.pattern.permute.xlu0 13
  %3237 = vperm.xlu0 %3236, %v89
  %v3238 = vpop.permute.xlu0 %3237
  %3239 = vset.pattern.permute.xlu0 13
  %3240 = vperm.xlu0 %3239, %v90
  %v3241 = vpop.permute.xlu0 %3240
  %3242 = vset.pattern.permute.xlu0 13
  %3243 = vperm.xlu0 %3242, %v91
  %v3244 = vpop.permute.xlu0 %3243
  %3245 = vset.pattern.permute.xlu0 13
  %3246 = vperm.xlu0 %3245, %v92
  %v3247 = vpop.permute.xlu0 %3246
  %vm3248 = vcmp.eq.s32.totalorder %v3142, %v205
  %vm3249 = vcmp.eq.s32.totalorder %v3145, %v205
  %vm3250 = vcmp.eq.s32.totalorder %v3148, %v205
  %vm3251 = vcmp.eq.s32.totalorder %v3151, %v205
  %vm3252 = vcmp.eq.s32.totalorder %v3154, %v205
  %vm3253 = vcmp.eq.s32.totalorder %v3157, %v205
  %vm3254 = vcmp.eq.s32.totalorder %v3160, %v205
  %vm3255 = vcmp.eq.s32.totalorder %v3163, %v205
  %vm3256 = vcmp.eq.s32.totalorder %v3166, %v205
  %vm3257 = vcmp.eq.s32.totalorder %v3169, %v205
  %vm3258 = vcmp.eq.s32.totalorder %v3172, %v205
  %vm3259 = vcmp.eq.s32.totalorder %v3175, %v205
  %vm3260 = vcmp.eq.s32.totalorder %v3178, %v205
  %vm3261 = vcmp.eq.s32.totalorder %v3181, %v205
  %vm3262 = vcmp.eq.s32.totalorder %v3184, %v205
  %vm3263 = vcmp.eq.s32.totalorder %v3187, %v205
  %vm3264 = vcmp.eq.s32.totalorder %v3190, %v205
  %vm3265 = vcmp.eq.s32.totalorder %v3193, %v205
  %vm3266 = vcmp.eq.s32.totalorder %v3196, %v205
  %vm3267 = vcmp.eq.s32.totalorder %v3199, %v205
  %vm3268 = vcmp.eq.s32.totalorder %v3202, %v205
  %vm3269 = vcmp.eq.s32.totalorder %v3205, %v205
  %vm3270 = vcmp.eq.s32.totalorder %v3208, %v205
  %vm3271 = vcmp.eq.s32.totalorder %v3211, %v205
  %vm3272 = vcmp.eq.s32.totalorder %v3214, %v205
  %vm3273 = vcmp.eq.s32.totalorder %v3217, %v205
  %vm3274 = vcmp.eq.s32.totalorder %v3220, %v205
  %vm3275 = vcmp.eq.s32.totalorder %v3223, %v205
  %vm3276 = vcmp.eq.s32.totalorder %v3226, %v205
  %vm3277 = vcmp.eq.s32.totalorder %v3229, %v205
  %vm3278 = vcmp.eq.s32.totalorder %v3232, %v205
  %vm3279 = vcmp.eq.s32.totalorder %v3235, %v205
  %vm3280 = vcmp.eq.s32.totalorder %v3238, %v205
  %vm3281 = vcmp.eq.s32.totalorder %v3241, %v205
  %vm3282 = vcmp.eq.s32.totalorder %v3244, %v205
  %vm3283 = vcmp.eq.s32.totalorder %v3247, %v205
  %v3284 = vsel %vm3248, 1, 0
  %v3285 = vsel %vm3249, 1, 0
  %v3286 = vsel %vm3250, 1, 0
  %v3287 = vsel %vm3251, 1, 0
  %v3288 = vsel %vm3252, 1, 0
  %v3289 = vsel %vm3253, 1, 0
  %v3290 = vsel %vm3254, 1, 0
  %v3291 = vsel %vm3255, 1, 0
  %v3292 = vsel %vm3256, 1, 0
  %v3293 = vsel %vm3257, 1, 0
  %v3294 = vsel %vm3258, 1, 0
  %v3295 = vsel %vm3259, 1, 0
  %v3296 = vsel %vm3260, 1, 0
  %v3297 = vsel %vm3261, 1, 0
  %v3298 = vsel %vm3262, 1, 0
  %v3299 = vsel %vm3263, 1, 0
  %v3300 = vsel %vm3264, 1, 0
  %v3301 = vsel %vm3265, 1, 0
  %v3302 = vsel %vm3266, 1, 0
  %v3303 = vsel %vm3267, 1, 0
  %v3304 = vsel %vm3268, 1, 0
  %v3305 = vsel %vm3269, 1, 0
  %v3306 = vsel %vm3270, 1, 0
  %v3307 = vsel %vm3271, 1, 0
  %v3308 = vsel %vm3272, 1, 0
  %v3309 = vsel %vm3273, 1, 0
  %v3310 = vsel %vm3274, 1, 0
  %v3311 = vsel %vm3275, 1, 0
  %v3312 = vsel %vm3276, 1, 0
  %v3313 = vsel %vm3277, 1, 0
  %v3314 = vsel %vm3278, 1, 0
  %v3315 = vsel %vm3279, 1, 0
  %v3316 = vsel %vm3280, 1, 0
  %v3317 = vsel %vm3281, 1, 0
  %v3318 = vsel %vm3282, 1, 0
  %v3319 = vsel %vm3283, 1, 0
  %v3320 = vcvt.s32.f32 %v3284
  %v3321 = vcvt.s32.f32 %v3285
  %v3322 = vcvt.s32.f32 %v3286
  %v3323 = vcvt.s32.f32 %v3287
  %v3324 = vcvt.s32.f32 %v3288
  %v3325 = vcvt.s32.f32 %v3289
  %v3326 = vcvt.s32.f32 %v3290
  %v3327 = vcvt.s32.f32 %v3291
  %v3328 = vcvt.s32.f32 %v3292
  %v3329 = vcvt.s32.f32 %v3293
  %v3330 = vcvt.s32.f32 %v3294
  %v3331 = vcvt.s32.f32 %v3295
  %v3332 = vcvt.s32.f32 %v3296
  %v3333 = vcvt.s32.f32 %v3297
  %v3334 = vcvt.s32.f32 %v3298
  %v3335 = vcvt.s32.f32 %v3299
  %v3336 = vcvt.s32.f32 %v3300
  %v3337 = vcvt.s32.f32 %v3301
  %v3338 = vcvt.s32.f32 %v3302
  %v3339 = vcvt.s32.f32 %v3303
  %v3340 = vcvt.s32.f32 %v3304
  %v3341 = vcvt.s32.f32 %v3305
  %v3342 = vcvt.s32.f32 %v3306
  %v3343 = vcvt.s32.f32 %v3307
  %v3344 = vcvt.s32.f32 %v3308
  %v3345 = vcvt.s32.f32 %v3309
  %v3346 = vcvt.s32.f32 %v3310
  %v3347 = vcvt.s32.f32 %v3311
  %v3348 = vcvt.s32.f32 %v3312
  %v3349 = vcvt.s32.f32 %v3313
  %v3350 = vcvt.s32.f32 %v3314
  %v3351 = vcvt.s32.f32 %v3315
  %v3352 = vcvt.s32.f32 %v3316
  %v3353 = vcvt.s32.f32 %v3317
  %v3354 = vcvt.s32.f32 %v3318
  %v3355 = vcvt.s32.f32 %v3319
  %v3356 = vpack.c.bf16 %v3321, %v3320
  %v3357 = vpack.c.bf16 %v3323, %v3322
  %v3358 = vpack.c.bf16 %v3325, %v3324
  %v3359 = vpack.c.bf16 %v3327, %v3326
  %v3360 = vpack.c.bf16 %v3329, %v3328
  %v3361 = vpack.c.bf16 %v3331, %v3330
  %v3362 = vpack.c.bf16 %v3333, %v3332
  %v3363 = vpack.c.bf16 %v3335, %v3334
  %v3364 = vpack.c.bf16 %v3337, %v3336
  %v3365 = vpack.c.bf16 %v3339, %v3338
  %v3366 = vpack.c.bf16 %v3341, %v3340
  %v3367 = vpack.c.bf16 %v3343, %v3342
  %v3368 = vpack.c.bf16 %v3345, %v3344
  %v3369 = vpack.c.bf16 %v3347, %v3346
  %v3370 = vpack.c.bf16 %v3349, %v3348
  %v3371 = vpack.c.bf16 %v3351, %v3350
  %v3372 = vpack.c.bf16 %v3353, %v3352
  %v3373 = vpack.c.bf16 %v3355, %v3354
  %3374 = vset.pattern.permute.xlu0 14
  %3375 = vperm.xlu0 %3374, %v57
  %v3376 = vpop.permute.xlu0 %3375
  %3377 = vset.pattern.permute.xlu0 14
  %3378 = vperm.xlu0 %3377, %v58
  %v3379 = vpop.permute.xlu0 %3378
  %3380 = vset.pattern.permute.xlu0 14
  %3381 = vperm.xlu0 %3380, %v59
  %v3382 = vpop.permute.xlu0 %3381
  %3383 = vset.pattern.permute.xlu0 14
  %3384 = vperm.xlu0 %3383, %v60
  %v3385 = vpop.permute.xlu0 %3384
  %3386 = vset.pattern.permute.xlu0 14
  %3387 = vperm.xlu0 %3386, %v61
  %v3388 = vpop.permute.xlu0 %3387
  %3389 = vset.pattern.permute.xlu0 14
  %3390 = vperm.xlu0 %3389, %v62
  %v3391 = vpop.permute.xlu0 %3390
  %3392 = vset.pattern.permute.xlu0 14
  %3393 = vperm.xlu0 %3392, %v63
  %v3394 = vpop.permute.xlu0 %3393
  %3395 = vset.pattern.permute.xlu0 14
  %3396 = vperm.xlu0 %3395, %v64
  %v3397 = vpop.permute.xlu0 %3396
  %3398 = vset.pattern.permute.xlu0 14
  %3399 = vperm.xlu0 %3398, %v65
  %v3400 = vpop.permute.xlu0 %3399
  %3401 = vset.pattern.permute.xlu0 14
  %3402 = vperm.xlu0 %3401, %v66
  %v3403 = vpop.permute.xlu0 %3402
  %3404 = vset.pattern.permute.xlu0 14
  %3405 = vperm.xlu0 %3404, %v67
  %v3406 = vpop.permute.xlu0 %3405
  %3407 = vset.pattern.permute.xlu0 14
  %3408 = vperm.xlu0 %3407, %v68
  %v3409 = vpop.permute.xlu0 %3408
  %3410 = vset.pattern.permute.xlu0 14
  %3411 = vperm.xlu0 %3410, %v69
  %v3412 = vpop.permute.xlu0 %3411
  %3413 = vset.pattern.permute.xlu0 14
  %3414 = vperm.xlu0 %3413, %v70
  %v3415 = vpop.permute.xlu0 %3414
  %3416 = vset.pattern.permute.xlu0 14
  %3417 = vperm.xlu0 %3416, %v71
  %v3418 = vpop.permute.xlu0 %3417
  %3419 = vset.pattern.permute.xlu0 14
  %3420 = vperm.xlu0 %3419, %v72
  %v3421 = vpop.permute.xlu0 %3420
  %3422 = vset.pattern.permute.xlu0 14
  %3423 = vperm.xlu0 %3422, %v73
  %v3424 = vpop.permute.xlu0 %3423
  %3425 = vset.pattern.permute.xlu0 14
  %3426 = vperm.xlu0 %3425, %v74
  %v3427 = vpop.permute.xlu0 %3426
  %3428 = vset.pattern.permute.xlu0 14
  %3429 = vperm.xlu0 %3428, %v75
  %v3430 = vpop.permute.xlu0 %3429
  %3431 = vset.pattern.permute.xlu0 14
  %3432 = vperm.xlu0 %3431, %v76
  %v3433 = vpop.permute.xlu0 %3432
  %3434 = vset.pattern.permute.xlu0 14
  %3435 = vperm.xlu0 %3434, %v77
  %v3436 = vpop.permute.xlu0 %3435
  %3437 = vset.pattern.permute.xlu0 14
  %3438 = vperm.xlu0 %3437, %v78
  %v3439 = vpop.permute.xlu0 %3438
  %3440 = vset.pattern.permute.xlu0 14
  %3441 = vperm.xlu0 %3440, %v79
  %v3442 = vpop.permute.xlu0 %3441
  %3443 = vset.pattern.permute.xlu0 14
  %3444 = vperm.xlu0 %3443, %v80
  %v3445 = vpop.permute.xlu0 %3444
  %3446 = vset.pattern.permute.xlu0 14
  %3447 = vperm.xlu0 %3446, %v81
  %v3448 = vpop.permute.xlu0 %3447
  %3449 = vset.pattern.permute.xlu0 14
  %3450 = vperm.xlu0 %3449, %v82
  %v3451 = vpop.permute.xlu0 %3450
  %3452 = vset.pattern.permute.xlu0 14
  %3453 = vperm.xlu0 %3452, %v83
  %v3454 = vpop.permute.xlu0 %3453
  %3455 = vset.pattern.permute.xlu0 14
  %3456 = vperm.xlu0 %3455, %v84
  %v3457 = vpop.permute.xlu0 %3456
  %3458 = vset.pattern.permute.xlu0 14
  %3459 = vperm.xlu0 %3458, %v85
  %v3460 = vpop.permute.xlu0 %3459
  %3461 = vset.pattern.permute.xlu0 14
  %3462 = vperm.xlu0 %3461, %v86
  %v3463 = vpop.permute.xlu0 %3462
  %3464 = vset.pattern.permute.xlu0 14
  %3465 = vperm.xlu0 %3464, %v87
  %v3466 = vpop.permute.xlu0 %3465
  %3467 = vset.pattern.permute.xlu0 14
  %3468 = vperm.xlu0 %3467, %v88
  %v3469 = vpop.permute.xlu0 %3468
  %3470 = vset.pattern.permute.xlu0 14
  %3471 = vperm.xlu0 %3470, %v89
  %v3472 = vpop.permute.xlu0 %3471
  %3473 = vset.pattern.permute.xlu0 14
  %3474 = vperm.xlu0 %3473, %v90
  %v3475 = vpop.permute.xlu0 %3474
  %3476 = vset.pattern.permute.xlu0 14
  %3477 = vperm.xlu0 %3476, %v91
  %v3478 = vpop.permute.xlu0 %3477
  %3479 = vset.pattern.permute.xlu0 14
  %3480 = vperm.xlu0 %3479, %v92
  %v3481 = vpop.permute.xlu0 %3480
  %vm3482 = vcmp.eq.s32.totalorder %v3376, %v205
  %vm3483 = vcmp.eq.s32.totalorder %v3379, %v205
  %vm3484 = vcmp.eq.s32.totalorder %v3382, %v205
  %vm3485 = vcmp.eq.s32.totalorder %v3385, %v205
  %vm3486 = vcmp.eq.s32.totalorder %v3388, %v205
  %vm3487 = vcmp.eq.s32.totalorder %v3391, %v205
  %vm3488 = vcmp.eq.s32.totalorder %v3394, %v205
  %vm3489 = vcmp.eq.s32.totalorder %v3397, %v205
  %vm3490 = vcmp.eq.s32.totalorder %v3400, %v205
  %vm3491 = vcmp.eq.s32.totalorder %v3403, %v205
  %vm3492 = vcmp.eq.s32.totalorder %v3406, %v205
  %vm3493 = vcmp.eq.s32.totalorder %v3409, %v205
  %vm3494 = vcmp.eq.s32.totalorder %v3412, %v205
  %vm3495 = vcmp.eq.s32.totalorder %v3415, %v205
  %vm3496 = vcmp.eq.s32.totalorder %v3418, %v205
  %vm3497 = vcmp.eq.s32.totalorder %v3421, %v205
  %vm3498 = vcmp.eq.s32.totalorder %v3424, %v205
  %vm3499 = vcmp.eq.s32.totalorder %v3427, %v205
  %vm3500 = vcmp.eq.s32.totalorder %v3430, %v205
  %vm3501 = vcmp.eq.s32.totalorder %v3433, %v205
  %vm3502 = vcmp.eq.s32.totalorder %v3436, %v205
  %vm3503 = vcmp.eq.s32.totalorder %v3439, %v205
  %vm3504 = vcmp.eq.s32.totalorder %v3442, %v205
  %vm3505 = vcmp.eq.s32.totalorder %v3445, %v205
  %vm3506 = vcmp.eq.s32.totalorder %v3448, %v205
  %vm3507 = vcmp.eq.s32.totalorder %v3451, %v205
  %vm3508 = vcmp.eq.s32.totalorder %v3454, %v205
  %vm3509 = vcmp.eq.s32.totalorder %v3457, %v205
  %vm3510 = vcmp.eq.s32.totalorder %v3460, %v205
  %vm3511 = vcmp.eq.s32.totalorder %v3463, %v205
  %vm3512 = vcmp.eq.s32.totalorder %v3466, %v205
  %vm3513 = vcmp.eq.s32.totalorder %v3469, %v205
  %vm3514 = vcmp.eq.s32.totalorder %v3472, %v205
  %vm3515 = vcmp.eq.s32.totalorder %v3475, %v205
  %vm3516 = vcmp.eq.s32.totalorder %v3478, %v205
  %vm3517 = vcmp.eq.s32.totalorder %v3481, %v205
  %v3518 = vsel %vm3482, 1, 0
  %v3519 = vsel %vm3483, 1, 0
  %v3520 = vsel %vm3484, 1, 0
  %v3521 = vsel %vm3485, 1, 0
  %v3522 = vsel %vm3486, 1, 0
  %v3523 = vsel %vm3487, 1, 0
  %v3524 = vsel %vm3488, 1, 0
  %v3525 = vsel %vm3489, 1, 0
  %v3526 = vsel %vm3490, 1, 0
  %v3527 = vsel %vm3491, 1, 0
  %v3528 = vsel %vm3492, 1, 0
  %v3529 = vsel %vm3493, 1, 0
  %v3530 = vsel %vm3494, 1, 0
  %v3531 = vsel %vm3495, 1, 0
  %v3532 = vsel %vm3496, 1, 0
  %v3533 = vsel %vm3497, 1, 0
  %v3534 = vsel %vm3498, 1, 0
  %v3535 = vsel %vm3499, 1, 0
  %v3536 = vsel %vm3500, 1, 0
  %v3537 = vsel %vm3501, 1, 0
  %v3538 = vsel %vm3502, 1, 0
  %v3539 = vsel %vm3503, 1, 0
  %v3540 = vsel %vm3504, 1, 0
  %v3541 = vsel %vm3505, 1, 0
  %v3542 = vsel %vm3506, 1, 0
  %v3543 = vsel %vm3507, 1, 0
  %v3544 = vsel %vm3508, 1, 0
  %v3545 = vsel %vm3509, 1, 0
  %v3546 = vsel %vm3510, 1, 0
  %v3547 = vsel %vm3511, 1, 0
  %v3548 = vsel %vm3512, 1, 0
  %v3549 = vsel %vm3513, 1, 0
  %v3550 = vsel %vm3514, 1, 0
  %v3551 = vsel %vm3515, 1, 0
  %v3552 = vsel %vm3516, 1, 0
  %v3553 = vsel %vm3517, 1, 0
  %v3554 = vcvt.s32.f32 %v3518
  %v3555 = vcvt.s32.f32 %v3519
  %v3556 = vcvt.s32.f32 %v3520
  %v3557 = vcvt.s32.f32 %v3521
  %v3558 = vcvt.s32.f32 %v3522
  %v3559 = vcvt.s32.f32 %v3523
  %v3560 = vcvt.s32.f32 %v3524
  %v3561 = vcvt.s32.f32 %v3525
  %v3562 = vcvt.s32.f32 %v3526
  %v3563 = vcvt.s32.f32 %v3527
  %v3564 = vcvt.s32.f32 %v3528
  %v3565 = vcvt.s32.f32 %v3529
  %v3566 = vcvt.s32.f32 %v3530
  %v3567 = vcvt.s32.f32 %v3531
  %v3568 = vcvt.s32.f32 %v3532
  %v3569 = vcvt.s32.f32 %v3533
  %v3570 = vcvt.s32.f32 %v3534
  %v3571 = vcvt.s32.f32 %v3535
  %v3572 = vcvt.s32.f32 %v3536
  %v3573 = vcvt.s32.f32 %v3537
  %v3574 = vcvt.s32.f32 %v3538
  %v3575 = vcvt.s32.f32 %v3539
  %v3576 = vcvt.s32.f32 %v3540
  %v3577 = vcvt.s32.f32 %v3541
  %v3578 = vcvt.s32.f32 %v3542
  %v3579 = vcvt.s32.f32 %v3543
  %v3580 = vcvt.s32.f32 %v3544
  %v3581 = vcvt.s32.f32 %v3545
  %v3582 = vcvt.s32.f32 %v3546
  %v3583 = vcvt.s32.f32 %v3547
  %v3584 = vcvt.s32.f32 %v3548
  %v3585 = vcvt.s32.f32 %v3549
  %v3586 = vcvt.s32.f32 %v3550
  %v3587 = vcvt.s32.f32 %v3551
  %v3588 = vcvt.s32.f32 %v3552
  %v3589 = vcvt.s32.f32 %v3553
  %v3590 = vpack.c.bf16 %v3555, %v3554
  %v3591 = vpack.c.bf16 %v3557, %v3556
  %v3592 = vpack.c.bf16 %v3559, %v3558
  %v3593 = vpack.c.bf16 %v3561, %v3560
  %v3594 = vpack.c.bf16 %v3563, %v3562
  %v3595 = vpack.c.bf16 %v3565, %v3564
  %v3596 = vpack.c.bf16 %v3567, %v3566
  %v3597 = vpack.c.bf16 %v3569, %v3568
  %v3598 = vpack.c.bf16 %v3571, %v3570
  %v3599 = vpack.c.bf16 %v3573, %v3572
  %v3600 = vpack.c.bf16 %v3575, %v3574
  %v3601 = vpack.c.bf16 %v3577, %v3576
  %v3602 = vpack.c.bf16 %v3579, %v3578
  %v3603 = vpack.c.bf16 %v3581, %v3580
  %v3604 = vpack.c.bf16 %v3583, %v3582
  %v3605 = vpack.c.bf16 %v3585, %v3584
  %v3606 = vpack.c.bf16 %v3587, %v3586
  %v3607 = vpack.c.bf16 %v3589, %v3588
  %3608 = vset.pattern.permute.xlu0 15
  %3609 = vperm.xlu0 %3608, %v57
  %v3610 = vpop.permute.xlu0 %3609
  %3611 = vset.pattern.permute.xlu0 15
  %3612 = vperm.xlu0 %3611, %v58
  %v3613 = vpop.permute.xlu0 %3612
  %3614 = vset.pattern.permute.xlu0 15
  %3615 = vperm.xlu0 %3614, %v59
  %v3616 = vpop.permute.xlu0 %3615
  %3617 = vset.pattern.permute.xlu0 15
  %3618 = vperm.xlu0 %3617, %v60
  %v3619 = vpop.permute.xlu0 %3618
  %3620 = vset.pattern.permute.xlu0 15
  %3621 = vperm.xlu0 %3620, %v61
  %v3622 = vpop.permute.xlu0 %3621
  %3623 = vset.pattern.permute.xlu0 15
  %3624 = vperm.xlu0 %3623, %v62
  %v3625 = vpop.permute.xlu0 %3624
  %3626 = vset.pattern.permute.xlu0 15
  %3627 = vperm.xlu0 %3626, %v63
  %v3628 = vpop.permute.xlu0 %3627
  %3629 = vset.pattern.permute.xlu0 15
  %3630 = vperm.xlu0 %3629, %v64
  %v3631 = vpop.permute.xlu0 %3630
  %3632 = vset.pattern.permute.xlu0 15
  %3633 = vperm.xlu0 %3632, %v65
  %v3634 = vpop.permute.xlu0 %3633
  %3635 = vset.pattern.permute.xlu0 15
  %3636 = vperm.xlu0 %3635, %v66
  %v3637 = vpop.permute.xlu0 %3636
  %3638 = vset.pattern.permute.xlu0 15
  %3639 = vperm.xlu0 %3638, %v67
  %v3640 = vpop.permute.xlu0 %3639
  %3641 = vset.pattern.permute.xlu0 15
  %3642 = vperm.xlu0 %3641, %v68
  %v3643 = vpop.permute.xlu0 %3642
  %3644 = vset.pattern.permute.xlu0 15
  %3645 = vperm.xlu0 %3644, %v69
  %v3646 = vpop.permute.xlu0 %3645
  %3647 = vset.pattern.permute.xlu0 15
  %3648 = vperm.xlu0 %3647, %v70
  %v3649 = vpop.permute.xlu0 %3648
  %3650 = vset.pattern.permute.xlu0 15
  %3651 = vperm.xlu0 %3650, %v71
  %v3652 = vpop.permute.xlu0 %3651
  %3653 = vset.pattern.permute.xlu0 15
  %3654 = vperm.xlu0 %3653, %v72
  %v3655 = vpop.permute.xlu0 %3654
  %3656 = vset.pattern.permute.xlu0 15
  %3657 = vperm.xlu0 %3656, %v73
  %v3658 = vpop.permute.xlu0 %3657
  %3659 = vset.pattern.permute.xlu0 15
  %3660 = vperm.xlu0 %3659, %v74
  %v3661 = vpop.permute.xlu0 %3660
  %3662 = vset.pattern.permute.xlu0 15
  %3663 = vperm.xlu0 %3662, %v75
  %v3664 = vpop.permute.xlu0 %3663
  %3665 = vset.pattern.permute.xlu0 15
  %3666 = vperm.xlu0 %3665, %v76
  %v3667 = vpop.permute.xlu0 %3666
  %3668 = vset.pattern.permute.xlu0 15
  %3669 = vperm.xlu0 %3668, %v77
  %v3670 = vpop.permute.xlu0 %3669
  %3671 = vset.pattern.permute.xlu0 15
  %3672 = vperm.xlu0 %3671, %v78
  %v3673 = vpop.permute.xlu0 %3672
  %3674 = vset.pattern.permute.xlu0 15
  %3675 = vperm.xlu0 %3674, %v79
  %v3676 = vpop.permute.xlu0 %3675
  %3677 = vset.pattern.permute.xlu0 15
  %3678 = vperm.xlu0 %3677, %v80
  %v3679 = vpop.permute.xlu0 %3678
  %3680 = vset.pattern.permute.xlu0 15
  %3681 = vperm.xlu0 %3680, %v81
  %v3682 = vpop.permute.xlu0 %3681
  %3683 = vset.pattern.permute.xlu0 15
  %3684 = vperm.xlu0 %3683, %v82
  %v3685 = vpop.permute.xlu0 %3684
  %3686 = vset.pattern.permute.xlu0 15
  %3687 = vperm.xlu0 %3686, %v83
  %v3688 = vpop.permute.xlu0 %3687
  %3689 = vset.pattern.permute.xlu0 15
  %3690 = vperm.xlu0 %3689, %v84
  %v3691 = vpop.permute.xlu0 %3690
  %3692 = vset.pattern.permute.xlu0 15
  %3693 = vperm.xlu0 %3692, %v85
  %v3694 = vpop.permute.xlu0 %3693
  %3695 = vset.pattern.permute.xlu0 15
  %3696 = vperm.xlu0 %3695, %v86
  %v3697 = vpop.permute.xlu0 %3696
  %3698 = vset.pattern.permute.xlu0 15
  %3699 = vperm.xlu0 %3698, %v87
  %v3700 = vpop.permute.xlu0 %3699
  %3701 = vset.pattern.permute.xlu0 15
  %3702 = vperm.xlu0 %3701, %v88
  %v3703 = vpop.permute.xlu0 %3702
  %3704 = vset.pattern.permute.xlu0 15
  %3705 = vperm.xlu0 %3704, %v89
  %v3706 = vpop.permute.xlu0 %3705
  %3707 = vset.pattern.permute.xlu0 15
  %3708 = vperm.xlu0 %3707, %v90
  %v3709 = vpop.permute.xlu0 %3708
  %3710 = vset.pattern.permute.xlu0 15
  %3711 = vperm.xlu0 %3710, %v91
  %v3712 = vpop.permute.xlu0 %3711
  %3713 = vset.pattern.permute.xlu0 15
  %3714 = vperm.xlu0 %3713, %v92
  %v3715 = vpop.permute.xlu0 %3714
  %vm3716 = vcmp.eq.s32.totalorder %v3610, %v205
  %vm3717 = vcmp.eq.s32.totalorder %v3613, %v205
  %vm3718 = vcmp.eq.s32.totalorder %v3616, %v205
  %vm3719 = vcmp.eq.s32.totalorder %v3619, %v205
  %vm3720 = vcmp.eq.s32.totalorder %v3622, %v205
  %vm3721 = vcmp.eq.s32.totalorder %v3625, %v205
  %vm3722 = vcmp.eq.s32.totalorder %v3628, %v205
  %vm3723 = vcmp.eq.s32.totalorder %v3631, %v205
  %vm3724 = vcmp.eq.s32.totalorder %v3634, %v205
  %vm3725 = vcmp.eq.s32.totalorder %v3637, %v205
  %vm3726 = vcmp.eq.s32.totalorder %v3640, %v205
  %vm3727 = vcmp.eq.s32.totalorder %v3643, %v205
  %vm3728 = vcmp.eq.s32.totalorder %v3646, %v205
  %vm3729 = vcmp.eq.s32.totalorder %v3649, %v205
  %vm3730 = vcmp.eq.s32.totalorder %v3652, %v205
  %vm3731 = vcmp.eq.s32.totalorder %v3655, %v205
  %vm3732 = vcmp.eq.s32.totalorder %v3658, %v205
  %vm3733 = vcmp.eq.s32.totalorder %v3661, %v205
  %vm3734 = vcmp.eq.s32.totalorder %v3664, %v205
  %vm3735 = vcmp.eq.s32.totalorder %v3667, %v205
  %vm3736 = vcmp.eq.s32.totalorder %v3670, %v205
  %vm3737 = vcmp.eq.s32.totalorder %v3673, %v205
  %vm3738 = vcmp.eq.s32.totalorder %v3676, %v205
  %vm3739 = vcmp.eq.s32.totalorder %v3679, %v205
  %vm3740 = vcmp.eq.s32.totalorder %v3682, %v205
  %vm3741 = vcmp.eq.s32.totalorder %v3685, %v205
  %vm3742 = vcmp.eq.s32.totalorder %v3688, %v205
  %vm3743 = vcmp.eq.s32.totalorder %v3691, %v205
  %vm3744 = vcmp.eq.s32.totalorder %v3694, %v205
  %vm3745 = vcmp.eq.s32.totalorder %v3697, %v205
  %vm3746 = vcmp.eq.s32.totalorder %v3700, %v205
  %vm3747 = vcmp.eq.s32.totalorder %v3703, %v205
  %vm3748 = vcmp.eq.s32.totalorder %v3706, %v205
  %vm3749 = vcmp.eq.s32.totalorder %v3709, %v205
  %vm3750 = vcmp.eq.s32.totalorder %v3712, %v205
  %vm3751 = vcmp.eq.s32.totalorder %v3715, %v205
  %v3752 = vsel %vm3716, 1, 0
  %v3753 = vsel %vm3717, 1, 0
  %v3754 = vsel %vm3718, 1, 0
  %v3755 = vsel %vm3719, 1, 0
  %v3756 = vsel %vm3720, 1, 0
  %v3757 = vsel %vm3721, 1, 0
  %v3758 = vsel %vm3722, 1, 0
  %v3759 = vsel %vm3723, 1, 0
  %v3760 = vsel %vm3724, 1, 0
  %v3761 = vsel %vm3725, 1, 0
  %v3762 = vsel %vm3726, 1, 0
  %v3763 = vsel %vm3727, 1, 0
  %v3764 = vsel %vm3728, 1, 0
  %v3765 = vsel %vm3729, 1, 0
  %v3766 = vsel %vm3730, 1, 0
  %v3767 = vsel %vm3731, 1, 0
  %v3768 = vsel %vm3732, 1, 0
  %v3769 = vsel %vm3733, 1, 0
  %v3770 = vsel %vm3734, 1, 0
  %v3771 = vsel %vm3735, 1, 0
  %v3772 = vsel %vm3736, 1, 0
  %v3773 = vsel %vm3737, 1, 0
  %v3774 = vsel %vm3738, 1, 0
  %v3775 = vsel %vm3739, 1, 0
  %v3776 = vsel %vm3740, 1, 0
  %v3777 = vsel %vm3741, 1, 0
  %v3778 = vsel %vm3742, 1, 0
  %v3779 = vsel %vm3743, 1, 0
  %v3780 = vsel %vm3744, 1, 0
  %v3781 = vsel %vm3745, 1, 0
  %v3782 = vsel %vm3746, 1, 0
  %v3783 = vsel %vm3747, 1, 0
  %v3784 = vsel %vm3748, 1, 0
  %v3785 = vsel %vm3749, 1, 0
  %v3786 = vsel %vm3750, 1, 0
  %v3787 = vsel %vm3751, 1, 0
  %v3788 = vcvt.s32.f32 %v3752
  %v3789 = vcvt.s32.f32 %v3753
  %v3790 = vcvt.s32.f32 %v3754
  %v3791 = vcvt.s32.f32 %v3755
  %v3792 = vcvt.s32.f32 %v3756
  %v3793 = vcvt.s32.f32 %v3757
  %v3794 = vcvt.s32.f32 %v3758
  %v3795 = vcvt.s32.f32 %v3759
  %v3796 = vcvt.s32.f32 %v3760
  %v3797 = vcvt.s32.f32 %v3761
  %v3798 = vcvt.s32.f32 %v3762
  %v3799 = vcvt.s32.f32 %v3763
  %v3800 = vcvt.s32.f32 %v3764
  %v3801 = vcvt.s32.f32 %v3765
  %v3802 = vcvt.s32.f32 %v3766
  %v3803 = vcvt.s32.f32 %v3767
  %v3804 = vcvt.s32.f32 %v3768
  %v3805 = vcvt.s32.f32 %v3769
  %v3806 = vcvt.s32.f32 %v3770
  %v3807 = vcvt.s32.f32 %v3771
  %v3808 = vcvt.s32.f32 %v3772
  %v3809 = vcvt.s32.f32 %v3773
  %v3810 = vcvt.s32.f32 %v3774
  %v3811 = vcvt.s32.f32 %v3775
  %v3812 = vcvt.s32.f32 %v3776
  %v3813 = vcvt.s32.f32 %v3777
  %v3814 = vcvt.s32.f32 %v3778
  %v3815 = vcvt.s32.f32 %v3779
  %v3816 = vcvt.s32.f32 %v3780
  %v3817 = vcvt.s32.f32 %v3781
  %v3818 = vcvt.s32.f32 %v3782
  %v3819 = vcvt.s32.f32 %v3783
  %v3820 = vcvt.s32.f32 %v3784
  %v3821 = vcvt.s32.f32 %v3785
  %v3822 = vcvt.s32.f32 %v3786
  %v3823 = vcvt.s32.f32 %v3787
  %v3824 = vpack.c.bf16 %v3789, %v3788
  %v3825 = vpack.c.bf16 %v3791, %v3790
  %v3826 = vpack.c.bf16 %v3793, %v3792
  %v3827 = vpack.c.bf16 %v3795, %v3794
  %v3828 = vpack.c.bf16 %v3797, %v3796
  %v3829 = vpack.c.bf16 %v3799, %v3798
  %v3830 = vpack.c.bf16 %v3801, %v3800
  %v3831 = vpack.c.bf16 %v3803, %v3802
  %v3832 = vpack.c.bf16 %v3805, %v3804
  %v3833 = vpack.c.bf16 %v3807, %v3806
  %v3834 = vpack.c.bf16 %v3809, %v3808
  %v3835 = vpack.c.bf16 %v3811, %v3810
  %v3836 = vpack.c.bf16 %v3813, %v3812
  %v3837 = vpack.c.bf16 %v3815, %v3814
  %v3838 = vpack.c.bf16 %v3817, %v3816
  %v3839 = vpack.c.bf16 %v3819, %v3818
  %v3840 = vpack.c.bf16 %v3821, %v3820
  %v3841 = vpack.c.bf16 %v3823, %v3822
  %v3842 = vld [vmem:[%s3] sm:$0xf]
  %v3843 = vld [vmem:[%s3 + $0x4] sm:$0xf]
  %v3844 = vld [vmem:[%s3 + $0x8] sm:$0xf]
  %v3845 = vld [vmem:[%s3 + $0xc] sm:$0xf]
  %v3846 = vld [vmem:[%s3 + $0x10] sm:$0xf]
  %v3847 = vld [vmem:[%s3 + $0x14] sm:$0xf]
  %v3848 = vld [vmem:[%s3 + $0x18] sm:$0xf]
  %v3849 = vld [vmem:[%s3 + $0x1c] sm:$0xf]
  %v3850 = vld [vmem:[%s3 + $0x20] sm:$0xf]
  %v3851 = vld [vmem:[%s3 + $0x24] sm:$0xf]
  %v3852 = vld [vmem:[%s3 + $0x28] sm:$0xf]
  %v3853 = vld [vmem:[%s3 + $0x2c] sm:$0xf]
  %v3854 = vld [vmem:[%s3 + $0x30] sm:$0xf]
  %v3855 = vld [vmem:[%s3 + $0x34] sm:$0xf]
  %v3856 = vld [vmem:[%s3 + $0x38] sm:$0xf]
  %v3857 = vld [vmem:[%s3 + $0x3c] sm:$0xf]
  %v3858 = vld [vmem:[%s3 + $0x40] sm:$0xf]
  %v3859 = vld [vmem:[%s3 + $0x44] sm:$0xf]
  %v3860 = vld [vmem:[%s3 + $0x48] sm:$0xf]
  %v3861 = vld [vmem:[%s3 + $0x4c] sm:$0xf]
  %v3862 = vld [vmem:[%s3 + $0x50] sm:$0xf]
  %v3863 = vld [vmem:[%s3 + $0x54] sm:$0xf]
  %v3864 = vld [vmem:[%s3 + $0x58] sm:$0xf]
  %v3865 = vld [vmem:[%s3 + $0x5c] sm:$0xf]
  %v3866 = vld [vmem:[%s3 + $0x60] sm:$0xf]
  %v3867 = vld [vmem:[%s3 + $0x64] sm:$0xf]
  %v3868 = vld [vmem:[%s3 + $0x68] sm:$0xf]
  %v3869 = vld [vmem:[%s3 + $0x6c] sm:$0xf]
  %v3870 = vld [vmem:[%s3 + $0x70] sm:$0xf]
  %v3871 = vld [vmem:[%s3 + $0x74] sm:$0xf]
  %v3872 = vld [vmem:[%s3 + $0x78] sm:$0xf]
  %v3873 = vld [vmem:[%s3 + $0x7c] sm:$0xf]
  %v3874 = vld [vmem:[%s3 + $0x80] sm:$0xf]
  %v3875 = vld [vmem:[%s3 + $0x84] sm:$0xf]
  %v3876 = vld [vmem:[%s3 + $0x88] sm:$0xf]
  %v3877 = vld [vmem:[%s3 + $0x8c] sm:$0xf]
  %v3878 = vld [vmem:[%s3 + $0x90] sm:$0xf]
  %v3879 = vld [vmem:[%s3 + $0x94] sm:$0xf]
  %v3880 = vld [vmem:[%s3 + $0x98] sm:$0xf]
  %v3881 = vld [vmem:[%s3 + $0x9c] sm:$0xf]
  %v3882 = vld [vmem:[%s3 + $0xa0] sm:$0xf]
  %v3883 = vld [vmem:[%s3 + $0xa4] sm:$0xf]
  %v3884 = vld [vmem:[%s3 + $0xa8] sm:$0xf]
  %v3885 = vld [vmem:[%s3 + $0xac] sm:$0xf]
  %v3886 = vld [vmem:[%s3 + $0xb0] sm:$0xf]
  %v3887 = vld [vmem:[%s3 + $0xb4] sm:$0xf]
  %v3888 = vld [vmem:[%s3 + $0xb8] sm:$0xf]
  %v3889 = vld [vmem:[%s3 + $0xbc] sm:$0xf]
  %v3890 = vld [vmem:[%s3 + $0xc0] sm:$0xf]
  %v3891 = vld [vmem:[%s3 + $0xc4] sm:$0xf]
  %v3892 = vld [vmem:[%s3 + $0xc8] sm:$0xf]
  %v3893 = vld [vmem:[%s3 + $0xcc] sm:$0xf]
  %v3894 = vld [vmem:[%s3 + $0xd0] sm:$0xf]
  %v3895 = vld [vmem:[%s3 + $0xd4] sm:$0xf]
  %v3896 = vld [vmem:[%s3 + $0xd8] sm:$0xf]
  %v3897 = vld [vmem:[%s3 + $0xdc] sm:$0xf]
  %v3898 = vld [vmem:[%s3 + $0xe0] sm:$0xf]
  %v3899 = vld [vmem:[%s3 + $0xe4] sm:$0xf]
  %v3900 = vld [vmem:[%s3 + $0xe8] sm:$0xf]
  %v3901 = vld [vmem:[%s3 + $0xec] sm:$0xf]
  %v3902 = vld [vmem:[%s3 + $0xf0] sm:$0xf]
  %v3903 = vld [vmem:[%s3 + $0xf4] sm:$0xf]
  %v3904 = vld [vmem:[%s3 + $0xf8] sm:$0xf]
  %v3905 = vld [vmem:[%s3 + $0xfc] sm:$0xf]
  %v3906 = vld [vmem:[%s3 + $0x100] sm:$0xf]
  %v3907 = vld [vmem:[%s3 + $0x104] sm:$0xf]
  %v3908 = vld [vmem:[%s3 + $0x108] sm:$0xf]
  %v3909 = vld [vmem:[%s3 + $0x10c] sm:$0xf]
  %v3910 = vld [vmem:[%s3 + $0x110] sm:$0xf]
  %v3911 = vld [vmem:[%s3 + $0x114] sm:$0xf]
  %v3912 = vld [vmem:[%s3 + $0x118] sm:$0xf]
  %v3913 = vld [vmem:[%s3 + $0x11c] sm:$0xf]
  %v3914 = vld [vmem:[%s3 + $0x120] sm:$0xf]
  %v3915 = vld [vmem:[%s3 + $0x124] sm:$0xf]
  %v3916 = vld [vmem:[%s3 + $0x128] sm:$0xf]
  %v3917 = vld [vmem:[%s3 + $0x12c] sm:$0xf]
  %v3918 = vld [vmem:[%s3 + $0x130] sm:$0xf]
  %v3919 = vld [vmem:[%s3 + $0x134] sm:$0xf]
  %v3920 = vld [vmem:[%s3 + $0x138] sm:$0xf]
  %v3921 = vld [vmem:[%s3 + $0x13c] sm:$0xf]
  %v3922 = vld [vmem:[%s3 + $0x140] sm:$0xf]
  %v3923 = vld [vmem:[%s3 + $0x144] sm:$0xf]
  %v3924 = vld [vmem:[%s3 + $0x148] sm:$0xf]
  %v3925 = vld [vmem:[%s3 + $0x14c] sm:$0xf]
  %v3926 = vld [vmem:[%s3 + $0x150] sm:$0xf]
  %v3927 = vld [vmem:[%s3 + $0x154] sm:$0xf]
  %v3928 = vld [vmem:[%s3 + $0x158] sm:$0xf]
  %v3929 = vld [vmem:[%s3 + $0x15c] sm:$0xf]
  %v3930 = vld [vmem:[%s3 + $0x160] sm:$0xf]
  %v3931 = vld [vmem:[%s3 + $0x164] sm:$0xf]
  %v3932 = vld [vmem:[%s3 + $0x168] sm:$0xf]
  %v3933 = vld [vmem:[%s3 + $0x16c] sm:$0xf]
  %v3934 = vld [vmem:[%s3 + $0x170] sm:$0xf]
  %v3935 = vld [vmem:[%s3 + $0x174] sm:$0xf]
  %v3936 = vld [vmem:[%s3 + $0x178] sm:$0xf]
  %v3937 = vld [vmem:[%s3 + $0x17c] sm:$0xf]
  %v3938 = vld [vmem:[%s3 + $0x180] sm:$0xf]
  %v3939 = vld [vmem:[%s3 + $0x184] sm:$0xf]
  %v3940 = vld [vmem:[%s3 + $0x188] sm:$0xf]
  %v3941 = vld [vmem:[%s3 + $0x18c] sm:$0xf]
  %v3942 = vld [vmem:[%s3 + $0x190] sm:$0xf]
  %v3943 = vld [vmem:[%s3 + $0x194] sm:$0xf]
  %v3944 = vld [vmem:[%s3 + $0x198] sm:$0xf]
  %v3945 = vld [vmem:[%s3 + $0x19c] sm:$0xf]
  %v3946 = vld [vmem:[%s3 + $0x1a0] sm:$0xf]
  %v3947 = vld [vmem:[%s3 + $0x1a4] sm:$0xf]
  %v3948 = vld [vmem:[%s3 + $0x1a8] sm:$0xf]
  %v3949 = vld [vmem:[%s3 + $0x1ac] sm:$0xf]
  %v3950 = vld [vmem:[%s3 + $0x1b0] sm:$0xf]
  %v3951 = vld [vmem:[%s3 + $0x1b4] sm:$0xf]
  %v3952 = vld [vmem:[%s3 + $0x1b8] sm:$0xf]
  %v3953 = vld [vmem:[%s3 + $0x1bc] sm:$0xf]
  %v3954 = vld [vmem:[%s3 + $0x1c0] sm:$0xf]
  %v3955 = vld [vmem:[%s3 + $0x1c4] sm:$0xf]
  %v3956 = vld [vmem:[%s3 + $0x1c8] sm:$0xf]
  %v3957 = vld [vmem:[%s3 + $0x1cc] sm:$0xf]
  %v3958 = vld [vmem:[%s3 + $0x1d0] sm:$0xf]
  %v3959 = vld [vmem:[%s3 + $0x1d4] sm:$0xf]
  %v3960 = vld [vmem:[%s3 + $0x1d8] sm:$0xf]
  %v3961 = vld [vmem:[%s3 + $0x1dc] sm:$0xf]
  %v3962 = vld [vmem:[%s3 + $0x1e0] sm:$0xf]
  %v3963 = vld [vmem:[%s3 + $0x1e4] sm:$0xf]
  %v3964 = vld [vmem:[%s3 + $0x1e8] sm:$0xf]
  %v3965 = vld [vmem:[%s3 + $0x1ec] sm:$0xf]
  %v3966 = vld [vmem:[%s3 + $0x1f0] sm:$0xf]
  %v3967 = vld [vmem:[%s3 + $0x1f4] sm:$0xf]
  %v3968 = vld [vmem:[%s3 + $0x1f8] sm:$0xf]
  %v3969 = vld [vmem:[%s3 + $0x1fc] sm:$0xf]
  %v3970 = vld [vmem:[%s3 + $0x200] sm:$0xf]
  %v3971 = vld [vmem:[%s3 + $0x204] sm:$0xf]
  %v3972 = vld [vmem:[%s3 + $0x208] sm:$0xf]
  %v3973 = vld [vmem:[%s3 + $0x20c] sm:$0xf]
  %v3974 = vld [vmem:[%s3 + $0x210] sm:$0xf]
  %v3975 = vld [vmem:[%s3 + $0x214] sm:$0xf]
  %v3976 = vld [vmem:[%s3 + $0x218] sm:$0xf]
  %v3977 = vld [vmem:[%s3 + $0x21c] sm:$0xf]
  %v3978 = vld [vmem:[%s3 + $0x220] sm:$0xf]
  %v3979 = vld [vmem:[%s3 + $0x224] sm:$0xf]
  %v3980 = vld [vmem:[%s3 + $0x228] sm:$0xf]
  %v3981 = vld [vmem:[%s3 + $0x22c] sm:$0xf]
  %v3982 = vld [vmem:[%s3 + $0x230] sm:$0xf]
  %v3983 = vld [vmem:[%s3 + $0x234] sm:$0xf]
  %v3984 = vld [vmem:[%s3 + $0x238] sm:$0xf]
  %v3985 = vld [vmem:[%s3 + $0x23c] sm:$0xf]
  %v3986 = vld [vmem:[%s3 + $0x240] sm:$0xf]
  %v3987 = vld [vmem:[%s3 + $0x244] sm:$0xf]
  %v3988 = vld [vmem:[%s3 + $0x248] sm:$0xf]
  %v3989 = vld [vmem:[%s3 + $0x24c] sm:$0xf]
  %v3990 = vld [vmem:[%s3 + $0x250] sm:$0xf]
  %v3991 = vld [vmem:[%s3 + $0x254] sm:$0xf]
  %v3992 = vld [vmem:[%s3 + $0x258] sm:$0xf]
  %v3993 = vld [vmem:[%s3 + $0x25c] sm:$0xf]
  %v3994 = vld [vmem:[%s3 + $0x260] sm:$0xf]
  %v3995 = vld [vmem:[%s3 + $0x264] sm:$0xf]
  %v3996 = vld [vmem:[%s3 + $0x268] sm:$0xf]
  %v3997 = vld [vmem:[%s3 + $0x26c] sm:$0xf]
  %v3998 = vld [vmem:[%s3 + $0x270] sm:$0xf]
  %v3999 = vld [vmem:[%s3 + $0x274] sm:$0xf]
  %v4000 = vld [vmem:[%s3 + $0x278] sm:$0xf]
  %v4001 = vld [vmem:[%s3 + $0x27c] sm:$0xf]
  %v4002 = vld [vmem:[%s3 + $0x280] sm:$0xf]
  %v4003 = vld [vmem:[%s3 + $0x284] sm:$0xf]
  %v4004 = vld [vmem:[%s3 + $0x288] sm:$0xf]
  %v4005 = vld [vmem:[%s3 + $0x28c] sm:$0xf]
  %v4006 = vld [vmem:[%s3 + $0x290] sm:$0xf]
  %v4007 = vld [vmem:[%s3 + $0x294] sm:$0xf]
  %v4008 = vld [vmem:[%s3 + $0x298] sm:$0xf]
  %v4009 = vld [vmem:[%s3 + $0x29c] sm:$0xf]
  %v4010 = vld [vmem:[%s3 + $0x2a0] sm:$0xf]
  %v4011 = vld [vmem:[%s3 + $0x2a4] sm:$0xf]
  %v4012 = vld [vmem:[%s3 + $0x2a8] sm:$0xf]
  %v4013 = vld [vmem:[%s3 + $0x2ac] sm:$0xf]
  %v4014 = vld [vmem:[%s3 + $0x2b0] sm:$0xf]
  %v4015 = vld [vmem:[%s3 + $0x2b4] sm:$0xf]
  %v4016 = vld [vmem:[%s3 + $0x2b8] sm:$0xf]
  %v4017 = vld [vmem:[%s3 + $0x2bc] sm:$0xf]
  %v4018 = vld [vmem:[%s3 + $0x2c0] sm:$0xf]
  %v4019 = vld [vmem:[%s3 + $0x2c4] sm:$0xf]
  %v4020 = vld [vmem:[%s3 + $0x2c8] sm:$0xf]
  %v4021 = vld [vmem:[%s3 + $0x2cc] sm:$0xf]
  %v4022 = vld [vmem:[%s3 + $0x2d0] sm:$0xf]
  %v4023 = vld [vmem:[%s3 + $0x2d4] sm:$0xf]
  %v4024 = vld [vmem:[%s3 + $0x2d8] sm:$0xf]
  %v4025 = vld [vmem:[%s3 + $0x2dc] sm:$0xf]
  %v4026 = vld [vmem:[%s3 + $0x2e0] sm:$0xf]
  %v4027 = vld [vmem:[%s3 + $0x2e4] sm:$0xf]
  %v4028 = vld [vmem:[%s3 + $0x2e8] sm:$0xf]
  %v4029 = vld [vmem:[%s3 + $0x2ec] sm:$0xf]
  %v4030 = vld [vmem:[%s3 + $0x2f0] sm:$0xf]
  %v4031 = vld [vmem:[%s3 + $0x2f4] sm:$0xf]
  %v4032 = vld [vmem:[%s3 + $0x2f8] sm:$0xf]
  %v4033 = vld [vmem:[%s3 + $0x2fc] sm:$0xf]
  %v4034 = vld [vmem:[%s3 + $0x300] sm:$0xf]
  %v4035 = vld [vmem:[%s3 + $0x304] sm:$0xf]
  %v4036 = vld [vmem:[%s3 + $0x308] sm:$0xf]
  %v4037 = vld [vmem:[%s3 + $0x30c] sm:$0xf]
  %v4038 = vld [vmem:[%s3 + $0x310] sm:$0xf]
  %v4039 = vld [vmem:[%s3 + $0x314] sm:$0xf]
  %v4040 = vld [vmem:[%s3 + $0x318] sm:$0xf]
  %v4041 = vld [vmem:[%s3 + $0x31c] sm:$0xf]
  %v4042 = vld [vmem:[%s3 + $0x320] sm:$0xf]
  %v4043 = vld [vmem:[%s3 + $0x324] sm:$0xf]
  %v4044 = vld [vmem:[%s3 + $0x328] sm:$0xf]
  %v4045 = vld [vmem:[%s3 + $0x32c] sm:$0xf]
  %v4046 = vld [vmem:[%s3 + $0x330] sm:$0xf]
  %v4047 = vld [vmem:[%s3 + $0x334] sm:$0xf]
  %v4048 = vld [vmem:[%s3 + $0x338] sm:$0xf]
  %v4049 = vld [vmem:[%s3 + $0x33c] sm:$0xf]
  %v4050 = vld [vmem:[%s3 + $0x340] sm:$0xf]
  %v4051 = vld [vmem:[%s3 + $0x344] sm:$0xf]
  %v4052 = vld [vmem:[%s3 + $0x348] sm:$0xf]
  %v4053 = vld [vmem:[%s3 + $0x34c] sm:$0xf]
  %v4054 = vld [vmem:[%s3 + $0x350] sm:$0xf]
  %v4055 = vld [vmem:[%s3 + $0x354] sm:$0xf]
  %v4056 = vld [vmem:[%s3 + $0x358] sm:$0xf]
  %v4057 = vld [vmem:[%s3 + $0x35c] sm:$0xf]
  %v4058 = vld [vmem:[%s3 + $0x360] sm:$0xf]
  %v4059 = vld [vmem:[%s3 + $0x364] sm:$0xf]
  %v4060 = vld [vmem:[%s3 + $0x368] sm:$0xf]
  %v4061 = vld [vmem:[%s3 + $0x36c] sm:$0xf]
  %v4062 = vld [vmem:[%s3 + $0x370] sm:$0xf]
  %v4063 = vld [vmem:[%s3 + $0x374] sm:$0xf]
  %v4064 = vld [vmem:[%s3 + $0x378] sm:$0xf]
  %v4065 = vld [vmem:[%s3 + $0x37c] sm:$0xf]
  %v4066 = vld [vmem:[%s3 + $0x380] sm:$0xf]
  %v4067 = vld [vmem:[%s3 + $0x384] sm:$0xf]
  %v4068 = vld [vmem:[%s3 + $0x388] sm:$0xf]
  %v4069 = vld [vmem:[%s3 + $0x38c] sm:$0xf]
  %v4070 = vld [vmem:[%s3 + $0x390] sm:$0xf]
  %v4071 = vld [vmem:[%s3 + $0x394] sm:$0xf]
  %v4072 = vld [vmem:[%s3 + $0x398] sm:$0xf]
  %v4073 = vld [vmem:[%s3 + $0x39c] sm:$0xf]
  %v4074 = vld [vmem:[%s3 + $0x3a0] sm:$0xf]
  %v4075 = vld [vmem:[%s3 + $0x3a4] sm:$0xf]
  %v4076 = vld [vmem:[%s3 + $0x3a8] sm:$0xf]
  %v4077 = vld [vmem:[%s3 + $0x3ac] sm:$0xf]
  %v4078 = vld [vmem:[%s3 + $0x3b0] sm:$0xf]
  %v4079 = vld [vmem:[%s3 + $0x3b4] sm:$0xf]
  %v4080 = vld [vmem:[%s3 + $0x3b8] sm:$0xf]
  %v4081 = vld [vmem:[%s3 + $0x3bc] sm:$0xf]
  %v4082 = vld [vmem:[%s3 + $0x3c0] sm:$0xf]
  %v4083 = vld [vmem:[%s3 + $0x3c4] sm:$0xf]
  %v4084 = vld [vmem:[%s3 + $0x3c8] sm:$0xf]
  %v4085 = vld [vmem:[%s3 + $0x3cc] sm:$0xf]
  %v4086 = vld [vmem:[%s3 + $0x3d0] sm:$0xf]
  %v4087 = vld [vmem:[%s3 + $0x3d4] sm:$0xf]
  %v4088 = vld [vmem:[%s3 + $0x3d8] sm:$0xf]
  %v4089 = vld [vmem:[%s3 + $0x3dc] sm:$0xf]
  %v4090 = vld [vmem:[%s3 + $0x3e0] sm:$0xf]
  %v4091 = vld [vmem:[%s3 + $0x3e4] sm:$0xf]
  %v4092 = vld [vmem:[%s3 + $0x3e8] sm:$0xf]
  %v4093 = vld [vmem:[%s3 + $0x3ec] sm:$0xf]
  %v4094 = vld [vmem:[%s3 + $0x3f0] sm:$0xf]
  %v4095 = vld [vmem:[%s3 + $0x3f4] sm:$0xf]
  %v4096 = vld [vmem:[%s3 + $0x3f8] sm:$0xf]
  %v4097 = vld [vmem:[%s3 + $0x3fc] sm:$0xf]
  %v4098 = vld [vmem:[%s4] sm:$0x1]
  %v4100 = vlaneseq
  %v4101 = vshrl.u32 %v4100, 7
  %v4102 = vsub.s32 0, %v4101
  %v4103 = vrot.slane %v4098, %v4102
  %v4361 = vunpack.c.l.b16 %v3842
  %v4362 = vunpack.c.l.b16 %v3843
  %v4363 = vunpack.c.l.b16 %v3844
  %v4364 = vunpack.c.l.b16 %v3845
  %v4365 = vunpack.c.l.b16 %v3846
  %v4366 = vunpack.c.l.b16 %v3847
  %v4367 = vunpack.c.l.b16 %v3848
  %v4368 = vunpack.c.l.b16 %v3849
  %v4369 = vunpack.c.l.b16 %v3850
  %v4370 = vunpack.c.l.b16 %v3851
  %v4371 = vunpack.c.l.b16 %v3852
  %v4372 = vunpack.c.l.b16 %v3853
  %v4373 = vunpack.c.l.b16 %v3854
  %v4374 = vunpack.c.l.b16 %v3855
  %v4375 = vunpack.c.l.b16 %v3856
  %v4376 = vunpack.c.l.b16 %v3857
  %v4377 = vunpack.c.l.b16 %v3858
  %v4378 = vunpack.c.l.b16 %v3859
  %v4379 = vunpack.c.l.b16 %v3860
  %v4380 = vunpack.c.l.b16 %v3861
  %v4381 = vunpack.c.l.b16 %v3862
  %v4382 = vunpack.c.l.b16 %v3863
  %v4383 = vunpack.c.l.b16 %v3864
  %v4384 = vunpack.c.l.b16 %v3865
  %v4385 = vunpack.c.l.b16 %v3866
  %v4386 = vunpack.c.l.b16 %v3867
  %v4387 = vunpack.c.l.b16 %v3868
  %v4388 = vunpack.c.l.b16 %v3869
  %v4389 = vunpack.c.l.b16 %v3870
  %v4390 = vunpack.c.l.b16 %v3871
  %v4391 = vunpack.c.l.b16 %v3872
  %v4392 = vunpack.c.l.b16 %v3873
  %v4393 = vunpack.c.l.b16 %v3874
  %v4394 = vunpack.c.l.b16 %v3875
  %v4395 = vunpack.c.l.b16 %v3876
  %v4396 = vunpack.c.l.b16 %v3877
  %v4397 = vunpack.c.l.b16 %v3878
  %v4398 = vunpack.c.l.b16 %v3879
  %v4399 = vunpack.c.l.b16 %v3880
  %v4400 = vunpack.c.l.b16 %v3881
  %v4401 = vunpack.c.l.b16 %v3882
  %v4402 = vunpack.c.l.b16 %v3883
  %v4403 = vunpack.c.l.b16 %v3884
  %v4404 = vunpack.c.l.b16 %v3885
  %v4405 = vunpack.c.l.b16 %v3886
  %v4406 = vunpack.c.l.b16 %v3887
  %v4407 = vunpack.c.l.b16 %v3888
  %v4408 = vunpack.c.l.b16 %v3889
  %v4409 = vunpack.c.l.b16 %v3890
  %v4410 = vunpack.c.l.b16 %v3891
  %v4411 = vunpack.c.l.b16 %v3892
  %v4412 = vunpack.c.l.b16 %v3893
  %v4413 = vunpack.c.l.b16 %v3894
  %v4414 = vunpack.c.l.b16 %v3895
  %v4415 = vunpack.c.l.b16 %v3896
  %v4416 = vunpack.c.l.b16 %v3897
  %v4417 = vunpack.c.l.b16 %v3898
  %v4418 = vunpack.c.l.b16 %v3899
  %v4419 = vunpack.c.l.b16 %v3900
  %v4420 = vunpack.c.l.b16 %v3901
  %v4421 = vunpack.c.l.b16 %v3902
  %v4422 = vunpack.c.l.b16 %v3903
  %v4423 = vunpack.c.l.b16 %v3904
  %v4424 = vunpack.c.l.b16 %v3905
  %v4425 = vunpack.c.l.b16 %v3906
  %v4426 = vunpack.c.l.b16 %v3907
  %v4427 = vunpack.c.l.b16 %v3908
  %v4428 = vunpack.c.l.b16 %v3909
  %v4429 = vunpack.c.l.b16 %v3910
  %v4430 = vunpack.c.l.b16 %v3911
  %v4431 = vunpack.c.l.b16 %v3912
  %v4432 = vunpack.c.l.b16 %v3913
  %v4433 = vunpack.c.l.b16 %v3914
  %v4434 = vunpack.c.l.b16 %v3915
  %v4435 = vunpack.c.l.b16 %v3916
  %v4436 = vunpack.c.l.b16 %v3917
  %v4437 = vunpack.c.l.b16 %v3918
  %v4438 = vunpack.c.l.b16 %v3919
  %v4439 = vunpack.c.l.b16 %v3920
  %v4440 = vunpack.c.l.b16 %v3921
  %v4441 = vunpack.c.l.b16 %v3922
  %v4442 = vunpack.c.l.b16 %v3923
  %v4443 = vunpack.c.l.b16 %v3924
  %v4444 = vunpack.c.l.b16 %v3925
  %v4445 = vunpack.c.l.b16 %v3926
  %v4446 = vunpack.c.l.b16 %v3927
  %v4447 = vunpack.c.l.b16 %v3928
  %v4448 = vunpack.c.l.b16 %v3929
  %v4449 = vunpack.c.l.b16 %v3930
  %v4450 = vunpack.c.l.b16 %v3931
  %v4451 = vunpack.c.l.b16 %v3932
  %v4452 = vunpack.c.l.b16 %v3933
  %v4453 = vunpack.c.l.b16 %v3934
  %v4454 = vunpack.c.l.b16 %v3935
  %v4455 = vunpack.c.l.b16 %v3936
  %v4456 = vunpack.c.l.b16 %v3937
  %v4457 = vunpack.c.l.b16 %v3938
  %v4458 = vunpack.c.l.b16 %v3939
  %v4459 = vunpack.c.l.b16 %v3940
  %v4460 = vunpack.c.l.b16 %v3941
  %v4461 = vunpack.c.l.b16 %v3942
  %v4462 = vunpack.c.l.b16 %v3943
  %v4463 = vunpack.c.l.b16 %v3944
  %v4464 = vunpack.c.l.b16 %v3945
  %v4465 = vunpack.c.l.b16 %v3946
  %v4466 = vunpack.c.l.b16 %v3947
  %v4467 = vunpack.c.l.b16 %v3948
  %v4468 = vunpack.c.l.b16 %v3949
  %v4469 = vunpack.c.l.b16 %v3950
  %v4470 = vunpack.c.l.b16 %v3951
  %v4471 = vunpack.c.l.b16 %v3952
  %v4472 = vunpack.c.l.b16 %v3953
  %v4473 = vunpack.c.l.b16 %v3954
  %v4474 = vunpack.c.l.b16 %v3955
  %v4475 = vunpack.c.l.b16 %v3956
  %v4476 = vunpack.c.l.b16 %v3957
  %v4477 = vunpack.c.l.b16 %v3958
  %v4478 = vunpack.c.l.b16 %v3959
  %v4479 = vunpack.c.l.b16 %v3960
  %v4480 = vunpack.c.l.b16 %v3961
  %v4481 = vunpack.c.l.b16 %v3962
  %v4482 = vunpack.c.l.b16 %v3963
  %v4483 = vunpack.c.l.b16 %v3964
  %v4484 = vunpack.c.l.b16 %v3965
  %v4485 = vunpack.c.l.b16 %v3966
  %v4486 = vunpack.c.l.b16 %v3967
  %v4487 = vunpack.c.l.b16 %v3968
  %v4488 = vunpack.c.l.b16 %v3969
  %v4489 = vunpack.c.l.b16 %v3970
  %v4490 = vunpack.c.l.b16 %v3971
  %v4491 = vunpack.c.l.b16 %v3972
  %v4492 = vunpack.c.l.b16 %v3973
  %v4493 = vunpack.c.l.b16 %v3974
  %v4494 = vunpack.c.l.b16 %v3975
  %v4495 = vunpack.c.l.b16 %v3976
  %v4496 = vunpack.c.l.b16 %v3977
  %v4497 = vunpack.c.l.b16 %v3978
  %v4498 = vunpack.c.l.b16 %v3979
  %v4499 = vunpack.c.l.b16 %v3980
  %v4500 = vunpack.c.l.b16 %v3981
  %v4501 = vunpack.c.l.b16 %v3982
  %v4502 = vunpack.c.l.b16 %v3983
  %v4503 = vunpack.c.l.b16 %v3984
  %v4504 = vunpack.c.l.b16 %v3985
  %v4505 = vunpack.c.l.b16 %v3986
  %v4506 = vunpack.c.l.b16 %v3987
  %v4507 = vunpack.c.l.b16 %v3988
  %v4508 = vunpack.c.l.b16 %v3989
  %v4509 = vunpack.c.l.b16 %v3990
  %v4510 = vunpack.c.l.b16 %v3991
  %v4511 = vunpack.c.l.b16 %v3992
  %v4512 = vunpack.c.l.b16 %v3993
  %v4513 = vunpack.c.l.b16 %v3994
  %v4514 = vunpack.c.l.b16 %v3995
  %v4515 = vunpack.c.l.b16 %v3996
  %v4516 = vunpack.c.l.b16 %v3997
  %v4517 = vunpack.c.l.b16 %v3998
  %v4518 = vunpack.c.l.b16 %v3999
  %v4519 = vunpack.c.l.b16 %v4000
  %v4520 = vunpack.c.l.b16 %v4001
  %v4521 = vunpack.c.l.b16 %v4002
  %v4522 = vunpack.c.l.b16 %v4003
  %v4523 = vunpack.c.l.b16 %v4004
  %v4524 = vunpack.c.l.b16 %v4005
  %v4525 = vunpack.c.l.b16 %v4006
  %v4526 = vunpack.c.l.b16 %v4007
  %v4527 = vunpack.c.l.b16 %v4008
  %v4528 = vunpack.c.l.b16 %v4009
  %v4529 = vunpack.c.l.b16 %v4010
  %v4530 = vunpack.c.l.b16 %v4011
  %v4531 = vunpack.c.l.b16 %v4012
  %v4532 = vunpack.c.l.b16 %v4013
  %v4533 = vunpack.c.l.b16 %v4014
  %v4534 = vunpack.c.l.b16 %v4015
  %v4535 = vunpack.c.l.b16 %v4016
  %v4536 = vunpack.c.l.b16 %v4017
  %v4537 = vunpack.c.l.b16 %v4018
  %v4538 = vunpack.c.l.b16 %v4019
  %v4539 = vunpack.c.l.b16 %v4020
  %v4540 = vunpack.c.l.b16 %v4021
  %v4541 = vunpack.c.l.b16 %v4022
  %v4542 = vunpack.c.l.b16 %v4023
  %v4543 = vunpack.c.l.b16 %v4024
  %v4544 = vunpack.c.l.b16 %v4025
  %v4545 = vunpack.c.l.b16 %v4026
  %v4546 = vunpack.c.l.b16 %v4027
  %v4547 = vunpack.c.l.b16 %v4028
  %v4548 = vunpack.c.l.b16 %v4029
  %v4549 = vunpack.c.l.b16 %v4030
  %v4550 = vunpack.c.l.b16 %v4031
  %v4551 = vunpack.c.l.b16 %v4032
  %v4552 = vunpack.c.l.b16 %v4033
  %v4553 = vunpack.c.l.b16 %v4034
  %v4554 = vunpack.c.l.b16 %v4035
  %v4555 = vunpack.c.l.b16 %v4036
  %v4556 = vunpack.c.l.b16 %v4037
  %v4557 = vunpack.c.l.b16 %v4038
  %v4558 = vunpack.c.l.b16 %v4039
  %v4559 = vunpack.c.l.b16 %v4040
  %v4560 = vunpack.c.l.b16 %v4041
  %v4561 = vunpack.c.l.b16 %v4042
  %v4562 = vunpack.c.l.b16 %v4043
  %v4563 = vunpack.c.l.b16 %v4044
  %v4564 = vunpack.c.l.b16 %v4045
  %v4565 = vunpack.c.l.b16 %v4046
  %v4566 = vunpack.c.l.b16 %v4047
  %v4567 = vunpack.c.l.b16 %v4048
  %v4568 = vunpack.c.l.b16 %v4049
  %v4569 = vunpack.c.l.b16 %v4050
  %v4570 = vunpack.c.l.b16 %v4051
  %v4571 = vunpack.c.l.b16 %v4052
  %v4572 = vunpack.c.l.b16 %v4053
  %v4573 = vunpack.c.l.b16 %v4054
  %v4574 = vunpack.c.l.b16 %v4055
  %v4575 = vunpack.c.l.b16 %v4056
  %v4576 = vunpack.c.l.b16 %v4057
  %v4577 = vunpack.c.l.b16 %v4058
  %v4578 = vunpack.c.l.b16 %v4059
  %v4579 = vunpack.c.l.b16 %v4060
  %v4580 = vunpack.c.l.b16 %v4061
  %v4581 = vunpack.c.l.b16 %v4062
  %v4582 = vunpack.c.l.b16 %v4063
  %v4583 = vunpack.c.l.b16 %v4064
  %v4584 = vunpack.c.l.b16 %v4065
  %v4585 = vunpack.c.l.b16 %v4066
  %v4586 = vunpack.c.l.b16 %v4067
  %v4587 = vunpack.c.l.b16 %v4068
  %v4588 = vunpack.c.l.b16 %v4069
  %v4589 = vunpack.c.l.b16 %v4070
  %v4590 = vunpack.c.l.b16 %v4071
  %v4591 = vunpack.c.l.b16 %v4072
  %v4592 = vunpack.c.l.b16 %v4073
  %v4593 = vunpack.c.l.b16 %v4074
  %v4594 = vunpack.c.l.b16 %v4075
  %v4595 = vunpack.c.l.b16 %v4076
  %v4596 = vunpack.c.l.b16 %v4077
  %v4597 = vunpack.c.l.b16 %v4078
  %v4598 = vunpack.c.l.b16 %v4079
  %v4599 = vunpack.c.l.b16 %v4080
  %v4600 = vunpack.c.l.b16 %v4081
  %v4601 = vunpack.c.l.b16 %v4082
  %v4602 = vunpack.c.l.b16 %v4083
  %v4603 = vunpack.c.l.b16 %v4084
  %v4604 = vunpack.c.l.b16 %v4085
  %v4605 = vunpack.c.l.b16 %v4086
  %v4606 = vunpack.c.l.b16 %v4087
  %v4607 = vunpack.c.l.b16 %v4088
  %v4608 = vunpack.c.l.b16 %v4089
  %v4609 = vunpack.c.l.b16 %v4090
  %v4610 = vunpack.c.l.b16 %v4091
  %v4611 = vunpack.c.l.b16 %v4092
  %v4612 = vunpack.c.l.b16 %v4093
  %v4613 = vunpack.c.l.b16 %v4094
  %v4614 = vunpack.c.l.b16 %v4095
  %v4615 = vunpack.c.l.b16 %v4096
  %v4616 = vunpack.c.l.b16 %v4097
  %v4617 = vpack.c.b16 %v4362, %v4361
  %v4618 = vpack.c.b16 %v4364, %v4363
  %v4619 = vpack.c.b16 %v4366, %v4365
  %v4620 = vpack.c.b16 %v4368, %v4367
  %v4621 = vpack.c.b16 %v4370, %v4369
  %v4622 = vpack.c.b16 %v4372, %v4371
  %v4623 = vpack.c.b16 %v4374, %v4373
  %v4624 = vpack.c.b16 %v4376, %v4375
  %v4625 = vpack.c.b16 %v4378, %v4377
  %v4626 = vpack.c.b16 %v4380, %v4379
  %v4627 = vpack.c.b16 %v4382, %v4381
  %v4628 = vpack.c.b16 %v4384, %v4383
  %v4629 = vpack.c.b16 %v4386, %v4385
  %v4630 = vpack.c.b16 %v4388, %v4387
  %v4631 = vpack.c.b16 %v4390, %v4389
  %v4632 = vpack.c.b16 %v4392, %v4391
  %v4633 = vpack.c.b16 %v4394, %v4393
  %v4634 = vpack.c.b16 %v4396, %v4395
  %v4635 = vpack.c.b16 %v4398, %v4397
  %v4636 = vpack.c.b16 %v4400, %v4399
  %v4637 = vpack.c.b16 %v4402, %v4401
  %v4638 = vpack.c.b16 %v4404, %v4403
  %v4639 = vpack.c.b16 %v4406, %v4405
  %v4640 = vpack.c.b16 %v4408, %v4407
  %v4641 = vpack.c.b16 %v4410, %v4409
  %v4642 = vpack.c.b16 %v4412, %v4411
  %v4643 = vpack.c.b16 %v4414, %v4413
  %v4644 = vpack.c.b16 %v4416, %v4415
  %v4645 = vpack.c.b16 %v4418, %v4417
  %v4646 = vpack.c.b16 %v4420, %v4419
  %v4647 = vpack.c.b16 %v4422, %v4421
  %v4648 = vpack.c.b16 %v4424, %v4423
  %v4649 = vpack.c.b16 %v4426, %v4425
  %v4650 = vpack.c.b16 %v4428, %v4427
  %v4651 = vpack.c.b16 %v4430, %v4429
  %v4652 = vpack.c.b16 %v4432, %v4431
  %v4653 = vpack.c.b16 %v4434, %v4433
  %v4654 = vpack.c.b16 %v4436, %v4435
  %v4655 = vpack.c.b16 %v4438, %v4437
  %v4656 = vpack.c.b16 %v4440, %v4439
  %v4657 = vpack.c.b16 %v4442, %v4441
  %v4658 = vpack.c.b16 %v4444, %v4443
  %v4659 = vpack.c.b16 %v4446, %v4445
  %v4660 = vpack.c.b16 %v4448, %v4447
  %v4661 = vpack.c.b16 %v4450, %v4449
  %v4662 = vpack.c.b16 %v4452, %v4451
  %v4663 = vpack.c.b16 %v4454, %v4453
  %v4664 = vpack.c.b16 %v4456, %v4455
  %v4665 = vpack.c.b16 %v4458, %v4457
  %v4666 = vpack.c.b16 %v4460, %v4459
  %v4667 = vpack.c.b16 %v4462, %v4461
  %v4668 = vpack.c.b16 %v4464, %v4463
  %v4669 = vpack.c.b16 %v4466, %v4465
  %v4670 = vpack.c.b16 %v4468, %v4467
  %v4671 = vpack.c.b16 %v4470, %v4469
  %v4672 = vpack.c.b16 %v4472, %v4471
  %v4673 = vpack.c.b16 %v4474, %v4473
  %v4674 = vpack.c.b16 %v4476, %v4475
  %v4675 = vpack.c.b16 %v4478, %v4477
  %v4676 = vpack.c.b16 %v4480, %v4479
  %v4677 = vpack.c.b16 %v4482, %v4481
  %v4678 = vpack.c.b16 %v4484, %v4483
  %v4679 = vpack.c.b16 %v4486, %v4485
  %v4680 = vpack.c.b16 %v4488, %v4487
  %v4681 = vpack.c.b16 %v4490, %v4489
  %v4682 = vpack.c.b16 %v4492, %v4491
  %v4683 = vpack.c.b16 %v4494, %v4493
  %v4684 = vpack.c.b16 %v4496, %v4495
  %v4685 = vpack.c.b16 %v4498, %v4497
  %v4686 = vpack.c.b16 %v4500, %v4499
  %v4687 = vpack.c.b16 %v4502, %v4501
  %v4688 = vpack.c.b16 %v4504, %v4503
  %v4689 = vpack.c.b16 %v4506, %v4505
  %v4690 = vpack.c.b16 %v4508, %v4507
  %v4691 = vpack.c.b16 %v4510, %v4509
  %v4692 = vpack.c.b16 %v4512, %v4511
  %v4693 = vpack.c.b16 %v4514, %v4513
  %v4694 = vpack.c.b16 %v4516, %v4515
  %v4695 = vpack.c.b16 %v4518, %v4517
  %v4696 = vpack.c.b16 %v4520, %v4519
  %v4697 = vpack.c.b16 %v4522, %v4521
  %v4698 = vpack.c.b16 %v4524, %v4523
  %v4699 = vpack.c.b16 %v4526, %v4525
  %v4700 = vpack.c.b16 %v4528, %v4527
  %v4701 = vpack.c.b16 %v4530, %v4529
  %v4702 = vpack.c.b16 %v4532, %v4531
  %v4703 = vpack.c.b16 %v4534, %v4533
  %v4704 = vpack.c.b16 %v4536, %v4535
  %v4705 = vpack.c.b16 %v4538, %v4537
  %v4706 = vpack.c.b16 %v4540, %v4539
  %v4707 = vpack.c.b16 %v4542, %v4541
  %v4708 = vpack.c.b16 %v4544, %v4543
  %v4709 = vpack.c.b16 %v4546, %v4545
  %v4710 = vpack.c.b16 %v4548, %v4547
  %v4711 = vpack.c.b16 %v4550, %v4549
  %v4712 = vpack.c.b16 %v4552, %v4551
  %v4713 = vpack.c.b16 %v4554, %v4553
  %v4714 = vpack.c.b16 %v4556, %v4555
  %v4715 = vpack.c.b16 %v4558, %v4557
  %v4716 = vpack.c.b16 %v4560, %v4559
  %v4717 = vpack.c.b16 %v4562, %v4561
  %v4718 = vpack.c.b16 %v4564, %v4563
  %v4719 = vpack.c.b16 %v4566, %v4565
  %v4720 = vpack.c.b16 %v4568, %v4567
  %v4721 = vpack.c.b16 %v4570, %v4569
  %v4722 = vpack.c.b16 %v4572, %v4571
  %v4723 = vpack.c.b16 %v4574, %v4573
  %v4724 = vpack.c.b16 %v4576, %v4575
  %v4725 = vpack.c.b16 %v4578, %v4577
  %v4726 = vpack.c.b16 %v4580, %v4579
  %v4727 = vpack.c.b16 %v4582, %v4581
  %v4728 = vpack.c.b16 %v4584, %v4583
  %v4729 = vpack.c.b16 %v4586, %v4585
  %v4730 = vpack.c.b16 %v4588, %v4587
  %v4731 = vpack.c.b16 %v4590, %v4589
  %v4732 = vpack.c.b16 %v4592, %v4591
  %v4733 = vpack.c.b16 %v4594, %v4593
  %v4734 = vpack.c.b16 %v4596, %v4595
  %v4735 = vpack.c.b16 %v4598, %v4597
  %v4736 = vpack.c.b16 %v4600, %v4599
  %v4737 = vpack.c.b16 %v4602, %v4601
  %v4738 = vpack.c.b16 %v4604, %v4603
  %v4739 = vpack.c.b16 %v4606, %v4605
  %v4740 = vpack.c.b16 %v4608, %v4607
  %v4741 = vpack.c.b16 %v4610, %v4609
  %v4742 = vpack.c.b16 %v4612, %v4611
  %v4743 = vpack.c.b16 %v4614, %v4613
  %v4744 = vpack.c.b16 %v4616, %v4615
  %4873 = vmatprep.subr.bf16.mxu0 0
  %4874 = vmatpush1.bf16.msra.mxu0 %v4617
  %4875 = vmatprep.subr.bf16.mxu0 0
  %4876 = vmatpush1.bf16.msra.mxu0 %v4618
  %4877 = vmatprep.subr.bf16.mxu0 0
  %4878 = vmatpush1.bf16.msra.mxu0 %v4619
  %4879 = vmatprep.subr.bf16.mxu0 0
  %4880 = vmatpush1.bf16.msra.mxu0 %v4620
  %4881 = vmatprep.subr.bf16.mxu0 0
  %4882 = vmatpush1.bf16.msra.mxu0 %v4621
  %4883 = vmatprep.subr.bf16.mxu0 0
  %4884 = vmatpush1.bf16.msra.mxu0 %v4622
  %4885 = vmatprep.subr.bf16.mxu0 0
  %4886 = vmatpush1.bf16.msra.mxu0 %v4623
  %4887 = vmatprep.subr.bf16.mxu0 0
  %4888 = vmatpush1.bf16.msra.mxu0 %v4624
  %4889 = vmatprep.subr.bf16.mxu0 0
  %4890 = vmatpush1.bf16.msra.mxu0 %v4625
  %4891 = vmatprep.subr.bf16.mxu0 0
  %4892 = vmatpush1.bf16.msra.mxu0 %v4626
  %4893 = vmatprep.subr.bf16.mxu0 0
  %4894 = vmatpush1.bf16.msra.mxu0 %v4627
  %4895 = vmatprep.subr.bf16.mxu0 0
  %4896 = vmatpush1.bf16.msra.mxu0 %v4628
  %4897 = vmatprep.subr.bf16.mxu0 0
  %4898 = vmatpush1.bf16.msra.mxu0 %v4629
  %4899 = vmatprep.subr.bf16.mxu0 0
  %4900 = vmatpush1.bf16.msra.mxu0 %v4630
  %4901 = vmatprep.subr.bf16.mxu0 0
  %4902 = vmatpush1.bf16.msra.mxu0 %v4631
  %4903 = vmatprep.subr.bf16.mxu0 0
  %4904 = vmatpush1.bf16.msra.mxu0 %v4632
  %4905 = vmatprep.mubr.bf16.mxu0 %v548
  %4906 = vmatmul.mubr.bf16.gmra.mrb[0].mxu0 %v314
  %v4907 = vpop.f32.mrb[0].mxu0
  %v4908 = vadd.f32 %v4103, %v4907
  %v4909 = vpop.f32.mrb[0].mxu0
  %v4910 = vpop.f32.mrb[0].mxu0
  %v4911 = vadd.f32 %v4103, %v4910
  %v4912 = vpop.f32.mrb[0].mxu0
  %4913 = vmatprep.mubr.bf16.mxu0 %v549
  %4914 = vmatmul.mubr.bf16.gmra.mrb[0].mxu0 %v315
  %v4915 = vpop.f32.mrb[0].mxu0
  %v4916 = vadd.f32 %v4103, %v4915
  %v4917 = vpop.f32.mrb[0].mxu0
  %v4918 = vpop.f32.mrb[0].mxu0
  %v4919 = vadd.f32 %v4103, %v4918
  %v4920 = vpop.f32.mrb[0].mxu0
  %4921 = vmatprep.mubr.bf16.mxu0 %v550
  %4922 = vmatmul.mubr.bf16.gmra.mrb[0].mxu0 %v316
  %v4923 = vpop.f32.mrb[0].mxu0
  %v4924 = vadd.f32 %v4103, %v4923
  %v4925 = vpop.f32.mrb[0].mxu0
  %v4926 = vpop.f32.mrb[0].mxu0
  %v4927 = vadd.f32 %v4103, %v4926
  %v4928 = vpop.f32.mrb[0].mxu0
  %4929 = vmatprep.mubr.bf16.mxu0 %v551
  %4930 = vmatmul.mubr.bf16.gmra.mrb[0].mxu0 %v317
  %v4931 = vpop.f32.mrb[0].mxu0
  %v4932 = vadd.f32 %v4103, %v4931
  %v4933 = vpop.f32.mrb[0].mxu0
  %v4934 = vpop.f32.mrb[0].mxu0
  %v4935 = vadd.f32 %v4103, %v4934
  %v4936 = vpop.f32.mrb[0].mxu0
  %4937 = vmatprep.mubr.bf16.mxu0 %v552
  %4938 = vmatmul.mubr.bf16.gmra.mrb[0].mxu0 %v318
  %v4939 = vpop.f32.mrb[0].mxu0
  %v4940 = vadd.f32 %v4103, %v4939
  %v4941 = vpop.f32.mrb[0].mxu0
  %v4942 = vpop.f32.mrb[0].mxu0
  %v4943 = vadd.f32 %v4103, %v4942
  %v4944 = vpop.f32.mrb[0].mxu0
  %4945 = vmatprep.mubr.bf16.mxu0 %v553
  %4946 = vmatmul.mubr.bf16.gmra.mrb[0].mxu0 %v319
  %v4947 = vpop.f32.mrb[0].mxu0
  %v4948 = vadd.f32 %v4103, %v4947
  %v4949 = vpop.f32.mrb[0].mxu0
  %v4950 = vpop.f32.mrb[0].mxu0
  %v4951 = vadd.f32 %v4103, %v4950
  %v4952 = vpop.f32.mrb[0].mxu0
  %4953 = vmatprep.mubr.bf16.mxu0 %v554
  %4954 = vmatmul.mubr.bf16.gmra.mrb[0].mxu0 %v320
  %v4955 = vpop.f32.mrb[0].mxu0
  %v4956 = vadd.f32 %v4103, %v4955
  %v4957 = vpop.f32.mrb[0].mxu0
  %v4958 = vpop.f32.mrb[0].mxu0
  %v4959 = vadd.f32 %v4103, %v4958
  %v4960 = vpop.f32.mrb[0].mxu0
  %4961 = vmatprep.mubr.bf16.mxu0 %v555
  %4962 = vmatmul.mubr.bf16.gmra.mrb[0].mxu0 %v321
  %v4963 = vpop.f32.mrb[0].mxu0
  %v4964 = vadd.f32 %v4103, %v4963
  %v4965 = vpop.f32.mrb[0].mxu0
  %v4966 = vpop.f32.mrb[0].mxu0
  %v4967 = vadd.f32 %v4103, %v4966
  %v4968 = vpop.f32.mrb[0].mxu0
  %4969 = vmatprep.mubr.bf16.mxu0 %v556
  %4970 = vmatmul.mubr.bf16.gmra.mrb[0].mxu0 %v322
  %v4971 = vpop.f32.mrb[0].mxu0
  %v4972 = vadd.f32 %v4103, %v4971
  %v4973 = vpop.f32.mrb[0].mxu0
  %v4974 = vpop.f32.mrb[0].mxu0
  %v4975 = vadd.f32 %v4103, %v4974
  %v4976 = vpop.f32.mrb[0].mxu0
  %4977 = vmatprep.mubr.bf16.mxu0 %v557
  %4978 = vmatmul.mubr.bf16.gmra.mrb[0].mxu0 %v323
  %v4979 = vpop.f32.mrb[0].mxu0
  %v4980 = vadd.f32 %v4103, %v4979
  %v4981 = vpop.f32.mrb[0].mxu0
  %v4982 = vpop.f32.mrb[0].mxu0
  %v4983 = vadd.f32 %v4103, %v4982
  %v4984 = vpop.f32.mrb[0].mxu0
  %4985 = vmatprep.mubr.bf16.mxu0 %v558
  %4986 = vmatmul.mubr.bf16.gmra.mrb[0].mxu0 %v324
  %v4987 = vpop.f32.mrb[0].mxu0
  %v4988 = vadd.f32 %v4103, %v4987
  %v4989 = vpop.f32.mrb[0].mxu0
  %v4990 = vpop.f32.mrb[0].mxu0
  %v4991 = vadd.f32 %v4103, %v4990
  %v4992 = vpop.f32.mrb[0].mxu0
  %4993 = vmatprep.mubr.bf16.mxu0 %v559
  %4994 = vmatmul.mubr.bf16.gmra.mrb[0].mxu0 %v325
  %v4995 = vpop.f32.mrb[0].mxu0
  %v4996 = vadd.f32 %v4103, %v4995
  %v4997 = vpop.f32.mrb[0].mxu0
  %v4998 = vpop.f32.mrb[0].mxu0
  %v4999 = vadd.f32 %v4103, %v4998
  %v5000 = vpop.f32.mrb[0].mxu0
  %5001 = vmatprep.mubr.bf16.mxu0 %v560
  %5002 = vmatmul.mubr.bf16.gmra.mrb[0].mxu0 %v326
  %v5003 = vpop.f32.mrb[0].mxu0
  %v5004 = vadd.f32 %v4103, %v5003
  %v5005 = vpop.f32.mrb[0].mxu0
  %v5006 = vpop.f32.mrb[0].mxu0
  %v5007 = vadd.f32 %v4103, %v5006
  %v5008 = vpop.f32.mrb[0].mxu0
  %5009 = vmatprep.mubr.bf16.mxu0 %v561
  %5010 = vmatmul.mubr.bf16.gmra.mrb[0].mxu0 %v327
  %v5011 = vpop.f32.mrb[0].mxu0
  %v5012 = vadd.f32 %v4103, %v5011
  %v5013 = vpop.f32.mrb[0].mxu0
  %v5014 = vpop.f32.mrb[0].mxu0
  %v5015 = vadd.f32 %v4103, %v5014
  %v5016 = vpop.f32.mrb[0].mxu0
  %5017 = vmatprep.mubr.bf16.mxu0 %v562
  %5018 = vmatmul.mubr.bf16.gmra.mrb[0].mxu0 %v328
  %v5019 = vpop.f32.mrb[0].mxu0
  %v5020 = vadd.f32 %v4103, %v5019
  %v5021 = vpop.f32.mrb[0].mxu0
  %v5022 = vpop.f32.mrb[0].mxu0
  %v5023 = vadd.f32 %v4103, %v5022
  %v5024 = vpop.f32.mrb[0].mxu0
  %5025 = vmatprep.mubr.bf16.mxu0 %v563
  %5026 = vmatmul.mubr.bf16.gmra.mrb[0].mxu0 %v329
  %v5027 = vpop.f32.mrb[0].mxu0
  %v5028 = vadd.f32 %v4103, %v5027
  %v5029 = vpop.f32.mrb[0].mxu0
  %v5030 = vpop.f32.mrb[0].mxu0
  %v5031 = vadd.f32 %v4103, %v5030
  %v5032 = vpop.f32.mrb[0].mxu0
  %5033 = vmatprep.mubr.bf16.mxu0 %v564
  %5034 = vmatmul.mubr.bf16.gmra.mrb[0].mxu0 %v330
  %v5035 = vpop.f32.mrb[0].mxu0
  %v5036 = vadd.f32 %v4103, %v5035
  %v5037 = vpop.f32.mrb[0].mxu0
  %v5038 = vpop.f32.mrb[0].mxu0
  %v5039 = vadd.f32 %v4103, %v5038
  %v5040 = vpop.f32.mrb[0].mxu0
  %5041 = vmatprep.mubr.bf16.mxu0 %v565
  %5042 = vmatmul.mubr.bf16.gmra.mrb[0].mxu0 %v331
  %v5043 = vpop.f32.mrb[0].mxu0
  %v5044 = vadd.f32 %v4103, %v5043
  %v5045 = vpop.f32.mrb[0].mxu0
  %v5046 = vpop.f32.mrb[0].mxu0
  %v5047 = vadd.f32 %v4103, %v5046
  %v5048 = vpop.f32.mrb[0].mxu0
  %5049 = vdwg.mxu0
  %5050 = vmatprep.subr.bf16.mxu0 0
  %5051 = vmatpush1.bf16.msra.mxu0 %v4633
  %5052 = vmatprep.subr.bf16.mxu0 0
  %5053 = vmatpush1.bf16.msra.mxu0 %v4634
  %5054 = vmatprep.subr.bf16.mxu0 0
  %5055 = vmatpush1.bf16.msra.mxu0 %v4635
  %5056 = vmatprep.subr.bf16.mxu0 0
  %5057 = vmatpush1.bf16.msra.mxu0 %v4636
  %5058 = vmatprep.subr.bf16.mxu0 0
  %5059 = vmatpush1.bf16.msra.mxu0 %v4637
  %5060 = vmatprep.subr.bf16.mxu0 0
  %5061 = vmatpush1.bf16.msra.mxu0 %v4638
  %5062 = vmatprep.subr.bf16.mxu0 0
  %5063 = vmatpush1.bf16.msra.mxu0 %v4639
  %5064 = vmatprep.subr.bf16.mxu0 0
  %5065 = vmatpush1.bf16.msra.mxu0 %v4640
  %5066 = vmatprep.subr.bf16.mxu0 0
  %5067 = vmatpush1.bf16.msra.mxu0 %v4641
  %5068 = vmatprep.subr.bf16.mxu0 0
  %5069 = vmatpush1.bf16.msra.mxu0 %v4642
  %5070 = vmatprep.subr.bf16.mxu0 0
  %5071 = vmatpush1.bf16.msra.mxu0 %v4643
  %5072 = vmatprep.subr.bf16.mxu0 0
  %5073 = vmatpush1.bf16.msra.mxu0 %v4644
  %5074 = vmatprep.subr.bf16.mxu0 0
  %5075 = vmatpush1.bf16.msra.mxu0 %v4645
  %5076 = vmatprep.subr.bf16.mxu0 0
  %5077 = vmatpush1.bf16.msra.mxu0 %v4646
  %5078 = vmatprep.subr.bf16.mxu0 0
  %5079 = vmatpush1.bf16.msra.mxu0 %v4647
  %5080 = vmatprep.subr.bf16.mxu0 0
  %5081 = vmatpush1.bf16.msra.mxu0 %v4648
  %5082 = vmatprep.mubr.bf16.mxu0 %v1016
  %5083 = vmatmul.mubr.bf16.gmra.mrb[0].mxu0 %v782
  %v5084 = vpop.f32.mrb[0].mxu0
  %v5085 = vadd.f32 %v4908, %v5084
  %v5086 = vpop.f32.mrb[0].mxu0
  %v5087 = vpop.f32.mrb[0].mxu0
  %v5088 = vadd.f32 %v4911, %v5087
  %v5089 = vpop.f32.mrb[0].mxu0
  %5090 = vmatprep.mubr.bf16.mxu0 %v1017
  %5091 = vmatmul.mubr.bf16.gmra.mrb[0].mxu0 %v783
  %v5092 = vpop.f32.mrb[0].mxu0
  %v5093 = vadd.f32 %v4916, %v5092
  %v5094 = vpop.f32.mrb[0].mxu0
  %v5095 = vpop.f32.mrb[0].mxu0
  %v5096 = vadd.f32 %v4919, %v5095
  %v5097 = vpop.f32.mrb[0].mxu0
  %5098 = vmatprep.mubr.bf16.mxu0 %v1018
  %5099 = vmatmul.mubr.bf16.gmra.mrb[0].mxu0 %v784
  %v5100 = vpop.f32.mrb[0].mxu0
  %v5101 = vadd.f32 %v4924, %v5100
  %v5102 = vpop.f32.mrb[0].mxu0
  %v5103 = vpop.f32.mrb[0].mxu0
  %v5104 = vadd.f32 %v4927, %v5103
  %v5105 = vpop.f32.mrb[0].mxu0
  %5106 = vmatprep.mubr.bf16.mxu0 %v1019
  %5107 = vmatmul.mubr.bf16.gmra.mrb[0].mxu0 %v785
  %v5108 = vpop.f32.mrb[0].mxu0
  %v5109 = vadd.f32 %v4932, %v5108
  %v5110 = vpop.f32.mrb[0].mxu0
  %v5111 = vpop.f32.mrb[0].mxu0
  %v5112 = vadd.f32 %v4935, %v5111
  %v5113 = vpop.f32.mrb[0].mxu0
  %5114 = vmatprep.mubr.bf16.mxu0 %v1020
  %5115 = vmatmul.mubr.bf16.gmra.mrb[0].mxu0 %v786
  %v5116 = vpop.f32.mrb[0].mxu0
  %v5117 = vadd.f32 %v4940, %v5116
  %v5118 = vpop.f32.mrb[0].mxu0
  %v5119 = vpop.f32.mrb[0].mxu0
  %v5120 = vadd.f32 %v4943, %v5119
  %v5121 = vpop.f32.mrb[0].mxu0
  %5122 = vmatprep.mubr.bf16.mxu0 %v1021
  %5123 = vmatmul.mubr.bf16.gmra.mrb[0].mxu0 %v787
  %v5124 = vpop.f32.mrb[0].mxu0
  %v5125 = vadd.f32 %v4948, %v5124
  %v5126 = vpop.f32.mrb[0].mxu0
  %v5127 = vpop.f32.mrb[0].mxu0
  %v5128 = vadd.f32 %v4951, %v5127
  %v5129 = vpop.f32.mrb[0].mxu0
  %5130 = vmatprep.mubr.bf16.mxu0 %v1022
  %5131 = vmatmul.mubr.bf16.gmra.mrb[0].mxu0 %v788
  %v5132 = vpop.f32.mrb[0].mxu0
  %v5133 = vadd.f32 %v4956, %v5132
  %v5134 = vpop.f32.mrb[0].mxu0
  %v5135 = vpop.f32.mrb[0].mxu0
  %v5136 = vadd.f32 %v4959, %v5135
  %v5137 = vpop.f32.mrb[0].mxu0
  %5138 = vmatprep.mubr.bf16.mxu0 %v1023
  %5139 = vmatmul.mubr.bf16.gmra.mrb[0].mxu0 %v789
  %v5140 = vpop.f32.mrb[0].mxu0
  %v5141 = vadd.f32 %v4964, %v5140
  %v5142 = vpop.f32.mrb[0].mxu0
  %v5143 = vpop.f32.mrb[0].mxu0
  %v5144 = vadd.f32 %v4967, %v5143
  %v5145 = vpop.f32.mrb[0].mxu0
  %5146 = vmatprep.mubr.bf16.mxu0 %v1024
  %5147 = vmatmul.mubr.bf16.gmra.mrb[0].mxu0 %v790
  %v5148 = vpop.f32.mrb[0].mxu0
  %v5149 = vadd.f32 %v4972, %v5148
  %v5150 = vpop.f32.mrb[0].mxu0
  %v5151 = vpop.f32.mrb[0].mxu0
  %v5152 = vadd.f32 %v4975, %v5151
  %v5153 = vpop.f32.mrb[0].mxu0
  %5154 = vmatprep.mubr.bf16.mxu0 %v1025
  %5155 = vmatmul.mubr.bf16.gmra.mrb[0].mxu0 %v791
  %v5156 = vpop.f32.mrb[0].mxu0
  %v5157 = vadd.f32 %v4980, %v5156
  %v5158 = vpop.f32.mrb[0].mxu0
  %v5159 = vpop.f32.mrb[0].mxu0
  %v5160 = vadd.f32 %v4983, %v5159
  %v5161 = vpop.f32.mrb[0].mxu0
  %5162 = vmatprep.mubr.bf16.mxu0 %v1026
  %5163 = vmatmul.mubr.bf16.gmra.mrb[0].mxu0 %v792
  %v5164 = vpop.f32.mrb[0].mxu0
  %v5165 = vadd.f32 %v4988, %v5164
  %v5166 = vpop.f32.mrb[0].mxu0
  %v5167 = vpop.f32.mrb[0].mxu0
  %v5168 = vadd.f32 %v4991, %v5167
  %v5169 = vpop.f32.mrb[0].mxu0
  %5170 = vmatprep.mubr.bf16.mxu0 %v1027
  %5171 = vmatmul.mubr.bf16.gmra.mrb[0].mxu0 %v793
  %v5172 = vpop.f32.mrb[0].mxu0
  %v5173 = vadd.f32 %v4996, %v5172
  %v5174 = vpop.f32.mrb[0].mxu0
  %v5175 = vpop.f32.mrb[0].mxu0
  %v5176 = vadd.f32 %v4999, %v5175
  %v5177 = vpop.f32.mrb[0].mxu0
  %5178 = vmatprep.mubr.bf16.mxu0 %v1028
  %5179 = vmatmul.mubr.bf16.gmra.mrb[0].mxu0 %v794
  %v5180 = vpop.f32.mrb[0].mxu0
  %v5181 = vadd.f32 %v5004, %v5180
  %v5182 = vpop.f32.mrb[0].mxu0
  %v5183 = vpop.f32.mrb[0].mxu0
  %v5184 = vadd.f32 %v5007, %v5183
  %v5185 = vpop.f32.mrb[0].mxu0
  %5186 = vmatprep.mubr.bf16.mxu0 %v1029
  %5187 = vmatmul.mubr.bf16.gmra.mrb[0].mxu0 %v795
  %v5188 = vpop.f32.mrb[0].mxu0
  %v5189 = vadd.f32 %v5012, %v5188
  %v5190 = vpop.f32.mrb[0].mxu0
  %v5191 = vpop.f32.mrb[0].mxu0
  %v5192 = vadd.f32 %v5015, %v5191
  %v5193 = vpop.f32.mrb[0].mxu0
  %5194 = vmatprep.mubr.bf16.mxu0 %v1030
  %5195 = vmatmul.mubr.bf16.gmra.mrb[0].mxu0 %v796
  %v5196 = vpop.f32.mrb[0].mxu0
  %v5197 = vadd.f32 %v5020, %v5196
  %v5198 = vpop.f32.mrb[0].mxu0
  %v5199 = vpop.f32.mrb[0].mxu0
  %v5200 = vadd.f32 %v5023, %v5199
  %v5201 = vpop.f32.mrb[0].mxu0
  %5202 = vmatprep.mubr.bf16.mxu0 %v1031
  %5203 = vmatmul.mubr.bf16.gmra.mrb[0].mxu0 %v797
  %v5204 = vpop.f32.mrb[0].mxu0
  %v5205 = vadd.f32 %v5028, %v5204
  %v5206 = vpop.f32.mrb[0].mxu0
  %v5207 = vpop.f32.mrb[0].mxu0
  %v5208 = vadd.f32 %v5031, %v5207
  %v5209 = vpop.f32.mrb[0].mxu0
  %5210 = vmatprep.mubr.bf16.mxu0 %v1032
  %5211 = vmatmul.mubr.bf16.gmra.mrb[0].mxu0 %v798
  %v5212 = vpop.f32.mrb[0].mxu0
  %v5213 = vadd.f32 %v5036, %v5212
  %v5214 = vpop.f32.mrb[0].mxu0
  %v5215 = vpop.f32.mrb[0].mxu0
  %v5216 = vadd.f32 %v5039, %v5215
  %v5217 = vpop.f32.mrb[0].mxu0
  %5218 = vmatprep.mubr.bf16.mxu0 %v1033
  %5219 = vmatmul.mubr.bf16.gmra.mrb[0].mxu0 %v799
  %v5220 = vpop.f32.mrb[0].mxu0
  %v5221 = vadd.f32 %v5044, %v5220
  %v5222 = vpop.f32.mrb[0].mxu0
  %v5223 = vpop.f32.mrb[0].mxu0
  %v5224 = vadd.f32 %v5047, %v5223
  %v5225 = vpop.f32.mrb[0].mxu0
  %5226 = vdwg.mxu0
  %5227 = vmatprep.subr.bf16.mxu0 0
  %5228 = vmatpush1.bf16.msra.mxu0 %v4649
  %5229 = vmatprep.subr.bf16.mxu0 0
  %5230 = vmatpush1.bf16.msra.mxu0 %v4650
  %5231 = vmatprep.subr.bf16.mxu0 0
  %5232 = vmatpush1.bf16.msra.mxu0 %v4651
  %5233 = vmatprep.subr.bf16.mxu0 0
  %5234 = vmatpush1.bf16.msra.mxu0 %v4652
  %5235 = vmatprep.subr.bf16.mxu0 0
  %5236 = vmatpush1.bf16.msra.mxu0 %v4653
  %5237 = vmatprep.subr.bf16.mxu0 0
  %5238 = vmatpush1.bf16.msra.mxu0 %v4654
  %5239 = vmatprep.subr.bf16.mxu0 0
  %5240 = vmatpush1.bf16.msra.mxu0 %v4655
  %5241 = vmatprep.subr.bf16.mxu0 0
  %5242 = vmatpush1.bf16.msra.mxu0 %v4656
  %5243 = vmatprep.subr.bf16.mxu0 0
  %5244 = vmatpush1.bf16.msra.mxu0 %v4657
  %5245 = vmatprep.subr.bf16.mxu0 0
  %5246 = vmatpush1.bf16.msra.mxu0 %v4658
  %5247 = vmatprep.subr.bf16.mxu0 0
  %5248 = vmatpush1.bf16.msra.mxu0 %v4659
  %5249 = vmatprep.subr.bf16.mxu0 0
  %5250 = vmatpush1.bf16.msra.mxu0 %v4660
  %5251 = vmatprep.subr.bf16.mxu0 0
  %5252 = vmatpush1.bf16.msra.mxu0 %v4661
  %5253 = vmatprep.subr.bf16.mxu0 0
  %5254 = vmatpush1.bf16.msra.mxu0 %v4662
  %5255 = vmatprep.subr.bf16.mxu0 0
  %5256 = vmatpush1.bf16.msra.mxu0 %v4663
  %5257 = vmatprep.subr.bf16.mxu0 0
  %5258 = vmatpush1.bf16.msra.mxu0 %v4664
  %5259 = vmatprep.mubr.bf16.mxu0 %v1484
  %5260 = vmatmul.mubr.bf16.gmra.mrb[0].mxu0 %v1250
  %v5261 = vpop.f32.mrb[0].mxu0
  %v5262 = vadd.f32 %v5085, %v5261
  %v5263 = vpop.f32.mrb[0].mxu0
  %v5264 = vpop.f32.mrb[0].mxu0
  %v5265 = vadd.f32 %v5088, %v5264
  %v5266 = vpop.f32.mrb[0].mxu0
  %5267 = vmatprep.mubr.bf16.mxu0 %v1485
  %5268 = vmatmul.mubr.bf16.gmra.mrb[0].mxu0 %v1251
  %v5269 = vpop.f32.mrb[0].mxu0
  %v5270 = vadd.f32 %v5093, %v5269
  %v5271 = vpop.f32.mrb[0].mxu0
  %v5272 = vpop.f32.mrb[0].mxu0
  %v5273 = vadd.f32 %v5096, %v5272
  %v5274 = vpop.f32.mrb[0].mxu0
  %5275 = vmatprep.mubr.bf16.mxu0 %v1486
  %5276 = vmatmul.mubr.bf16.gmra.mrb[0].mxu0 %v1252
  %v5277 = vpop.f32.mrb[0].mxu0
  %v5278 = vadd.f32 %v5101, %v5277
  %v5279 = vpop.f32.mrb[0].mxu0
  %v5280 = vpop.f32.mrb[0].mxu0
  %v5281 = vadd.f32 %v5104, %v5280
  %v5282 = vpop.f32.mrb[0].mxu0
  %5283 = vmatprep.mubr.bf16.mxu0 %v1487
  %5284 = vmatmul.mubr.bf16.gmra.mrb[0].mxu0 %v1253
  %v5285 = vpop.f32.mrb[0].mxu0
  %v5286 = vadd.f32 %v5109, %v5285
  %v5287 = vpop.f32.mrb[0].mxu0
  %v5288 = vpop.f32.mrb[0].mxu0
  %v5289 = vadd.f32 %v5112, %v5288
  %v5290 = vpop.f32.mrb[0].mxu0
  %5291 = vmatprep.mubr.bf16.mxu0 %v1488
  %5292 = vmatmul.mubr.bf16.gmra.mrb[0].mxu0 %v1254
  %v5293 = vpop.f32.mrb[0].mxu0
  %v5294 = vadd.f32 %v5117, %v5293
  %v5295 = vpop.f32.mrb[0].mxu0
  %v5296 = vpop.f32.mrb[0].mxu0
  %v5297 = vadd.f32 %v5120, %v5296
  %v5298 = vpop.f32.mrb[0].mxu0
  %5299 = vmatprep.mubr.bf16.mxu0 %v1489
  %5300 = vmatmul.mubr.bf16.gmra.mrb[0].mxu0 %v1255
  %v5301 = vpop.f32.mrb[0].mxu0
  %v5302 = vadd.f32 %v5125, %v5301
  %v5303 = vpop.f32.mrb[0].mxu0
  %v5304 = vpop.f32.mrb[0].mxu0
  %v5305 = vadd.f32 %v5128, %v5304
  %v5306 = vpop.f32.mrb[0].mxu0
  %5307 = vmatprep.mubr.bf16.mxu0 %v1490
  %5308 = vmatmul.mubr.bf16.gmra.mrb[0].mxu0 %v1256
  %v5309 = vpop.f32.mrb[0].mxu0
  %v5310 = vadd.f32 %v5133, %v5309
  %v5311 = vpop.f32.mrb[0].mxu0
  %v5312 = vpop.f32.mrb[0].mxu0
  %v5313 = vadd.f32 %v5136, %v5312
  %v5314 = vpop.f32.mrb[0].mxu0
  %5315 = vmatprep.mubr.bf16.mxu0 %v1491
  %5316 = vmatmul.mubr.bf16.gmra.mrb[0].mxu0 %v1257
  %v5317 = vpop.f32.mrb[0].mxu0
  %v5318 = vadd.f32 %v5141, %v5317
  %v5319 = vpop.f32.mrb[0].mxu0
  %v5320 = vpop.f32.mrb[0].mxu0
  %v5321 = vadd.f32 %v5144, %v5320
  %v5322 = vpop.f32.mrb[0].mxu0
  %5323 = vmatprep.mubr.bf16.mxu0 %v1492
  %5324 = vmatmul.mubr.bf16.gmra.mrb[0].mxu0 %v1258
  %v5325 = vpop.f32.mrb[0].mxu0
  %v5326 = vadd.f32 %v5149, %v5325
  %v5327 = vpop.f32.mrb[0].mxu0
  %v5328 = vpop.f32.mrb[0].mxu0
  %v5329 = vadd.f32 %v5152, %v5328
  %v5330 = vpop.f32.mrb[0].mxu0
  %5331 = vmatprep.mubr.bf16.mxu0 %v1493
  %5332 = vmatmul.mubr.bf16.gmra.mrb[0].mxu0 %v1259
  %v5333 = vpop.f32.mrb[0].mxu0
  %v5334 = vadd.f32 %v5157, %v5333
  %v5335 = vpop.f32.mrb[0].mxu0
  %v5336 = vpop.f32.mrb[0].mxu0
  %v5337 = vadd.f32 %v5160, %v5336
  %v5338 = vpop.f32.mrb[0].mxu0
  %5339 = vmatprep.mubr.bf16.mxu0 %v1494
  %5340 = vmatmul.mubr.bf16.gmra.mrb[0].mxu0 %v1260
  %v5341 = vpop.f32.mrb[0].mxu0
  %v5342 = vadd.f32 %v5165, %v5341
  %v5343 = vpop.f32.mrb[0].mxu0
  %v5344 = vpop.f32.mrb[0].mxu0
  %v5345 = vadd.f32 %v5168, %v5344
  %v5346 = vpop.f32.mrb[0].mxu0
  %5347 = vmatprep.mubr.bf16.mxu0 %v1495
  %5348 = vmatmul.mubr.bf16.gmra.mrb[0].mxu0 %v1261
  %v5349 = vpop.f32.mrb[0].mxu0
  %v5350 = vadd.f32 %v5173, %v5349
  %v5351 = vpop.f32.mrb[0].mxu0
  %v5352 = vpop.f32.mrb[0].mxu0
  %v5353 = vadd.f32 %v5176, %v5352
  %v5354 = vpop.f32.mrb[0].mxu0
  %5355 = vmatprep.mubr.bf16.mxu0 %v1496
  %5356 = vmatmul.mubr.bf16.gmra.mrb[0].mxu0 %v1262
  %v5357 = vpop.f32.mrb[0].mxu0
  %v5358 = vadd.f32 %v5181, %v5357
  %v5359 = vpop.f32.mrb[0].mxu0
  %v5360 = vpop.f32.mrb[0].mxu0
  %v5361 = vadd.f32 %v5184, %v5360
  %v5362 = vpop.f32.mrb[0].mxu0
  %5363 = vmatprep.mubr.bf16.mxu0 %v1497
  %5364 = vmatmul.mubr.bf16.gmra.mrb[0].mxu0 %v1263
  %v5365 = vpop.f32.mrb[0].mxu0
  %v5366 = vadd.f32 %v5189, %v5365
  %v5367 = vpop.f32.mrb[0].mxu0
  %v5368 = vpop.f32.mrb[0].mxu0
  %v5369 = vadd.f32 %v5192, %v5368
  %v5370 = vpop.f32.mrb[0].mxu0
  %5371 = vmatprep.mubr.bf16.mxu0 %v1498
  %5372 = vmatmul.mubr.bf16.gmra.mrb[0].mxu0 %v1264
  %v5373 = vpop.f32.mrb[0].mxu0
  %v5374 = vadd.f32 %v5197, %v5373
  %v5375 = vpop.f32.mrb[0].mxu0
  %v5376 = vpop.f32.mrb[0].mxu0
  %v5377 = vadd.f32 %v5200, %v5376
  %v5378 = vpop.f32.mrb[0].mxu0
  %5379 = vmatprep.mubr.bf16.mxu0 %v1499
  %5380 = vmatmul.mubr.bf16.gmra.mrb[0].mxu0 %v1265
  %v5381 = vpop.f32.mrb[0].mxu0
  %v5382 = vadd.f32 %v5205, %v5381
  %v5383 = vpop.f32.mrb[0].mxu0
  %v5384 = vpop.f32.mrb[0].mxu0
  %v5385 = vadd.f32 %v5208, %v5384
  %v5386 = vpop.f32.mrb[0].mxu0
  %5387 = vmatprep.mubr.bf16.mxu0 %v1500
  %5388 = vmatmul.mubr.bf16.gmra.mrb[0].mxu0 %v1266
  %v5389 = vpop.f32.mrb[0].mxu0
  %v5390 = vadd.f32 %v5213, %v5389
  %v5391 = vpop.f32.mrb[0].mxu0
  %v5392 = vpop.f32.mrb[0].mxu0
  %v5393 = vadd.f32 %v5216, %v5392
  %v5394 = vpop.f32.mrb[0].mxu0
  %5395 = vmatprep.mubr.bf16.mxu0 %v1501
  %5396 = vmatmul.mubr.bf16.gmra.mrb[0].mxu0 %v1267
  %v5397 = vpop.f32.mrb[0].mxu0
  %v5398 = vadd.f32 %v5221, %v5397
  %v5399 = vpop.f32.mrb[0].mxu0
  %v5400 = vpop.f32.mrb[0].mxu0
  %v5401 = vadd.f32 %v5224, %v5400
  %v5402 = vpop.f32.mrb[0].mxu0
  %5403 = vdwg.mxu0
  %5404 = vmatprep.subr.bf16.mxu0 0
  %5405 = vmatpush1.bf16.msra.mxu0 %v4665
  %5406 = vmatprep.subr.bf16.mxu0 0
  %5407 = vmatpush1.bf16.msra.mxu0 %v4666
  %5408 = vmatprep.subr.bf16.mxu0 0
  %5409 = vmatpush1.bf16.msra.mxu0 %v4667
  %5410 = vmatprep.subr.bf16.mxu0 0
  %5411 = vmatpush1.bf16.msra.mxu0 %v4668
  %5412 = vmatprep.subr.bf16.mxu0 0
  %5413 = vmatpush1.bf16.msra.mxu0 %v4669
  %5414 = vmatprep.subr.bf16.mxu0 0
  %5415 = vmatpush1.bf16.msra.mxu0 %v4670
  %5416 = vmatprep.subr.bf16.mxu0 0
  %5417 = vmatpush1.bf16.msra.mxu0 %v4671
  %5418 = vmatprep.subr.bf16.mxu0 0
  %5419 = vmatpush1.bf16.msra.mxu0 %v4672
  %5420 = vmatprep.subr.bf16.mxu0 0
  %5421 = vmatpush1.bf16.msra.mxu0 %v4673
  %5422 = vmatprep.subr.bf16.mxu0 0
  %5423 = vmatpush1.bf16.msra.mxu0 %v4674
  %5424 = vmatprep.subr.bf16.mxu0 0
  %5425 = vmatpush1.bf16.msra.mxu0 %v4675
  %5426 = vmatprep.subr.bf16.mxu0 0
  %5427 = vmatpush1.bf16.msra.mxu0 %v4676
  %5428 = vmatprep.subr.bf16.mxu0 0
  %5429 = vmatpush1.bf16.msra.mxu0 %v4677
  %5430 = vmatprep.subr.bf16.mxu0 0
  %5431 = vmatpush1.bf16.msra.mxu0 %v4678
  %5432 = vmatprep.subr.bf16.mxu0 0
  %5433 = vmatpush1.bf16.msra.mxu0 %v4679
  %5434 = vmatprep.subr.bf16.mxu0 0
  %5435 = vmatpush1.bf16.msra.mxu0 %v4680
  %5436 = vmatprep.mubr.bf16.mxu0 %v1952
  %5437 = vmatmul.mubr.bf16.gmra.mrb[0].mxu0 %v1718
  %v5438 = vpop.f32.mrb[0].mxu0
  %v5439 = vadd.f32 %v5262, %v5438
  %v5440 = vpop.f32.mrb[0].mxu0
  %v5441 = vpop.f32.mrb[0].mxu0
  %v5442 = vadd.f32 %v5265, %v5441
  %v5443 = vpop.f32.mrb[0].mxu0
  %5444 = vmatprep.mubr.bf16.mxu0 %v1953
  %5445 = vmatmul.mubr.bf16.gmra.mrb[0].mxu0 %v1719
  %v5446 = vpop.f32.mrb[0].mxu0
  %v5447 = vadd.f32 %v5270, %v5446
  %v5448 = vpop.f32.mrb[0].mxu0
  %v5449 = vpop.f32.mrb[0].mxu0
  %v5450 = vadd.f32 %v5273, %v5449
  %v5451 = vpop.f32.mrb[0].mxu0
  %5452 = vmatprep.mubr.bf16.mxu0 %v1954
  %5453 = vmatmul.mubr.bf16.gmra.mrb[0].mxu0 %v1720
  %v5454 = vpop.f32.mrb[0].mxu0
  %v5455 = vadd.f32 %v5278, %v5454
  %v5456 = vpop.f32.mrb[0].mxu0
  %v5457 = vpop.f32.mrb[0].mxu0
  %v5458 = vadd.f32 %v5281, %v5457
  %v5459 = vpop.f32.mrb[0].mxu0
  %5460 = vmatprep.mubr.bf16.mxu0 %v1955
  %5461 = vmatmul.mubr.bf16.gmra.mrb[0].mxu0 %v1721
  %v5462 = vpop.f32.mrb[0].mxu0
  %v5463 = vadd.f32 %v5286, %v5462
  %v5464 = vpop.f32.mrb[0].mxu0
  %v5465 = vpop.f32.mrb[0].mxu0
  %v5466 = vadd.f32 %v5289, %v5465
  %v5467 = vpop.f32.mrb[0].mxu0
  %5468 = vmatprep.mubr.bf16.mxu0 %v1956
  %5469 = vmatmul.mubr.bf16.gmra.mrb[0].mxu0 %v1722
  %v5470 = vpop.f32.mrb[0].mxu0
  %v5471 = vadd.f32 %v5294, %v5470
  %v5472 = vpop.f32.mrb[0].mxu0
  %v5473 = vpop.f32.mrb[0].mxu0
  %v5474 = vadd.f32 %v5297, %v5473
  %v5475 = vpop.f32.mrb[0].mxu0
  %5476 = vmatprep.mubr.bf16.mxu0 %v1957
  %5477 = vmatmul.mubr.bf16.gmra.mrb[0].mxu0 %v1723
  %v5478 = vpop.f32.mrb[0].mxu0
  %v5479 = vadd.f32 %v5302, %v5478
  %v5480 = vpop.f32.mrb[0].mxu0
  %v5481 = vpop.f32.mrb[0].mxu0
  %v5482 = vadd.f32 %v5305, %v5481
  %v5483 = vpop.f32.mrb[0].mxu0
  %5484 = vmatprep.mubr.bf16.mxu0 %v1958
  %5485 = vmatmul.mubr.bf16.gmra.mrb[0].mxu0 %v1724
  %v5486 = vpop.f32.mrb[0].mxu0
  %v5487 = vadd.f32 %v5310, %v5486
  %v5488 = vpop.f32.mrb[0].mxu0
  %v5489 = vpop.f32.mrb[0].mxu0
  %v5490 = vadd.f32 %v5313, %v5489
  %v5491 = vpop.f32.mrb[0].mxu0
  %5492 = vmatprep.mubr.bf16.mxu0 %v1959
  %5493 = vmatmul.mubr.bf16.gmra.mrb[0].mxu0 %v1725
  %v5494 = vpop.f32.mrb[0].mxu0
  %v5495 = vadd.f32 %v5318, %v5494
  %v5496 = vpop.f32.mrb[0].mxu0
  %v5497 = vpop.f32.mrb[0].mxu0
  %v5498 = vadd.f32 %v5321, %v5497
  %v5499 = vpop.f32.mrb[0].mxu0
  %5500 = vmatprep.mubr.bf16.mxu0 %v1960
  %5501 = vmatmul.mubr.bf16.gmra.mrb[0].mxu0 %v1726
  %v5502 = vpop.f32.mrb[0].mxu0
  %v5503 = vadd.f32 %v5326, %v5502
  %v5504 = vpop.f32.mrb[0].mxu0
  %v5505 = vpop.f32.mrb[0].mxu0
  %v5506 = vadd.f32 %v5329, %v5505
  %v5507 = vpop.f32.mrb[0].mxu0
  %5508 = vmatprep.mubr.bf16.mxu0 %v1961
  %5509 = vmatmul.mubr.bf16.gmra.mrb[0].mxu0 %v1727
  %v5510 = vpop.f32.mrb[0].mxu0
  %v5511 = vadd.f32 %v5334, %v5510
  %v5512 = vpop.f32.mrb[0].mxu0
  %v5513 = vpop.f32.mrb[0].mxu0
  %v5514 = vadd.f32 %v5337, %v5513
  %v5515 = vpop.f32.mrb[0].mxu0
  %5516 = vmatprep.mubr.bf16.mxu0 %v1962
  %5517 = vmatmul.mubr.bf16.gmra.mrb[0].mxu0 %v1728
  %v5518 = vpop.f32.mrb[0].mxu0
  %v5519 = vadd.f32 %v5342, %v5518
  %v5520 = vpop.f32.mrb[0].mxu0
  %v5521 = vpop.f32.mrb[0].mxu0
  %v5522 = vadd.f32 %v5345, %v5521
  %v5523 = vpop.f32.mrb[0].mxu0
  %5524 = vmatprep.mubr.bf16.mxu0 %v1963
  %5525 = vmatmul.mubr.bf16.gmra.mrb[0].mxu0 %v1729
  %v5526 = vpop.f32.mrb[0].mxu0
  %v5527 = vadd.f32 %v5350, %v5526
  %v5528 = vpop.f32.mrb[0].mxu0
  %v5529 = vpop.f32.mrb[0].mxu0
  %v5530 = vadd.f32 %v5353, %v5529
  %v5531 = vpop.f32.mrb[0].mxu0
  %5532 = vmatprep.mubr.bf16.mxu0 %v1964
  %5533 = vmatmul.mubr.bf16.gmra.mrb[0].mxu0 %v1730
  %v5534 = vpop.f32.mrb[0].mxu0
  %v5535 = vadd.f32 %v5358, %v5534
  %v5536 = vpop.f32.mrb[0].mxu0
  %v5537 = vpop.f32.mrb[0].mxu0
  %v5538 = vadd.f32 %v5361, %v5537
  %v5539 = vpop.f32.mrb[0].mxu0
  %5540 = vmatprep.mubr.bf16.mxu0 %v1965
  %5541 = vmatmul.mubr.bf16.gmra.mrb[0].mxu0 %v1731
  %v5542 = vpop.f32.mrb[0].mxu0
  %v5543 = vadd.f32 %v5366, %v5542
  %v5544 = vpop.f32.mrb[0].mxu0
  %v5545 = vpop.f32.mrb[0].mxu0
  %v5546 = vadd.f32 %v5369, %v5545
  %v5547 = vpop.f32.mrb[0].mxu0
  %5548 = vmatprep.mubr.bf16.mxu0 %v1966
  %5549 = vmatmul.mubr.bf16.gmra.mrb[0].mxu0 %v1732
  %v5550 = vpop.f32.mrb[0].mxu0
  %v5551 = vadd.f32 %v5374, %v5550
  %v5552 = vpop.f32.mrb[0].mxu0
  %v5553 = vpop.f32.mrb[0].mxu0
  %v5554 = vadd.f32 %v5377, %v5553
  %v5555 = vpop.f32.mrb[0].mxu0
  %5556 = vmatprep.mubr.bf16.mxu0 %v1967
  %5557 = vmatmul.mubr.bf16.gmra.mrb[0].mxu0 %v1733
  %v5558 = vpop.f32.mrb[0].mxu0
  %v5559 = vadd.f32 %v5382, %v5558
  %v5560 = vpop.f32.mrb[0].mxu0
  %v5561 = vpop.f32.mrb[0].mxu0
  %v5562 = vadd.f32 %v5385, %v5561
  %v5563 = vpop.f32.mrb[0].mxu0
  %5564 = vmatprep.mubr.bf16.mxu0 %v1968
  %5565 = vmatmul.mubr.bf16.gmra.mrb[0].mxu0 %v1734
  %v5566 = vpop.f32.mrb[0].mxu0
  %v5567 = vadd.f32 %v5390, %v5566
  %v5568 = vpop.f32.mrb[0].mxu0
  %v5569 = vpop.f32.mrb[0].mxu0
  %v5570 = vadd.f32 %v5393, %v5569
  %v5571 = vpop.f32.mrb[0].mxu0
  %5572 = vmatprep.mubr.bf16.mxu0 %v1969
  %5573 = vmatmul.mubr.bf16.gmra.mrb[0].mxu0 %v1735
  %v5574 = vpop.f32.mrb[0].mxu0
  %v5575 = vadd.f32 %v5398, %v5574
  %v5576 = vpop.f32.mrb[0].mxu0
  %v5577 = vpop.f32.mrb[0].mxu0
  %v5578 = vadd.f32 %v5401, %v5577
  %v5579 = vpop.f32.mrb[0].mxu0
  %5580 = vdwg.mxu0
  %5581 = vmatprep.subr.bf16.mxu0 0
  %5582 = vmatpush1.bf16.msra.mxu0 %v4681
  %5583 = vmatprep.subr.bf16.mxu0 0
  %5584 = vmatpush1.bf16.msra.mxu0 %v4682
  %5585 = vmatprep.subr.bf16.mxu0 0
  %5586 = vmatpush1.bf16.msra.mxu0 %v4683
  %5587 = vmatprep.subr.bf16.mxu0 0
  %5588 = vmatpush1.bf16.msra.mxu0 %v4684
  %5589 = vmatprep.subr.bf16.mxu0 0
  %5590 = vmatpush1.bf16.msra.mxu0 %v4685
  %5591 = vmatprep.subr.bf16.mxu0 0
  %5592 = vmatpush1.bf16.msra.mxu0 %v4686
  %5593 = vmatprep.subr.bf16.mxu0 0
  %5594 = vmatpush1.bf16.msra.mxu0 %v4687
  %5595 = vmatprep.subr.bf16.mxu0 0
  %5596 = vmatpush1.bf16.msra.mxu0 %v4688
  %5597 = vmatprep.subr.bf16.mxu0 0
  %5598 = vmatpush1.bf16.msra.mxu0 %v4689
  %5599 = vmatprep.subr.bf16.mxu0 0
  %5600 = vmatpush1.bf16.msra.mxu0 %v4690
  %5601 = vmatprep.subr.bf16.mxu0 0
  %5602 = vmatpush1.bf16.msra.mxu0 %v4691
  %5603 = vmatprep.subr.bf16.mxu0 0
  %5604 = vmatpush1.bf16.msra.mxu0 %v4692
  %5605 = vmatprep.subr.bf16.mxu0 0
  %5606 = vmatpush1.bf16.msra.mxu0 %v4693
  %5607 = vmatprep.subr.bf16.mxu0 0
  %5608 = vmatpush1.bf16.msra.mxu0 %v4694
  %5609 = vmatprep.subr.bf16.mxu0 0
  %5610 = vmatpush1.bf16.msra.mxu0 %v4695
  %5611 = vmatprep.subr.bf16.mxu0 0
  %5612 = vmatpush1.bf16.msra.mxu0 %v4696
  %5613 = vmatprep.mubr.bf16.mxu0 %v2420
  %5614 = vmatmul.mubr.bf16.gmra.mrb[0].mxu0 %v2186
  %v5615 = vpop.f32.mrb[0].mxu0
  %v5616 = vadd.f32 %v5439, %v5615
  %v5617 = vpop.f32.mrb[0].mxu0
  %v5618 = vpop.f32.mrb[0].mxu0
  %v5619 = vadd.f32 %v5442, %v5618
  %v5620 = vpop.f32.mrb[0].mxu0
  %5621 = vmatprep.mubr.bf16.mxu0 %v2421
  %5622 = vmatmul.mubr.bf16.gmra.mrb[0].mxu0 %v2187
  %v5623 = vpop.f32.mrb[0].mxu0
  %v5624 = vadd.f32 %v5447, %v5623
  %v5625 = vpop.f32.mrb[0].mxu0
  %v5626 = vpop.f32.mrb[0].mxu0
  %v5627 = vadd.f32 %v5450, %v5626
  %v5628 = vpop.f32.mrb[0].mxu0
  %5629 = vmatprep.mubr.bf16.mxu0 %v2422
  %5630 = vmatmul.mubr.bf16.gmra.mrb[0].mxu0 %v2188
  %v5631 = vpop.f32.mrb[0].mxu0
  %v5632 = vadd.f32 %v5455, %v5631
  %v5633 = vpop.f32.mrb[0].mxu0
  %v5634 = vpop.f32.mrb[0].mxu0
  %v5635 = vadd.f32 %v5458, %v5634
  %v5636 = vpop.f32.mrb[0].mxu0
  %5637 = vmatprep.mubr.bf16.mxu0 %v2423
  %5638 = vmatmul.mubr.bf16.gmra.mrb[0].mxu0 %v2189
  %v5639 = vpop.f32.mrb[0].mxu0
  %v5640 = vadd.f32 %v5463, %v5639
  %v5641 = vpop.f32.mrb[0].mxu0
  %v5642 = vpop.f32.mrb[0].mxu0
  %v5643 = vadd.f32 %v5466, %v5642
  %v5644 = vpop.f32.mrb[0].mxu0
  %5645 = vmatprep.mubr.bf16.mxu0 %v2424
  %5646 = vmatmul.mubr.bf16.gmra.mrb[0].mxu0 %v2190
  %v5647 = vpop.f32.mrb[0].mxu0
  %v5648 = vadd.f32 %v5471, %v5647
  %v5649 = vpop.f32.mrb[0].mxu0
  %v5650 = vpop.f32.mrb[0].mxu0
  %v5651 = vadd.f32 %v5474, %v5650
  %v5652 = vpop.f32.mrb[0].mxu0
  %5653 = vmatprep.mubr.bf16.mxu0 %v2425
  %5654 = vmatmul.mubr.bf16.gmra.mrb[0].mxu0 %v2191
  %v5655 = vpop.f32.mrb[0].mxu0
  %v5656 = vadd.f32 %v5479, %v5655
  %v5657 = vpop.f32.mrb[0].mxu0
  %v5658 = vpop.f32.mrb[0].mxu0
  %v5659 = vadd.f32 %v5482, %v5658
  %v5660 = vpop.f32.mrb[0].mxu0
  %5661 = vmatprep.mubr.bf16.mxu0 %v2426
  %5662 = vmatmul.mubr.bf16.gmra.mrb[0].mxu0 %v2192
  %v5663 = vpop.f32.mrb[0].mxu0
  %v5664 = vadd.f32 %v5487, %v5663
  %v5665 = vpop.f32.mrb[0].mxu0
  %v5666 = vpop.f32.mrb[0].mxu0
  %v5667 = vadd.f32 %v5490, %v5666
  %v5668 = vpop.f32.mrb[0].mxu0
  %5669 = vmatprep.mubr.bf16.mxu0 %v2427
  %5670 = vmatmul.mubr.bf16.gmra.mrb[0].mxu0 %v2193
  %v5671 = vpop.f32.mrb[0].mxu0
  %v5672 = vadd.f32 %v5495, %v5671
  %v5673 = vpop.f32.mrb[0].mxu0
  %v5674 = vpop.f32.mrb[0].mxu0
  %v5675 = vadd.f32 %v5498, %v5674
  %v5676 = vpop.f32.mrb[0].mxu0
  %5677 = vmatprep.mubr.bf16.mxu0 %v2428
  %5678 = vmatmul.mubr.bf16.gmra.mrb[0].mxu0 %v2194
  %v5679 = vpop.f32.mrb[0].mxu0
  %v5680 = vadd.f32 %v5503, %v5679
  %v5681 = vpop.f32.mrb[0].mxu0
  %v5682 = vpop.f32.mrb[0].mxu0
  %v5683 = vadd.f32 %v5506, %v5682
  %v5684 = vpop.f32.mrb[0].mxu0
  %5685 = vmatprep.mubr.bf16.mxu0 %v2429
  %5686 = vmatmul.mubr.bf16.gmra.mrb[0].mxu0 %v2195
  %v5687 = vpop.f32.mrb[0].mxu0
  %v5688 = vadd.f32 %v5511, %v5687
  %v5689 = vpop.f32.mrb[0].mxu0
  %v5690 = vpop.f32.mrb[0].mxu0
  %v5691 = vadd.f32 %v5514, %v5690
  %v5692 = vpop.f32.mrb[0].mxu0
  %5693 = vmatprep.mubr.bf16.mxu0 %v2430
  %5694 = vmatmul.mubr.bf16.gmra.mrb[0].mxu0 %v2196
  %v5695 = vpop.f32.mrb[0].mxu0
  %v5696 = vadd.f32 %v5519, %v5695
  %v5697 = vpop.f32.mrb[0].mxu0
  %v5698 = vpop.f32.mrb[0].mxu0
  %v5699 = vadd.f32 %v5522, %v5698
  %v5700 = vpop.f32.mrb[0].mxu0
  %5701 = vmatprep.mubr.bf16.mxu0 %v2431
  %5702 = vmatmul.mubr.bf16.gmra.mrb[0].mxu0 %v2197
  %v5703 = vpop.f32.mrb[0].mxu0
  %v5704 = vadd.f32 %v5527, %v5703
  %v5705 = vpop.f32.mrb[0].mxu0
  %v5706 = vpop.f32.mrb[0].mxu0
  %v5707 = vadd.f32 %v5530, %v5706
  %v5708 = vpop.f32.mrb[0].mxu0
  %5709 = vmatprep.mubr.bf16.mxu0 %v2432
  %5710 = vmatmul.mubr.bf16.gmra.mrb[0].mxu0 %v2198
  %v5711 = vpop.f32.mrb[0].mxu0
  %v5712 = vadd.f32 %v5535, %v5711
  %v5713 = vpop.f32.mrb[0].mxu0
  %v5714 = vpop.f32.mrb[0].mxu0
  %v5715 = vadd.f32 %v5538, %v5714
  %v5716 = vpop.f32.mrb[0].mxu0
  %5717 = vmatprep.mubr.bf16.mxu0 %v2433
  %5718 = vmatmul.mubr.bf16.gmra.mrb[0].mxu0 %v2199
  %v5719 = vpop.f32.mrb[0].mxu0
  %v5720 = vadd.f32 %v5543, %v5719
  %v5721 = vpop.f32.mrb[0].mxu0
  %v5722 = vpop.f32.mrb[0].mxu0
  %v5723 = vadd.f32 %v5546, %v5722
  %v5724 = vpop.f32.mrb[0].mxu0
  %5725 = vmatprep.mubr.bf16.mxu0 %v2434
  %5726 = vmatmul.mubr.bf16.gmra.mrb[0].mxu0 %v2200
  %v5727 = vpop.f32.mrb[0].mxu0
  %v5728 = vadd.f32 %v5551, %v5727
  %v5729 = vpop.f32.mrb[0].mxu0
  %v5730 = vpop.f32.mrb[0].mxu0
  %v5731 = vadd.f32 %v5554, %v5730
  %v5732 = vpop.f32.mrb[0].mxu0
  %5733 = vmatprep.mubr.bf16.mxu0 %v2435
  %5734 = vmatmul.mubr.bf16.gmra.mrb[0].mxu0 %v2201
  %v5735 = vpop.f32.mrb[0].mxu0
  %v5736 = vadd.f32 %v5559, %v5735
  %v5737 = vpop.f32.mrb[0].mxu0
  %v5738 = vpop.f32.mrb[0].mxu0
  %v5739 = vadd.f32 %v5562, %v5738
  %v5740 = vpop.f32.mrb[0].mxu0
  %5741 = vmatprep.mubr.bf16.mxu0 %v2436
  %5742 = vmatmul.mubr.bf16.gmra.mrb[0].mxu0 %v2202
  %v5743 = vpop.f32.mrb[0].mxu0
  %v5744 = vadd.f32 %v5567, %v5743
  %v5745 = vpop.f32.mrb[0].mxu0
  %v5746 = vpop.f32.mrb[0].mxu0
  %v5747 = vadd.f32 %v5570, %v5746
  %v5748 = vpop.f32.mrb[0].mxu0
  %5749 = vmatprep.mubr.bf16.mxu0 %v2437
  %5750 = vmatmul.mubr.bf16.gmra.mrb[0].mxu0 %v2203
  %v5751 = vpop.f32.mrb[0].mxu0
  %v5752 = vadd.f32 %v5575, %v5751
  %v5753 = vpop.f32.mrb[0].mxu0
  %v5754 = vpop.f32.mrb[0].mxu0
  %v5755 = vadd.f32 %v5578, %v5754
  %v5756 = vpop.f32.mrb[0].mxu0
  %5757 = vdwg.mxu0
  %5758 = vmatprep.subr.bf16.mxu0 0
  %5759 = vmatpush1.bf16.msra.mxu0 %v4697
  %5760 = vmatprep.subr.bf16.mxu0 0
  %5761 = vmatpush1.bf16.msra.mxu0 %v4698
  %5762 = vmatprep.subr.bf16.mxu0 0
  %5763 = vmatpush1.bf16.msra.mxu0 %v4699
  %5764 = vmatprep.subr.bf16.mxu0 0
  %5765 = vmatpush1.bf16.msra.mxu0 %v4700
  %5766 = vmatprep.subr.bf16.mxu0 0
  %5767 = vmatpush1.bf16.msra.mxu0 %v4701
  %5768 = vmatprep.subr.bf16.mxu0 0
  %5769 = vmatpush1.bf16.msra.mxu0 %v4702
  %5770 = vmatprep.subr.bf16.mxu0 0
  %5771 = vmatpush1.bf16.msra.mxu0 %v4703
  %5772 = vmatprep.subr.bf16.mxu0 0
  %5773 = vmatpush1.bf16.msra.mxu0 %v4704
  %5774 = vmatprep.subr.bf16.mxu0 0
  %5775 = vmatpush1.bf16.msra.mxu0 %v4705
  %5776 = vmatprep.subr.bf16.mxu0 0
  %5777 = vmatpush1.bf16.msra.mxu0 %v4706
  %5778 = vmatprep.subr.bf16.mxu0 0
  %5779 = vmatpush1.bf16.msra.mxu0 %v4707
  %5780 = vmatprep.subr.bf16.mxu0 0
  %5781 = vmatpush1.bf16.msra.mxu0 %v4708
  %5782 = vmatprep.subr.bf16.mxu0 0
  %5783 = vmatpush1.bf16.msra.mxu0 %v4709
  %5784 = vmatprep.subr.bf16.mxu0 0
  %5785 = vmatpush1.bf16.msra.mxu0 %v4710
  %5786 = vmatprep.subr.bf16.mxu0 0
  %5787 = vmatpush1.bf16.msra.mxu0 %v4711
  %5788 = vmatprep.subr.bf16.mxu0 0
  %5789 = vmatpush1.bf16.msra.mxu0 %v4712
  %5790 = vmatprep.mubr.bf16.mxu0 %v2888
  %5791 = vmatmul.mubr.bf16.gmra.mrb[0].mxu0 %v2654
  %v5792 = vpop.f32.mrb[0].mxu0
  %v5793 = vadd.f32 %v5616, %v5792
  %v5794 = vpop.f32.mrb[0].mxu0
  %v5795 = vpop.f32.mrb[0].mxu0
  %v5796 = vadd.f32 %v5619, %v5795
  %v5797 = vpop.f32.mrb[0].mxu0
  %5798 = vmatprep.mubr.bf16.mxu0 %v2889
  %5799 = vmatmul.mubr.bf16.gmra.mrb[0].mxu0 %v2655
  %v5800 = vpop.f32.mrb[0].mxu0
  %v5801 = vadd.f32 %v5624, %v5800
  %v5802 = vpop.f32.mrb[0].mxu0
  %v5803 = vpop.f32.mrb[0].mxu0
  %v5804 = vadd.f32 %v5627, %v5803
  %v5805 = vpop.f32.mrb[0].mxu0
  %5806 = vmatprep.mubr.bf16.mxu0 %v2890
  %5807 = vmatmul.mubr.bf16.gmra.mrb[0].mxu0 %v2656
  %v5808 = vpop.f32.mrb[0].mxu0
  %v5809 = vadd.f32 %v5632, %v5808
  %v5810 = vpop.f32.mrb[0].mxu0
  %v5811 = vpop.f32.mrb[0].mxu0
  %v5812 = vadd.f32 %v5635, %v5811
  %v5813 = vpop.f32.mrb[0].mxu0
  %5814 = vmatprep.mubr.bf16.mxu0 %v2891
  %5815 = vmatmul.mubr.bf16.gmra.mrb[0].mxu0 %v2657
  %v5816 = vpop.f32.mrb[0].mxu0
  %v5817 = vadd.f32 %v5640, %v5816
  %v5818 = vpop.f32.mrb[0].mxu0
  %v5819 = vpop.f32.mrb[0].mxu0
  %v5820 = vadd.f32 %v5643, %v5819
  %v5821 = vpop.f32.mrb[0].mxu0
  %5822 = vmatprep.mubr.bf16.mxu0 %v2892
  %5823 = vmatmul.mubr.bf16.gmra.mrb[0].mxu0 %v2658
  %v5824 = vpop.f32.mrb[0].mxu0
  %v5825 = vadd.f32 %v5648, %v5824
  %v5826 = vpop.f32.mrb[0].mxu0
  %v5827 = vpop.f32.mrb[0].mxu0
  %v5828 = vadd.f32 %v5651, %v5827
  %v5829 = vpop.f32.mrb[0].mxu0
  %5830 = vmatprep.mubr.bf16.mxu0 %v2893
  %5831 = vmatmul.mubr.bf16.gmra.mrb[0].mxu0 %v2659
  %v5832 = vpop.f32.mrb[0].mxu0
  %v5833 = vadd.f32 %v5656, %v5832
  %v5834 = vpop.f32.mrb[0].mxu0
  %v5835 = vpop.f32.mrb[0].mxu0
  %v5836 = vadd.f32 %v5659, %v5835
  %v5837 = vpop.f32.mrb[0].mxu0
  %5838 = vmatprep.mubr.bf16.mxu0 %v2894
  %5839 = vmatmul.mubr.bf16.gmra.mrb[0].mxu0 %v2660
  %v5840 = vpop.f32.mrb[0].mxu0
  %v5841 = vadd.f32 %v5664, %v5840
  %v5842 = vpop.f32.mrb[0].mxu0
  %v5843 = vpop.f32.mrb[0].mxu0
  %v5844 = vadd.f32 %v5667, %v5843
  %v5845 = vpop.f32.mrb[0].mxu0
  %5846 = vmatprep.mubr.bf16.mxu0 %v2895
  %5847 = vmatmul.mubr.bf16.gmra.mrb[0].mxu0 %v2661
  %v5848 = vpop.f32.mrb[0].mxu0
  %v5849 = vadd.f32 %v5672, %v5848
  %v5850 = vpop.f32.mrb[0].mxu0
  %v5851 = vpop.f32.mrb[0].mxu0
  %v5852 = vadd.f32 %v5675, %v5851
  %v5853 = vpop.f32.mrb[0].mxu0
  %5854 = vmatprep.mubr.bf16.mxu0 %v2896
  %5855 = vmatmul.mubr.bf16.gmra.mrb[0].mxu0 %v2662
  %v5856 = vpop.f32.mrb[0].mxu0
  %v5857 = vadd.f32 %v5680, %v5856
  %v5858 = vpop.f32.mrb[0].mxu0
  %v5859 = vpop.f32.mrb[0].mxu0
  %v5860 = vadd.f32 %v5683, %v5859
  %v5861 = vpop.f32.mrb[0].mxu0
  %5862 = vmatprep.mubr.bf16.mxu0 %v2897
  %5863 = vmatmul.mubr.bf16.gmra.mrb[0].mxu0 %v2663
  %v5864 = vpop.f32.mrb[0].mxu0
  %v5865 = vadd.f32 %v5688, %v5864
  %v5866 = vpop.f32.mrb[0].mxu0
  %v5867 = vpop.f32.mrb[0].mxu0
  %v5868 = vadd.f32 %v5691, %v5867
  %v5869 = vpop.f32.mrb[0].mxu0
  %5870 = vmatprep.mubr.bf16.mxu0 %v2898
  %5871 = vmatmul.mubr.bf16.gmra.mrb[0].mxu0 %v2664
  %v5872 = vpop.f32.mrb[0].mxu0
  %v5873 = vadd.f32 %v5696, %v5872
  %v5874 = vpop.f32.mrb[0].mxu0
  %v5875 = vpop.f32.mrb[0].mxu0
  %v5876 = vadd.f32 %v5699, %v5875
  %v5877 = vpop.f32.mrb[0].mxu0
  %5878 = vmatprep.mubr.bf16.mxu0 %v2899
  %5879 = vmatmul.mubr.bf16.gmra.mrb[0].mxu0 %v2665
  %v5880 = vpop.f32.mrb[0].mxu0
  %v5881 = vadd.f32 %v5704, %v5880
  %v5882 = vpop.f32.mrb[0].mxu0
  %v5883 = vpop.f32.mrb[0].mxu0
  %v5884 = vadd.f32 %v5707, %v5883
  %v5885 = vpop.f32.mrb[0].mxu0
  %5886 = vmatprep.mubr.bf16.mxu0 %v2900
  %5887 = vmatmul.mubr.bf16.gmra.mrb[0].mxu0 %v2666
  %v5888 = vpop.f32.mrb[0].mxu0
  %v5889 = vadd.f32 %v5712, %v5888
  %v5890 = vpop.f32.mrb[0].mxu0
  %v5891 = vpop.f32.mrb[0].mxu0
  %v5892 = vadd.f32 %v5715, %v5891
  %v5893 = vpop.f32.mrb[0].mxu0
  %5894 = vmatprep.mubr.bf16.mxu0 %v2901
  %5895 = vmatmul.mubr.bf16.gmra.mrb[0].mxu0 %v2667
  %v5896 = vpop.f32.mrb[0].mxu0
  %v5897 = vadd.f32 %v5720, %v5896
  %v5898 = vpop.f32.mrb[0].mxu0
  %v5899 = vpop.f32.mrb[0].mxu0
  %v5900 = vadd.f32 %v5723, %v5899
  %v5901 = vpop.f32.mrb[0].mxu0
  %5902 = vmatprep.mubr.bf16.mxu0 %v2902
  %5903 = vmatmul.mubr.bf16.gmra.mrb[0].mxu0 %v2668
  %v5904 = vpop.f32.mrb[0].mxu0
  %v5905 = vadd.f32 %v5728, %v5904
  %v5906 = vpop.f32.mrb[0].mxu0
  %v5907 = vpop.f32.mrb[0].mxu0
  %v5908 = vadd.f32 %v5731, %v5907
  %v5909 = vpop.f32.mrb[0].mxu0
  %5910 = vmatprep.mubr.bf16.mxu0 %v2903
  %5911 = vmatmul.mubr.bf16.gmra.mrb[0].mxu0 %v2669
  %v5912 = vpop.f32.mrb[0].mxu0
  %v5913 = vadd.f32 %v5736, %v5912
  %v5914 = vpop.f32.mrb[0].mxu0
  %v5915 = vpop.f32.mrb[0].mxu0
  %v5916 = vadd.f32 %v5739, %v5915
  %v5917 = vpop.f32.mrb[0].mxu0
  %5918 = vmatprep.mubr.bf16.mxu0 %v2904
  %5919 = vmatmul.mubr.bf16.gmra.mrb[0].mxu0 %v2670
  %v5920 = vpop.f32.mrb[0].mxu0
  %v5921 = vadd.f32 %v5744, %v5920
  %v5922 = vpop.f32.mrb[0].mxu0
  %v5923 = vpop.f32.mrb[0].mxu0
  %v5924 = vadd.f32 %v5747, %v5923
  %v5925 = vpop.f32.mrb[0].mxu0
  %5926 = vmatprep.mubr.bf16.mxu0 %v2905
  %5927 = vmatmul.mubr.bf16.gmra.mrb[0].mxu0 %v2671
  %v5928 = vpop.f32.mrb[0].mxu0
  %v5929 = vadd.f32 %v5752, %v5928
  %v5930 = vpop.f32.mrb[0].mxu0
  %v5931 = vpop.f32.mrb[0].mxu0
  %v5932 = vadd.f32 %v5755, %v5931
  %v5933 = vpop.f32.mrb[0].mxu0
  %5934 = vdwg.mxu0
  %5935 = vmatprep.subr.bf16.mxu0 0
  %5936 = vmatpush1.bf16.msra.mxu0 %v4713
  %5937 = vmatprep.subr.bf16.mxu0 0
  %5938 = vmatpush1.bf16.msra.mxu0 %v4714
  %5939 = vmatprep.subr.bf16.mxu0 0
  %5940 = vmatpush1.bf16.msra.mxu0 %v4715
  %5941 = vmatprep.subr.bf16.mxu0 0
  %5942 = vmatpush1.bf16.msra.mxu0 %v4716
  %5943 = vmatprep.subr.bf16.mxu0 0
  %5944 = vmatpush1.bf16.msra.mxu0 %v4717
  %5945 = vmatprep.subr.bf16.mxu0 0
  %5946 = vmatpush1.bf16.msra.mxu0 %v4718
  %5947 = vmatprep.subr.bf16.mxu0 0
  %5948 = vmatpush1.bf16.msra.mxu0 %v4719
  %5949 = vmatprep.subr.bf16.mxu0 0
  %5950 = vmatpush1.bf16.msra.mxu0 %v4720
  %5951 = vmatprep.subr.bf16.mxu0 0
  %5952 = vmatpush1.bf16.msra.mxu0 %v4721
  %5953 = vmatprep.subr.bf16.mxu0 0
  %5954 = vmatpush1.bf16.msra.mxu0 %v4722
  %5955 = vmatprep.subr.bf16.mxu0 0
  %5956 = vmatpush1.bf16.msra.mxu0 %v4723
  %5957 = vmatprep.subr.bf16.mxu0 0
  %5958 = vmatpush1.bf16.msra.mxu0 %v4724
  %5959 = vmatprep.subr.bf16.mxu0 0
  %5960 = vmatpush1.bf16.msra.mxu0 %v4725
  %5961 = vmatprep.subr.bf16.mxu0 0
  %5962 = vmatpush1.bf16.msra.mxu0 %v4726
  %5963 = vmatprep.subr.bf16.mxu0 0
  %5964 = vmatpush1.bf16.msra.mxu0 %v4727
  %5965 = vmatprep.subr.bf16.mxu0 0
  %5966 = vmatpush1.bf16.msra.mxu0 %v4728
  %5967 = vmatprep.mubr.bf16.mxu0 %v3356
  %5968 = vmatmul.mubr.bf16.gmra.mrb[0].mxu0 %v3122
  %v5969 = vpop.f32.mrb[0].mxu0
  %v5970 = vadd.f32 %v5793, %v5969
  %v5971 = vpop.f32.mrb[0].mxu0
  %v5972 = vpop.f32.mrb[0].mxu0
  %v5973 = vadd.f32 %v5796, %v5972
  %v5974 = vpop.f32.mrb[0].mxu0
  %5975 = vmatprep.mubr.bf16.mxu0 %v3357
  %5976 = vmatmul.mubr.bf16.gmra.mrb[0].mxu0 %v3123
  %v5977 = vpop.f32.mrb[0].mxu0
  %v5978 = vadd.f32 %v5801, %v5977
  %v5979 = vpop.f32.mrb[0].mxu0
  %v5980 = vpop.f32.mrb[0].mxu0
  %v5981 = vadd.f32 %v5804, %v5980
  %v5982 = vpop.f32.mrb[0].mxu0
  %5983 = vmatprep.mubr.bf16.mxu0 %v3358
  %5984 = vmatmul.mubr.bf16.gmra.mrb[0].mxu0 %v3124
  %v5985 = vpop.f32.mrb[0].mxu0
  %v5986 = vadd.f32 %v5809, %v5985
  %v5987 = vpop.f32.mrb[0].mxu0
  %v5988 = vpop.f32.mrb[0].mxu0
  %v5989 = vadd.f32 %v5812, %v5988
  %v5990 = vpop.f32.mrb[0].mxu0
  %5991 = vmatprep.mubr.bf16.mxu0 %v3359
  %5992 = vmatmul.mubr.bf16.gmra.mrb[0].mxu0 %v3125
  %v5993 = vpop.f32.mrb[0].mxu0
  %v5994 = vadd.f32 %v5817, %v5993
  %v5995 = vpop.f32.mrb[0].mxu0
  %v5996 = vpop.f32.mrb[0].mxu0
  %v5997 = vadd.f32 %v5820, %v5996
  %v5998 = vpop.f32.mrb[0].mxu0
  %5999 = vmatprep.mubr.bf16.mxu0 %v3360
  %6000 = vmatmul.mubr.bf16.gmra.mrb[0].mxu0 %v3126
  %v6001 = vpop.f32.mrb[0].mxu0
  %v6002 = vadd.f32 %v5825, %v6001
  %v6003 = vpop.f32.mrb[0].mxu0
  %v6004 = vpop.f32.mrb[0].mxu0
  %v6005 = vadd.f32 %v5828, %v6004
  %v6006 = vpop.f32.mrb[0].mxu0
  %6007 = vmatprep.mubr.bf16.mxu0 %v3361
  %6008 = vmatmul.mubr.bf16.gmra.mrb[0].mxu0 %v3127
  %v6009 = vpop.f32.mrb[0].mxu0
  %v6010 = vadd.f32 %v5833, %v6009
  %v6011 = vpop.f32.mrb[0].mxu0
  %v6012 = vpop.f32.mrb[0].mxu0
  %v6013 = vadd.f32 %v5836, %v6012
  %v6014 = vpop.f32.mrb[0].mxu0
  %6015 = vmatprep.mubr.bf16.mxu0 %v3362
  %6016 = vmatmul.mubr.bf16.gmra.mrb[0].mxu0 %v3128
  %v6017 = vpop.f32.mrb[0].mxu0
  %v6018 = vadd.f32 %v5841, %v6017
  %v6019 = vpop.f32.mrb[0].mxu0
  %v6020 = vpop.f32.mrb[0].mxu0
  %v6021 = vadd.f32 %v5844, %v6020
  %v6022 = vpop.f32.mrb[0].mxu0
  %6023 = vmatprep.mubr.bf16.mxu0 %v3363
  %6024 = vmatmul.mubr.bf16.gmra.mrb[0].mxu0 %v3129
  %v6025 = vpop.f32.mrb[0].mxu0
  %v6026 = vadd.f32 %v5849, %v6025
  %v6027 = vpop.f32.mrb[0].mxu0
  %v6028 = vpop.f32.mrb[0].mxu0
  %v6029 = vadd.f32 %v5852, %v6028
  %v6030 = vpop.f32.mrb[0].mxu0
  %6031 = vmatprep.mubr.bf16.mxu0 %v3364
  %6032 = vmatmul.mubr.bf16.gmra.mrb[0].mxu0 %v3130
  %v6033 = vpop.f32.mrb[0].mxu0
  %v6034 = vadd.f32 %v5857, %v6033
  %v6035 = vpop.f32.mrb[0].mxu0
  %v6036 = vpop.f32.mrb[0].mxu0
  %v6037 = vadd.f32 %v5860, %v6036
  %v6038 = vpop.f32.mrb[0].mxu0
  %6039 = vmatprep.mubr.bf16.mxu0 %v3365
  %6040 = vmatmul.mubr.bf16.gmra.mrb[0].mxu0 %v3131
  %v6041 = vpop.f32.mrb[0].mxu0
  %v6042 = vadd.f32 %v5865, %v6041
  %v6043 = vpop.f32.mrb[0].mxu0
  %v6044 = vpop.f32.mrb[0].mxu0
  %v6045 = vadd.f32 %v5868, %v6044
  %v6046 = vpop.f32.mrb[0].mxu0
  %6047 = vmatprep.mubr.bf16.mxu0 %v3366
  %6048 = vmatmul.mubr.bf16.gmra.mrb[0].mxu0 %v3132
  %v6049 = vpop.f32.mrb[0].mxu0
  %v6050 = vadd.f32 %v5873, %v6049
  %v6051 = vpop.f32.mrb[0].mxu0
  %v6052 = vpop.f32.mrb[0].mxu0
  %v6053 = vadd.f32 %v5876, %v6052
  %v6054 = vpop.f32.mrb[0].mxu0
  %6055 = vmatprep.mubr.bf16.mxu0 %v3367
  %6056 = vmatmul.mubr.bf16.gmra.mrb[0].mxu0 %v3133
  %v6057 = vpop.f32.mrb[0].mxu0
  %v6058 = vadd.f32 %v5881, %v6057
  %v6059 = vpop.f32.mrb[0].mxu0
  %v6060 = vpop.f32.mrb[0].mxu0
  %v6061 = vadd.f32 %v5884, %v6060
  %v6062 = vpop.f32.mrb[0].mxu0
  %6063 = vmatprep.mubr.bf16.mxu0 %v3368
  %6064 = vmatmul.mubr.bf16.gmra.mrb[0].mxu0 %v3134
  %v6065 = vpop.f32.mrb[0].mxu0
  %v6066 = vadd.f32 %v5889, %v6065
  %v6067 = vpop.f32.mrb[0].mxu0
  %v6068 = vpop.f32.mrb[0].mxu0
  %v6069 = vadd.f32 %v5892, %v6068
  %v6070 = vpop.f32.mrb[0].mxu0
  %6071 = vmatprep.mubr.bf16.mxu0 %v3369
  %6072 = vmatmul.mubr.bf16.gmra.mrb[0].mxu0 %v3135
  %v6073 = vpop.f32.mrb[0].mxu0
  %v6074 = vadd.f32 %v5897, %v6073
  %v6075 = vpop.f32.mrb[0].mxu0
  %v6076 = vpop.f32.mrb[0].mxu0
  %v6077 = vadd.f32 %v5900, %v6076
  %v6078 = vpop.f32.mrb[0].mxu0
  %6079 = vmatprep.mubr.bf16.mxu0 %v3370
  %6080 = vmatmul.mubr.bf16.gmra.mrb[0].mxu0 %v3136
  %v6081 = vpop.f32.mrb[0].mxu0
  %v6082 = vadd.f32 %v5905, %v6081
  %v6083 = vpop.f32.mrb[0].mxu0
  %v6084 = vpop.f32.mrb[0].mxu0
  %v6085 = vadd.f32 %v5908, %v6084
  %v6086 = vpop.f32.mrb[0].mxu0
  %6087 = vmatprep.mubr.bf16.mxu0 %v3371
  %6088 = vmatmul.mubr.bf16.gmra.mrb[0].mxu0 %v3137
  %v6089 = vpop.f32.mrb[0].mxu0
  %v6090 = vadd.f32 %v5913, %v6089
  %v6091 = vpop.f32.mrb[0].mxu0
  %v6092 = vpop.f32.mrb[0].mxu0
  %v6093 = vadd.f32 %v5916, %v6092
  %v6094 = vpop.f32.mrb[0].mxu0
  %6095 = vmatprep.mubr.bf16.mxu0 %v3372
  %6096 = vmatmul.mubr.bf16.gmra.mrb[0].mxu0 %v3138
  %v6097 = vpop.f32.mrb[0].mxu0
  %v6098 = vadd.f32 %v5921, %v6097
  %v6099 = vpop.f32.mrb[0].mxu0
  %v6100 = vpop.f32.mrb[0].mxu0
  %v6101 = vadd.f32 %v5924, %v6100
  %v6102 = vpop.f32.mrb[0].mxu0
  %6103 = vmatprep.mubr.bf16.mxu0 %v3373
  %6104 = vmatmul.mubr.bf16.gmra.mrb[0].mxu0 %v3139
  %v6105 = vpop.f32.mrb[0].mxu0
  %v6106 = vadd.f32 %v5929, %v6105
  %v6107 = vpop.f32.mrb[0].mxu0
  %v6108 = vpop.f32.mrb[0].mxu0
  %v6109 = vadd.f32 %v5932, %v6108
  %v6110 = vpop.f32.mrb[0].mxu0
  %6111 = vdwg.mxu0
  %6112 = vmatprep.subr.bf16.mxu0 0
  %6113 = vmatpush1.bf16.msra.mxu0 %v4729
  %6114 = vmatprep.subr.bf16.mxu0 0
  %6115 = vmatpush1.bf16.msra.mxu0 %v4730
  %6116 = vmatprep.subr.bf16.mxu0 0
  %6117 = vmatpush1.bf16.msra.mxu0 %v4731
  %6118 = vmatprep.subr.bf16.mxu0 0
  %6119 = vmatpush1.bf16.msra.mxu0 %v4732
  %6120 = vmatprep.subr.bf16.mxu0 0
  %6121 = vmatpush1.bf16.msra.mxu0 %v4733
  %6122 = vmatprep.subr.bf16.mxu0 0
  %6123 = vmatpush1.bf16.msra.mxu0 %v4734
  %6124 = vmatprep.subr.bf16.mxu0 0
  %6125 = vmatpush1.bf16.msra.mxu0 %v4735
  %6126 = vmatprep.subr.bf16.mxu0 0
  %6127 = vmatpush1.bf16.msra.mxu0 %v4736
  %6128 = vmatprep.subr.bf16.mxu0 0
  %6129 = vmatpush1.bf16.msra.mxu0 %v4737
  %6130 = vmatprep.subr.bf16.mxu0 0
  %6131 = vmatpush1.bf16.msra.mxu0 %v4738
  %6132 = vmatprep.subr.bf16.mxu0 0
  %6133 = vmatpush1.bf16.msra.mxu0 %v4739
  %6134 = vmatprep.subr.bf16.mxu0 0
  %6135 = vmatpush1.bf16.msra.mxu0 %v4740
  %6136 = vmatprep.subr.bf16.mxu0 0
  %6137 = vmatpush1.bf16.msra.mxu0 %v4741
  %6138 = vmatprep.subr.bf16.mxu0 0
  %6139 = vmatpush1.bf16.msra.mxu0 %v4742
  %6140 = vmatprep.subr.bf16.mxu0 0
  %6141 = vmatpush1.bf16.msra.mxu0 %v4743
  %6142 = vmatprep.subr.bf16.mxu0 0
  %6143 = vmatpush1.bf16.msra.mxu0 %v4744
  %6144 = vmatprep.mubr.bf16.mxu0 %v3824
  %6145 = vmatmul.mubr.bf16.gmra.mrb[0].mxu0 %v3590
  %v6146 = vpop.f32.mrb[0].mxu0
  %v6147 = vadd.f32 %v5970, %v6146
  %v6148 = vpop.f32.mrb[0].mxu0
  %v6149 = vpop.f32.mrb[0].mxu0
  %v6150 = vadd.f32 %v5973, %v6149
  %v6151 = vpop.f32.mrb[0].mxu0
  %6152 = vmatprep.mubr.bf16.mxu0 %v3825
  %6153 = vmatmul.mubr.bf16.gmra.mrb[0].mxu0 %v3591
  %v6154 = vpop.f32.mrb[0].mxu0
  %v6155 = vadd.f32 %v5978, %v6154
  %v6156 = vpop.f32.mrb[0].mxu0
  %v6157 = vpop.f32.mrb[0].mxu0
  %v6158 = vadd.f32 %v5981, %v6157
  %v6159 = vpop.f32.mrb[0].mxu0
  %6160 = vmatprep.mubr.bf16.mxu0 %v3826
  %6161 = vmatmul.mubr.bf16.gmra.mrb[0].mxu0 %v3592
  %v6162 = vpop.f32.mrb[0].mxu0
  %v6163 = vadd.f32 %v5986, %v6162
  %v6164 = vpop.f32.mrb[0].mxu0
  %v6165 = vpop.f32.mrb[0].mxu0
  %v6166 = vadd.f32 %v5989, %v6165
  %v6167 = vpop.f32.mrb[0].mxu0
  %6168 = vmatprep.mubr.bf16.mxu0 %v3827
  %6169 = vmatmul.mubr.bf16.gmra.mrb[0].mxu0 %v3593
  %v6170 = vpop.f32.mrb[0].mxu0
  %v6171 = vadd.f32 %v5994, %v6170
  %v6172 = vpop.f32.mrb[0].mxu0
  %v6173 = vpop.f32.mrb[0].mxu0
  %v6174 = vadd.f32 %v5997, %v6173
  %v6175 = vpop.f32.mrb[0].mxu0
  %6176 = vmatprep.mubr.bf16.mxu0 %v3828
  %6177 = vmatmul.mubr.bf16.gmra.mrb[0].mxu0 %v3594
  %v6178 = vpop.f32.mrb[0].mxu0
  %v6179 = vadd.f32 %v6002, %v6178
  %v6180 = vpop.f32.mrb[0].mxu0
  %v6181 = vpop.f32.mrb[0].mxu0
  %v6182 = vadd.f32 %v6005, %v6181
  %v6183 = vpop.f32.mrb[0].mxu0
  %6184 = vmatprep.mubr.bf16.mxu0 %v3829
  %6185 = vmatmul.mubr.bf16.gmra.mrb[0].mxu0 %v3595
  %v6186 = vpop.f32.mrb[0].mxu0
  %v6187 = vadd.f32 %v6010, %v6186
  %v6188 = vpop.f32.mrb[0].mxu0
  %v6189 = vpop.f32.mrb[0].mxu0
  %v6190 = vadd.f32 %v6013, %v6189
  %v6191 = vpop.f32.mrb[0].mxu0
  %6192 = vmatprep.mubr.bf16.mxu0 %v3830
  %6193 = vmatmul.mubr.bf16.gmra.mrb[0].mxu0 %v3596
  %v6194 = vpop.f32.mrb[0].mxu0
  %v6195 = vadd.f32 %v6018, %v6194
  %v6196 = vpop.f32.mrb[0].mxu0
  %v6197 = vpop.f32.mrb[0].mxu0
  %v6198 = vadd.f32 %v6021, %v6197
  %v6199 = vpop.f32.mrb[0].mxu0
  %6200 = vmatprep.mubr.bf16.mxu0 %v3831
  %6201 = vmatmul.mubr.bf16.gmra.mrb[0].mxu0 %v3597
  %v6202 = vpop.f32.mrb[0].mxu0
  %v6203 = vadd.f32 %v6026, %v6202
  %v6204 = vpop.f32.mrb[0].mxu0
  %v6205 = vpop.f32.mrb[0].mxu0
  %v6206 = vadd.f32 %v6029, %v6205
  %v6207 = vpop.f32.mrb[0].mxu0
  %6208 = vmatprep.mubr.bf16.mxu0 %v3832
  %6209 = vmatmul.mubr.bf16.gmra.mrb[0].mxu0 %v3598
  %v6210 = vpop.f32.mrb[0].mxu0
  %v6211 = vadd.f32 %v6034, %v6210
  %v6212 = vpop.f32.mrb[0].mxu0
  %v6213 = vpop.f32.mrb[0].mxu0
  %v6214 = vadd.f32 %v6037, %v6213
  %v6215 = vpop.f32.mrb[0].mxu0
  %6216 = vmatprep.mubr.bf16.mxu0 %v3833
  %6217 = vmatmul.mubr.bf16.gmra.mrb[0].mxu0 %v3599
  %v6218 = vpop.f32.mrb[0].mxu0
  %v6219 = vadd.f32 %v6042, %v6218
  %v6220 = vpop.f32.mrb[0].mxu0
  %v6221 = vpop.f32.mrb[0].mxu0
  %v6222 = vadd.f32 %v6045, %v6221
  %v6223 = vpop.f32.mrb[0].mxu0
  %6224 = vmatprep.mubr.bf16.mxu0 %v3834
  %6225 = vmatmul.mubr.bf16.gmra.mrb[0].mxu0 %v3600
  %v6226 = vpop.f32.mrb[0].mxu0
  %v6227 = vadd.f32 %v6050, %v6226
  %v6228 = vpop.f32.mrb[0].mxu0
  %v6229 = vpop.f32.mrb[0].mxu0
  %v6230 = vadd.f32 %v6053, %v6229
  %v6231 = vpop.f32.mrb[0].mxu0
  %6232 = vmatprep.mubr.bf16.mxu0 %v3835
  %6233 = vmatmul.mubr.bf16.gmra.mrb[0].mxu0 %v3601
  %v6234 = vpop.f32.mrb[0].mxu0
  %v6235 = vadd.f32 %v6058, %v6234
  %v6236 = vpop.f32.mrb[0].mxu0
  %v6237 = vpop.f32.mrb[0].mxu0
  %v6238 = vadd.f32 %v6061, %v6237
  %v6239 = vpop.f32.mrb[0].mxu0
  %6240 = vmatprep.mubr.bf16.mxu0 %v3836
  %6241 = vmatmul.mubr.bf16.gmra.mrb[0].mxu0 %v3602
  %v6242 = vpop.f32.mrb[0].mxu0
  %v6243 = vadd.f32 %v6066, %v6242
  %v6244 = vpop.f32.mrb[0].mxu0
  %v6245 = vpop.f32.mrb[0].mxu0
  %v6246 = vadd.f32 %v6069, %v6245
  %v6247 = vpop.f32.mrb[0].mxu0
  %6248 = vmatprep.mubr.bf16.mxu0 %v3837
  %6249 = vmatmul.mubr.bf16.gmra.mrb[0].mxu0 %v3603
  %v6250 = vpop.f32.mrb[0].mxu0
  %v6251 = vadd.f32 %v6074, %v6250
  %v6252 = vpop.f32.mrb[0].mxu0
  %v6253 = vpop.f32.mrb[0].mxu0
  %v6254 = vadd.f32 %v6077, %v6253
  %v6255 = vpop.f32.mrb[0].mxu0
  %6256 = vmatprep.mubr.bf16.mxu0 %v3838
  %6257 = vmatmul.mubr.bf16.gmra.mrb[0].mxu0 %v3604
  %v6258 = vpop.f32.mrb[0].mxu0
  %v6259 = vadd.f32 %v6082, %v6258
  %v6260 = vpop.f32.mrb[0].mxu0
  %v6261 = vpop.f32.mrb[0].mxu0
  %v6262 = vadd.f32 %v6085, %v6261
  %v6263 = vpop.f32.mrb[0].mxu0
  %6264 = vmatprep.mubr.bf16.mxu0 %v3839
  %6265 = vmatmul.mubr.bf16.gmra.mrb[0].mxu0 %v3605
  %v6266 = vpop.f32.mrb[0].mxu0
  %v6267 = vadd.f32 %v6090, %v6266
  %v6268 = vpop.f32.mrb[0].mxu0
  %v6269 = vpop.f32.mrb[0].mxu0
  %v6270 = vadd.f32 %v6093, %v6269
  %v6271 = vpop.f32.mrb[0].mxu0
  %6272 = vmatprep.mubr.bf16.mxu0 %v3840
  %6273 = vmatmul.mubr.bf16.gmra.mrb[0].mxu0 %v3606
  %v6274 = vpop.f32.mrb[0].mxu0
  %v6275 = vadd.f32 %v6098, %v6274
  %v6276 = vpop.f32.mrb[0].mxu0
  %v6277 = vpop.f32.mrb[0].mxu0
  %v6278 = vadd.f32 %v6101, %v6277
  %v6279 = vpop.f32.mrb[0].mxu0
  %6280 = vmatprep.mubr.bf16.mxu0 %v3841
  %6281 = vmatmul.mubr.bf16.gmra.mrb[0].mxu0 %v3607
  %v6282 = vpop.f32.mrb[0].mxu0
  %v6283 = vadd.f32 %v6106, %v6282
  %v6284 = vpop.f32.mrb[0].mxu0
  %v6285 = vpop.f32.mrb[0].mxu0
  %v6286 = vadd.f32 %v6109, %v6285
  %v6287 = vpop.f32.mrb[0].mxu0
  %6288 = vdwg.mxu0
  %6289 = vmax.xlane.f32.xlu0 %v6147
  %v6290 = vpop.xlane.xlu0 %6289
  %6291 = vmax.xlane.f32.xlu0 %v6150
  %v6292 = vpop.xlane.xlu0 %6291
  %6293 = vmax.xlane.f32.xlu0 %v6155
  %v6294 = vpop.xlane.xlu0 %6293
  %6295 = vmax.xlane.f32.xlu0 %v6158
  %v6296 = vpop.xlane.xlu0 %6295
  %6297 = vmax.xlane.f32.xlu0 %v6163
  %v6298 = vpop.xlane.xlu0 %6297
  %6299 = vmax.xlane.f32.xlu0 %v6166
  %v6300 = vpop.xlane.xlu0 %6299
  %6301 = vmax.xlane.f32.xlu0 %v6171
  %v6302 = vpop.xlane.xlu0 %6301
  %6303 = vmax.xlane.f32.xlu0 %v6174
  %v6304 = vpop.xlane.xlu0 %6303
  %6305 = vmax.xlane.f32.xlu0 %v6179
  %v6306 = vpop.xlane.xlu0 %6305
  %6307 = vmax.xlane.f32.xlu0 %v6182
  %v6308 = vpop.xlane.xlu0 %6307
  %6309 = vmax.xlane.f32.xlu0 %v6187
  %v6310 = vpop.xlane.xlu0 %6309
  %6311 = vmax.xlane.f32.xlu0 %v6190
  %v6312 = vpop.xlane.xlu0 %6311
  %6313 = vmax.xlane.f32.xlu0 %v6195
  %v6314 = vpop.xlane.xlu0 %6313
  %6315 = vmax.xlane.f32.xlu0 %v6198
  %v6316 = vpop.xlane.xlu0 %6315
  %6317 = vmax.xlane.f32.xlu0 %v6203
  %v6318 = vpop.xlane.xlu0 %6317
  %6319 = vmax.xlane.f32.xlu0 %v6206
  %v6320 = vpop.xlane.xlu0 %6319
  %6321 = vmax.xlane.f32.xlu0 %v6211
  %v6322 = vpop.xlane.xlu0 %6321
  %6323 = vmax.xlane.f32.xlu0 %v6214
  %v6324 = vpop.xlane.xlu0 %6323
  %6325 = vmax.xlane.f32.xlu0 %v6219
  %v6326 = vpop.xlane.xlu0 %6325
  %6327 = vmax.xlane.f32.xlu0 %v6222
  %v6328 = vpop.xlane.xlu0 %6327
  %6329 = vmax.xlane.f32.xlu0 %v6227
  %v6330 = vpop.xlane.xlu0 %6329
  %6331 = vmax.xlane.f32.xlu0 %v6230
  %v6332 = vpop.xlane.xlu0 %6331
  %6333 = vmax.xlane.f32.xlu0 %v6235
  %v6334 = vpop.xlane.xlu0 %6333
  %6335 = vmax.xlane.f32.xlu0 %v6238
  %v6336 = vpop.xlane.xlu0 %6335
  %6337 = vmax.xlane.f32.xlu0 %v6243
  %v6338 = vpop.xlane.xlu0 %6337
  %6339 = vmax.xlane.f32.xlu0 %v6246
  %v6340 = vpop.xlane.xlu0 %6339
  %6341 = vmax.xlane.f32.xlu0 %v6251
  %v6342 = vpop.xlane.xlu0 %6341
  %6343 = vmax.xlane.f32.xlu0 %v6254
  %v6344 = vpop.xlane.xlu0 %6343
  %6345 = vmax.xlane.f32.xlu0 %v6259
  %v6346 = vpop.xlane.xlu0 %6345
  %6347 = vmax.xlane.f32.xlu0 %v6262
  %v6348 = vpop.xlane.xlu0 %6347
  %6349 = vmax.xlane.f32.xlu0 %v6267
  %v6350 = vpop.xlane.xlu0 %6349
  %6351 = vmax.xlane.f32.xlu0 %v6270
  %v6352 = vpop.xlane.xlu0 %6351
  %6353 = vmax.xlane.f32.xlu0 %v6275
  %v6354 = vpop.xlane.xlu0 %6353
  %6355 = vmax.xlane.f32.xlu0 %v6278
  %v6356 = vpop.xlane.xlu0 %6355
  %6357 = vmax.xlane.f32.xlu0 %v6283
  %v6358 = vpop.xlane.xlu0 %6357
  %6359 = vmax.xlane.f32.xlu0 %v6286
  %v6360 = vpop.xlane.xlu0 %6359
  %v6361 = vsub.f32 %v6147, %v6290
  %v6362 = vsub.f32 %v6150, %v6292
  %v6363 = vsub.f32 %v6155, %v6294
  %v6364 = vsub.f32 %v6158, %v6296
  %v6365 = vsub.f32 %v6163, %v6298
  %v6366 = vsub.f32 %v6166, %v6300
  %v6367 = vsub.f32 %v6171, %v6302
  %v6368 = vsub.f32 %v6174, %v6304
  %v6369 = vsub.f32 %v6179, %v6306
  %v6370 = vsub.f32 %v6182, %v6308
  %v6371 = vsub.f32 %v6187, %v6310
  %v6372 = vsub.f32 %v6190, %v6312
  %v6373 = vsub.f32 %v6195, %v6314
  %v6374 = vsub.f32 %v6198, %v6316
  %v6375 = vsub.f32 %v6203, %v6318
  %v6376 = vsub.f32 %v6206, %v6320
  %v6377 = vsub.f32 %v6211, %v6322
  %v6378 = vsub.f32 %v6214, %v6324
  %v6379 = vsub.f32 %v6219, %v6326
  %v6380 = vsub.f32 %v6222, %v6328
  %v6381 = vsub.f32 %v6227, %v6330
  %v6382 = vsub.f32 %v6230, %v6332
  %v6383 = vsub.f32 %v6235, %v6334
  %v6384 = vsub.f32 %v6238, %v6336
  %v6385 = vsub.f32 %v6243, %v6338
  %v6386 = vsub.f32 %v6246, %v6340
  %v6387 = vsub.f32 %v6251, %v6342
  %v6388 = vsub.f32 %v6254, %v6344
  %v6389 = vsub.f32 %v6259, %v6346
  %v6390 = vsub.f32 %v6262, %v6348
  %v6391 = vsub.f32 %v6267, %v6350
  %v6392 = vsub.f32 %v6270, %v6352
  %v6393 = vsub.f32 %v6275, %v6354
  %v6394 = vsub.f32 %v6278, %v6356
  %v6395 = vsub.f32 %v6283, %v6358
  %v6396 = vsub.f32 %v6286, %v6360
  %v6397 = vmul.f32 %v6361, 1.442695
  %v6398 = vpow.pop %v6397
  %v6399 = vmul.f32 %v6362, 1.442695
  %v6400 = vpow.pop %v6399
  %v6401 = vmul.f32 %v6363, 1.442695
  %v6402 = vpow.pop %v6401
  %v6403 = vmul.f32 %v6364, 1.442695
  %v6404 = vpow.pop %v6403
  %v6405 = vmul.f32 %v6365, 1.442695
  %v6406 = vpow.pop %v6405
  %v6407 = vmul.f32 %v6366, 1.442695
  %v6408 = vpow.pop %v6407
  %v6409 = vmul.f32 %v6367, 1.442695
  %v6410 = vpow.pop %v6409
  %v6411 = vmul.f32 %v6368, 1.442695
  %v6412 = vpow.pop %v6411
  %v6413 = vmul.f32 %v6369, 1.442695
  %v6414 = vpow.pop %v6413
  %v6415 = vmul.f32 %v6370, 1.442695
  %v6416 = vpow.pop %v6415
  %v6417 = vmul.f32 %v6371, 1.442695
  %v6418 = vpow.pop %v6417
  %v6419 = vmul.f32 %v6372, 1.442695
  %v6420 = vpow.pop %v6419
  %v6421 = vmul.f32 %v6373, 1.442695
  %v6422 = vpow.pop %v6421
  %v6423 = vmul.f32 %v6374, 1.442695
  %v6424 = vpow.pop %v6423
  %v6425 = vmul.f32 %v6375, 1.442695
  %v6426 = vpow.pop %v6425
  %v6427 = vmul.f32 %v6376, 1.442695
  %v6428 = vpow.pop %v6427
  %v6429 = vmul.f32 %v6377, 1.442695
  %v6430 = vpow.pop %v6429
  %v6431 = vmul.f32 %v6378, 1.442695
  %v6432 = vpow.pop %v6431
  %v6433 = vmul.f32 %v6379, 1.442695
  %v6434 = vpow.pop %v6433
  %v6435 = vmul.f32 %v6380, 1.442695
  %v6436 = vpow.pop %v6435
  %v6437 = vmul.f32 %v6381, 1.442695
  %v6438 = vpow.pop %v6437
  %v6439 = vmul.f32 %v6382, 1.442695
  %v6440 = vpow.pop %v6439
  %v6441 = vmul.f32 %v6383, 1.442695
  %v6442 = vpow.pop %v6441
  %v6443 = vmul.f32 %v6384, 1.442695
  %v6444 = vpow.pop %v6443
  %v6445 = vmul.f32 %v6385, 1.442695
  %v6446 = vpow.pop %v6445
  %v6447 = vmul.f32 %v6386, 1.442695
  %v6448 = vpow.pop %v6447
  %v6449 = vmul.f32 %v6387, 1.442695
  %v6450 = vpow.pop %v6449
  %v6451 = vmul.f32 %v6388, 1.442695
  %v6452 = vpow.pop %v6451
  %v6453 = vmul.f32 %v6389, 1.442695
  %v6454 = vpow.pop %v6453
  %v6455 = vmul.f32 %v6390, 1.442695
  %v6456 = vpow.pop %v6455
  %v6457 = vmul.f32 %v6391, 1.442695
  %v6458 = vpow.pop %v6457
  %v6459 = vmul.f32 %v6392, 1.442695
  %v6460 = vpow.pop %v6459
  %v6461 = vmul.f32 %v6393, 1.442695
  %v6462 = vpow.pop %v6461
  %v6463 = vmul.f32 %v6394, 1.442695
  %v6464 = vpow.pop %v6463
  %v6465 = vmul.f32 %v6395, 1.442695
  %v6466 = vpow.pop %v6465
  %v6467 = vmul.f32 %v6396, 1.442695
  %v6468 = vpow.pop %v6467
  %v6469 = vld [vmem:[%s5] sm:$0xff]
  %v6470 = vld [vmem:[%s5 + $0x8] sm:$0xff]
  %v6471 = vld [vmem:[%s5 + $0x10] sm:$0xff]
  %v6472 = vld [vmem:[%s5 + $0x18] sm:$0xff]
  %v6473 = vld [vmem:[%s5 + $0x20] sm:$0xff]
  %v6474 = vld [vmem:[%s5 + $0x28] sm:$0xff]
  %v6475 = vld [vmem:[%s5 + $0x30] sm:$0xff]
  %v6476 = vld [vmem:[%s5 + $0x38] sm:$0xff]
  %v6477 = vld [vmem:[%s5 + $0x40] sm:$0xff]
  %v6478 = vld [vmem:[%s5 + $0x48] sm:$0xff]
  %v6479 = vld [vmem:[%s5 + $0x50] sm:$0xff]
  %v6480 = vld [vmem:[%s5 + $0x58] sm:$0xff]
  %v6481 = vld [vmem:[%s5 + $0x60] sm:$0xff]
  %v6482 = vld [vmem:[%s5 + $0x68] sm:$0xff]
  %v6483 = vld [vmem:[%s5 + $0x70] sm:$0xff]
  %v6484 = vld [vmem:[%s5 + $0x78] sm:$0xff]
  %6485 = vmatprep.subr.mxu0 0.0
  %6486 = vmatpush1.msra.mxu0 %v6469
  %6487 = vmatprep.subr.mxu0 0.0
  %6488 = vmatpush1.msra.mxu0 %v6470
  %6489 = vmatprep.subr.mxu0 0.0
  %6490 = vmatpush1.msra.mxu0 %v6471
  %6491 = vmatprep.subr.mxu0 0.0
  %6492 = vmatpush1.msra.mxu0 %v6472
  %6493 = vmatprep.subr.mxu0 0.0
  %6494 = vmatpush1.msra.mxu0 %v6473
  %6495 = vmatprep.subr.mxu0 0.0
  %6496 = vmatpush1.msra.mxu0 %v6474
  %6497 = vmatprep.subr.mxu0 0.0
  %6498 = vmatpush1.msra.mxu0 %v6475
  %6499 = vmatprep.subr.mxu0 0.0
  %6500 = vmatpush1.msra.mxu0 %v6476
  %6501 = vmatprep.subr.mxu0 0.0
  %6502 = vmatpush1.msra.mxu0 %v6477
  %6503 = vmatprep.subr.mxu0 0.0
  %6504 = vmatpush1.msra.mxu0 %v6478
  %6505 = vmatprep.subr.mxu0 0.0
  %6506 = vmatpush1.msra.mxu0 %v6479
  %6507 = vmatprep.subr.mxu0 0.0
  %6508 = vmatpush1.msra.mxu0 %v6480
  %6509 = vmatprep.subr.mxu0 0.0
  %6510 = vmatpush1.msra.mxu0 %v6481
  %6511 = vmatprep.subr.mxu0 0.0
  %6512 = vmatpush1.msra.mxu0 %v6482
  %6513 = vmatprep.subr.mxu0 0.0
  %6514 = vmatpush1.msra.mxu0 %v6483
  %6515 = vmatprep.subr.mxu0 0.0
  %6516 = vmatpush1.msra.mxu0 %v6484
  %6517 = vmatprep.subr.mxu0 0.0
  %6518 = vmatpush1.msra.mxu0 0.0
  %6519 = vmatprep.subr.mxu0 0.0
  %6520 = vmatpush1.msra.mxu0 0.0
  %6521 = vmatprep.subr.mxu0 0.0
  %6522 = vmatpush1.msra.mxu0 0.0
  %6523 = vmatprep.subr.mxu0 0.0
  %6524 = vmatpush1.msra.mxu0 0.0
  %6525 = vmatprep.subr.mxu0 0.0
  %6526 = vmatpush1.msra.mxu0 0.0
  %6527 = vmatprep.subr.mxu0 0.0
  %6528 = vmatpush1.msra.mxu0 0.0
  %6529 = vmatprep.subr.mxu0 0.0
  %6530 = vmatpush1.msra.mxu0 0.0
  %6531 = vmatprep.subr.mxu0 0.0
  %6532 = vmatpush1.msra.mxu0 0.0
  %6533 = vmatprep.subr.mxu0 0.0
  %6534 = vmatpush1.msra.mxu0 0.0
  %6535 = vmatprep.subr.mxu0 0.0
  %6536 = vmatpush1.msra.mxu0 0.0
  %6537 = vmatprep.subr.mxu0 0.0
  %6538 = vmatpush1.msra.mxu0 0.0
  %6539 = vmatprep.subr.mxu0 0.0
  %6540 = vmatpush1.msra.mxu0 0.0
  %6541 = vmatprep.subr.mxu0 0.0
  %6542 = vmatpush1.msra.mxu0 0.0
  %6543 = vmatprep.subr.mxu0 0.0
  %6544 = vmatpush1.msra.mxu0 0.0
  %6545 = vmatprep.subr.mxu0 0.0
  %6546 = vmatpush1.msra.mxu0 0.0
  %6547 = vmatprep.subr.mxu0 0.0
  %6548 = vmatpush1.msra.mxu0 0.0
  %6549 = vmatprep.mubr.f32.mxu0 0.0
  %6550 = vmatmul.mubr.f32.gmra.mrb[0].mxu0 %v6398
  %v6551 = vpop.f32.mrb[0].mxu0
  %v6552 = vadd.f32 0.0, %v6551
  %v6553 = vpop.f32.mrb[0].mxu0
  %6554 = vmatprep.mubr.f32.mxu0 0.0
  %6555 = vmatmul.mubr.f32.gmra.mrb[0].mxu0 %v6400
  %v6556 = vpop.f32.mrb[0].mxu0
  %v6557 = vadd.f32 0.0, %v6556
  %v6558 = vpop.f32.mrb[0].mxu0
  %6559 = vmatprep.mubr.f32.mxu0 0.0
  %6560 = vmatmul.mubr.f32.gmra.mrb[0].mxu0 %v6402
  %v6561 = vpop.f32.mrb[0].mxu0
  %v6562 = vadd.f32 0.0, %v6561
  %v6563 = vpop.f32.mrb[0].mxu0
  %6564 = vmatprep.mubr.f32.mxu0 0.0
  %6565 = vmatmul.mubr.f32.gmra.mrb[0].mxu0 %v6404
  %v6566 = vpop.f32.mrb[0].mxu0
  %v6567 = vadd.f32 0.0, %v6566
  %v6568 = vpop.f32.mrb[0].mxu0
  %6569 = vmatprep.mubr.f32.mxu0 0.0
  %6570 = vmatmul.mubr.f32.gmra.mrb[0].mxu0 %v6406
  %v6571 = vpop.f32.mrb[0].mxu0
  %v6572 = vadd.f32 0.0, %v6571
  %v6573 = vpop.f32.mrb[0].mxu0
  %6574 = vmatprep.mubr.f32.mxu0 0.0
  %6575 = vmatmul.mubr.f32.gmra.mrb[0].mxu0 %v6408
  %v6576 = vpop.f32.mrb[0].mxu0
  %v6577 = vadd.f32 0.0, %v6576
  %v6578 = vpop.f32.mrb[0].mxu0
  %6579 = vmatprep.mubr.f32.mxu0 0.0
  %6580 = vmatmul.mubr.f32.gmra.mrb[0].mxu0 %v6410
  %v6581 = vpop.f32.mrb[0].mxu0
  %v6582 = vadd.f32 0.0, %v6581
  %v6583 = vpop.f32.mrb[0].mxu0
  %6584 = vmatprep.mubr.f32.mxu0 0.0
  %6585 = vmatmul.mubr.f32.gmra.mrb[0].mxu0 %v6412
  %v6586 = vpop.f32.mrb[0].mxu0
  %v6587 = vadd.f32 0.0, %v6586
  %v6588 = vpop.f32.mrb[0].mxu0
  %6589 = vmatprep.mubr.f32.mxu0 0.0
  %6590 = vmatmul.mubr.f32.gmra.mrb[0].mxu0 %v6414
  %v6591 = vpop.f32.mrb[0].mxu0
  %v6592 = vadd.f32 0.0, %v6591
  %v6593 = vpop.f32.mrb[0].mxu0
  %6594 = vmatprep.mubr.f32.mxu0 0.0
  %6595 = vmatmul.mubr.f32.gmra.mrb[0].mxu0 %v6416
  %v6596 = vpop.f32.mrb[0].mxu0
  %v6597 = vadd.f32 0.0, %v6596
  %v6598 = vpop.f32.mrb[0].mxu0
  %6599 = vmatprep.mubr.f32.mxu0 0.0
  %6600 = vmatmul.mubr.f32.gmra.mrb[0].mxu0 %v6418
  %v6601 = vpop.f32.mrb[0].mxu0
  %v6602 = vadd.f32 0.0, %v6601
  %v6603 = vpop.f32.mrb[0].mxu0
  %6604 = vmatprep.mubr.f32.mxu0 0.0
  %6605 = vmatmul.mubr.f32.gmra.mrb[0].mxu0 %v6420
  %v6606 = vpop.f32.mrb[0].mxu0
  %v6607 = vadd.f32 0.0, %v6606
  %v6608 = vpop.f32.mrb[0].mxu0
  %6609 = vmatprep.mubr.f32.mxu0 0.0
  %6610 = vmatmul.mubr.f32.gmra.mrb[0].mxu0 %v6422
  %v6611 = vpop.f32.mrb[0].mxu0
  %v6612 = vadd.f32 0.0, %v6611
  %v6613 = vpop.f32.mrb[0].mxu0
  %6614 = vmatprep.mubr.f32.mxu0 0.0
  %6615 = vmatmul.mubr.f32.gmra.mrb[0].mxu0 %v6424
  %v6616 = vpop.f32.mrb[0].mxu0
  %v6617 = vadd.f32 0.0, %v6616
  %v6618 = vpop.f32.mrb[0].mxu0
  %6619 = vmatprep.mubr.f32.mxu0 0.0
  %6620 = vmatmul.mubr.f32.gmra.mrb[0].mxu0 %v6426
  %v6621 = vpop.f32.mrb[0].mxu0
  %v6622 = vadd.f32 0.0, %v6621
  %v6623 = vpop.f32.mrb[0].mxu0
  %6624 = vmatprep.mubr.f32.mxu0 0.0
  %6625 = vmatmul.mubr.f32.gmra.mrb[0].mxu0 %v6428
  %v6626 = vpop.f32.mrb[0].mxu0
  %v6627 = vadd.f32 0.0, %v6626
  %v6628 = vpop.f32.mrb[0].mxu0
  %6629 = vmatprep.mubr.f32.mxu0 0.0
  %6630 = vmatmul.mubr.f32.gmra.mrb[0].mxu0 %v6430
  %v6631 = vpop.f32.mrb[0].mxu0
  %v6632 = vadd.f32 0.0, %v6631
  %v6633 = vpop.f32.mrb[0].mxu0
  %6634 = vmatprep.mubr.f32.mxu0 0.0
  %6635 = vmatmul.mubr.f32.gmra.mrb[0].mxu0 %v6432
  %v6636 = vpop.f32.mrb[0].mxu0
  %v6637 = vadd.f32 0.0, %v6636
  %v6638 = vpop.f32.mrb[0].mxu0
  %6639 = vmatprep.mubr.f32.mxu0 0.0
  %6640 = vmatmul.mubr.f32.gmra.mrb[0].mxu0 %v6434
  %v6641 = vpop.f32.mrb[0].mxu0
  %v6642 = vadd.f32 0.0, %v6641
  %v6643 = vpop.f32.mrb[0].mxu0
  %6644 = vmatprep.mubr.f32.mxu0 0.0
  %6645 = vmatmul.mubr.f32.gmra.mrb[0].mxu0 %v6436
  %v6646 = vpop.f32.mrb[0].mxu0
  %v6647 = vadd.f32 0.0, %v6646
  %v6648 = vpop.f32.mrb[0].mxu0
  %6649 = vmatprep.mubr.f32.mxu0 0.0
  %6650 = vmatmul.mubr.f32.gmra.mrb[0].mxu0 %v6438
  %v6651 = vpop.f32.mrb[0].mxu0
  %v6652 = vadd.f32 0.0, %v6651
  %v6653 = vpop.f32.mrb[0].mxu0
  %6654 = vmatprep.mubr.f32.mxu0 0.0
  %6655 = vmatmul.mubr.f32.gmra.mrb[0].mxu0 %v6440
  %v6656 = vpop.f32.mrb[0].mxu0
  %v6657 = vadd.f32 0.0, %v6656
  %v6658 = vpop.f32.mrb[0].mxu0
  %6659 = vmatprep.mubr.f32.mxu0 0.0
  %6660 = vmatmul.mubr.f32.gmra.mrb[0].mxu0 %v6442
  %v6661 = vpop.f32.mrb[0].mxu0
  %v6662 = vadd.f32 0.0, %v6661
  %v6663 = vpop.f32.mrb[0].mxu0
  %6664 = vmatprep.mubr.f32.mxu0 0.0
  %6665 = vmatmul.mubr.f32.gmra.mrb[0].mxu0 %v6444
  %v6666 = vpop.f32.mrb[0].mxu0
  %v6667 = vadd.f32 0.0, %v6666
  %v6668 = vpop.f32.mrb[0].mxu0
  %6669 = vmatprep.mubr.f32.mxu0 0.0
  %6670 = vmatmul.mubr.f32.gmra.mrb[0].mxu0 %v6446
  %v6671 = vpop.f32.mrb[0].mxu0
  %v6672 = vadd.f32 0.0, %v6671
  %v6673 = vpop.f32.mrb[0].mxu0
  %6674 = vmatprep.mubr.f32.mxu0 0.0
  %6675 = vmatmul.mubr.f32.gmra.mrb[0].mxu0 %v6448
  %v6676 = vpop.f32.mrb[0].mxu0
  %v6677 = vadd.f32 0.0, %v6676
  %v6678 = vpop.f32.mrb[0].mxu0
  %6679 = vmatprep.mubr.f32.mxu0 0.0
  %6680 = vmatmul.mubr.f32.gmra.mrb[0].mxu0 %v6450
  %v6681 = vpop.f32.mrb[0].mxu0
  %v6682 = vadd.f32 0.0, %v6681
  %v6683 = vpop.f32.mrb[0].mxu0
  %6684 = vmatprep.mubr.f32.mxu0 0.0
  %6685 = vmatmul.mubr.f32.gmra.mrb[0].mxu0 %v6452
  %v6686 = vpop.f32.mrb[0].mxu0
  %v6687 = vadd.f32 0.0, %v6686
  %v6688 = vpop.f32.mrb[0].mxu0
  %6689 = vmatprep.mubr.f32.mxu0 0.0
  %6690 = vmatmul.mubr.f32.gmra.mrb[0].mxu0 %v6454
  %v6691 = vpop.f32.mrb[0].mxu0
  %v6692 = vadd.f32 0.0, %v6691
  %v6693 = vpop.f32.mrb[0].mxu0
  %6694 = vmatprep.mubr.f32.mxu0 0.0
  %6695 = vmatmul.mubr.f32.gmra.mrb[0].mxu0 %v6456
  %v6696 = vpop.f32.mrb[0].mxu0
  %v6697 = vadd.f32 0.0, %v6696
  %v6698 = vpop.f32.mrb[0].mxu0
  %6699 = vmatprep.mubr.f32.mxu0 0.0
  %6700 = vmatmul.mubr.f32.gmra.mrb[0].mxu0 %v6458
  %v6701 = vpop.f32.mrb[0].mxu0
  %v6702 = vadd.f32 0.0, %v6701
  %v6703 = vpop.f32.mrb[0].mxu0
  %6704 = vmatprep.mubr.f32.mxu0 0.0
  %6705 = vmatmul.mubr.f32.gmra.mrb[0].mxu0 %v6460
  %v6706 = vpop.f32.mrb[0].mxu0
  %v6707 = vadd.f32 0.0, %v6706
  %v6708 = vpop.f32.mrb[0].mxu0
  %6709 = vmatprep.mubr.f32.mxu0 0.0
  %6710 = vmatmul.mubr.f32.gmra.mrb[0].mxu0 %v6462
  %v6711 = vpop.f32.mrb[0].mxu0
  %v6712 = vadd.f32 0.0, %v6711
  %v6713 = vpop.f32.mrb[0].mxu0
  %6714 = vmatprep.mubr.f32.mxu0 0.0
  %6715 = vmatmul.mubr.f32.gmra.mrb[0].mxu0 %v6464
  %v6716 = vpop.f32.mrb[0].mxu0
  %v6717 = vadd.f32 0.0, %v6716
  %v6718 = vpop.f32.mrb[0].mxu0
  %6719 = vmatprep.mubr.f32.mxu0 0.0
  %6720 = vmatmul.mubr.f32.gmra.mrb[0].mxu0 %v6466
  %v6721 = vpop.f32.mrb[0].mxu0
  %v6722 = vadd.f32 0.0, %v6721
  %v6723 = vpop.f32.mrb[0].mxu0
  %6724 = vmatprep.mubr.f32.mxu0 0.0
  %6725 = vmatmul.mubr.f32.gmra.mrb[0].mxu0 %v6468
  %v6726 = vpop.f32.mrb[0].mxu0
  %v6727 = vadd.f32 0.0, %v6726
  %v6728 = vpop.f32.mrb[0].mxu0
  %6729 = vdwg.mxu0
  %v6730 = vmax.f32 %v6552, 1e-30
  %v6731 = vmax.f32 %v6557, 1e-30
  %v6732 = vmax.f32 %v6562, 1e-30
  %v6733 = vmax.f32 %v6567, 1e-30
  %v6734 = vmax.f32 %v6572, 1e-30
  %v6735 = vmax.f32 %v6577, 1e-30
  %v6736 = vmax.f32 %v6582, 1e-30
  %v6737 = vmax.f32 %v6587, 1e-30
  %v6738 = vmax.f32 %v6592, 1e-30
  %v6739 = vmax.f32 %v6597, 1e-30
  %v6740 = vmax.f32 %v6602, 1e-30
  %v6741 = vmax.f32 %v6607, 1e-30
  %v6742 = vmax.f32 %v6612, 1e-30
  %v6743 = vmax.f32 %v6617, 1e-30
  %v6744 = vmax.f32 %v6622, 1e-30
  %v6745 = vmax.f32 %v6627, 1e-30
  %v6746 = vmax.f32 %v6632, 1e-30
  %v6747 = vmax.f32 %v6637, 1e-30
  %v6748 = vmax.f32 %v6642, 1e-30
  %v6749 = vmax.f32 %v6647, 1e-30
  %v6750 = vmax.f32 %v6652, 1e-30
  %v6751 = vmax.f32 %v6657, 1e-30
  %v6752 = vmax.f32 %v6662, 1e-30
  %v6753 = vmax.f32 %v6667, 1e-30
  %v6754 = vmax.f32 %v6672, 1e-30
  %v6755 = vmax.f32 %v6677, 1e-30
  %v6756 = vmax.f32 %v6682, 1e-30
  %v6757 = vmax.f32 %v6687, 1e-30
  %v6758 = vmax.f32 %v6692, 1e-30
  %v6759 = vmax.f32 %v6697, 1e-30
  %v6760 = vmax.f32 %v6702, 1e-30
  %v6761 = vmax.f32 %v6707, 1e-30
  %v6762 = vmax.f32 %v6712, 1e-30
  %v6763 = vmax.f32 %v6717, 1e-30
  %v6764 = vmax.f32 %v6722, 1e-30
  %v6765 = vmax.f32 %v6727, 1e-30
  %v6766 = vrcp.pop %v6730
  %v6767 = vrcp.pop %v6731
  %v6768 = vrcp.pop %v6732
  %v6769 = vrcp.pop %v6733
  %v6770 = vrcp.pop %v6734
  %v6771 = vrcp.pop %v6735
  %v6772 = vrcp.pop %v6736
  %v6773 = vrcp.pop %v6737
  %v6774 = vrcp.pop %v6738
  %v6775 = vrcp.pop %v6739
  %v6776 = vrcp.pop %v6740
  %v6777 = vrcp.pop %v6741
  %v6778 = vrcp.pop %v6742
  %v6779 = vrcp.pop %v6743
  %v6780 = vrcp.pop %v6744
  %v6781 = vrcp.pop %v6745
  %v6782 = vrcp.pop %v6746
  %v6783 = vrcp.pop %v6747
  %v6784 = vrcp.pop %v6748
  %v6785 = vrcp.pop %v6749
  %v6786 = vrcp.pop %v6750
  %v6787 = vrcp.pop %v6751
  %v6788 = vrcp.pop %v6752
  %v6789 = vrcp.pop %v6753
  %v6790 = vrcp.pop %v6754
  %v6791 = vrcp.pop %v6755
  %v6792 = vrcp.pop %v6756
  %v6793 = vrcp.pop %v6757
  %v6794 = vrcp.pop %v6758
  %v6795 = vrcp.pop %v6759
  %v6796 = vrcp.pop %v6760
  %v6797 = vrcp.pop %v6761
  %v6798 = vrcp.pop %v6762
  %v6799 = vrcp.pop %v6763
  %v6800 = vrcp.pop %v6764
  %v6801 = vrcp.pop %v6765
  %v6802 = vmul.f32 %v6398, %v6766
  %v6803 = vmul.f32 %v6400, %v6767
  %v6804 = vmul.f32 %v6402, %v6768
  %v6805 = vmul.f32 %v6404, %v6769
  %v6806 = vmul.f32 %v6406, %v6770
  %v6807 = vmul.f32 %v6408, %v6771
  %v6808 = vmul.f32 %v6410, %v6772
  %v6809 = vmul.f32 %v6412, %v6773
  %v6810 = vmul.f32 %v6414, %v6774
  %v6811 = vmul.f32 %v6416, %v6775
  %v6812 = vmul.f32 %v6418, %v6776
  %v6813 = vmul.f32 %v6420, %v6777
  %v6814 = vmul.f32 %v6422, %v6778
  %v6815 = vmul.f32 %v6424, %v6779
  %v6816 = vmul.f32 %v6426, %v6780
  %v6817 = vmul.f32 %v6428, %v6781
  %v6818 = vmul.f32 %v6430, %v6782
  %v6819 = vmul.f32 %v6432, %v6783
  %v6820 = vmul.f32 %v6434, %v6784
  %v6821 = vmul.f32 %v6436, %v6785
  %v6822 = vmul.f32 %v6438, %v6786
  %v6823 = vmul.f32 %v6440, %v6787
  %v6824 = vmul.f32 %v6442, %v6788
  %v6825 = vmul.f32 %v6444, %v6789
  %v6826 = vmul.f32 %v6446, %v6790
  %v6827 = vmul.f32 %v6448, %v6791
  %v6828 = vmul.f32 %v6450, %v6792
  %v6829 = vmul.f32 %v6452, %v6793
  %v6830 = vmul.f32 %v6454, %v6794
  %v6831 = vmul.f32 %v6456, %v6795
  %v6832 = vmul.f32 %v6458, %v6796
  %v6833 = vmul.f32 %v6460, %v6797
  %v6834 = vmul.f32 %v6462, %v6798
  %v6835 = vmul.f32 %v6464, %v6799
  %v6836 = vmul.f32 %v6466, %v6800
  %v6837 = vmul.f32 %v6468, %v6801
  %v6838 = vpack.c.bf16 %v6803, %v6802
  %v6839 = vpack.c.bf16 %v6805, %v6804
  %v6840 = vpack.c.bf16 %v6807, %v6806
  %v6841 = vpack.c.bf16 %v6809, %v6808
  %v6842 = vpack.c.bf16 %v6811, %v6810
  %v6843 = vpack.c.bf16 %v6813, %v6812
  %v6844 = vpack.c.bf16 %v6815, %v6814
  %v6845 = vpack.c.bf16 %v6817, %v6816
  %v6846 = vpack.c.bf16 %v6819, %v6818
  %v6847 = vpack.c.bf16 %v6821, %v6820
  %v6848 = vpack.c.bf16 %v6823, %v6822
  %v6849 = vpack.c.bf16 %v6825, %v6824
  %v6850 = vpack.c.bf16 %v6827, %v6826
  %v6851 = vpack.c.bf16 %v6829, %v6828
  %v6852 = vpack.c.bf16 %v6831, %v6830
  %v6853 = vpack.c.bf16 %v6833, %v6832
  %v6854 = vpack.c.bf16 %v6835, %v6834
  %v6855 = vpack.c.bf16 %v6837, %v6836
  %v6874 = vunpack.c.l.b16 %v6838
  %v6875 = vunpack.c.h.b16 %v6838
  %v6876 = vunpack.c.l.b16 %v6839
  %v6877 = vunpack.c.h.b16 %v6839
  %v6878 = vunpack.c.l.b16 %v6840
  %v6879 = vunpack.c.h.b16 %v6840
  %v6880 = vunpack.c.l.b16 %v6841
  %v6881 = vunpack.c.h.b16 %v6841
  %v6882 = vunpack.c.l.b16 %v6842
  %v6883 = vunpack.c.h.b16 %v6842
  %v6884 = vunpack.c.l.b16 %v6843
  %v6885 = vunpack.c.h.b16 %v6843
  %v6886 = vunpack.c.l.b16 %v6844
  %v6887 = vunpack.c.h.b16 %v6844
  %v6888 = vunpack.c.l.b16 %v6845
  %v6889 = vunpack.c.h.b16 %v6845
  %v6890 = vunpack.c.l.b16 %v6846
  %v6891 = vunpack.c.h.b16 %v6846
  %v6892 = vunpack.c.l.b16 %v6847
  %v6893 = vunpack.c.h.b16 %v6847
  %v6894 = vunpack.c.l.b16 %v6848
  %v6895 = vunpack.c.h.b16 %v6848
  %v6896 = vunpack.c.l.b16 %v6849
  %v6897 = vunpack.c.h.b16 %v6849
  %v6898 = vunpack.c.l.b16 %v6850
  %v6899 = vunpack.c.h.b16 %v6850
  %v6900 = vunpack.c.l.b16 %v6851
  %v6901 = vunpack.c.h.b16 %v6851
  %v6902 = vunpack.c.l.b16 %v6852
  %v6903 = vunpack.c.h.b16 %v6852
  %v6904 = vunpack.c.l.b16 %v6853
  %v6905 = vunpack.c.h.b16 %v6853
  %v6906 = vunpack.c.l.b16 %v6854
  %v6907 = vunpack.c.h.b16 %v6854
  %v6908 = vunpack.c.l.b16 %v6855
  %v6909 = vunpack.c.h.b16 %v6855
  %v6910 = vld [vmem:[%s6] sm:$0xff]
  %v6911 = vld [vmem:[%s6 + $0x8] sm:$0xff]
  %v6912 = vld [vmem:[%s6 + $0x10] sm:$0xff]
  %v6913 = vld [vmem:[%s6 + $0x18] sm:$0xff]
  %v6914 = vld [vmem:[%s6 + $0x20] sm:$0xff]
  %v6915 = vld [vmem:[%s6 + $0x28] sm:$0xff]
  %v6916 = vld [vmem:[%s6 + $0x30] sm:$0xff]
  %v6917 = vld [vmem:[%s6 + $0x38] sm:$0xff]
  %v6918 = vld [vmem:[%s6 + $0x40] sm:$0xff]
  %v6919 = vld [vmem:[%s6 + $0x48] sm:$0xff]
  %v6920 = vld [vmem:[%s6 + $0x50] sm:$0xff]
  %v6921 = vld [vmem:[%s6 + $0x58] sm:$0xff]
  %v6922 = vld [vmem:[%s6 + $0x60] sm:$0xff]
  %v6923 = vld [vmem:[%s6 + $0x68] sm:$0xff]
  %v6924 = vld [vmem:[%s6 + $0x70] sm:$0xff]
  %v6925 = vld [vmem:[%s6 + $0x78] sm:$0xff]
  %s6926 = scalar_lea.vmem %s6, 128
  %v6927 = vld [vmem:[%s6926] sm:$0xff]
  %v6928 = vld [vmem:[%s6926 + $0x8] sm:$0xff]
  %v6929 = vld [vmem:[%s6926 + $0x10] sm:$0xff]
  %v6930 = vld [vmem:[%s6926 + $0x18] sm:$0xff]
  %v6931 = vld [vmem:[%s6926 + $0x20] sm:$0xff]
  %v6932 = vld [vmem:[%s6926 + $0x28] sm:$0xff]
  %v6933 = vld [vmem:[%s6926 + $0x30] sm:$0xff]
  %v6934 = vld [vmem:[%s6926 + $0x38] sm:$0xff]
  %v6935 = vld [vmem:[%s6926 + $0x40] sm:$0xff]
  %v6936 = vld [vmem:[%s6926 + $0x48] sm:$0xff]
  %v6937 = vld [vmem:[%s6926 + $0x50] sm:$0xff]
  %v6938 = vld [vmem:[%s6926 + $0x58] sm:$0xff]
  %v6939 = vld [vmem:[%s6926 + $0x60] sm:$0xff]
  %v6940 = vld [vmem:[%s6926 + $0x68] sm:$0xff]
  %v6941 = vld [vmem:[%s6926 + $0x70] sm:$0xff]
  %v6942 = vld [vmem:[%s6926 + $0x78] sm:$0xff]
  %v6943 = vpack.c.b16 %v6876, %v6875
  %v6944 = vpack.c.b16 %v6878, %v6877
  %v6945 = vpack.c.b16 %v6881, %v6879
  %v6946 = vpack.c.b16 %v6883, %v6882
  %v6947 = vpack.c.b16 %v6885, %v6884
  %v6948 = vpack.c.b16 %v6888, %v6887
  %v6949 = vpack.c.b16 %v6890, %v6889
  %v6950 = vpack.c.b16 %v6893, %v6891
  %v6951 = vpack.c.b16 %v6895, %v6894
  %v6952 = vpack.c.b16 %v6897, %v6896
  %v6953 = vpack.c.b16 %v6900, %v6899
  %v6954 = vpack.c.b16 %v6902, %v6901
  %v6955 = vpack.c.b16 %v6903, %v6903
  %v6985 = vunpack.c.l.b16 %v6927
  %v6986 = vunpack.c.h.b16 %v6927
  %v6987 = vunpack.c.l.b16 %v6928
  %v6988 = vunpack.c.h.b16 %v6928
  %v6989 = vunpack.c.l.b16 %v6929
  %v6990 = vunpack.c.h.b16 %v6929
  %v6991 = vunpack.c.l.b16 %v6930
  %v6992 = vunpack.c.h.b16 %v6930
  %v6993 = vunpack.c.l.b16 %v6931
  %v6994 = vunpack.c.h.b16 %v6931
  %v6995 = vunpack.c.l.b16 %v6932
  %v6996 = vunpack.c.h.b16 %v6932
  %v6997 = vunpack.c.l.b16 %v6933
  %v6998 = vunpack.c.h.b16 %v6933
  %v6999 = vunpack.c.l.b16 %v6934
  %v7000 = vunpack.c.h.b16 %v6934
  %v7001 = vunpack.c.l.b16 %v6935
  %v7002 = vunpack.c.h.b16 %v6935
  %v7003 = vunpack.c.l.b16 %v6936
  %v7004 = vunpack.c.h.b16 %v6936
  %v7005 = vunpack.c.l.b16 %v6937
  %v7006 = vunpack.c.h.b16 %v6937
  %v7007 = vunpack.c.l.b16 %v6938
  %v7008 = vunpack.c.h.b16 %v6938
  %v7009 = vunpack.c.l.b16 %v6939
  %v7010 = vunpack.c.h.b16 %v6939
  %v7011 = vunpack.c.l.b16 %v6940
  %v7012 = vunpack.c.h.b16 %v6940
  %v7013 = vunpack.c.l.b16 %v6941
  %v7014 = vunpack.c.h.b16 %v6941
  %v7015 = vunpack.c.l.b16 %v6942
  %v7016 = vunpack.c.h.b16 %v6942
  %v7017 = vpack.c.b16 %v6987, %v6985
  %v7018 = vpack.c.b16 %v6988, %v6986
  %v7019 = vpack.c.b16 %v6991, %v6989
  %v7020 = vpack.c.b16 %v6992, %v6990
  %v7021 = vpack.c.b16 %v6995, %v6993
  %v7022 = vpack.c.b16 %v6996, %v6994
  %v7023 = vpack.c.b16 %v6999, %v6997
  %v7024 = vpack.c.b16 %v7000, %v6998
  %v7025 = vpack.c.b16 %v7003, %v7001
  %v7026 = vpack.c.b16 %v7004, %v7002
  %v7027 = vpack.c.b16 %v7007, %v7005
  %v7028 = vpack.c.b16 %v7008, %v7006
  %v7029 = vpack.c.b16 %v7011, %v7009
  %v7030 = vpack.c.b16 %v7012, %v7010
  %v7031 = vpack.c.b16 %v7015, %v7013
  %v7032 = vpack.c.b16 %v7016, %v7014
  %7049 = vmatprep.subr.bf16.mxu0 %v7018
  %7050 = vmatpush1.bf16.msra.mxu0 %v7017
  %7051 = vmatprep.subr.bf16.mxu0 %v7020
  %7052 = vmatpush1.bf16.msra.mxu0 %v7019
  %7053 = vmatprep.subr.bf16.mxu0 %v7022
  %7054 = vmatpush1.bf16.msra.mxu0 %v7021
  %7055 = vmatprep.subr.bf16.mxu0 %v7024
  %7056 = vmatpush1.bf16.msra.mxu0 %v7023
  %7057 = vmatprep.subr.bf16.mxu0 %v7026
  %7058 = vmatpush1.bf16.msra.mxu0 %v7025
  %7059 = vmatprep.subr.bf16.mxu0 %v7028
  %7060 = vmatpush1.bf16.msra.mxu0 %v7027
  %7061 = vmatprep.subr.bf16.mxu0 %v7030
  %7062 = vmatpush1.bf16.msra.mxu0 %v7029
  %7063 = vmatprep.subr.bf16.mxu0 %v7032
  %7064 = vmatpush1.bf16.msra.mxu0 %v7031
  %7065 = vmatprep.subr.bf16.mxu0 0
  %7066 = vmatpush1.bf16.msra.mxu0 0
  %7067 = vmatprep.subr.bf16.mxu0 0
  %7068 = vmatpush1.bf16.msra.mxu0 0
  %7069 = vmatprep.subr.bf16.mxu0 0
  %7070 = vmatpush1.bf16.msra.mxu0 0
  %7071 = vmatprep.subr.bf16.mxu0 0
  %7072 = vmatpush1.bf16.msra.mxu0 0
  %7073 = vmatprep.subr.bf16.mxu0 0
  %7074 = vmatpush1.bf16.msra.mxu0 0
  %7075 = vmatprep.subr.bf16.mxu0 0
  %7076 = vmatpush1.bf16.msra.mxu0 0
  %7077 = vmatprep.subr.bf16.mxu0 0
  %7078 = vmatpush1.bf16.msra.mxu0 0
  %7079 = vmatprep.subr.bf16.mxu0 0
  %7080 = vmatpush1.bf16.msra.mxu0 0
  %7081 = vmatprep.mubr.bf16.mxu0 0
  %7082 = vmatmul.mubr.bf16.gmra.mrb[0].mxu0 %v6943
  %v7083 = vpop.f32.mrb[0].mxu0
  %v7084 = vadd.f32 0.0, %v7083
  %v7085 = vpop.f32.mrb[0].mxu0
  %v7086 = vadd.f32 0.0, %v7085
  %v7087 = vpop.f32.mrb[0].mxu0
  %v7088 = vadd.f32 0.0, %v7087
  %v7089 = vpop.f32.mrb[0].mxu0
  %v7090 = vadd.f32 0.0, %v7089
  %7091 = vmatprep.mubr.bf16.mxu0 0
  %7092 = vmatmul.mubr.bf16.gmra.mrb[0].mxu0 %v6944
  %v7093 = vpop.f32.mrb[0].mxu0
  %v7094 = vadd.f32 0.0, %v7093
  %v7095 = vpop.f32.mrb[0].mxu0
  %v7096 = vadd.f32 0.0, %v7095
  %v7097 = vpop.f32.mrb[0].mxu0
  %v7098 = vadd.f32 0.0, %v7097
  %v7099 = vpop.f32.mrb[0].mxu0
  %v7100 = vadd.f32 0.0, %v7099
  %7101 = vmatprep.mubr.bf16.mxu0 0
  %7102 = vmatmul.mubr.bf16.gmra.mrb[0].mxu0 %v6945
  %v7103 = vpop.f32.mrb[0].mxu0
  %v7104 = vadd.f32 0.0, %v7103
  %v7105 = vpop.f32.mrb[0].mxu0
  %v7106 = vadd.f32 0.0, %v7105
  %v7107 = vpop.f32.mrb[0].mxu0
  %v7108 = vadd.f32 0.0, %v7107
  %v7109 = vpop.f32.mrb[0].mxu0
  %v7110 = vadd.f32 0.0, %v7109
  %7111 = vmatprep.mubr.bf16.mxu0 0
  %7112 = vmatmul.mubr.bf16.gmra.mrb[0].mxu0 %v6946
  %v7113 = vpop.f32.mrb[0].mxu0
  %v7114 = vadd.f32 0.0, %v7113
  %v7115 = vpop.f32.mrb[0].mxu0
  %v7116 = vadd.f32 0.0, %v7115
  %v7117 = vpop.f32.mrb[0].mxu0
  %v7118 = vadd.f32 0.0, %v7117
  %v7119 = vpop.f32.mrb[0].mxu0
  %v7120 = vadd.f32 0.0, %v7119
  %7121 = vmatprep.mubr.bf16.mxu0 0
  %7122 = vmatmul.mubr.bf16.gmra.mrb[0].mxu0 %v6947
  %v7123 = vpop.f32.mrb[0].mxu0
  %v7124 = vadd.f32 0.0, %v7123
  %v7125 = vpop.f32.mrb[0].mxu0
  %v7126 = vadd.f32 0.0, %v7125
  %v7127 = vpop.f32.mrb[0].mxu0
  %v7128 = vadd.f32 0.0, %v7127
  %v7129 = vpop.f32.mrb[0].mxu0
  %v7130 = vadd.f32 0.0, %v7129
  %7131 = vmatprep.mubr.bf16.mxu0 0
  %7132 = vmatmul.mubr.bf16.gmra.mrb[0].mxu0 %v6948
  %v7133 = vpop.f32.mrb[0].mxu0
  %v7134 = vadd.f32 0.0, %v7133
  %v7135 = vpop.f32.mrb[0].mxu0
  %v7136 = vadd.f32 0.0, %v7135
  %v7137 = vpop.f32.mrb[0].mxu0
  %v7138 = vadd.f32 0.0, %v7137
  %v7139 = vpop.f32.mrb[0].mxu0
  %v7140 = vadd.f32 0.0, %v7139
  %7141 = vmatprep.mubr.bf16.mxu0 0
  %7142 = vmatmul.mubr.bf16.gmra.mrb[0].mxu0 %v6949
  %v7143 = vpop.f32.mrb[0].mxu0
  %v7144 = vadd.f32 0.0, %v7143
  %v7145 = vpop.f32.mrb[0].mxu0
  %v7146 = vadd.f32 0.0, %v7145
  %v7147 = vpop.f32.mrb[0].mxu0
  %v7148 = vadd.f32 0.0, %v7147
  %v7149 = vpop.f32.mrb[0].mxu0
  %v7150 = vadd.f32 0.0, %v7149
  %7151 = vmatprep.mubr.bf16.mxu0 0
  %7152 = vmatmul.mubr.bf16.gmra.mrb[0].mxu0 %v6950
  %v7153 = vpop.f32.mrb[0].mxu0
  %v7154 = vadd.f32 0.0, %v7153
  %v7155 = vpop.f32.mrb[0].mxu0
  %v7156 = vadd.f32 0.0, %v7155
  %v7157 = vpop.f32.mrb[0].mxu0
  %v7158 = vadd.f32 0.0, %v7157
  %v7159 = vpop.f32.mrb[0].mxu0
  %v7160 = vadd.f32 0.0, %v7159
  %7161 = vmatprep.mubr.bf16.mxu0 0
  %7162 = vmatmul.mubr.bf16.gmra.mrb[0].mxu0 %v6951
  %v7163 = vpop.f32.mrb[0].mxu0
  %v7164 = vadd.f32 0.0, %v7163
  %v7165 = vpop.f32.mrb[0].mxu0
  %v7166 = vadd.f32 0.0, %v7165
  %v7167 = vpop.f32.mrb[0].mxu0
  %v7168 = vadd.f32 0.0, %v7167
  %v7169 = vpop.f32.mrb[0].mxu0
  %v7170 = vadd.f32 0.0, %v7169
  %7171 = vmatprep.mubr.bf16.mxu0 0
  %7172 = vmatmul.mubr.bf16.gmra.mrb[0].mxu0 %v6952
  %v7173 = vpop.f32.mrb[0].mxu0
  %v7174 = vadd.f32 0.0, %v7173
  %v7175 = vpop.f32.mrb[0].mxu0
  %v7176 = vadd.f32 0.0, %v7175
  %v7177 = vpop.f32.mrb[0].mxu0
  %v7178 = vadd.f32 0.0, %v7177
  %v7179 = vpop.f32.mrb[0].mxu0
  %v7180 = vadd.f32 0.0, %v7179
  %7181 = vmatprep.mubr.bf16.mxu0 0
  %7182 = vmatmul.mubr.bf16.gmra.mrb[0].mxu0 %v6953
  %v7183 = vpop.f32.mrb[0].mxu0
  %v7184 = vadd.f32 0.0, %v7183
  %v7185 = vpop.f32.mrb[0].mxu0
  %v7186 = vadd.f32 0.0, %v7185
  %v7187 = vpop.f32.mrb[0].mxu0
  %v7188 = vadd.f32 0.0, %v7187
  %v7189 = vpop.f32.mrb[0].mxu0
  %v7190 = vadd.f32 0.0, %v7189
  %7191 = vmatprep.mubr.bf16.mxu0 0
  %7192 = vmatmul.mubr.bf16.gmra.mrb[0].mxu0 %v6954
  %v7193 = vpop.f32.mrb[0].mxu0
  %v7194 = vadd.f32 0.0, %v7193
  %v7195 = vpop.f32.mrb[0].mxu0
  %v7196 = vadd.f32 0.0, %v7195
  %v7197 = vpop.f32.mrb[0].mxu0
  %v7198 = vadd.f32 0.0, %v7197
  %v7199 = vpop.f32.mrb[0].mxu0
  %v7200 = vadd.f32 0.0, %v7199
  %7201 = vmatprep.mubr.bf16.mxu0 0
  %7202 = vmatmul.mubr.bf16.gmra.mrb[0].mxu0 %v6955
  %v7203 = vpop.f32.mrb[0].mxu0
  %v7204 = vadd.f32 0.0, %v7203
  %v7205 = vpop.f32.mrb[0].mxu0
  %v7206 = vadd.f32 0.0, %v7205
  %v7207 = vpop.f32.mrb[0].mxu0
  %v7208 = vpop.f32.mrb[0].mxu0
  %7209 = vdwg.mxu0
  %v7210 = vpack.c.b16 %v6875, %v6874
  %v7211 = vpack.c.b16 %v6877, %v6876
  %v7212 = vpack.c.b16 %v6880, %v6878
  %v7213 = vpack.c.b16 %v6882, %v6881
  %v7214 = vpack.c.b16 %v6884, %v6883
  %v7215 = vpack.c.b16 %v6887, %v6886
  %v7216 = vpack.c.b16 %v6889, %v6888
  %v7217 = vpack.c.b16 %v6892, %v6890
  %v7218 = vpack.c.b16 %v6894, %v6893
  %v7219 = vpack.c.b16 %v6896, %v6895
  %v7220 = vpack.c.b16 %v6899, %v6898
  %v7221 = vpack.c.b16 %v6901, %v6900
  %v7222 = vpack.c.b16 %v6902, %v6902
  %v7252 = vunpack.c.l.b16 %v6910
  %v7253 = vunpack.c.h.b16 %v6910
  %v7254 = vunpack.c.l.b16 %v6911
  %v7255 = vunpack.c.h.b16 %v6911
  %v7256 = vunpack.c.l.b16 %v6912
  %v7257 = vunpack.c.h.b16 %v6912
  %v7258 = vunpack.c.l.b16 %v6913
  %v7259 = vunpack.c.h.b16 %v6913
  %v7260 = vunpack.c.l.b16 %v6914
  %v7261 = vunpack.c.h.b16 %v6914
  %v7262 = vunpack.c.l.b16 %v6915
  %v7263 = vunpack.c.h.b16 %v6915
  %v7264 = vunpack.c.l.b16 %v6916
  %v7265 = vunpack.c.h.b16 %v6916
  %v7266 = vunpack.c.l.b16 %v6917
  %v7267 = vunpack.c.h.b16 %v6917
  %v7268 = vunpack.c.l.b16 %v6918
  %v7269 = vunpack.c.h.b16 %v6918
  %v7270 = vunpack.c.l.b16 %v6919
  %v7271 = vunpack.c.h.b16 %v6919
  %v7272 = vunpack.c.l.b16 %v6920
  %v7273 = vunpack.c.h.b16 %v6920
  %v7274 = vunpack.c.l.b16 %v6921
  %v7275 = vunpack.c.h.b16 %v6921
  %v7276 = vunpack.c.l.b16 %v6922
  %v7277 = vunpack.c.h.b16 %v6922
  %v7278 = vunpack.c.l.b16 %v6923
  %v7279 = vunpack.c.h.b16 %v6923
  %v7280 = vunpack.c.l.b16 %v6924
  %v7281 = vunpack.c.h.b16 %v6924
  %v7282 = vunpack.c.l.b16 %v6925
  %v7283 = vunpack.c.h.b16 %v6925
  %v7284 = vpack.c.b16 %v7254, %v7252
  %v7285 = vpack.c.b16 %v7255, %v7253
  %v7286 = vpack.c.b16 %v7258, %v7256
  %v7287 = vpack.c.b16 %v7259, %v7257
  %v7288 = vpack.c.b16 %v7262, %v7260
  %v7289 = vpack.c.b16 %v7263, %v7261
  %v7290 = vpack.c.b16 %v7266, %v7264
  %v7291 = vpack.c.b16 %v7267, %v7265
  %v7292 = vpack.c.b16 %v7270, %v7268
  %v7293 = vpack.c.b16 %v7271, %v7269
  %v7294 = vpack.c.b16 %v7274, %v7272
  %v7295 = vpack.c.b16 %v7275, %v7273
  %v7296 = vpack.c.b16 %v7278, %v7276
  %v7297 = vpack.c.b16 %v7279, %v7277
  %v7298 = vpack.c.b16 %v7282, %v7280
  %v7299 = vpack.c.b16 %v7283, %v7281
  %7316 = vmatprep.subr.bf16.mxu0 %v7285
  %7317 = vmatpush1.bf16.msra.mxu0 %v7284
  %7318 = vmatprep.subr.bf16.mxu0 %v7287
  %7319 = vmatpush1.bf16.msra.mxu0 %v7286
  %7320 = vmatprep.subr.bf16.mxu0 %v7289
  %7321 = vmatpush1.bf16.msra.mxu0 %v7288
  %7322 = vmatprep.subr.bf16.mxu0 %v7291
  %7323 = vmatpush1.bf16.msra.mxu0 %v7290
  %7324 = vmatprep.subr.bf16.mxu0 %v7293
  %7325 = vmatpush1.bf16.msra.mxu0 %v7292
  %7326 = vmatprep.subr.bf16.mxu0 %v7295
  %7327 = vmatpush1.bf16.msra.mxu0 %v7294
  %7328 = vmatprep.subr.bf16.mxu0 %v7297
  %7329 = vmatpush1.bf16.msra.mxu0 %v7296
  %7330 = vmatprep.subr.bf16.mxu0 %v7299
  %7331 = vmatpush1.bf16.msra.mxu0 %v7298
  %7332 = vmatprep.subr.bf16.mxu0 0
  %7333 = vmatpush1.bf16.msra.mxu0 0
  %7334 = vmatprep.subr.bf16.mxu0 0
  %7335 = vmatpush1.bf16.msra.mxu0 0
  %7336 = vmatprep.subr.bf16.mxu0 0
  %7337 = vmatpush1.bf16.msra.mxu0 0
  %7338 = vmatprep.subr.bf16.mxu0 0
  %7339 = vmatpush1.bf16.msra.mxu0 0
  %7340 = vmatprep.subr.bf16.mxu0 0
  %7341 = vmatpush1.bf16.msra.mxu0 0
  %7342 = vmatprep.subr.bf16.mxu0 0
  %7343 = vmatpush1.bf16.msra.mxu0 0
  %7344 = vmatprep.subr.bf16.mxu0 0
  %7345 = vmatpush1.bf16.msra.mxu0 0
  %7346 = vmatprep.subr.bf16.mxu0 0
  %7347 = vmatpush1.bf16.msra.mxu0 0
  %7348 = vmatprep.mubr.bf16.mxu0 0
  %7349 = vmatmul.mubr.bf16.gmra.mrb[0].mxu0 %v7210
  %v7350 = vpop.f32.mrb[0].mxu0
  %v7351 = vadd.f32 %v7084, %v7350
  %v7352 = vpop.f32.mrb[0].mxu0
  %v7353 = vadd.f32 %v7086, %v7352
  %v7354 = vpop.f32.mrb[0].mxu0
  %v7355 = vadd.f32 %v7088, %v7354
  %v7356 = vpop.f32.mrb[0].mxu0
  %v7357 = vadd.f32 %v7090, %v7356
  %7358 = vmatprep.mubr.bf16.mxu0 0
  %7359 = vmatmul.mubr.bf16.gmra.mrb[0].mxu0 %v7211
  %v7360 = vpop.f32.mrb[0].mxu0
  %v7361 = vadd.f32 %v7094, %v7360
  %v7362 = vpop.f32.mrb[0].mxu0
  %v7363 = vadd.f32 %v7096, %v7362
  %v7364 = vpop.f32.mrb[0].mxu0
  %v7365 = vadd.f32 %v7098, %v7364
  %v7366 = vpop.f32.mrb[0].mxu0
  %v7367 = vadd.f32 %v7100, %v7366
  %7368 = vmatprep.mubr.bf16.mxu0 0
  %7369 = vmatmul.mubr.bf16.gmra.mrb[0].mxu0 %v7212
  %v7370 = vpop.f32.mrb[0].mxu0
  %v7371 = vadd.f32 %v7104, %v7370
  %v7372 = vpop.f32.mrb[0].mxu0
  %v7373 = vadd.f32 %v7106, %v7372
  %v7374 = vpop.f32.mrb[0].mxu0
  %v7375 = vadd.f32 %v7108, %v7374
  %v7376 = vpop.f32.mrb[0].mxu0
  %v7377 = vadd.f32 %v7110, %v7376
  %7378 = vmatprep.mubr.bf16.mxu0 0
  %7379 = vmatmul.mubr.bf16.gmra.mrb[0].mxu0 %v7213
  %v7380 = vpop.f32.mrb[0].mxu0
  %v7381 = vadd.f32 %v7114, %v7380
  %v7382 = vpop.f32.mrb[0].mxu0
  %v7383 = vadd.f32 %v7116, %v7382
  %v7384 = vpop.f32.mrb[0].mxu0
  %v7385 = vadd.f32 %v7118, %v7384
  %v7386 = vpop.f32.mrb[0].mxu0
  %v7387 = vadd.f32 %v7120, %v7386
  %7388 = vmatprep.mubr.bf16.mxu0 0
  %7389 = vmatmul.mubr.bf16.gmra.mrb[0].mxu0 %v7214
  %v7390 = vpop.f32.mrb[0].mxu0
  %v7391 = vadd.f32 %v7124, %v7390
  %v7392 = vpop.f32.mrb[0].mxu0
  %v7393 = vadd.f32 %v7126, %v7392
  %v7394 = vpop.f32.mrb[0].mxu0
  %v7395 = vadd.f32 %v7128, %v7394
  %v7396 = vpop.f32.mrb[0].mxu0
  %v7397 = vadd.f32 %v7130, %v7396
  %7398 = vmatprep.mubr.bf16.mxu0 0
  %7399 = vmatmul.mubr.bf16.gmra.mrb[0].mxu0 %v7215
  %v7400 = vpop.f32.mrb[0].mxu0
  %v7401 = vadd.f32 %v7134, %v7400
  %v7402 = vpop.f32.mrb[0].mxu0
  %v7403 = vadd.f32 %v7136, %v7402
  %v7404 = vpop.f32.mrb[0].mxu0
  %v7405 = vadd.f32 %v7138, %v7404
  %v7406 = vpop.f32.mrb[0].mxu0
  %v7407 = vadd.f32 %v7140, %v7406
  %7408 = vmatprep.mubr.bf16.mxu0 0
  %7409 = vmatmul.mubr.bf16.gmra.mrb[0].mxu0 %v7216
  %v7410 = vpop.f32.mrb[0].mxu0
  %v7411 = vadd.f32 %v7144, %v7410
  %v7412 = vpop.f32.mrb[0].mxu0
  %v7413 = vadd.f32 %v7146, %v7412
  %v7414 = vpop.f32.mrb[0].mxu0
  %v7415 = vadd.f32 %v7148, %v7414
  %v7416 = vpop.f32.mrb[0].mxu0
  %v7417 = vadd.f32 %v7150, %v7416
  %7418 = vmatprep.mubr.bf16.mxu0 0
  %7419 = vmatmul.mubr.bf16.gmra.mrb[0].mxu0 %v7217
  %v7420 = vpop.f32.mrb[0].mxu0
  %v7421 = vadd.f32 %v7154, %v7420
  %v7422 = vpop.f32.mrb[0].mxu0
  %v7423 = vadd.f32 %v7156, %v7422
  %v7424 = vpop.f32.mrb[0].mxu0
  %v7425 = vadd.f32 %v7158, %v7424
  %v7426 = vpop.f32.mrb[0].mxu0
  %v7427 = vadd.f32 %v7160, %v7426
  %7428 = vmatprep.mubr.bf16.mxu0 0
  %7429 = vmatmul.mubr.bf16.gmra.mrb[0].mxu0 %v7218
  %v7430 = vpop.f32.mrb[0].mxu0
  %v7431 = vadd.f32 %v7164, %v7430
  %v7432 = vpop.f32.mrb[0].mxu0
  %v7433 = vadd.f32 %v7166, %v7432
  %v7434 = vpop.f32.mrb[0].mxu0
  %v7435 = vadd.f32 %v7168, %v7434
  %v7436 = vpop.f32.mrb[0].mxu0
  %v7437 = vadd.f32 %v7170, %v7436
  %7438 = vmatprep.mubr.bf16.mxu0 0
  %7439 = vmatmul.mubr.bf16.gmra.mrb[0].mxu0 %v7219
  %v7440 = vpop.f32.mrb[0].mxu0
  %v7441 = vadd.f32 %v7174, %v7440
  %v7442 = vpop.f32.mrb[0].mxu0
  %v7443 = vadd.f32 %v7176, %v7442
  %v7444 = vpop.f32.mrb[0].mxu0
  %v7445 = vadd.f32 %v7178, %v7444
  %v7446 = vpop.f32.mrb[0].mxu0
  %v7447 = vadd.f32 %v7180, %v7446
  %7448 = vmatprep.mubr.bf16.mxu0 0
  %7449 = vmatmul.mubr.bf16.gmra.mrb[0].mxu0 %v7220
  %v7450 = vpop.f32.mrb[0].mxu0
  %v7451 = vadd.f32 %v7184, %v7450
  %v7452 = vpop.f32.mrb[0].mxu0
  %v7453 = vadd.f32 %v7186, %v7452
  %v7454 = vpop.f32.mrb[0].mxu0
  %v7455 = vadd.f32 %v7188, %v7454
  %v7456 = vpop.f32.mrb[0].mxu0
  %v7457 = vadd.f32 %v7190, %v7456
  %7458 = vmatprep.mubr.bf16.mxu0 0
  %7459 = vmatmul.mubr.bf16.gmra.mrb[0].mxu0 %v7221
  %v7460 = vpop.f32.mrb[0].mxu0
  %v7461 = vadd.f32 %v7194, %v7460
  %v7462 = vpop.f32.mrb[0].mxu0
  %v7463 = vadd.f32 %v7196, %v7462
  %v7464 = vpop.f32.mrb[0].mxu0
  %v7465 = vadd.f32 %v7198, %v7464
  %v7466 = vpop.f32.mrb[0].mxu0
  %v7467 = vadd.f32 %v7200, %v7466
  %7468 = vmatprep.mubr.bf16.mxu0 0
  %7469 = vmatmul.mubr.bf16.gmra.mrb[0].mxu0 %v7222
  %v7470 = vpop.f32.mrb[0].mxu0
  %v7471 = vadd.f32 %v7204, %v7470
  %v7472 = vpop.f32.mrb[0].mxu0
  %v7473 = vadd.f32 %v7206, %v7472
  %v7474 = vpop.f32.mrb[0].mxu0
  %v7475 = vpop.f32.mrb[0].mxu0
  %7476 = vdwg.mxu0
  %s7477 = scalar_lea.vmem %s6, 256
  %v7478 = vld [vmem:[%s7477] sm:$0xff]
  %v7479 = vld [vmem:[%s7477 + $0x8] sm:$0xff]
  %v7480 = vld [vmem:[%s7477 + $0x10] sm:$0xff]
  %v7481 = vld [vmem:[%s7477 + $0x18] sm:$0xff]
  %v7482 = vld [vmem:[%s7477 + $0x20] sm:$0xff]
  %v7483 = vld [vmem:[%s7477 + $0x28] sm:$0xff]
  %v7484 = vld [vmem:[%s7477 + $0x30] sm:$0xff]
  %v7485 = vld [vmem:[%s7477 + $0x38] sm:$0xff]
  %v7486 = vld [vmem:[%s7477 + $0x40] sm:$0xff]
  %v7487 = vld [vmem:[%s7477 + $0x48] sm:$0xff]
  %v7488 = vld [vmem:[%s7477 + $0x50] sm:$0xff]
  %v7489 = vld [vmem:[%s7477 + $0x58] sm:$0xff]
  %v7490 = vld [vmem:[%s7477 + $0x60] sm:$0xff]
  %v7491 = vld [vmem:[%s7477 + $0x68] sm:$0xff]
  %v7492 = vld [vmem:[%s7477 + $0x70] sm:$0xff]
  %v7493 = vld [vmem:[%s7477 + $0x78] sm:$0xff]
  %v7494 = vpack.c.b16 %v6881, %v6880
  %v7495 = vpack.c.b16 %v6886, %v6884
  %v7496 = vpack.c.b16 %v6893, %v6892
  %v7497 = vpack.c.b16 %v6898, %v6896
  %v7498 = vpack.c.b16 %v6905, %v6904
  %v7499 = vpack.c.b16 %v6907, %v6906
  %v7500 = vpack.c.b16 %v6908, %v6908
  %v7524 = vunpack.c.l.b16 %v7478
  %v7525 = vunpack.c.h.b16 %v7478
  %v7526 = vunpack.c.l.b16 %v7479
  %v7527 = vunpack.c.h.b16 %v7479
  %v7528 = vunpack.c.l.b16 %v7480
  %v7529 = vunpack.c.h.b16 %v7480
  %v7530 = vunpack.c.l.b16 %v7481
  %v7531 = vunpack.c.h.b16 %v7481
  %v7532 = vunpack.c.l.b16 %v7482
  %v7533 = vunpack.c.h.b16 %v7482
  %v7534 = vunpack.c.l.b16 %v7483
  %v7535 = vunpack.c.h.b16 %v7483
  %v7536 = vunpack.c.l.b16 %v7484
  %v7537 = vunpack.c.h.b16 %v7484
  %v7538 = vunpack.c.l.b16 %v7485
  %v7539 = vunpack.c.h.b16 %v7485
  %v7540 = vunpack.c.l.b16 %v7486
  %v7541 = vunpack.c.h.b16 %v7486
  %v7542 = vunpack.c.l.b16 %v7487
  %v7543 = vunpack.c.h.b16 %v7487
  %v7544 = vunpack.c.l.b16 %v7488
  %v7545 = vunpack.c.h.b16 %v7488
  %v7546 = vunpack.c.l.b16 %v7489
  %v7547 = vunpack.c.h.b16 %v7489
  %v7548 = vunpack.c.l.b16 %v7490
  %v7549 = vunpack.c.h.b16 %v7490
  %v7550 = vunpack.c.l.b16 %v7491
  %v7551 = vunpack.c.h.b16 %v7491
  %v7552 = vunpack.c.l.b16 %v7492
  %v7553 = vunpack.c.h.b16 %v7492
  %v7554 = vunpack.c.l.b16 %v7493
  %v7555 = vunpack.c.h.b16 %v7493
  %v7556 = vpack.c.b16 %v7526, %v7524
  %v7557 = vpack.c.b16 %v7527, %v7525
  %v7558 = vpack.c.b16 %v7530, %v7528
  %v7559 = vpack.c.b16 %v7531, %v7529
  %v7560 = vpack.c.b16 %v7534, %v7532
  %v7561 = vpack.c.b16 %v7535, %v7533
  %v7562 = vpack.c.b16 %v7538, %v7536
  %v7563 = vpack.c.b16 %v7539, %v7537
  %v7564 = vpack.c.b16 %v7542, %v7540
  %v7565 = vpack.c.b16 %v7543, %v7541
  %v7566 = vpack.c.b16 %v7546, %v7544
  %v7567 = vpack.c.b16 %v7547, %v7545
  %v7568 = vpack.c.b16 %v7550, %v7548
  %v7569 = vpack.c.b16 %v7551, %v7549
  %v7570 = vpack.c.b16 %v7554, %v7552
  %v7571 = vpack.c.b16 %v7555, %v7553
  %7588 = vmatprep.subr.bf16.mxu0 %v7557
  %7589 = vmatpush1.bf16.msra.mxu0 %v7556
  %7590 = vmatprep.subr.bf16.mxu0 %v7559
  %7591 = vmatpush1.bf16.msra.mxu0 %v7558
  %7592 = vmatprep.subr.bf16.mxu0 %v7561
  %7593 = vmatpush1.bf16.msra.mxu0 %v7560
  %7594 = vmatprep.subr.bf16.mxu0 %v7563
  %7595 = vmatpush1.bf16.msra.mxu0 %v7562
  %7596 = vmatprep.subr.bf16.mxu0 %v7565
  %7597 = vmatpush1.bf16.msra.mxu0 %v7564
  %7598 = vmatprep.subr.bf16.mxu0 %v7567
  %7599 = vmatpush1.bf16.msra.mxu0 %v7566
  %7600 = vmatprep.subr.bf16.mxu0 %v7569
  %7601 = vmatpush1.bf16.msra.mxu0 %v7568
  %7602 = vmatprep.subr.bf16.mxu0 %v7571
  %7603 = vmatpush1.bf16.msra.mxu0 %v7570
  %7604 = vmatprep.subr.bf16.mxu0 0
  %7605 = vmatpush1.bf16.msra.mxu0 0
  %7606 = vmatprep.subr.bf16.mxu0 0
  %7607 = vmatpush1.bf16.msra.mxu0 0
  %7608 = vmatprep.subr.bf16.mxu0 0
  %7609 = vmatpush1.bf16.msra.mxu0 0
  %7610 = vmatprep.subr.bf16.mxu0 0
  %7611 = vmatpush1.bf16.msra.mxu0 0
  %7612 = vmatprep.subr.bf16.mxu0 0
  %7613 = vmatpush1.bf16.msra.mxu0 0
  %7614 = vmatprep.subr.bf16.mxu0 0
  %7615 = vmatpush1.bf16.msra.mxu0 0
  %7616 = vmatprep.subr.bf16.mxu0 0
  %7617 = vmatpush1.bf16.msra.mxu0 0
  %7618 = vmatprep.subr.bf16.mxu0 0
  %7619 = vmatpush1.bf16.msra.mxu0 0
  %7620 = vmatprep.mubr.bf16.mxu0 0
  %7621 = vmatmul.mubr.bf16.gmra.mrb[0].mxu0 %v7494
  %v7622 = vpop.f32.mrb[0].mxu0
  %v7623 = vadd.f32 0.0, %v7622
  %v7624 = vpop.f32.mrb[0].mxu0
  %v7625 = vadd.f32 0.0, %v7624
  %v7626 = vpop.f32.mrb[0].mxu0
  %v7627 = vadd.f32 0.0, %v7626
  %v7628 = vpop.f32.mrb[0].mxu0
  %v7629 = vadd.f32 0.0, %v7628
  %7630 = vmatprep.mubr.bf16.mxu0 0
  %7631 = vmatmul.mubr.bf16.gmra.mrb[0].mxu0 %v6946
  %v7632 = vpop.f32.mrb[0].mxu0
  %v7633 = vadd.f32 0.0, %v7632
  %v7634 = vpop.f32.mrb[0].mxu0
  %v7635 = vadd.f32 0.0, %v7634
  %v7636 = vpop.f32.mrb[0].mxu0
  %v7637 = vadd.f32 0.0, %v7636
  %v7638 = vpop.f32.mrb[0].mxu0
  %v7639 = vadd.f32 0.0, %v7638
  %7640 = vmatprep.mubr.bf16.mxu0 0
  %7641 = vmatmul.mubr.bf16.gmra.mrb[0].mxu0 %v7495
  %v7642 = vpop.f32.mrb[0].mxu0
  %v7643 = vadd.f32 0.0, %v7642
  %v7644 = vpop.f32.mrb[0].mxu0
  %v7645 = vadd.f32 0.0, %v7644
  %v7646 = vpop.f32.mrb[0].mxu0
  %v7647 = vadd.f32 0.0, %v7646
  %v7648 = vpop.f32.mrb[0].mxu0
  %v7649 = vadd.f32 0.0, %v7648
  %7650 = vmatprep.mubr.bf16.mxu0 0
  %7651 = vmatmul.mubr.bf16.gmra.mrb[0].mxu0 %v6948
  %v7652 = vpop.f32.mrb[0].mxu0
  %v7653 = vadd.f32 0.0, %v7652
  %v7654 = vpop.f32.mrb[0].mxu0
  %v7655 = vadd.f32 0.0, %v7654
  %v7656 = vpop.f32.mrb[0].mxu0
  %v7657 = vadd.f32 0.0, %v7656
  %v7658 = vpop.f32.mrb[0].mxu0
  %v7659 = vadd.f32 0.0, %v7658
  %7660 = vmatprep.mubr.bf16.mxu0 0
  %7661 = vmatmul.mubr.bf16.gmra.mrb[0].mxu0 %v6949
  %v7662 = vpop.f32.mrb[0].mxu0
  %v7663 = vadd.f32 0.0, %v7662
  %v7664 = vpop.f32.mrb[0].mxu0
  %v7665 = vadd.f32 0.0, %v7664
  %v7666 = vpop.f32.mrb[0].mxu0
  %v7667 = vadd.f32 0.0, %v7666
  %v7668 = vpop.f32.mrb[0].mxu0
  %v7669 = vadd.f32 0.0, %v7668
  %7670 = vmatprep.mubr.bf16.mxu0 0
  %7671 = vmatmul.mubr.bf16.gmra.mrb[0].mxu0 %v7496
  %v7672 = vpop.f32.mrb[0].mxu0
  %v7673 = vadd.f32 0.0, %v7672
  %v7674 = vpop.f32.mrb[0].mxu0
  %v7675 = vadd.f32 0.0, %v7674
  %v7676 = vpop.f32.mrb[0].mxu0
  %v7677 = vadd.f32 0.0, %v7676
  %v7678 = vpop.f32.mrb[0].mxu0
  %v7679 = vadd.f32 0.0, %v7678
  %7680 = vmatprep.mubr.bf16.mxu0 0
  %7681 = vmatmul.mubr.bf16.gmra.mrb[0].mxu0 %v6951
  %v7682 = vpop.f32.mrb[0].mxu0
  %v7683 = vadd.f32 0.0, %v7682
  %v7684 = vpop.f32.mrb[0].mxu0
  %v7685 = vadd.f32 0.0, %v7684
  %v7686 = vpop.f32.mrb[0].mxu0
  %v7687 = vadd.f32 0.0, %v7686
  %v7688 = vpop.f32.mrb[0].mxu0
  %v7689 = vadd.f32 0.0, %v7688
  %7690 = vmatprep.mubr.bf16.mxu0 0
  %7691 = vmatmul.mubr.bf16.gmra.mrb[0].mxu0 %v7497
  %v7692 = vpop.f32.mrb[0].mxu0
  %v7693 = vadd.f32 0.0, %v7692
  %v7694 = vpop.f32.mrb[0].mxu0
  %v7695 = vadd.f32 0.0, %v7694
  %v7696 = vpop.f32.mrb[0].mxu0
  %v7697 = vadd.f32 0.0, %v7696
  %v7698 = vpop.f32.mrb[0].mxu0
  %v7699 = vadd.f32 0.0, %v7698
  %7700 = vmatprep.mubr.bf16.mxu0 0
  %7701 = vmatmul.mubr.bf16.gmra.mrb[0].mxu0 %v6953
  %v7702 = vpop.f32.mrb[0].mxu0
  %v7703 = vadd.f32 0.0, %v7702
  %v7704 = vpop.f32.mrb[0].mxu0
  %v7705 = vadd.f32 0.0, %v7704
  %v7706 = vpop.f32.mrb[0].mxu0
  %v7707 = vadd.f32 0.0, %v7706
  %v7708 = vpop.f32.mrb[0].mxu0
  %v7709 = vadd.f32 0.0, %v7708
  %7710 = vmatprep.mubr.bf16.mxu0 0
  %7711 = vmatmul.mubr.bf16.gmra.mrb[0].mxu0 %v6954
  %v7712 = vpop.f32.mrb[0].mxu0
  %v7713 = vadd.f32 0.0, %v7712
  %v7714 = vpop.f32.mrb[0].mxu0
  %v7715 = vadd.f32 0.0, %v7714
  %v7716 = vpop.f32.mrb[0].mxu0
  %v7717 = vadd.f32 0.0, %v7716
  %v7718 = vpop.f32.mrb[0].mxu0
  %v7719 = vadd.f32 0.0, %v7718
  %7720 = vmatprep.mubr.bf16.mxu0 0
  %7721 = vmatmul.mubr.bf16.gmra.mrb[0].mxu0 %v7498
  %v7722 = vpop.f32.mrb[0].mxu0
  %v7723 = vadd.f32 0.0, %v7722
  %v7724 = vpop.f32.mrb[0].mxu0
  %v7725 = vadd.f32 0.0, %v7724
  %v7726 = vpop.f32.mrb[0].mxu0
  %v7727 = vadd.f32 0.0, %v7726
  %v7728 = vpop.f32.mrb[0].mxu0
  %v7729 = vadd.f32 0.0, %v7728
  %7730 = vmatprep.mubr.bf16.mxu0 0
  %7731 = vmatmul.mubr.bf16.gmra.mrb[0].mxu0 %v7499
  %v7732 = vpop.f32.mrb[0].mxu0
  %v7733 = vadd.f32 0.0, %v7732
  %v7734 = vpop.f32.mrb[0].mxu0
  %v7735 = vadd.f32 0.0, %v7734
  %v7736 = vpop.f32.mrb[0].mxu0
  %v7737 = vadd.f32 0.0, %v7736
  %v7738 = vpop.f32.mrb[0].mxu0
  %v7739 = vadd.f32 0.0, %v7738
  %7740 = vmatprep.mubr.bf16.mxu0 0
  %7741 = vmatmul.mubr.bf16.gmra.mrb[0].mxu0 %v7500
  %v7742 = vpop.f32.mrb[0].mxu0
  %v7743 = vadd.f32 0.0, %v7742
  %v7744 = vpop.f32.mrb[0].mxu0
  %v7745 = vadd.f32 0.0, %v7744
  %v7746 = vpop.f32.mrb[0].mxu0
  %v7747 = vpop.f32.mrb[0].mxu0
  %7748 = vdwg.mxu0
  %v7749 = vadd.f32 %v7351, %v7623
  %v7750 = vadd.f32 %v7353, %v7625
  %v7751 = vadd.f32 %v7355, %v7627
  %v7752 = vadd.f32 %v7357, %v7629
  %v7753 = vadd.f32 %v7361, %v7633
  %v7754 = vadd.f32 %v7363, %v7635
  %v7755 = vadd.f32 %v7365, %v7637
  %v7756 = vadd.f32 %v7367, %v7639
  %v7757 = vadd.f32 %v7371, %v7643
  %v7758 = vadd.f32 %v7373, %v7645
  %v7759 = vadd.f32 %v7375, %v7647
  %v7760 = vadd.f32 %v7377, %v7649
  %v7761 = vadd.f32 %v7381, %v7653
  %v7762 = vadd.f32 %v7383, %v7655
  %v7763 = vadd.f32 %v7385, %v7657
  %v7764 = vadd.f32 %v7387, %v7659
  %v7765 = vadd.f32 %v7391, %v7663
  %v7766 = vadd.f32 %v7393, %v7665
  %v7767 = vadd.f32 %v7395, %v7667
  %v7768 = vadd.f32 %v7397, %v7669
  %v7769 = vadd.f32 %v7401, %v7673
  %v7770 = vadd.f32 %v7403, %v7675
  %v7771 = vadd.f32 %v7405, %v7677
  %v7772 = vadd.f32 %v7407, %v7679
  %v7773 = vadd.f32 %v7411, %v7683
  %v7774 = vadd.f32 %v7413, %v7685
  %v7775 = vadd.f32 %v7415, %v7687
  %v7776 = vadd.f32 %v7417, %v7689
  %v7777 = vadd.f32 %v7421, %v7693
  %v7778 = vadd.f32 %v7423, %v7695
  %v7779 = vadd.f32 %v7425, %v7697
  %v7780 = vadd.f32 %v7427, %v7699
  %v7781 = vadd.f32 %v7431, %v7703
  %v7782 = vadd.f32 %v7433, %v7705
  %v7783 = vadd.f32 %v7435, %v7707
  %v7784 = vadd.f32 %v7437, %v7709
  %v7785 = vadd.f32 %v7441, %v7713
  %v7786 = vadd.f32 %v7443, %v7715
  %v7787 = vadd.f32 %v7445, %v7717
  %v7788 = vadd.f32 %v7447, %v7719
  %v7789 = vadd.f32 %v7451, %v7723
  %v7790 = vadd.f32 %v7453, %v7725
  %v7791 = vadd.f32 %v7455, %v7727
  %v7792 = vadd.f32 %v7457, %v7729
  %v7793 = vadd.f32 %v7461, %v7733
  %v7794 = vadd.f32 %v7463, %v7735
  %v7795 = vadd.f32 %v7465, %v7737
  %v7796 = vadd.f32 %v7467, %v7739
  %v7797 = vadd.f32 %v7471, %v7743
  %v7798 = vadd.f32 %v7473, %v7745
  %s7799 = scalar_lea.vmem %s6, 384
  %v7800 = vld [vmem:[%s7799] sm:$0xff]
  %v7801 = vld [vmem:[%s7799 + $0x8] sm:$0xff]
  %v7802 = vld [vmem:[%s7799 + $0x10] sm:$0xff]
  %v7803 = vld [vmem:[%s7799 + $0x18] sm:$0xff]
  %v7804 = vld [vmem:[%s7799 + $0x20] sm:$0xff]
  %v7805 = vld [vmem:[%s7799 + $0x28] sm:$0xff]
  %v7806 = vld [vmem:[%s7799 + $0x30] sm:$0xff]
  %v7807 = vld [vmem:[%s7799 + $0x38] sm:$0xff]
  %v7808 = vld [vmem:[%s7799 + $0x40] sm:$0xff]
  %v7809 = vld [vmem:[%s7799 + $0x48] sm:$0xff]
  %v7810 = vld [vmem:[%s7799 + $0x50] sm:$0xff]
  %v7811 = vld [vmem:[%s7799 + $0x58] sm:$0xff]
  %v7812 = vld [vmem:[%s7799 + $0x60] sm:$0xff]
  %v7813 = vld [vmem:[%s7799 + $0x68] sm:$0xff]
  %v7814 = vld [vmem:[%s7799 + $0x70] sm:$0xff]
  %v7815 = vld [vmem:[%s7799 + $0x78] sm:$0xff]
  %v7816 = vpack.c.b16 %v6887, %v6885
  %v7817 = vpack.c.b16 %v6891, %v6890
  %v7818 = vpack.c.b16 %v6899, %v6897
  %v7819 = vpack.c.b16 %v6903, %v6902
  %v7820 = vpack.c.b16 %v6906, %v6905
  %v7821 = vpack.c.b16 %v6908, %v6907
  %v7822 = vpack.c.b16 %v6909, %v6909
  %v7846 = vunpack.c.l.b16 %v7800
  %v7847 = vunpack.c.h.b16 %v7800
  %v7848 = vunpack.c.l.b16 %v7801
  %v7849 = vunpack.c.h.b16 %v7801
  %v7850 = vunpack.c.l.b16 %v7802
  %v7851 = vunpack.c.h.b16 %v7802
  %v7852 = vunpack.c.l.b16 %v7803
  %v7853 = vunpack.c.h.b16 %v7803
  %v7854 = vunpack.c.l.b16 %v7804
  %v7855 = vunpack.c.h.b16 %v7804
  %v7856 = vunpack.c.l.b16 %v7805
  %v7857 = vunpack.c.h.b16 %v7805
  %v7858 = vunpack.c.l.b16 %v7806
  %v7859 = vunpack.c.h.b16 %v7806
  %v7860 = vunpack.c.l.b16 %v7807
  %v7861 = vunpack.c.h.b16 %v7807
  %v7862 = vunpack.c.l.b16 %v7808
  %v7863 = vunpack.c.h.b16 %v7808
  %v7864 = vunpack.c.l.b16 %v7809
  %v7865 = vunpack.c.h.b16 %v7809
  %v7866 = vunpack.c.l.b16 %v7810
  %v7867 = vunpack.c.h.b16 %v7810
  %v7868 = vunpack.c.l.b16 %v7811
  %v7869 = vunpack.c.h.b16 %v7811
  %v7870 = vunpack.c.l.b16 %v7812
  %v7871 = vunpack.c.h.b16 %v7812
  %v7872 = vunpack.c.l.b16 %v7813
  %v7873 = vunpack.c.h.b16 %v7813
  %v7874 = vunpack.c.l.b16 %v7814
  %v7875 = vunpack.c.h.b16 %v7814
  %v7876 = vunpack.c.l.b16 %v7815
  %v7877 = vunpack.c.h.b16 %v7815
  %v7878 = vpack.c.b16 %v7848, %v7846
  %v7879 = vpack.c.b16 %v7849, %v7847
  %v7880 = vpack.c.b16 %v7852, %v7850
  %v7881 = vpack.c.b16 %v7853, %v7851
  %v7882 = vpack.c.b16 %v7856, %v7854
  %v7883 = vpack.c.b16 %v7857, %v7855
  %v7884 = vpack.c.b16 %v7860, %v7858
  %v7885 = vpack.c.b16 %v7861, %v7859
  %v7886 = vpack.c.b16 %v7864, %v7862
  %v7887 = vpack.c.b16 %v7865, %v7863
  %v7888 = vpack.c.b16 %v7868, %v7866
  %v7889 = vpack.c.b16 %v7869, %v7867
  %v7890 = vpack.c.b16 %v7872, %v7870
  %v7891 = vpack.c.b16 %v7873, %v7871
  %v7892 = vpack.c.b16 %v7876, %v7874
  %v7893 = vpack.c.b16 %v7877, %v7875
  %7910 = vmatprep.subr.bf16.mxu0 %v7879
  %7911 = vmatpush1.bf16.msra.mxu0 %v7878
  %7912 = vmatprep.subr.bf16.mxu0 %v7881
  %7913 = vmatpush1.bf16.msra.mxu0 %v7880
  %7914 = vmatprep.subr.bf16.mxu0 %v7883
  %7915 = vmatpush1.bf16.msra.mxu0 %v7882
  %7916 = vmatprep.subr.bf16.mxu0 %v7885
  %7917 = vmatpush1.bf16.msra.mxu0 %v7884
  %7918 = vmatprep.subr.bf16.mxu0 %v7887
  %7919 = vmatpush1.bf16.msra.mxu0 %v7886
  %7920 = vmatprep.subr.bf16.mxu0 %v7889
  %7921 = vmatpush1.bf16.msra.mxu0 %v7888
  %7922 = vmatprep.subr.bf16.mxu0 %v7891
  %7923 = vmatpush1.bf16.msra.mxu0 %v7890
  %7924 = vmatprep.subr.bf16.mxu0 %v7893
  %7925 = vmatpush1.bf16.msra.mxu0 %v7892
  %7926 = vmatprep.subr.bf16.mxu0 0
  %7927 = vmatpush1.bf16.msra.mxu0 0
  %7928 = vmatprep.subr.bf16.mxu0 0
  %7929 = vmatpush1.bf16.msra.mxu0 0
  %7930 = vmatprep.subr.bf16.mxu0 0
  %7931 = vmatpush1.bf16.msra.mxu0 0
  %7932 = vmatprep.subr.bf16.mxu0 0
  %7933 = vmatpush1.bf16.msra.mxu0 0
  %7934 = vmatprep.subr.bf16.mxu0 0
  %7935 = vmatpush1.bf16.msra.mxu0 0
  %7936 = vmatprep.subr.bf16.mxu0 0
  %7937 = vmatpush1.bf16.msra.mxu0 0
  %7938 = vmatprep.subr.bf16.mxu0 0
  %7939 = vmatpush1.bf16.msra.mxu0 0
  %7940 = vmatprep.subr.bf16.mxu0 0
  %7941 = vmatpush1.bf16.msra.mxu0 0
  %7942 = vmatprep.mubr.bf16.mxu0 0
  %7943 = vmatmul.mubr.bf16.gmra.mrb[0].mxu0 %v7213
  %v7944 = vpop.f32.mrb[0].mxu0
  %v7945 = vadd.f32 0.0, %v7944
  %v7946 = vpop.f32.mrb[0].mxu0
  %v7947 = vadd.f32 0.0, %v7946
  %v7948 = vpop.f32.mrb[0].mxu0
  %v7949 = vadd.f32 0.0, %v7948
  %v7950 = vpop.f32.mrb[0].mxu0
  %v7951 = vadd.f32 0.0, %v7950
  %7952 = vmatprep.mubr.bf16.mxu0 0
  %7953 = vmatmul.mubr.bf16.gmra.mrb[0].mxu0 %v7214
  %v7954 = vpop.f32.mrb[0].mxu0
  %v7955 = vadd.f32 0.0, %v7954
  %v7956 = vpop.f32.mrb[0].mxu0
  %v7957 = vadd.f32 0.0, %v7956
  %v7958 = vpop.f32.mrb[0].mxu0
  %v7959 = vadd.f32 0.0, %v7958
  %v7960 = vpop.f32.mrb[0].mxu0
  %v7961 = vadd.f32 0.0, %v7960
  %7962 = vmatprep.mubr.bf16.mxu0 0
  %7963 = vmatmul.mubr.bf16.gmra.mrb[0].mxu0 %v7816
  %v7964 = vpop.f32.mrb[0].mxu0
  %v7965 = vadd.f32 0.0, %v7964
  %v7966 = vpop.f32.mrb[0].mxu0
  %v7967 = vadd.f32 0.0, %v7966
  %v7968 = vpop.f32.mrb[0].mxu0
  %v7969 = vadd.f32 0.0, %v7968
  %v7970 = vpop.f32.mrb[0].mxu0
  %v7971 = vadd.f32 0.0, %v7970
  %7972 = vmatprep.mubr.bf16.mxu0 0
  %7973 = vmatmul.mubr.bf16.gmra.mrb[0].mxu0 %v7216
  %v7974 = vpop.f32.mrb[0].mxu0
  %v7975 = vadd.f32 0.0, %v7974
  %v7976 = vpop.f32.mrb[0].mxu0
  %v7977 = vadd.f32 0.0, %v7976
  %v7978 = vpop.f32.mrb[0].mxu0
  %v7979 = vadd.f32 0.0, %v7978
  %v7980 = vpop.f32.mrb[0].mxu0
  %v7981 = vadd.f32 0.0, %v7980
  %7982 = vmatprep.mubr.bf16.mxu0 0
  %7983 = vmatmul.mubr.bf16.gmra.mrb[0].mxu0 %v7817
  %v7984 = vpop.f32.mrb[0].mxu0
  %v7985 = vadd.f32 0.0, %v7984
  %v7986 = vpop.f32.mrb[0].mxu0
  %v7987 = vadd.f32 0.0, %v7986
  %v7988 = vpop.f32.mrb[0].mxu0
  %v7989 = vadd.f32 0.0, %v7988
  %v7990 = vpop.f32.mrb[0].mxu0
  %v7991 = vadd.f32 0.0, %v7990
  %7992 = vmatprep.mubr.bf16.mxu0 0
  %7993 = vmatmul.mubr.bf16.gmra.mrb[0].mxu0 %v7218
  %v7994 = vpop.f32.mrb[0].mxu0
  %v7995 = vadd.f32 0.0, %v7994
  %v7996 = vpop.f32.mrb[0].mxu0
  %v7997 = vadd.f32 0.0, %v7996
  %v7998 = vpop.f32.mrb[0].mxu0
  %v7999 = vadd.f32 0.0, %v7998
  %v8000 = vpop.f32.mrb[0].mxu0
  %v8001 = vadd.f32 0.0, %v8000
  %8002 = vmatprep.mubr.bf16.mxu0 0
  %8003 = vmatmul.mubr.bf16.gmra.mrb[0].mxu0 %v7219
  %v8004 = vpop.f32.mrb[0].mxu0
  %v8005 = vadd.f32 0.0, %v8004
  %v8006 = vpop.f32.mrb[0].mxu0
  %v8007 = vadd.f32 0.0, %v8006
  %v8008 = vpop.f32.mrb[0].mxu0
  %v8009 = vadd.f32 0.0, %v8008
  %v8010 = vpop.f32.mrb[0].mxu0
  %v8011 = vadd.f32 0.0, %v8010
  %8012 = vmatprep.mubr.bf16.mxu0 0
  %8013 = vmatmul.mubr.bf16.gmra.mrb[0].mxu0 %v7818
  %v8014 = vpop.f32.mrb[0].mxu0
  %v8015 = vadd.f32 0.0, %v8014
  %v8016 = vpop.f32.mrb[0].mxu0
  %v8017 = vadd.f32 0.0, %v8016
  %v8018 = vpop.f32.mrb[0].mxu0
  %v8019 = vadd.f32 0.0, %v8018
  %v8020 = vpop.f32.mrb[0].mxu0
  %v8021 = vadd.f32 0.0, %v8020
  %8022 = vmatprep.mubr.bf16.mxu0 0
  %8023 = vmatmul.mubr.bf16.gmra.mrb[0].mxu0 %v7221
  %v8024 = vpop.f32.mrb[0].mxu0
  %v8025 = vadd.f32 0.0, %v8024
  %v8026 = vpop.f32.mrb[0].mxu0
  %v8027 = vadd.f32 0.0, %v8026
  %v8028 = vpop.f32.mrb[0].mxu0
  %v8029 = vadd.f32 0.0, %v8028
  %v8030 = vpop.f32.mrb[0].mxu0
  %v8031 = vadd.f32 0.0, %v8030
  %8032 = vmatprep.mubr.bf16.mxu0 0
  %8033 = vmatmul.mubr.bf16.gmra.mrb[0].mxu0 %v7819
  %v8034 = vpop.f32.mrb[0].mxu0
  %v8035 = vadd.f32 0.0, %v8034
  %v8036 = vpop.f32.mrb[0].mxu0
  %v8037 = vadd.f32 0.0, %v8036
  %v8038 = vpop.f32.mrb[0].mxu0
  %v8039 = vadd.f32 0.0, %v8038
  %v8040 = vpop.f32.mrb[0].mxu0
  %v8041 = vadd.f32 0.0, %v8040
  %8042 = vmatprep.mubr.bf16.mxu0 0
  %8043 = vmatmul.mubr.bf16.gmra.mrb[0].mxu0 %v7820
  %v8044 = vpop.f32.mrb[0].mxu0
  %v8045 = vadd.f32 0.0, %v8044
  %v8046 = vpop.f32.mrb[0].mxu0
  %v8047 = vadd.f32 0.0, %v8046
  %v8048 = vpop.f32.mrb[0].mxu0
  %v8049 = vadd.f32 0.0, %v8048
  %v8050 = vpop.f32.mrb[0].mxu0
  %v8051 = vadd.f32 0.0, %v8050
  %8052 = vmatprep.mubr.bf16.mxu0 0
  %8053 = vmatmul.mubr.bf16.gmra.mrb[0].mxu0 %v7821
  %v8054 = vpop.f32.mrb[0].mxu0
  %v8055 = vadd.f32 0.0, %v8054
  %v8056 = vpop.f32.mrb[0].mxu0
  %v8057 = vadd.f32 0.0, %v8056
  %v8058 = vpop.f32.mrb[0].mxu0
  %v8059 = vadd.f32 0.0, %v8058
  %v8060 = vpop.f32.mrb[0].mxu0
  %v8061 = vadd.f32 0.0, %v8060
  %8062 = vmatprep.mubr.bf16.mxu0 0
  %8063 = vmatmul.mubr.bf16.gmra.mrb[0].mxu0 %v7822
  %v8064 = vpop.f32.mrb[0].mxu0
  %v8065 = vadd.f32 0.0, %v8064
  %v8066 = vpop.f32.mrb[0].mxu0
  %v8067 = vadd.f32 0.0, %v8066
  %v8068 = vpop.f32.mrb[0].mxu0
  %v8069 = vpop.f32.mrb[0].mxu0
  %8070 = vdwg.mxu0
  %v8071 = vadd.f32 %v7749, %v7945
  %v8072 = vadd.f32 %v7750, %v7947
  %v8073 = vadd.f32 %v7751, %v7949
  %v8074 = vadd.f32 %v7752, %v7951
  %v8075 = vadd.f32 %v7753, %v7955
  %v8076 = vadd.f32 %v7754, %v7957
  %v8077 = vadd.f32 %v7755, %v7959
  %v8078 = vadd.f32 %v7756, %v7961
  %v8079 = vadd.f32 %v7757, %v7965
  %v8080 = vadd.f32 %v7758, %v7967
  %v8081 = vadd.f32 %v7759, %v7969
  %v8082 = vadd.f32 %v7760, %v7971
  %v8083 = vadd.f32 %v7761, %v7975
  %v8084 = vadd.f32 %v7762, %v7977
  %v8085 = vadd.f32 %v7763, %v7979
  %v8086 = vadd.f32 %v7764, %v7981
  %v8087 = vadd.f32 %v7765, %v7985
  %v8088 = vadd.f32 %v7766, %v7987
  %v8089 = vadd.f32 %v7767, %v7989
  %v8090 = vadd.f32 %v7768, %v7991
  %v8091 = vadd.f32 %v7769, %v7995
  %v8092 = vadd.f32 %v7770, %v7997
  %v8093 = vadd.f32 %v7771, %v7999
  %v8094 = vadd.f32 %v7772, %v8001
  %v8095 = vadd.f32 %v7773, %v8005
  %v8096 = vadd.f32 %v7774, %v8007
  %v8097 = vadd.f32 %v7775, %v8009
  %v8098 = vadd.f32 %v7776, %v8011
  %v8099 = vadd.f32 %v7777, %v8015
  %v8100 = vadd.f32 %v7778, %v8017
  %v8101 = vadd.f32 %v7779, %v8019
  %v8102 = vadd.f32 %v7780, %v8021
  %v8103 = vadd.f32 %v7781, %v8025
  %v8104 = vadd.f32 %v7782, %v8027
  %v8105 = vadd.f32 %v7783, %v8029
  %v8106 = vadd.f32 %v7784, %v8031
  %v8107 = vadd.f32 %v7785, %v8035
  %v8108 = vadd.f32 %v7786, %v8037
  %v8109 = vadd.f32 %v7787, %v8039
  %v8110 = vadd.f32 %v7788, %v8041
  %v8111 = vadd.f32 %v7789, %v8045
  %v8112 = vadd.f32 %v7790, %v8047
  %v8113 = vadd.f32 %v7791, %v8049
  %v8114 = vadd.f32 %v7792, %v8051
  %v8115 = vadd.f32 %v7793, %v8055
  %v8116 = vadd.f32 %v7794, %v8057
  %v8117 = vadd.f32 %v7795, %v8059
  %v8118 = vadd.f32 %v7796, %v8061
  %v8119 = vadd.f32 %v7797, %v8065
  %v8120 = vadd.f32 %v7798, %v8067
  %v8121 = vld [vmem:[%s7] sm:$0x3]
  %v8123 = vlaneseq
  %v8124 = vshrl.u32 %v8123, 7
  %v8125 = vsub.s32 0, %v8124
  %v8126 = vrot.slane %v8121, %v8125
  %v8127 = vlaneseq
  %v8128 = vshrl.u32 %v8127, 7
  %v8129 = vsub.s32 1, %v8128
  %v8130 = vrot.slane %v8121, %v8129
  %v8133 = vadd.f32 %v8071, %v8126
  %v8134 = vadd.f32 %v8072, %v8130
  %v8135 = vadd.f32 %v8073, %v8126
  %v8136 = vadd.f32 %v8074, %v8130
  %v8137 = vadd.f32 %v8075, %v8126
  %v8138 = vadd.f32 %v8076, %v8130
  %v8139 = vadd.f32 %v8077, %v8126
  %v8140 = vadd.f32 %v8078, %v8130
  %v8141 = vadd.f32 %v8079, %v8126
  %v8142 = vadd.f32 %v8080, %v8130
  %v8143 = vadd.f32 %v8081, %v8126
  %v8144 = vadd.f32 %v8082, %v8130
  %v8145 = vadd.f32 %v8083, %v8126
  %v8146 = vadd.f32 %v8084, %v8130
  %v8147 = vadd.f32 %v8085, %v8126
  %v8148 = vadd.f32 %v8086, %v8130
  %v8149 = vadd.f32 %v8087, %v8126
  %v8150 = vadd.f32 %v8088, %v8130
  %v8151 = vadd.f32 %v8089, %v8126
  %v8152 = vadd.f32 %v8090, %v8130
  %v8153 = vadd.f32 %v8091, %v8126
  %v8154 = vadd.f32 %v8092, %v8130
  %v8155 = vadd.f32 %v8093, %v8126
  %v8156 = vadd.f32 %v8094, %v8130
  %v8157 = vadd.f32 %v8095, %v8126
  %v8158 = vadd.f32 %v8096, %v8130
  %v8159 = vadd.f32 %v8097, %v8126
  %v8160 = vadd.f32 %v8098, %v8130
  %v8161 = vadd.f32 %v8099, %v8126
  %v8162 = vadd.f32 %v8100, %v8130
  %v8163 = vadd.f32 %v8101, %v8126
  %v8164 = vadd.f32 %v8102, %v8130
  %v8165 = vadd.f32 %v8103, %v8126
  %v8166 = vadd.f32 %v8104, %v8130
  %v8167 = vadd.f32 %v8105, %v8126
  %v8168 = vadd.f32 %v8106, %v8130
  %v8169 = vadd.f32 %v8107, %v8126
  %v8170 = vadd.f32 %v8108, %v8130
  %v8171 = vadd.f32 %v8109, %v8126
  %v8172 = vadd.f32 %v8110, %v8130
  %v8173 = vadd.f32 %v8111, %v8126
  %v8174 = vadd.f32 %v8112, %v8130
  %v8175 = vadd.f32 %v8113, %v8126
  %v8176 = vadd.f32 %v8114, %v8130
  %v8177 = vadd.f32 %v8115, %v8126
  %v8178 = vadd.f32 %v8116, %v8130
  %v8179 = vadd.f32 %v8117, %v8126
  %v8180 = vadd.f32 %v8118, %v8130
  %v8181 = vadd.f32 %v8119, %v8126
  %v8182 = vadd.f32 %v8120, %v8130
  %v8183 = vmax.f32 %v8133, 0.0
  %v8184 = vmax.f32 %v8134, 0.0
  %v8185 = vmax.f32 %v8135, 0.0
  %v8186 = vmax.f32 %v8136, 0.0
  %v8187 = vmax.f32 %v8137, 0.0
  %v8188 = vmax.f32 %v8138, 0.0
  %v8189 = vmax.f32 %v8139, 0.0
  %v8190 = vmax.f32 %v8140, 0.0
  %v8191 = vmax.f32 %v8141, 0.0
  %v8192 = vmax.f32 %v8142, 0.0
  %v8193 = vmax.f32 %v8143, 0.0
  %v8194 = vmax.f32 %v8144, 0.0
  %v8195 = vmax.f32 %v8145, 0.0
  %v8196 = vmax.f32 %v8146, 0.0
  %v8197 = vmax.f32 %v8147, 0.0
  %v8198 = vmax.f32 %v8148, 0.0
  %v8199 = vmax.f32 %v8149, 0.0
  %v8200 = vmax.f32 %v8150, 0.0
  %v8201 = vmax.f32 %v8151, 0.0
  %v8202 = vmax.f32 %v8152, 0.0
  %v8203 = vmax.f32 %v8153, 0.0
  %v8204 = vmax.f32 %v8154, 0.0
  %v8205 = vmax.f32 %v8155, 0.0
  %v8206 = vmax.f32 %v8156, 0.0
  %v8207 = vmax.f32 %v8157, 0.0
  %v8208 = vmax.f32 %v8158, 0.0
  %v8209 = vmax.f32 %v8159, 0.0
  %v8210 = vmax.f32 %v8160, 0.0
  %v8211 = vmax.f32 %v8161, 0.0
  %v8212 = vmax.f32 %v8162, 0.0
  %v8213 = vmax.f32 %v8163, 0.0
  %v8214 = vmax.f32 %v8164, 0.0
  %v8215 = vmax.f32 %v8165, 0.0
  %v8216 = vmax.f32 %v8166, 0.0
  %v8217 = vmax.f32 %v8167, 0.0
  %v8218 = vmax.f32 %v8168, 0.0
  %v8219 = vmax.f32 %v8169, 0.0
  %v8220 = vmax.f32 %v8170, 0.0
  %v8221 = vmax.f32 %v8171, 0.0
  %v8222 = vmax.f32 %v8172, 0.0
  %v8223 = vmax.f32 %v8173, 0.0
  %v8224 = vmax.f32 %v8174, 0.0
  %v8225 = vmax.f32 %v8175, 0.0
  %v8226 = vmax.f32 %v8176, 0.0
  %v8227 = vmax.f32 %v8177, 0.0
  %v8228 = vmax.f32 %v8178, 0.0
  %v8229 = vmax.f32 %v8179, 0.0
  %v8230 = vmax.f32 %v8180, 0.0
  %v8231 = vmax.f32 %v8181, 0.0
  %v8232 = vmax.f32 %v8182, 0.0
  %v8233 = vpack.c.bf16 %v8185, %v8183
  %v8234 = vpack.c.bf16 %v8186, %v8184
  %v8235 = vpack.c.bf16 %v8189, %v8187
  %v8236 = vpack.c.bf16 %v8190, %v8188
  %v8237 = vpack.c.bf16 %v8193, %v8191
  %v8238 = vpack.c.bf16 %v8194, %v8192
  %v8239 = vpack.c.bf16 %v8197, %v8195
  %v8240 = vpack.c.bf16 %v8198, %v8196
  %v8241 = vpack.c.bf16 %v8201, %v8199
  %v8242 = vpack.c.bf16 %v8202, %v8200
  %v8243 = vpack.c.bf16 %v8205, %v8203
  %v8244 = vpack.c.bf16 %v8206, %v8204
  %v8245 = vpack.c.bf16 %v8209, %v8207
  %v8246 = vpack.c.bf16 %v8210, %v8208
  %v8247 = vpack.c.bf16 %v8213, %v8211
  %v8248 = vpack.c.bf16 %v8214, %v8212
  %v8249 = vpack.c.bf16 %v8217, %v8215
  %v8250 = vpack.c.bf16 %v8218, %v8216
  %v8251 = vpack.c.bf16 %v8221, %v8219
  %v8252 = vpack.c.bf16 %v8222, %v8220
  %v8253 = vpack.c.bf16 %v8225, %v8223
  %v8254 = vpack.c.bf16 %v8226, %v8224
  %v8255 = vpack.c.bf16 %v8229, %v8227
  %v8256 = vpack.c.bf16 %v8230, %v8228
  %v8257 = vpack.c.bf16 %v8231, %v8231
  %v8258 = vpack.c.bf16 %v8232, %v8232
  %v8285 = vunpack.c.l.b16 %v8233
  %v8286 = vunpack.c.l.b16 %v8234
  %v8287 = vunpack.c.h.b16 %v8233
  %v8288 = vunpack.c.h.b16 %v8234
  %v8289 = vunpack.c.l.b16 %v8235
  %v8290 = vunpack.c.l.b16 %v8236
  %v8291 = vunpack.c.h.b16 %v8235
  %v8292 = vunpack.c.h.b16 %v8236
  %v8293 = vunpack.c.l.b16 %v8237
  %v8294 = vunpack.c.l.b16 %v8238
  %v8295 = vunpack.c.h.b16 %v8237
  %v8296 = vunpack.c.h.b16 %v8238
  %v8297 = vunpack.c.l.b16 %v8239
  %v8298 = vunpack.c.l.b16 %v8240
  %v8299 = vunpack.c.h.b16 %v8239
  %v8300 = vunpack.c.h.b16 %v8240
  %v8301 = vunpack.c.l.b16 %v8241
  %v8302 = vunpack.c.l.b16 %v8242
  %v8303 = vunpack.c.h.b16 %v8241
  %v8304 = vunpack.c.h.b16 %v8242
  %v8305 = vunpack.c.l.b16 %v8243
  %v8306 = vunpack.c.l.b16 %v8244
  %v8307 = vunpack.c.h.b16 %v8243
  %v8308 = vunpack.c.h.b16 %v8244
  %v8309 = vunpack.c.l.b16 %v8245
  %v8310 = vunpack.c.l.b16 %v8246
  %v8311 = vunpack.c.h.b16 %v8245
  %v8312 = vunpack.c.h.b16 %v8246
  %v8313 = vunpack.c.l.b16 %v8247
  %v8314 = vunpack.c.l.b16 %v8248
  %v8315 = vunpack.c.h.b16 %v8247
  %v8316 = vunpack.c.h.b16 %v8248
  %v8317 = vunpack.c.l.b16 %v8249
  %v8318 = vunpack.c.l.b16 %v8250
  %v8319 = vunpack.c.h.b16 %v8249
  %v8320 = vunpack.c.h.b16 %v8250
  %v8321 = vunpack.c.l.b16 %v8251
  %v8322 = vunpack.c.l.b16 %v8252
  %v8323 = vunpack.c.h.b16 %v8251
  %v8324 = vunpack.c.h.b16 %v8252
  %v8325 = vunpack.c.l.b16 %v8253
  %v8326 = vunpack.c.l.b16 %v8254
  %v8327 = vunpack.c.h.b16 %v8253
  %v8328 = vunpack.c.h.b16 %v8254
  %v8329 = vunpack.c.l.b16 %v8255
  %v8330 = vunpack.c.l.b16 %v8256
  %v8331 = vunpack.c.h.b16 %v8255
  %v8332 = vunpack.c.h.b16 %v8256
  %v8333 = vunpack.c.l.b16 %v8257
  %v8334 = vunpack.c.l.b16 %v8258
  %v8335 = vld [vmem:[%s8] sm:$0xf]
  %v8336 = vld [vmem:[%s8 + $0x4] sm:$0xf]
  %v8337 = vld [vmem:[%s8 + $0x8] sm:$0xf]
  %v8338 = vld [vmem:[%s8 + $0xc] sm:$0xf]
  %v8339 = vld [vmem:[%s8 + $0x10] sm:$0xf]
  %v8340 = vld [vmem:[%s8 + $0x14] sm:$0xf]
  %v8341 = vld [vmem:[%s8 + $0x18] sm:$0xf]
  %v8342 = vld [vmem:[%s8 + $0x1c] sm:$0xf]
  %v8343 = vld [vmem:[%s8 + $0x20] sm:$0xf]
  %v8344 = vld [vmem:[%s8 + $0x24] sm:$0xf]
  %v8345 = vld [vmem:[%s8 + $0x28] sm:$0xf]
  %v8346 = vld [vmem:[%s8 + $0x2c] sm:$0xf]
  %v8347 = vld [vmem:[%s8 + $0x30] sm:$0xf]
  %v8348 = vld [vmem:[%s8 + $0x34] sm:$0xf]
  %v8349 = vld [vmem:[%s8 + $0x38] sm:$0xf]
  %v8350 = vld [vmem:[%s8 + $0x3c] sm:$0xf]
  %v8351 = vld [vmem:[%s8 + $0x40] sm:$0xf]
  %v8352 = vld [vmem:[%s8 + $0x44] sm:$0xf]
  %v8353 = vld [vmem:[%s8 + $0x48] sm:$0xf]
  %v8354 = vld [vmem:[%s8 + $0x4c] sm:$0xf]
  %v8355 = vld [vmem:[%s8 + $0x50] sm:$0xf]
  %v8356 = vld [vmem:[%s8 + $0x54] sm:$0xf]
  %v8357 = vld [vmem:[%s8 + $0x58] sm:$0xf]
  %v8358 = vld [vmem:[%s8 + $0x5c] sm:$0xf]
  %v8359 = vld [vmem:[%s8 + $0x60] sm:$0xf]
  %v8360 = vld [vmem:[%s8 + $0x64] sm:$0xf]
  %v8361 = vld [vmem:[%s8 + $0x68] sm:$0xf]
  %v8362 = vld [vmem:[%s8 + $0x6c] sm:$0xf]
  %v8363 = vld [vmem:[%s8 + $0x70] sm:$0xf]
  %v8364 = vld [vmem:[%s8 + $0x74] sm:$0xf]
  %v8365 = vld [vmem:[%s8 + $0x78] sm:$0xf]
  %v8366 = vld [vmem:[%s8 + $0x7c] sm:$0xf]
  %s8367 = scalar_lea.vmem %s8, 128
  %v8368 = vld [vmem:[%s8367] sm:$0xf]
  %v8369 = vld [vmem:[%s8367 + $0x4] sm:$0xf]
  %v8370 = vld [vmem:[%s8367 + $0x8] sm:$0xf]
  %v8371 = vld [vmem:[%s8367 + $0xc] sm:$0xf]
  %v8372 = vld [vmem:[%s8367 + $0x10] sm:$0xf]
  %v8373 = vld [vmem:[%s8367 + $0x14] sm:$0xf]
  %v8374 = vld [vmem:[%s8367 + $0x18] sm:$0xf]
  %v8375 = vld [vmem:[%s8367 + $0x1c] sm:$0xf]
  %v8376 = vld [vmem:[%s8367 + $0x20] sm:$0xf]
  %v8377 = vld [vmem:[%s8367 + $0x24] sm:$0xf]
  %v8378 = vld [vmem:[%s8367 + $0x28] sm:$0xf]
  %v8379 = vld [vmem:[%s8367 + $0x2c] sm:$0xf]
  %v8380 = vld [vmem:[%s8367 + $0x30] sm:$0xf]
  %v8381 = vld [vmem:[%s8367 + $0x34] sm:$0xf]
  %v8382 = vld [vmem:[%s8367 + $0x38] sm:$0xf]
  %v8383 = vld [vmem:[%s8367 + $0x3c] sm:$0xf]
  %v8384 = vld [vmem:[%s8367 + $0x40] sm:$0xf]
  %v8385 = vld [vmem:[%s8367 + $0x44] sm:$0xf]
  %v8386 = vld [vmem:[%s8367 + $0x48] sm:$0xf]
  %v8387 = vld [vmem:[%s8367 + $0x4c] sm:$0xf]
  %v8388 = vld [vmem:[%s8367 + $0x50] sm:$0xf]
  %v8389 = vld [vmem:[%s8367 + $0x54] sm:$0xf]
  %v8390 = vld [vmem:[%s8367 + $0x58] sm:$0xf]
  %v8391 = vld [vmem:[%s8367 + $0x5c] sm:$0xf]
  %v8392 = vld [vmem:[%s8367 + $0x60] sm:$0xf]
  %v8393 = vld [vmem:[%s8367 + $0x64] sm:$0xf]
  %v8394 = vld [vmem:[%s8367 + $0x68] sm:$0xf]
  %v8395 = vld [vmem:[%s8367 + $0x6c] sm:$0xf]
  %v8396 = vld [vmem:[%s8367 + $0x70] sm:$0xf]
  %v8397 = vld [vmem:[%s8367 + $0x74] sm:$0xf]
  %v8398 = vld [vmem:[%s8367 + $0x78] sm:$0xf]
  %v8399 = vld [vmem:[%s8367 + $0x7c] sm:$0xf]
  %v8400 = vpack.c.b16 %v8289, %v8287
  %v8401 = vpack.c.b16 %v8290, %v8288
  %v8402 = vpack.c.b16 %v8293, %v8291
  %v8403 = vpack.c.b16 %v8294, %v8292
  %v8404 = vpack.c.b16 %v8299, %v8297
  %v8405 = vpack.c.b16 %v8300, %v8298
  %v8406 = vpack.c.b16 %v8303, %v8301
  %v8407 = vpack.c.b16 %v8304, %v8302
  %v8408 = vpack.c.b16 %v8309, %v8307
  %v8409 = vpack.c.b16 %v8310, %v8308
  %v8410 = vpack.c.b16 %v8313, %v8311
  %v8411 = vpack.c.b16 %v8314, %v8312
  %v8412 = vpack.c.b16 %v8319, %v8317
  %v8413 = vpack.c.b16 %v8320, %v8318
  %v8414 = vpack.c.b16 %v8323, %v8321
  %v8415 = vpack.c.b16 %v8324, %v8322
  %v8464 = vunpack.c.l.b16 %v8368
  %v8465 = vunpack.c.l.b16 %v8369
  %v8466 = vunpack.c.l.b16 %v8370
  %v8467 = vunpack.c.l.b16 %v8371
  %v8468 = vunpack.c.l.b16 %v8372
  %v8469 = vunpack.c.l.b16 %v8373
  %v8470 = vunpack.c.l.b16 %v8374
  %v8471 = vunpack.c.l.b16 %v8375
  %v8472 = vunpack.c.l.b16 %v8376
  %v8473 = vunpack.c.l.b16 %v8377
  %v8474 = vunpack.c.l.b16 %v8378
  %v8475 = vunpack.c.l.b16 %v8379
  %v8476 = vunpack.c.l.b16 %v8380
  %v8477 = vunpack.c.l.b16 %v8381
  %v8478 = vunpack.c.l.b16 %v8382
  %v8479 = vunpack.c.l.b16 %v8383
  %v8480 = vunpack.c.l.b16 %v8384
  %v8481 = vunpack.c.l.b16 %v8385
  %v8482 = vunpack.c.l.b16 %v8386
  %v8483 = vunpack.c.l.b16 %v8387
  %v8484 = vunpack.c.l.b16 %v8388
  %v8485 = vunpack.c.l.b16 %v8389
  %v8486 = vunpack.c.l.b16 %v8390
  %v8487 = vunpack.c.l.b16 %v8391
  %v8488 = vunpack.c.l.b16 %v8392
  %v8489 = vunpack.c.l.b16 %v8393
  %v8490 = vunpack.c.l.b16 %v8394
  %v8491 = vunpack.c.l.b16 %v8395
  %v8492 = vunpack.c.l.b16 %v8396
  %v8493 = vunpack.c.l.b16 %v8397
  %v8494 = vunpack.c.l.b16 %v8398
  %v8495 = vunpack.c.l.b16 %v8399
  %v8496 = vpack.c.b16 %v8465, %v8464
  %v8497 = vpack.c.b16 %v8467, %v8466
  %v8498 = vpack.c.b16 %v8469, %v8468
  %v8499 = vpack.c.b16 %v8471, %v8470
  %v8500 = vpack.c.b16 %v8473, %v8472
  %v8501 = vpack.c.b16 %v8475, %v8474
  %v8502 = vpack.c.b16 %v8477, %v8476
  %v8503 = vpack.c.b16 %v8479, %v8478
  %v8504 = vpack.c.b16 %v8481, %v8480
  %v8505 = vpack.c.b16 %v8483, %v8482
  %v8506 = vpack.c.b16 %v8485, %v8484
  %v8507 = vpack.c.b16 %v8487, %v8486
  %v8508 = vpack.c.b16 %v8489, %v8488
  %v8509 = vpack.c.b16 %v8491, %v8490
  %v8510 = vpack.c.b16 %v8493, %v8492
  %v8511 = vpack.c.b16 %v8495, %v8494
  %8528 = vmatprep.subr.bf16.mxu0 0
  %8529 = vmatpush1.bf16.msra.mxu0 %v8496
  %8530 = vmatprep.subr.bf16.mxu0 0
  %8531 = vmatpush1.bf16.msra.mxu0 %v8497
  %8532 = vmatprep.subr.bf16.mxu0 0
  %8533 = vmatpush1.bf16.msra.mxu0 %v8498
  %8534 = vmatprep.subr.bf16.mxu0 0
  %8535 = vmatpush1.bf16.msra.mxu0 %v8499
  %8536 = vmatprep.subr.bf16.mxu0 0
  %8537 = vmatpush1.bf16.msra.mxu0 %v8500
  %8538 = vmatprep.subr.bf16.mxu0 0
  %8539 = vmatpush1.bf16.msra.mxu0 %v8501
  %8540 = vmatprep.subr.bf16.mxu0 0
  %8541 = vmatpush1.bf16.msra.mxu0 %v8502
  %8542 = vmatprep.subr.bf16.mxu0 0
  %8543 = vmatpush1.bf16.msra.mxu0 %v8503
  %8544 = vmatprep.subr.bf16.mxu0 0
  %8545 = vmatpush1.bf16.msra.mxu0 %v8504
  %8546 = vmatprep.subr.bf16.mxu0 0
  %8547 = vmatpush1.bf16.msra.mxu0 %v8505
  %8548 = vmatprep.subr.bf16.mxu0 0
  %8549 = vmatpush1.bf16.msra.mxu0 %v8506
  %8550 = vmatprep.subr.bf16.mxu0 0
  %8551 = vmatpush1.bf16.msra.mxu0 %v8507
  %8552 = vmatprep.subr.bf16.mxu0 0
  %8553 = vmatpush1.bf16.msra.mxu0 %v8508
  %8554 = vmatprep.subr.bf16.mxu0 0
  %8555 = vmatpush1.bf16.msra.mxu0 %v8509
  %8556 = vmatprep.subr.bf16.mxu0 0
  %8557 = vmatpush1.bf16.msra.mxu0 %v8510
  %8558 = vmatprep.subr.bf16.mxu0 0
  %8559 = vmatpush1.bf16.msra.mxu0 %v8511
  %8560 = vmatprep.mubr.bf16.mxu0 %v8401
  %8561 = vmatmul.mubr.bf16.gmra.mrb[0].mxu0 %v8400
  %v8562 = vpop.f32.mrb[0].mxu0
  %v8563 = vadd.f32 0.0, %v8562
  %v8564 = vpop.f32.mrb[0].mxu0
  %v8565 = vpop.f32.mrb[0].mxu0
  %v8566 = vadd.f32 0.0, %v8565
  %v8567 = vpop.f32.mrb[0].mxu0
  %8568 = vmatprep.mubr.bf16.mxu0 %v8403
  %8569 = vmatmul.mubr.bf16.gmra.mrb[0].mxu0 %v8402
  %v8570 = vpop.f32.mrb[0].mxu0
  %v8571 = vadd.f32 0.0, %v8570
  %v8572 = vpop.f32.mrb[0].mxu0
  %v8573 = vpop.f32.mrb[0].mxu0
  %v8574 = vadd.f32 0.0, %v8573
  %v8575 = vpop.f32.mrb[0].mxu0
  %8576 = vmatprep.mubr.bf16.mxu0 %v8405
  %8577 = vmatmul.mubr.bf16.gmra.mrb[0].mxu0 %v8404
  %v8578 = vpop.f32.mrb[0].mxu0
  %v8579 = vadd.f32 0.0, %v8578
  %v8580 = vpop.f32.mrb[0].mxu0
  %v8581 = vpop.f32.mrb[0].mxu0
  %v8582 = vadd.f32 0.0, %v8581
  %v8583 = vpop.f32.mrb[0].mxu0
  %8584 = vmatprep.mubr.bf16.mxu0 %v8407
  %8585 = vmatmul.mubr.bf16.gmra.mrb[0].mxu0 %v8406
  %v8586 = vpop.f32.mrb[0].mxu0
  %v8587 = vadd.f32 0.0, %v8586
  %v8588 = vpop.f32.mrb[0].mxu0
  %v8589 = vpop.f32.mrb[0].mxu0
  %v8590 = vadd.f32 0.0, %v8589
  %v8591 = vpop.f32.mrb[0].mxu0
  %8592 = vmatprep.mubr.bf16.mxu0 %v8409
  %8593 = vmatmul.mubr.bf16.gmra.mrb[0].mxu0 %v8408
  %v8594 = vpop.f32.mrb[0].mxu0
  %v8595 = vadd.f32 0.0, %v8594
  %v8596 = vpop.f32.mrb[0].mxu0
  %v8597 = vpop.f32.mrb[0].mxu0
  %v8598 = vadd.f32 0.0, %v8597
  %v8599 = vpop.f32.mrb[0].mxu0
  %8600 = vmatprep.mubr.bf16.mxu0 %v8411
  %8601 = vmatmul.mubr.bf16.gmra.mrb[0].mxu0 %v8410
  %v8602 = vpop.f32.mrb[0].mxu0
  %v8603 = vadd.f32 0.0, %v8602
  %v8604 = vpop.f32.mrb[0].mxu0
  %v8605 = vpop.f32.mrb[0].mxu0
  %v8606 = vadd.f32 0.0, %v8605
  %v8607 = vpop.f32.mrb[0].mxu0
  %8608 = vmatprep.mubr.bf16.mxu0 %v8413
  %8609 = vmatmul.mubr.bf16.gmra.mrb[0].mxu0 %v8412
  %v8610 = vpop.f32.mrb[0].mxu0
  %v8611 = vadd.f32 0.0, %v8610
  %v8612 = vpop.f32.mrb[0].mxu0
  %v8613 = vpop.f32.mrb[0].mxu0
  %v8614 = vadd.f32 0.0, %v8613
  %v8615 = vpop.f32.mrb[0].mxu0
  %8616 = vmatprep.mubr.bf16.mxu0 %v8415
  %8617 = vmatmul.mubr.bf16.gmra.mrb[0].mxu0 %v8414
  %v8618 = vpop.f32.mrb[0].mxu0
  %v8619 = vadd.f32 0.0, %v8618
  %v8620 = vpop.f32.mrb[0].mxu0
  %v8621 = vpop.f32.mrb[0].mxu0
  %v8622 = vadd.f32 0.0, %v8621
  %v8623 = vpop.f32.mrb[0].mxu0
  %8624 = vdwg.mxu0
  %v8625 = vpack.c.b16 %v8287, %v8285
  %v8626 = vpack.c.b16 %v8288, %v8286
  %v8627 = vpack.c.b16 %v8291, %v8289
  %v8628 = vpack.c.b16 %v8292, %v8290
  %v8629 = vpack.c.b16 %v8297, %v8295
  %v8630 = vpack.c.b16 %v8298, %v8296
  %v8631 = vpack.c.b16 %v8301, %v8299
  %v8632 = vpack.c.b16 %v8302, %v8300
  %v8633 = vpack.c.b16 %v8307, %v8305
  %v8634 = vpack.c.b16 %v8308, %v8306
  %v8635 = vpack.c.b16 %v8311, %v8309
  %v8636 = vpack.c.b16 %v8312, %v8310
  %v8637 = vpack.c.b16 %v8317, %v8315
  %v8638 = vpack.c.b16 %v8318, %v8316
  %v8639 = vpack.c.b16 %v8321, %v8319
  %v8640 = vpack.c.b16 %v8322, %v8320
  %v8689 = vunpack.c.l.b16 %v8335
  %v8690 = vunpack.c.l.b16 %v8336
  %v8691 = vunpack.c.l.b16 %v8337
  %v8692 = vunpack.c.l.b16 %v8338
  %v8693 = vunpack.c.l.b16 %v8339
  %v8694 = vunpack.c.l.b16 %v8340
  %v8695 = vunpack.c.l.b16 %v8341
  %v8696 = vunpack.c.l.b16 %v8342
  %v8697 = vunpack.c.l.b16 %v8343
  %v8698 = vunpack.c.l.b16 %v8344
  %v8699 = vunpack.c.l.b16 %v8345
  %v8700 = vunpack.c.l.b16 %v8346
  %v8701 = vunpack.c.l.b16 %v8347
  %v8702 = vunpack.c.l.b16 %v8348
  %v8703 = vunpack.c.l.b16 %v8349
  %v8704 = vunpack.c.l.b16 %v8350
  %v8705 = vunpack.c.l.b16 %v8351
  %v8706 = vunpack.c.l.b16 %v8352
  %v8707 = vunpack.c.l.b16 %v8353
  %v8708 = vunpack.c.l.b16 %v8354
  %v8709 = vunpack.c.l.b16 %v8355
  %v8710 = vunpack.c.l.b16 %v8356
  %v8711 = vunpack.c.l.b16 %v8357
  %v8712 = vunpack.c.l.b16 %v8358
  %v8713 = vunpack.c.l.b16 %v8359
  %v8714 = vunpack.c.l.b16 %v8360
  %v8715 = vunpack.c.l.b16 %v8361
  %v8716 = vunpack.c.l.b16 %v8362
  %v8717 = vunpack.c.l.b16 %v8363
  %v8718 = vunpack.c.l.b16 %v8364
  %v8719 = vunpack.c.l.b16 %v8365
  %v8720 = vunpack.c.l.b16 %v8366
  %v8721 = vpack.c.b16 %v8690, %v8689
  %v8722 = vpack.c.b16 %v8692, %v8691
  %v8723 = vpack.c.b16 %v8694, %v8693
  %v8724 = vpack.c.b16 %v8696, %v8695
  %v8725 = vpack.c.b16 %v8698, %v8697
  %v8726 = vpack.c.b16 %v8700, %v8699
  %v8727 = vpack.c.b16 %v8702, %v8701
  %v8728 = vpack.c.b16 %v8704, %v8703
  %v8729 = vpack.c.b16 %v8706, %v8705
  %v8730 = vpack.c.b16 %v8708, %v8707
  %v8731 = vpack.c.b16 %v8710, %v8709
  %v8732 = vpack.c.b16 %v8712, %v8711
  %v8733 = vpack.c.b16 %v8714, %v8713
  %v8734 = vpack.c.b16 %v8716, %v8715
  %v8735 = vpack.c.b16 %v8718, %v8717
  %v8736 = vpack.c.b16 %v8720, %v8719
  %8753 = vmatprep.subr.bf16.mxu0 0
  %8754 = vmatpush1.bf16.msra.mxu0 %v8721
  %8755 = vmatprep.subr.bf16.mxu0 0
  %8756 = vmatpush1.bf16.msra.mxu0 %v8722
  %8757 = vmatprep.subr.bf16.mxu0 0
  %8758 = vmatpush1.bf16.msra.mxu0 %v8723
  %8759 = vmatprep.subr.bf16.mxu0 0
  %8760 = vmatpush1.bf16.msra.mxu0 %v8724
  %8761 = vmatprep.subr.bf16.mxu0 0
  %8762 = vmatpush1.bf16.msra.mxu0 %v8725
  %8763 = vmatprep.subr.bf16.mxu0 0
  %8764 = vmatpush1.bf16.msra.mxu0 %v8726
  %8765 = vmatprep.subr.bf16.mxu0 0
  %8766 = vmatpush1.bf16.msra.mxu0 %v8727
  %8767 = vmatprep.subr.bf16.mxu0 0
  %8768 = vmatpush1.bf16.msra.mxu0 %v8728
  %8769 = vmatprep.subr.bf16.mxu0 0
  %8770 = vmatpush1.bf16.msra.mxu0 %v8729
  %8771 = vmatprep.subr.bf16.mxu0 0
  %8772 = vmatpush1.bf16.msra.mxu0 %v8730
  %8773 = vmatprep.subr.bf16.mxu0 0
  %8774 = vmatpush1.bf16.msra.mxu0 %v8731
  %8775 = vmatprep.subr.bf16.mxu0 0
  %8776 = vmatpush1.bf16.msra.mxu0 %v8732
  %8777 = vmatprep.subr.bf16.mxu0 0
  %8778 = vmatpush1.bf16.msra.mxu0 %v8733
  %8779 = vmatprep.subr.bf16.mxu0 0
  %8780 = vmatpush1.bf16.msra.mxu0 %v8734
  %8781 = vmatprep.subr.bf16.mxu0 0
  %8782 = vmatpush1.bf16.msra.mxu0 %v8735
  %8783 = vmatprep.subr.bf16.mxu0 0
  %8784 = vmatpush1.bf16.msra.mxu0 %v8736
  %8785 = vmatprep.mubr.bf16.mxu0 %v8626
  %8786 = vmatmul.mubr.bf16.gmra.mrb[0].mxu0 %v8625
  %v8787 = vpop.f32.mrb[0].mxu0
  %v8788 = vadd.f32 %v8563, %v8787
  %v8789 = vpop.f32.mrb[0].mxu0
  %v8790 = vpop.f32.mrb[0].mxu0
  %v8791 = vadd.f32 %v8566, %v8790
  %v8792 = vpop.f32.mrb[0].mxu0
  %8793 = vmatprep.mubr.bf16.mxu0 %v8628
  %8794 = vmatmul.mubr.bf16.gmra.mrb[0].mxu0 %v8627
  %v8795 = vpop.f32.mrb[0].mxu0
  %v8796 = vadd.f32 %v8571, %v8795
  %v8797 = vpop.f32.mrb[0].mxu0
  %v8798 = vpop.f32.mrb[0].mxu0
  %v8799 = vadd.f32 %v8574, %v8798
  %v8800 = vpop.f32.mrb[0].mxu0
  %8801 = vmatprep.mubr.bf16.mxu0 %v8630
  %8802 = vmatmul.mubr.bf16.gmra.mrb[0].mxu0 %v8629
  %v8803 = vpop.f32.mrb[0].mxu0
  %v8804 = vadd.f32 %v8579, %v8803
  %v8805 = vpop.f32.mrb[0].mxu0
  %v8806 = vpop.f32.mrb[0].mxu0
  %v8807 = vadd.f32 %v8582, %v8806
  %v8808 = vpop.f32.mrb[0].mxu0
  %8809 = vmatprep.mubr.bf16.mxu0 %v8632
  %8810 = vmatmul.mubr.bf16.gmra.mrb[0].mxu0 %v8631
  %v8811 = vpop.f32.mrb[0].mxu0
  %v8812 = vadd.f32 %v8587, %v8811
  %v8813 = vpop.f32.mrb[0].mxu0
  %v8814 = vpop.f32.mrb[0].mxu0
  %v8815 = vadd.f32 %v8590, %v8814
  %v8816 = vpop.f32.mrb[0].mxu0
  %8817 = vmatprep.mubr.bf16.mxu0 %v8634
  %8818 = vmatmul.mubr.bf16.gmra.mrb[0].mxu0 %v8633
  %v8819 = vpop.f32.mrb[0].mxu0
  %v8820 = vadd.f32 %v8595, %v8819
  %v8821 = vpop.f32.mrb[0].mxu0
  %v8822 = vpop.f32.mrb[0].mxu0
  %v8823 = vadd.f32 %v8598, %v8822
  %v8824 = vpop.f32.mrb[0].mxu0
  %8825 = vmatprep.mubr.bf16.mxu0 %v8636
  %8826 = vmatmul.mubr.bf16.gmra.mrb[0].mxu0 %v8635
  %v8827 = vpop.f32.mrb[0].mxu0
  %v8828 = vadd.f32 %v8603, %v8827
  %v8829 = vpop.f32.mrb[0].mxu0
  %v8830 = vpop.f32.mrb[0].mxu0
  %v8831 = vadd.f32 %v8606, %v8830
  %v8832 = vpop.f32.mrb[0].mxu0
  %8833 = vmatprep.mubr.bf16.mxu0 %v8638
  %8834 = vmatmul.mubr.bf16.gmra.mrb[0].mxu0 %v8637
  %v8835 = vpop.f32.mrb[0].mxu0
  %v8836 = vadd.f32 %v8611, %v8835
  %v8837 = vpop.f32.mrb[0].mxu0
  %v8838 = vpop.f32.mrb[0].mxu0
  %v8839 = vadd.f32 %v8614, %v8838
  %v8840 = vpop.f32.mrb[0].mxu0
  %8841 = vmatprep.mubr.bf16.mxu0 %v8640
  %8842 = vmatmul.mubr.bf16.gmra.mrb[0].mxu0 %v8639
  %v8843 = vpop.f32.mrb[0].mxu0
  %v8844 = vadd.f32 %v8619, %v8843
  %v8845 = vpop.f32.mrb[0].mxu0
  %v8846 = vpop.f32.mrb[0].mxu0
  %v8847 = vadd.f32 %v8622, %v8846
  %v8848 = vpop.f32.mrb[0].mxu0
  %8849 = vdwg.mxu0
  %s8850 = scalar_lea.vmem %s8, 256
  %v8851 = vld [vmem:[%s8850] sm:$0xf]
  %v8852 = vld [vmem:[%s8850 + $0x4] sm:$0xf]
  %v8853 = vld [vmem:[%s8850 + $0x8] sm:$0xf]
  %v8854 = vld [vmem:[%s8850 + $0xc] sm:$0xf]
  %v8855 = vld [vmem:[%s8850 + $0x10] sm:$0xf]
  %v8856 = vld [vmem:[%s8850 + $0x14] sm:$0xf]
  %v8857 = vld [vmem:[%s8850 + $0x18] sm:$0xf]
  %v8858 = vld [vmem:[%s8850 + $0x1c] sm:$0xf]
  %v8859 = vld [vmem:[%s8850 + $0x20] sm:$0xf]
  %v8860 = vld [vmem:[%s8850 + $0x24] sm:$0xf]
  %v8861 = vld [vmem:[%s8850 + $0x28] sm:$0xf]
  %v8862 = vld [vmem:[%s8850 + $0x2c] sm:$0xf]
  %v8863 = vld [vmem:[%s8850 + $0x30] sm:$0xf]
  %v8864 = vld [vmem:[%s8850 + $0x34] sm:$0xf]
  %v8865 = vld [vmem:[%s8850 + $0x38] sm:$0xf]
  %v8866 = vld [vmem:[%s8850 + $0x3c] sm:$0xf]
  %v8867 = vld [vmem:[%s8850 + $0x40] sm:$0xf]
  %v8868 = vld [vmem:[%s8850 + $0x44] sm:$0xf]
  %v8869 = vld [vmem:[%s8850 + $0x48] sm:$0xf]
  %v8870 = vld [vmem:[%s8850 + $0x4c] sm:$0xf]
  %v8871 = vld [vmem:[%s8850 + $0x50] sm:$0xf]
  %v8872 = vld [vmem:[%s8850 + $0x54] sm:$0xf]
  %v8873 = vld [vmem:[%s8850 + $0x58] sm:$0xf]
  %v8874 = vld [vmem:[%s8850 + $0x5c] sm:$0xf]
  %v8875 = vld [vmem:[%s8850 + $0x60] sm:$0xf]
  %v8876 = vld [vmem:[%s8850 + $0x64] sm:$0xf]
  %v8877 = vld [vmem:[%s8850 + $0x68] sm:$0xf]
  %v8878 = vld [vmem:[%s8850 + $0x6c] sm:$0xf]
  %v8879 = vld [vmem:[%s8850 + $0x70] sm:$0xf]
  %v8880 = vld [vmem:[%s8850 + $0x74] sm:$0xf]
  %v8881 = vld [vmem:[%s8850 + $0x78] sm:$0xf]
  %v8882 = vld [vmem:[%s8850 + $0x7c] sm:$0xf]
  %v8883 = vpack.c.b16 %v8327, %v8325
  %v8884 = vpack.c.b16 %v8328, %v8326
  %v8885 = vpack.c.b16 %v8331, %v8329
  %v8886 = vpack.c.b16 %v8332, %v8330
  %v8923 = vunpack.c.l.b16 %v8851
  %v8924 = vunpack.c.l.b16 %v8852
  %v8925 = vunpack.c.l.b16 %v8853
  %v8926 = vunpack.c.l.b16 %v8854
  %v8927 = vunpack.c.l.b16 %v8855
  %v8928 = vunpack.c.l.b16 %v8856
  %v8929 = vunpack.c.l.b16 %v8857
  %v8930 = vunpack.c.l.b16 %v8858
  %v8931 = vunpack.c.l.b16 %v8859
  %v8932 = vunpack.c.l.b16 %v8860
  %v8933 = vunpack.c.l.b16 %v8861
  %v8934 = vunpack.c.l.b16 %v8862
  %v8935 = vunpack.c.l.b16 %v8863
  %v8936 = vunpack.c.l.b16 %v8864
  %v8937 = vunpack.c.l.b16 %v8865
  %v8938 = vunpack.c.l.b16 %v8866
  %v8939 = vunpack.c.l.b16 %v8867
  %v8940 = vunpack.c.l.b16 %v8868
  %v8941 = vunpack.c.l.b16 %v8869
  %v8942 = vunpack.c.l.b16 %v8870
  %v8943 = vunpack.c.l.b16 %v8871
  %v8944 = vunpack.c.l.b16 %v8872
  %v8945 = vunpack.c.l.b16 %v8873
  %v8946 = vunpack.c.l.b16 %v8874
  %v8947 = vunpack.c.l.b16 %v8875
  %v8948 = vunpack.c.l.b16 %v8876
  %v8949 = vunpack.c.l.b16 %v8877
  %v8950 = vunpack.c.l.b16 %v8878
  %v8951 = vunpack.c.l.b16 %v8879
  %v8952 = vunpack.c.l.b16 %v8880
  %v8953 = vunpack.c.l.b16 %v8881
  %v8954 = vunpack.c.l.b16 %v8882
  %v8955 = vpack.c.b16 %v8924, %v8923
  %v8956 = vpack.c.b16 %v8926, %v8925
  %v8957 = vpack.c.b16 %v8928, %v8927
  %v8958 = vpack.c.b16 %v8930, %v8929
  %v8959 = vpack.c.b16 %v8932, %v8931
  %v8960 = vpack.c.b16 %v8934, %v8933
  %v8961 = vpack.c.b16 %v8936, %v8935
  %v8962 = vpack.c.b16 %v8938, %v8937
  %v8963 = vpack.c.b16 %v8940, %v8939
  %v8964 = vpack.c.b16 %v8942, %v8941
  %v8965 = vpack.c.b16 %v8944, %v8943
  %v8966 = vpack.c.b16 %v8946, %v8945
  %v8967 = vpack.c.b16 %v8948, %v8947
  %v8968 = vpack.c.b16 %v8950, %v8949
  %v8969 = vpack.c.b16 %v8952, %v8951
  %v8970 = vpack.c.b16 %v8954, %v8953
  %8987 = vmatprep.subr.bf16.mxu0 0
  %8988 = vmatpush1.bf16.msra.mxu0 %v8955
  %8989 = vmatprep.subr.bf16.mxu0 0
  %8990 = vmatpush1.bf16.msra.mxu0 %v8956
  %8991 = vmatprep.subr.bf16.mxu0 0
  %8992 = vmatpush1.bf16.msra.mxu0 %v8957
  %8993 = vmatprep.subr.bf16.mxu0 0
  %8994 = vmatpush1.bf16.msra.mxu0 %v8958
  %8995 = vmatprep.subr.bf16.mxu0 0
  %8996 = vmatpush1.bf16.msra.mxu0 %v8959
  %8997 = vmatprep.subr.bf16.mxu0 0
  %8998 = vmatpush1.bf16.msra.mxu0 %v8960
  %8999 = vmatprep.subr.bf16.mxu0 0
  %9000 = vmatpush1.bf16.msra.mxu0 %v8961
  %9001 = vmatprep.subr.bf16.mxu0 0
  %9002 = vmatpush1.bf16.msra.mxu0 %v8962
  %9003 = vmatprep.subr.bf16.mxu0 0
  %9004 = vmatpush1.bf16.msra.mxu0 %v8963
  %9005 = vmatprep.subr.bf16.mxu0 0
  %9006 = vmatpush1.bf16.msra.mxu0 %v8964
  %9007 = vmatprep.subr.bf16.mxu0 0
  %9008 = vmatpush1.bf16.msra.mxu0 %v8965
  %9009 = vmatprep.subr.bf16.mxu0 0
  %9010 = vmatpush1.bf16.msra.mxu0 %v8966
  %9011 = vmatprep.subr.bf16.mxu0 0
  %9012 = vmatpush1.bf16.msra.mxu0 %v8967
  %9013 = vmatprep.subr.bf16.mxu0 0
  %9014 = vmatpush1.bf16.msra.mxu0 %v8968
  %9015 = vmatprep.subr.bf16.mxu0 0
  %9016 = vmatpush1.bf16.msra.mxu0 %v8969
  %9017 = vmatprep.subr.bf16.mxu0 0
  %9018 = vmatpush1.bf16.msra.mxu0 %v8970
  %9019 = vmatprep.mubr.bf16.mxu0 %v8630
  %9020 = vmatmul.mubr.bf16.gmra.mrb[0].mxu0 %v8629
  %v9021 = vpop.f32.mrb[0].mxu0
  %v9022 = vadd.f32 0.0, %v9021
  %v9023 = vpop.f32.mrb[0].mxu0
  %v9024 = vpop.f32.mrb[0].mxu0
  %v9025 = vadd.f32 0.0, %v9024
  %v9026 = vpop.f32.mrb[0].mxu0
  %9027 = vmatprep.mubr.bf16.mxu0 %v8632
  %9028 = vmatmul.mubr.bf16.gmra.mrb[0].mxu0 %v8631
  %v9029 = vpop.f32.mrb[0].mxu0
  %v9030 = vadd.f32 0.0, %v9029
  %v9031 = vpop.f32.mrb[0].mxu0
  %v9032 = vpop.f32.mrb[0].mxu0
  %v9033 = vadd.f32 0.0, %v9032
  %v9034 = vpop.f32.mrb[0].mxu0
  %9035 = vmatprep.mubr.bf16.mxu0 %v8634
  %9036 = vmatmul.mubr.bf16.gmra.mrb[0].mxu0 %v8633
  %v9037 = vpop.f32.mrb[0].mxu0
  %v9038 = vadd.f32 0.0, %v9037
  %v9039 = vpop.f32.mrb[0].mxu0
  %v9040 = vpop.f32.mrb[0].mxu0
  %v9041 = vadd.f32 0.0, %v9040
  %v9042 = vpop.f32.mrb[0].mxu0
  %9043 = vmatprep.mubr.bf16.mxu0 %v8636
  %9044 = vmatmul.mubr.bf16.gmra.mrb[0].mxu0 %v8635
  %v9045 = vpop.f32.mrb[0].mxu0
  %v9046 = vadd.f32 0.0, %v9045
  %v9047 = vpop.f32.mrb[0].mxu0
  %v9048 = vpop.f32.mrb[0].mxu0
  %v9049 = vadd.f32 0.0, %v9048
  %v9050 = vpop.f32.mrb[0].mxu0
  %9051 = vmatprep.mubr.bf16.mxu0 %v8638
  %9052 = vmatmul.mubr.bf16.gmra.mrb[0].mxu0 %v8637
  %v9053 = vpop.f32.mrb[0].mxu0
  %v9054 = vadd.f32 0.0, %v9053
  %v9055 = vpop.f32.mrb[0].mxu0
  %v9056 = vpop.f32.mrb[0].mxu0
  %v9057 = vadd.f32 0.0, %v9056
  %v9058 = vpop.f32.mrb[0].mxu0
  %9059 = vmatprep.mubr.bf16.mxu0 %v8640
  %9060 = vmatmul.mubr.bf16.gmra.mrb[0].mxu0 %v8639
  %v9061 = vpop.f32.mrb[0].mxu0
  %v9062 = vadd.f32 0.0, %v9061
  %v9063 = vpop.f32.mrb[0].mxu0
  %v9064 = vpop.f32.mrb[0].mxu0
  %v9065 = vadd.f32 0.0, %v9064
  %v9066 = vpop.f32.mrb[0].mxu0
  %9067 = vmatprep.mubr.bf16.mxu0 %v8884
  %9068 = vmatmul.mubr.bf16.gmra.mrb[0].mxu0 %v8883
  %v9069 = vpop.f32.mrb[0].mxu0
  %v9070 = vadd.f32 0.0, %v9069
  %v9071 = vpop.f32.mrb[0].mxu0
  %v9072 = vpop.f32.mrb[0].mxu0
  %v9073 = vadd.f32 0.0, %v9072
  %v9074 = vpop.f32.mrb[0].mxu0
  %9075 = vmatprep.mubr.bf16.mxu0 %v8886
  %9076 = vmatmul.mubr.bf16.gmra.mrb[0].mxu0 %v8885
  %v9077 = vpop.f32.mrb[0].mxu0
  %v9078 = vadd.f32 0.0, %v9077
  %v9079 = vpop.f32.mrb[0].mxu0
  %v9080 = vpop.f32.mrb[0].mxu0
  %v9081 = vadd.f32 0.0, %v9080
  %v9082 = vpop.f32.mrb[0].mxu0
  %9083 = vdwg.mxu0
  %v9084 = vadd.f32 %v8788, %v9022
  %v9085 = vadd.f32 %v8791, %v9025
  %v9086 = vadd.f32 %v8796, %v9030
  %v9087 = vadd.f32 %v8799, %v9033
  %v9088 = vadd.f32 %v8804, %v9038
  %v9089 = vadd.f32 %v8807, %v9041
  %v9090 = vadd.f32 %v8812, %v9046
  %v9091 = vadd.f32 %v8815, %v9049
  %v9092 = vadd.f32 %v8820, %v9054
  %v9093 = vadd.f32 %v8823, %v9057
  %v9094 = vadd.f32 %v8828, %v9062
  %v9095 = vadd.f32 %v8831, %v9065
  %v9096 = vadd.f32 %v8836, %v9070
  %v9097 = vadd.f32 %v8839, %v9073
  %v9098 = vadd.f32 %v8844, %v9078
  %v9099 = vadd.f32 %v8847, %v9081
  %s9100 = scalar_lea.vmem %s8, 384
  %v9101 = vld [vmem:[%s9100] sm:$0xf]
  %v9102 = vld [vmem:[%s9100 + $0x4] sm:$0xf]
  %v9103 = vld [vmem:[%s9100 + $0x8] sm:$0xf]
  %v9104 = vld [vmem:[%s9100 + $0xc] sm:$0xf]
  %v9105 = vld [vmem:[%s9100 + $0x10] sm:$0xf]
  %v9106 = vld [vmem:[%s9100 + $0x14] sm:$0xf]
  %v9107 = vld [vmem:[%s9100 + $0x18] sm:$0xf]
  %v9108 = vld [vmem:[%s9100 + $0x1c] sm:$0xf]
  %v9109 = vld [vmem:[%s9100 + $0x20] sm:$0xf]
  %v9110 = vld [vmem:[%s9100 + $0x24] sm:$0xf]
  %v9111 = vld [vmem:[%s9100 + $0x28] sm:$0xf]
  %v9112 = vld [vmem:[%s9100 + $0x2c] sm:$0xf]
  %v9113 = vld [vmem:[%s9100 + $0x30] sm:$0xf]
  %v9114 = vld [vmem:[%s9100 + $0x34] sm:$0xf]
  %v9115 = vld [vmem:[%s9100 + $0x38] sm:$0xf]
  %v9116 = vld [vmem:[%s9100 + $0x3c] sm:$0xf]
  %v9117 = vld [vmem:[%s9100 + $0x40] sm:$0xf]
  %v9118 = vld [vmem:[%s9100 + $0x44] sm:$0xf]
  %v9119 = vld [vmem:[%s9100 + $0x48] sm:$0xf]
  %v9120 = vld [vmem:[%s9100 + $0x4c] sm:$0xf]
  %v9121 = vld [vmem:[%s9100 + $0x50] sm:$0xf]
  %v9122 = vld [vmem:[%s9100 + $0x54] sm:$0xf]
  %v9123 = vld [vmem:[%s9100 + $0x58] sm:$0xf]
  %v9124 = vld [vmem:[%s9100 + $0x5c] sm:$0xf]
  %v9125 = vld [vmem:[%s9100 + $0x60] sm:$0xf]
  %v9126 = vld [vmem:[%s9100 + $0x64] sm:$0xf]
  %v9127 = vld [vmem:[%s9100 + $0x68] sm:$0xf]
  %v9128 = vld [vmem:[%s9100 + $0x6c] sm:$0xf]
  %v9129 = vld [vmem:[%s9100 + $0x70] sm:$0xf]
  %v9130 = vld [vmem:[%s9100 + $0x74] sm:$0xf]
  %v9131 = vld [vmem:[%s9100 + $0x78] sm:$0xf]
  %v9132 = vld [vmem:[%s9100 + $0x7c] sm:$0xf]
  %v9133 = vpack.c.b16 %v8329, %v8327
  %v9134 = vpack.c.b16 %v8330, %v8328
  %v9135 = vpack.c.b16 %v8333, %v8331
  %v9136 = vpack.c.b16 %v8334, %v8332
  %v9173 = vunpack.c.l.b16 %v9101
  %v9174 = vunpack.c.l.b16 %v9102
  %v9175 = vunpack.c.l.b16 %v9103
  %v9176 = vunpack.c.l.b16 %v9104
  %v9177 = vunpack.c.l.b16 %v9105
  %v9178 = vunpack.c.l.b16 %v9106
  %v9179 = vunpack.c.l.b16 %v9107
  %v9180 = vunpack.c.l.b16 %v9108
  %v9181 = vunpack.c.l.b16 %v9109
  %v9182 = vunpack.c.l.b16 %v9110
  %v9183 = vunpack.c.l.b16 %v9111
  %v9184 = vunpack.c.l.b16 %v9112
  %v9185 = vunpack.c.l.b16 %v9113
  %v9186 = vunpack.c.l.b16 %v9114
  %v9187 = vunpack.c.l.b16 %v9115
  %v9188 = vunpack.c.l.b16 %v9116
  %v9189 = vunpack.c.l.b16 %v9117
  %v9190 = vunpack.c.l.b16 %v9118
  %v9191 = vunpack.c.l.b16 %v9119
  %v9192 = vunpack.c.l.b16 %v9120
  %v9193 = vunpack.c.l.b16 %v9121
  %v9194 = vunpack.c.l.b16 %v9122
  %v9195 = vunpack.c.l.b16 %v9123
  %v9196 = vunpack.c.l.b16 %v9124
  %v9197 = vunpack.c.l.b16 %v9125
  %v9198 = vunpack.c.l.b16 %v9126
  %v9199 = vunpack.c.l.b16 %v9127
  %v9200 = vunpack.c.l.b16 %v9128
  %v9201 = vunpack.c.l.b16 %v9129
  %v9202 = vunpack.c.l.b16 %v9130
  %v9203 = vunpack.c.l.b16 %v9131
  %v9204 = vunpack.c.l.b16 %v9132
  %v9205 = vpack.c.b16 %v9174, %v9173
  %v9206 = vpack.c.b16 %v9176, %v9175
  %v9207 = vpack.c.b16 %v9178, %v9177
  %v9208 = vpack.c.b16 %v9180, %v9179
  %v9209 = vpack.c.b16 %v9182, %v9181
  %v9210 = vpack.c.b16 %v9184, %v9183
  %v9211 = vpack.c.b16 %v9186, %v9185
  %v9212 = vpack.c.b16 %v9188, %v9187
  %v9213 = vpack.c.b16 %v9190, %v9189
  %v9214 = vpack.c.b16 %v9192, %v9191
  %v9215 = vpack.c.b16 %v9194, %v9193
  %v9216 = vpack.c.b16 %v9196, %v9195
  %v9217 = vpack.c.b16 %v9198, %v9197
  %v9218 = vpack.c.b16 %v9200, %v9199
  %v9219 = vpack.c.b16 %v9202, %v9201
  %v9220 = vpack.c.b16 %v9204, %v9203
  %9237 = vmatprep.subr.bf16.mxu0 0
  %9238 = vmatpush1.bf16.msra.mxu0 %v9205
  %9239 = vmatprep.subr.bf16.mxu0 0
  %9240 = vmatpush1.bf16.msra.mxu0 %v9206
  %9241 = vmatprep.subr.bf16.mxu0 0
  %9242 = vmatpush1.bf16.msra.mxu0 %v9207
  %9243 = vmatprep.subr.bf16.mxu0 0
  %9244 = vmatpush1.bf16.msra.mxu0 %v9208
  %9245 = vmatprep.subr.bf16.mxu0 0
  %9246 = vmatpush1.bf16.msra.mxu0 %v9209
  %9247 = vmatprep.subr.bf16.mxu0 0
  %9248 = vmatpush1.bf16.msra.mxu0 %v9210
  %9249 = vmatprep.subr.bf16.mxu0 0
  %9250 = vmatpush1.bf16.msra.mxu0 %v9211
  %9251 = vmatprep.subr.bf16.mxu0 0
  %9252 = vmatpush1.bf16.msra.mxu0 %v9212
  %9253 = vmatprep.subr.bf16.mxu0 0
  %9254 = vmatpush1.bf16.msra.mxu0 %v9213
  %9255 = vmatprep.subr.bf16.mxu0 0
  %9256 = vmatpush1.bf16.msra.mxu0 %v9214
  %9257 = vmatprep.subr.bf16.mxu0 0
  %9258 = vmatpush1.bf16.msra.mxu0 %v9215
  %9259 = vmatprep.subr.bf16.mxu0 0
  %9260 = vmatpush1.bf16.msra.mxu0 %v9216
  %9261 = vmatprep.subr.bf16.mxu0 0
  %9262 = vmatpush1.bf16.msra.mxu0 %v9217
  %9263 = vmatprep.subr.bf16.mxu0 0
  %9264 = vmatpush1.bf16.msra.mxu0 %v9218
  %9265 = vmatprep.subr.bf16.mxu0 0
  %9266 = vmatpush1.bf16.msra.mxu0 %v9219
  %9267 = vmatprep.subr.bf16.mxu0 0
  %9268 = vmatpush1.bf16.msra.mxu0 %v9220
  %9269 = vmatprep.mubr.bf16.mxu0 %v8405
  %9270 = vmatmul.mubr.bf16.gmra.mrb[0].mxu0 %v8404
  %v9271 = vpop.f32.mrb[0].mxu0
  %v9272 = vadd.f32 0.0, %v9271
  %v9273 = vpop.f32.mrb[0].mxu0
  %v9274 = vpop.f32.mrb[0].mxu0
  %v9275 = vadd.f32 0.0, %v9274
  %v9276 = vpop.f32.mrb[0].mxu0
  %9277 = vmatprep.mubr.bf16.mxu0 %v8407
  %9278 = vmatmul.mubr.bf16.gmra.mrb[0].mxu0 %v8406
  %v9279 = vpop.f32.mrb[0].mxu0
  %v9280 = vadd.f32 0.0, %v9279
  %v9281 = vpop.f32.mrb[0].mxu0
  %v9282 = vpop.f32.mrb[0].mxu0
  %v9283 = vadd.f32 0.0, %v9282
  %v9284 = vpop.f32.mrb[0].mxu0
  %9285 = vmatprep.mubr.bf16.mxu0 %v8409
  %9286 = vmatmul.mubr.bf16.gmra.mrb[0].mxu0 %v8408
  %v9287 = vpop.f32.mrb[0].mxu0
  %v9288 = vadd.f32 0.0, %v9287
  %v9289 = vpop.f32.mrb[0].mxu0
  %v9290 = vpop.f32.mrb[0].mxu0
  %v9291 = vadd.f32 0.0, %v9290
  %v9292 = vpop.f32.mrb[0].mxu0
  %9293 = vmatprep.mubr.bf16.mxu0 %v8411
  %9294 = vmatmul.mubr.bf16.gmra.mrb[0].mxu0 %v8410
  %v9295 = vpop.f32.mrb[0].mxu0
  %v9296 = vadd.f32 0.0, %v9295
  %v9297 = vpop.f32.mrb[0].mxu0
  %v9298 = vpop.f32.mrb[0].mxu0
  %v9299 = vadd.f32 0.0, %v9298
  %v9300 = vpop.f32.mrb[0].mxu0
  %9301 = vmatprep.mubr.bf16.mxu0 %v8413
  %9302 = vmatmul.mubr.bf16.gmra.mrb[0].mxu0 %v8412
  %v9303 = vpop.f32.mrb[0].mxu0
  %v9304 = vadd.f32 0.0, %v9303
  %v9305 = vpop.f32.mrb[0].mxu0
  %v9306 = vpop.f32.mrb[0].mxu0
  %v9307 = vadd.f32 0.0, %v9306
  %v9308 = vpop.f32.mrb[0].mxu0
  %9309 = vmatprep.mubr.bf16.mxu0 %v8415
  %9310 = vmatmul.mubr.bf16.gmra.mrb[0].mxu0 %v8414
  %v9311 = vpop.f32.mrb[0].mxu0
  %v9312 = vadd.f32 0.0, %v9311
  %v9313 = vpop.f32.mrb[0].mxu0
  %v9314 = vpop.f32.mrb[0].mxu0
  %v9315 = vadd.f32 0.0, %v9314
  %v9316 = vpop.f32.mrb[0].mxu0
  %9317 = vmatprep.mubr.bf16.mxu0 %v9134
  %9318 = vmatmul.mubr.bf16.gmra.mrb[0].mxu0 %v9133
  %v9319 = vpop.f32.mrb[0].mxu0
  %v9320 = vadd.f32 0.0, %v9319
  %v9321 = vpop.f32.mrb[0].mxu0
  %v9322 = vpop.f32.mrb[0].mxu0
  %v9323 = vadd.f32 0.0, %v9322
  %v9324 = vpop.f32.mrb[0].mxu0
  %9325 = vmatprep.mubr.bf16.mxu0 %v9136
  %9326 = vmatmul.mubr.bf16.gmra.mrb[0].mxu0 %v9135
  %v9327 = vpop.f32.mrb[0].mxu0
  %v9328 = vadd.f32 0.0, %v9327
  %v9329 = vpop.f32.mrb[0].mxu0
  %v9330 = vpop.f32.mrb[0].mxu0
  %v9331 = vadd.f32 0.0, %v9330
  %v9332 = vpop.f32.mrb[0].mxu0
  %9333 = vdwg.mxu0
  %v9334 = vadd.f32 %v9084, %v9272
  %v9335 = vadd.f32 %v9085, %v9275
  %v9336 = vadd.f32 %v9086, %v9280
  %v9337 = vadd.f32 %v9087, %v9283
  %v9338 = vadd.f32 %v9088, %v9288
  %v9339 = vadd.f32 %v9089, %v9291
  %v9340 = vadd.f32 %v9090, %v9296
  %v9341 = vadd.f32 %v9091, %v9299
  %v9342 = vadd.f32 %v9092, %v9304
  %v9343 = vadd.f32 %v9093, %v9307
  %v9344 = vadd.f32 %v9094, %v9312
  %v9345 = vadd.f32 %v9095, %v9315
  %v9346 = vadd.f32 %v9096, %v9320
  %v9347 = vadd.f32 %v9097, %v9323
  %v9348 = vadd.f32 %v9098, %v9328
  %v9349 = vadd.f32 %v9099, %v9331
  %v9350 = vld [vmem:[%s9] sm:$0x1]
  %v9352 = vlaneseq
  %v9353 = vshrl.u32 %v9352, 7
  %v9354 = vsub.s32 0, %v9353
  %v9355 = vrot.slane %v9350, %v9354
  %v9357 = vadd.f32 %v9334, %v9355
  %v9358 = vadd.f32 %v9335, %v9355
  %v9359 = vadd.f32 %v9336, %v9355
  %v9360 = vadd.f32 %v9337, %v9355
  %v9361 = vadd.f32 %v9338, %v9355
  %v9362 = vadd.f32 %v9339, %v9355
  %v9363 = vadd.f32 %v9340, %v9355
  %v9364 = vadd.f32 %v9341, %v9355
  %v9365 = vadd.f32 %v9342, %v9355
  %v9366 = vadd.f32 %v9343, %v9355
  %v9367 = vadd.f32 %v9344, %v9355
  %v9368 = vadd.f32 %v9345, %v9355
  %v9369 = vadd.f32 %v9346, %v9355
  %v9370 = vadd.f32 %v9347, %v9355
  %v9371 = vadd.f32 %v9348, %v9355
  %v9372 = vadd.f32 %v9349, %v9355
  %v9373 = vmax.f32 %v9357, 0.0
  %v9374 = vmax.f32 %v9358, 0.0
  %v9375 = vmax.f32 %v9359, 0.0
  %v9376 = vmax.f32 %v9360, 0.0
  %v9377 = vmax.f32 %v9361, 0.0
  %v9378 = vmax.f32 %v9362, 0.0
  %v9379 = vmax.f32 %v9363, 0.0
  %v9380 = vmax.f32 %v9364, 0.0
  %v9381 = vmax.f32 %v9365, 0.0
  %v9382 = vmax.f32 %v9366, 0.0
  %v9383 = vmax.f32 %v9367, 0.0
  %v9384 = vmax.f32 %v9368, 0.0
  %v9385 = vmax.f32 %v9369, 0.0
  %v9386 = vmax.f32 %v9370, 0.0
  %v9387 = vmax.f32 %v9371, 0.0
  %v9388 = vmax.f32 %v9372, 0.0
  %v9389 = vpack.c.bf16 %v9374, %v9373
  %v9390 = vpack.c.bf16 %v9376, %v9375
  %v9391 = vpack.c.bf16 %v9378, %v9377
  %v9392 = vpack.c.bf16 %v9380, %v9379
  %v9393 = vpack.c.bf16 %v9382, %v9381
  %v9394 = vpack.c.bf16 %v9384, %v9383
  %v9395 = vpack.c.bf16 %v9386, %v9385
  %v9396 = vpack.c.bf16 %v9388, %v9387
  %v9398 = vrot.slane %v9389, 4
  %9399 = vrot.lane.b32.xlu0 %v9398, 64
  %v9400 = vpop.permute.xlu0 %9399
  %v9402 = vrot.slane %v9390, 4
  %9403 = vrot.lane.b32.xlu0 %v9402, 64
  %v9404 = vpop.permute.xlu0 %9403
  %v9406 = vrot.slane %v9391, 4
  %9407 = vrot.lane.b32.xlu0 %v9406, 64
  %v9408 = vpop.permute.xlu0 %9407
  %v9410 = vrot.slane %v9392, 4
  %9411 = vrot.lane.b32.xlu0 %v9410, 64
  %v9412 = vpop.permute.xlu0 %9411
  %v9414 = vrot.slane %v9393, 4
  %9415 = vrot.lane.b32.xlu0 %v9414, 64
  %v9416 = vpop.permute.xlu0 %9415
  %v9418 = vrot.slane %v9394, 4
  %9419 = vrot.lane.b32.xlu0 %v9418, 64
  %v9420 = vpop.permute.xlu0 %9419
  %v9422 = vrot.slane %v9395, 4
  %9423 = vrot.lane.b32.xlu0 %v9422, 64
  %v9424 = vpop.permute.xlu0 %9423
  %v9426 = vrot.slane %v9396, 4
  %9427 = vrot.lane.b32.xlu0 %v9426, 64
  %v9428 = vpop.permute.xlu0 %9427
  %vm9429 = vcmask 523264
  %v9432 = vsel %vm9429, %v9389, %v9400
  %v9436 = vsel %vm9429, %v9390, %v9404
  %v9440 = vsel %vm9429, %v9391, %v9408
  %v9444 = vsel %vm9429, %v9392, %v9412
  %v9448 = vsel %vm9429, %v9393, %v9416
  %v9452 = vsel %vm9429, %v9394, %v9420
  %v9456 = vsel %vm9429, %v9395, %v9424
  %v9460 = vsel %vm9429, %v9396, %v9428
  %v9462 = vld [vmem:[%s10] sm:$0xff]
  %v9463 = vld [vmem:[%s10 + $0x8] sm:$0xff]
  %v9464 = vld [vmem:[%s10 + $0x10] sm:$0xff]
  %v9465 = vld [vmem:[%s10 + $0x18] sm:$0xff]
  %v9466 = vld [vmem:[%s10 + $0x20] sm:$0xff]
  %v9467 = vld [vmem:[%s10 + $0x28] sm:$0xff]
  %v9468 = vld [vmem:[%s10 + $0x30] sm:$0xff]
  %v9469 = vld [vmem:[%s10 + $0x38] sm:$0xff]
  %v9470 = vld [vmem:[%s10 + $0x40] sm:$0xff]
  %v9471 = vld [vmem:[%s10 + $0x48] sm:$0xff]
  %v9472 = vld [vmem:[%s10 + $0x50] sm:$0xff]
  %v9473 = vld [vmem:[%s10 + $0x58] sm:$0xff]
  %v9474 = vld [vmem:[%s10 + $0x60] sm:$0xff]
  %v9475 = vld [vmem:[%s10 + $0x68] sm:$0xff]
  %v9476 = vld [vmem:[%s10 + $0x70] sm:$0xff]
  %v9477 = vld [vmem:[%s10 + $0x78] sm:$0xff]
  %v9478 = vld [vmem:[%s10 + $0x80] sm:$0xff]
  %v9479 = vld [vmem:[%s10 + $0x88] sm:$0xff]
  %v9480 = vld [vmem:[%s10 + $0x90] sm:$0xff]
  %v9481 = vld [vmem:[%s10 + $0x98] sm:$0xff]
  %v9482 = vld [vmem:[%s10 + $0xa0] sm:$0xff]
  %v9483 = vld [vmem:[%s10 + $0xa8] sm:$0xff]
  %v9484 = vld [vmem:[%s10 + $0xb0] sm:$0xff]
  %v9485 = vld [vmem:[%s10 + $0xb8] sm:$0xff]
  %v9486 = vld [vmem:[%s10 + $0xc0] sm:$0xff]
  %v9487 = vld [vmem:[%s10 + $0xc8] sm:$0xff]
  %v9488 = vld [vmem:[%s10 + $0xd0] sm:$0xff]
  %v9489 = vld [vmem:[%s10 + $0xd8] sm:$0xff]
  %v9490 = vld [vmem:[%s10 + $0xe0] sm:$0xff]
  %v9491 = vld [vmem:[%s10 + $0xe8] sm:$0xff]
  %v9492 = vld [vmem:[%s10 + $0xf0] sm:$0xff]
  %v9493 = vld [vmem:[%s10 + $0xf8] sm:$0xff]
  %v9494 = vld [vmem:[%s10 + $0x100] sm:$0xff]
  %v9495 = vld [vmem:[%s10 + $0x108] sm:$0xff]
  %v9496 = vld [vmem:[%s10 + $0x110] sm:$0xff]
  %v9497 = vld [vmem:[%s10 + $0x118] sm:$0xff]
  %v9498 = vld [vmem:[%s10 + $0x120] sm:$0xff]
  %v9499 = vld [vmem:[%s10 + $0x128] sm:$0xff]
  %v9500 = vld [vmem:[%s10 + $0x130] sm:$0xff]
  %v9501 = vld [vmem:[%s10 + $0x138] sm:$0xff]
  %v9502 = vld [vmem:[%s10 + $0x140] sm:$0xff]
  %v9503 = vld [vmem:[%s10 + $0x148] sm:$0xff]
  %v9504 = vld [vmem:[%s10 + $0x150] sm:$0xff]
  %v9505 = vld [vmem:[%s10 + $0x158] sm:$0xff]
  %v9506 = vld [vmem:[%s10 + $0x160] sm:$0xff]
  %v9507 = vld [vmem:[%s10 + $0x168] sm:$0xff]
  %v9508 = vld [vmem:[%s10 + $0x170] sm:$0xff]
  %v9509 = vld [vmem:[%s10 + $0x178] sm:$0xff]
  %v9510 = vld [vmem:[%s10 + $0x180] sm:$0xff]
  %v9511 = vld [vmem:[%s10 + $0x188] sm:$0xff]
  %v9512 = vld [vmem:[%s10 + $0x190] sm:$0xff]
  %v9513 = vld [vmem:[%s10 + $0x198] sm:$0xff]
  %v9514 = vld [vmem:[%s10 + $0x1a0] sm:$0xff]
  %v9515 = vld [vmem:[%s10 + $0x1a8] sm:$0xff]
  %v9516 = vld [vmem:[%s10 + $0x1b0] sm:$0xff]
  %v9517 = vld [vmem:[%s10 + $0x1b8] sm:$0xff]
  %v9518 = vld [vmem:[%s10 + $0x1c0] sm:$0xff]
  %v9519 = vld [vmem:[%s10 + $0x1c8] sm:$0xff]
  %v9520 = vld [vmem:[%s10 + $0x1d0] sm:$0xff]
  %v9521 = vld [vmem:[%s10 + $0x1d8] sm:$0xff]
  %v9522 = vld [vmem:[%s10 + $0x1e0] sm:$0xff]
  %v9523 = vld [vmem:[%s10 + $0x1e8] sm:$0xff]
  %v9524 = vld [vmem:[%s10 + $0x1f0] sm:$0xff]
  %v9525 = vld [vmem:[%s10 + $0x1f8] sm:$0xff]
  %v9526 = vld [vmem:[%s10 + $0x200] sm:$0xff]
  %v9527 = vld [vmem:[%s10 + $0x208] sm:$0xff]
  %v9528 = vld [vmem:[%s10 + $0x210] sm:$0xff]
  %v9529 = vld [vmem:[%s10 + $0x218] sm:$0xff]
  %v9530 = vld [vmem:[%s10 + $0x220] sm:$0xff]
  %v9531 = vld [vmem:[%s10 + $0x228] sm:$0xff]
  %v9532 = vld [vmem:[%s10 + $0x230] sm:$0xff]
  %v9533 = vld [vmem:[%s10 + $0x238] sm:$0xff]
  %v9534 = vld [vmem:[%s10 + $0x240] sm:$0xff]
  %v9535 = vld [vmem:[%s10 + $0x248] sm:$0xff]
  %v9536 = vld [vmem:[%s10 + $0x250] sm:$0xff]
  %v9537 = vld [vmem:[%s10 + $0x258] sm:$0xff]
  %v9538 = vld [vmem:[%s10 + $0x260] sm:$0xff]
  %v9539 = vld [vmem:[%s10 + $0x268] sm:$0xff]
  %v9540 = vld [vmem:[%s10 + $0x270] sm:$0xff]
  %v9541 = vld [vmem:[%s10 + $0x278] sm:$0xff]
  %v9542 = vld [vmem:[%s10 + $0x280] sm:$0xff]
  %v9543 = vld [vmem:[%s10 + $0x288] sm:$0xff]
  %v9544 = vld [vmem:[%s10 + $0x290] sm:$0xff]
  %v9545 = vld [vmem:[%s10 + $0x298] sm:$0xff]
  %v9546 = vld [vmem:[%s10 + $0x2a0] sm:$0xff]
  %v9547 = vld [vmem:[%s10 + $0x2a8] sm:$0xff]
  %v9548 = vld [vmem:[%s10 + $0x2b0] sm:$0xff]
  %v9549 = vld [vmem:[%s10 + $0x2b8] sm:$0xff]
  %v9550 = vld [vmem:[%s10 + $0x2c0] sm:$0xff]
  %v9551 = vld [vmem:[%s10 + $0x2c8] sm:$0xff]
  %v9552 = vld [vmem:[%s10 + $0x2d0] sm:$0xff]
  %v9553 = vld [vmem:[%s10 + $0x2d8] sm:$0xff]
  %v9554 = vld [vmem:[%s10 + $0x2e0] sm:$0xff]
  %v9555 = vld [vmem:[%s10 + $0x2e8] sm:$0xff]
  %v9556 = vld [vmem:[%s10 + $0x2f0] sm:$0xff]
  %v9557 = vld [vmem:[%s10 + $0x2f8] sm:$0xff]
  %v9558 = vld [vmem:[%s10 + $0x300] sm:$0xff]
  %v9559 = vld [vmem:[%s10 + $0x308] sm:$0xff]
  %v9560 = vld [vmem:[%s10 + $0x310] sm:$0xff]
  %v9561 = vld [vmem:[%s10 + $0x318] sm:$0xff]
  %v9562 = vld [vmem:[%s10 + $0x320] sm:$0xff]
  %v9563 = vld [vmem:[%s10 + $0x328] sm:$0xff]
  %v9564 = vld [vmem:[%s10 + $0x330] sm:$0xff]
  %v9565 = vld [vmem:[%s10 + $0x338] sm:$0xff]
  %v9566 = vld [vmem:[%s10 + $0x340] sm:$0xff]
  %v9567 = vld [vmem:[%s10 + $0x348] sm:$0xff]
  %v9568 = vld [vmem:[%s10 + $0x350] sm:$0xff]
  %v9569 = vld [vmem:[%s10 + $0x358] sm:$0xff]
  %v9570 = vld [vmem:[%s10 + $0x360] sm:$0xff]
  %v9571 = vld [vmem:[%s10 + $0x368] sm:$0xff]
  %v9572 = vld [vmem:[%s10 + $0x370] sm:$0xff]
  %v9573 = vld [vmem:[%s10 + $0x378] sm:$0xff]
  %v9574 = vld [vmem:[%s10 + $0x380] sm:$0xff]
  %v9575 = vld [vmem:[%s10 + $0x388] sm:$0xff]
  %v9576 = vld [vmem:[%s10 + $0x390] sm:$0xff]
  %v9577 = vld [vmem:[%s10 + $0x398] sm:$0xff]
  %v9578 = vld [vmem:[%s10 + $0x3a0] sm:$0xff]
  %v9579 = vld [vmem:[%s10 + $0x3a8] sm:$0xff]
  %v9580 = vld [vmem:[%s10 + $0x3b0] sm:$0xff]
  %v9581 = vld [vmem:[%s10 + $0x3b8] sm:$0xff]
  %v9582 = vld [vmem:[%s10 + $0x3c0] sm:$0xff]
  %v9583 = vld [vmem:[%s10 + $0x3c8] sm:$0xff]
  %v9584 = vld [vmem:[%s10 + $0x3d0] sm:$0xff]
  %v9585 = vld [vmem:[%s10 + $0x3d8] sm:$0xff]
  %v9586 = vld [vmem:[%s10 + $0x3e0] sm:$0xff]
  %v9587 = vld [vmem:[%s10 + $0x3e8] sm:$0xff]
  %v9588 = vld [vmem:[%s10 + $0x3f0] sm:$0xff]
  %v9589 = vld [vmem:[%s10 + $0x3f8] sm:$0xff]
  %v9590 = vld [vmem:[%s10 + $0x400] sm:$0xff]
  %v9591 = vld [vmem:[%s10 + $0x408] sm:$0xff]
  %v9592 = vld [vmem:[%s10 + $0x410] sm:$0xff]
  %v9593 = vld [vmem:[%s10 + $0x418] sm:$0xff]
  %v9594 = vld [vmem:[%s10 + $0x420] sm:$0xff]
  %v9595 = vld [vmem:[%s10 + $0x428] sm:$0xff]
  %v9596 = vld [vmem:[%s10 + $0x430] sm:$0xff]
  %v9597 = vld [vmem:[%s10 + $0x438] sm:$0xff]
  %v9598 = vld [vmem:[%s10 + $0x440] sm:$0xff]
  %v9599 = vld [vmem:[%s10 + $0x448] sm:$0xff]
  %v9600 = vld [vmem:[%s10 + $0x450] sm:$0xff]
  %v9601 = vld [vmem:[%s10 + $0x458] sm:$0xff]
  %v9602 = vld [vmem:[%s10 + $0x460] sm:$0xff]
  %v9603 = vld [vmem:[%s10 + $0x468] sm:$0xff]
  %v9604 = vld [vmem:[%s10 + $0x470] sm:$0xff]
  %v9605 = vld [vmem:[%s10 + $0x478] sm:$0xff]
  %v9606 = vld [vmem:[%s10 + $0x480] sm:$0xff]
  %v9607 = vld [vmem:[%s10 + $0x488] sm:$0xff]
  %v9608 = vld [vmem:[%s10 + $0x490] sm:$0xff]
  %v9609 = vld [vmem:[%s10 + $0x498] sm:$0xff]
  %v9610 = vld [vmem:[%s10 + $0x4a0] sm:$0xff]
  %v9611 = vld [vmem:[%s10 + $0x4a8] sm:$0xff]
  %v9612 = vld [vmem:[%s10 + $0x4b0] sm:$0xff]
  %v9613 = vld [vmem:[%s10 + $0x4b8] sm:$0xff]
  %v9614 = vld [vmem:[%s10 + $0x4c0] sm:$0xff]
  %v9615 = vld [vmem:[%s10 + $0x4c8] sm:$0xff]
  %v9616 = vld [vmem:[%s10 + $0x4d0] sm:$0xff]
  %v9617 = vld [vmem:[%s10 + $0x4d8] sm:$0xff]
  %v9618 = vld [vmem:[%s10 + $0x4e0] sm:$0xff]
  %v9619 = vld [vmem:[%s10 + $0x4e8] sm:$0xff]
  %v9620 = vld [vmem:[%s10 + $0x4f0] sm:$0xff]
  %v9621 = vld [vmem:[%s10 + $0x4f8] sm:$0xff]
  %v9622 = vld [vmem:[%s10 + $0x500] sm:$0xff]
  %v9623 = vld [vmem:[%s10 + $0x508] sm:$0xff]
  %v9624 = vld [vmem:[%s10 + $0x510] sm:$0xff]
  %v9625 = vld [vmem:[%s10 + $0x518] sm:$0xff]
  %v9626 = vld [vmem:[%s10 + $0x520] sm:$0xff]
  %v9627 = vld [vmem:[%s10 + $0x528] sm:$0xff]
  %v9628 = vld [vmem:[%s10 + $0x530] sm:$0xff]
  %v9629 = vld [vmem:[%s10 + $0x538] sm:$0xff]
  %v9630 = vld [vmem:[%s10 + $0x540] sm:$0xff]
  %v9631 = vld [vmem:[%s10 + $0x548] sm:$0xff]
  %v9632 = vld [vmem:[%s10 + $0x550] sm:$0xff]
  %v9633 = vld [vmem:[%s10 + $0x558] sm:$0xff]
  %v9634 = vld [vmem:[%s10 + $0x560] sm:$0xff]
  %v9635 = vld [vmem:[%s10 + $0x568] sm:$0xff]
  %v9636 = vld [vmem:[%s10 + $0x570] sm:$0xff]
  %v9637 = vld [vmem:[%s10 + $0x578] sm:$0xff]
  %v9638 = vld [vmem:[%s10 + $0x580] sm:$0xff]
  %v9639 = vld [vmem:[%s10 + $0x588] sm:$0xff]
  %v9640 = vld [vmem:[%s10 + $0x590] sm:$0xff]
  %v9641 = vld [vmem:[%s10 + $0x598] sm:$0xff]
  %v9642 = vld [vmem:[%s10 + $0x5a0] sm:$0xff]
  %v9643 = vld [vmem:[%s10 + $0x5a8] sm:$0xff]
  %v9644 = vld [vmem:[%s10 + $0x5b0] sm:$0xff]
  %v9645 = vld [vmem:[%s10 + $0x5b8] sm:$0xff]
  %v9646 = vld [vmem:[%s10 + $0x5c0] sm:$0xff]
  %v9647 = vld [vmem:[%s10 + $0x5c8] sm:$0xff]
  %v9648 = vld [vmem:[%s10 + $0x5d0] sm:$0xff]
  %v9649 = vld [vmem:[%s10 + $0x5d8] sm:$0xff]
  %v9650 = vld [vmem:[%s10 + $0x5e0] sm:$0xff]
  %v9651 = vld [vmem:[%s10 + $0x5e8] sm:$0xff]
  %v9652 = vld [vmem:[%s10 + $0x5f0] sm:$0xff]
  %v9653 = vld [vmem:[%s10 + $0x5f8] sm:$0xff]
  %v9654 = vld [vmem:[%s10 + $0x600] sm:$0xff]
  %v9655 = vld [vmem:[%s10 + $0x608] sm:$0xff]
  %v9656 = vld [vmem:[%s10 + $0x610] sm:$0xff]
  %v9657 = vld [vmem:[%s10 + $0x618] sm:$0xff]
  %v9658 = vld [vmem:[%s10 + $0x620] sm:$0xff]
  %v9659 = vld [vmem:[%s10 + $0x628] sm:$0xff]
  %v9660 = vld [vmem:[%s10 + $0x630] sm:$0xff]
  %v9661 = vld [vmem:[%s10 + $0x638] sm:$0xff]
  %v9662 = vld [vmem:[%s10 + $0x640] sm:$0xff]
  %v9663 = vld [vmem:[%s10 + $0x648] sm:$0xff]
  %v9664 = vld [vmem:[%s10 + $0x650] sm:$0xff]
  %v9665 = vld [vmem:[%s10 + $0x658] sm:$0xff]
  %v9666 = vld [vmem:[%s10 + $0x660] sm:$0xff]
  %v9667 = vld [vmem:[%s10 + $0x668] sm:$0xff]
  %v9668 = vld [vmem:[%s10 + $0x670] sm:$0xff]
  %v9669 = vld [vmem:[%s10 + $0x678] sm:$0xff]
  %v9670 = vld [vmem:[%s10 + $0x680] sm:$0xff]
  %v9671 = vld [vmem:[%s10 + $0x688] sm:$0xff]
  %v9672 = vld [vmem:[%s10 + $0x690] sm:$0xff]
  %v9673 = vld [vmem:[%s10 + $0x698] sm:$0xff]
  %v9674 = vld [vmem:[%s10 + $0x6a0] sm:$0xff]
  %v9675 = vld [vmem:[%s10 + $0x6a8] sm:$0xff]
  %v9676 = vld [vmem:[%s10 + $0x6b0] sm:$0xff]
  %v9677 = vld [vmem:[%s10 + $0x6b8] sm:$0xff]
  %v9678 = vld [vmem:[%s10 + $0x6c0] sm:$0xff]
  %v9679 = vld [vmem:[%s10 + $0x6c8] sm:$0xff]
  %v9680 = vld [vmem:[%s10 + $0x6d0] sm:$0xff]
  %v9681 = vld [vmem:[%s10 + $0x6d8] sm:$0xff]
  %v9682 = vld [vmem:[%s10 + $0x6e0] sm:$0xff]
  %v9683 = vld [vmem:[%s10 + $0x6e8] sm:$0xff]
  %v9684 = vld [vmem:[%s10 + $0x6f0] sm:$0xff]
  %v9685 = vld [vmem:[%s10 + $0x6f8] sm:$0xff]
  %v9686 = vld [vmem:[%s10 + $0x700] sm:$0xff]
  %v9687 = vld [vmem:[%s10 + $0x708] sm:$0xff]
  %v9688 = vld [vmem:[%s10 + $0x710] sm:$0xff]
  %v9689 = vld [vmem:[%s10 + $0x718] sm:$0xff]
  %v9690 = vld [vmem:[%s10 + $0x720] sm:$0xff]
  %v9691 = vld [vmem:[%s10 + $0x728] sm:$0xff]
  %v9692 = vld [vmem:[%s10 + $0x730] sm:$0xff]
  %v9693 = vld [vmem:[%s10 + $0x738] sm:$0xff]
  %v9694 = vld [vmem:[%s10 + $0x740] sm:$0xff]
  %v9695 = vld [vmem:[%s10 + $0x748] sm:$0xff]
  %v9696 = vld [vmem:[%s10 + $0x750] sm:$0xff]
  %v9697 = vld [vmem:[%s10 + $0x758] sm:$0xff]
  %v9698 = vld [vmem:[%s10 + $0x760] sm:$0xff]
  %v9699 = vld [vmem:[%s10 + $0x768] sm:$0xff]
  %v9700 = vld [vmem:[%s10 + $0x770] sm:$0xff]
  %v9701 = vld [vmem:[%s10 + $0x778] sm:$0xff]
  %v9702 = vld [vmem:[%s10 + $0x780] sm:$0xff]
  %v9703 = vld [vmem:[%s10 + $0x788] sm:$0xff]
  %v9704 = vld [vmem:[%s10 + $0x790] sm:$0xff]
  %v9705 = vld [vmem:[%s10 + $0x798] sm:$0xff]
  %v9706 = vld [vmem:[%s10 + $0x7a0] sm:$0xff]
  %v9707 = vld [vmem:[%s10 + $0x7a8] sm:$0xff]
  %v9708 = vld [vmem:[%s10 + $0x7b0] sm:$0xff]
  %v9709 = vld [vmem:[%s10 + $0x7b8] sm:$0xff]
  %v9710 = vld [vmem:[%s10 + $0x7c0] sm:$0xff]
  %v9711 = vld [vmem:[%s10 + $0x7c8] sm:$0xff]
  %v9712 = vld [vmem:[%s10 + $0x7d0] sm:$0xff]
  %v9713 = vld [vmem:[%s10 + $0x7d8] sm:$0xff]
  %v9714 = vld [vmem:[%s10 + $0x7e0] sm:$0xff]
  %v9715 = vld [vmem:[%s10 + $0x7e8] sm:$0xff]
  %v9716 = vld [vmem:[%s10 + $0x7f0] sm:$0xff]
  %v9717 = vld [vmem:[%s10 + $0x7f8] sm:$0xff]
  %v9718 = vld [vmem:[%s1] sm:$0xff]
  %v9719 = vpack.c.bf16 %v9718, %v9718
  %v9720 = vld [vmem:[%s11] sm:$0xff]
  %v9721 = vld [vmem:[%s11 + $0x8] sm:$0xff]
  %v9724 = vunpack.c.l.b16 %v9720
  %v9725 = vunpack.c.h.b16 %v9720
  %v9726 = vunpack.c.l.b16 %v9721
  %v9727 = vunpack.c.h.b16 %v9721
  %v9728 = vpack.c.b16 %v9724, %v9724
  %v9729 = vpack.c.b16 %v9725, %v9725
  %v9730 = vpack.c.b16 %v9726, %v9726
  %v9731 = vpack.c.b16 %v9727, %v9727
  %vm9732 = vcmask 64512
  %v9734 = vsel %vm9732, %v9719, 0
  %vm9736 = vcmask 1043456
  %v9738 = vsel %vm9736, %v9728, 0
  %v9741 = vsel %vm9736, %v9729, 0
  %v9744 = vsel %vm9736, %v9730, 0
  %v9747 = vsel %vm9736, %v9731, 0
  %9749 = vmatprep.subr.bf16.mxu0 %v9741
  %9750 = vmatpush1.bf16.msra.mxu0 %v9738
  %9751 = vmatprep.subr.bf16.mxu0 0
  %9752 = vmatpush1.bf16.msra.mxu0 0
  %9753 = vmatprep.subr.bf16.mxu0 0
  %9754 = vmatpush1.bf16.msra.mxu0 0
  %9755 = vmatprep.subr.bf16.mxu0 0
  %9756 = vmatpush1.bf16.msra.mxu0 0
  %9757 = vmatprep.subr.bf16.mxu0 0
  %9758 = vmatpush1.bf16.msra.mxu0 0
  %9759 = vmatprep.subr.bf16.mxu0 0
  %9760 = vmatpush1.bf16.msra.mxu0 0
  %9761 = vmatprep.subr.bf16.mxu0 0
  %9762 = vmatpush1.bf16.msra.mxu0 0
  %9763 = vmatprep.subr.bf16.mxu0 0
  %9764 = vmatpush1.bf16.msra.mxu0 0
  %9765 = vmatprep.subr.bf16.mxu0 0
  %9766 = vmatpush1.bf16.msra.mxu0 0
  %9767 = vmatprep.subr.bf16.mxu0 0
  %9768 = vmatpush1.bf16.msra.mxu0 0
  %9769 = vmatprep.subr.bf16.mxu0 0
  %9770 = vmatpush1.bf16.msra.mxu0 0
  %9771 = vmatprep.subr.bf16.mxu0 0
  %9772 = vmatpush1.bf16.msra.mxu0 0
  %9773 = vmatprep.subr.bf16.mxu0 0
  %9774 = vmatpush1.bf16.msra.mxu0 0
  %9775 = vmatprep.subr.bf16.mxu0 0
  %9776 = vmatpush1.bf16.msra.mxu0 0
  %9777 = vmatprep.subr.bf16.mxu0 0
  %9778 = vmatpush1.bf16.msra.mxu0 0
  %9779 = vmatprep.subr.bf16.mxu0 0
  %9780 = vmatpush1.bf16.msra.mxu0 0
  %9781 = vmatprep.mubr.bf16.mxu0 0
  %9782 = vmatmul.mubr.bf16.gmra.mrb[0].mxu0 %v9734
  %v9783 = vpop.f32.mrb[0].mxu0
  %v9784 = vadd.f32 0.0, %v9783
  %v9785 = vpop.f32.mrb[0].mxu0
  %v9786 = vadd.f32 0.0, %v9785
  %v9787 = vpop.f32.mrb[0].mxu0
  %v9788 = vpop.f32.mrb[0].mxu0
  %9789 = vdwg.mxu0
  %9790 = vmatprep.subr.bf16.mxu0 %v9747
  %9791 = vmatpush1.bf16.msra.mxu0 %v9744
  %9792 = vmatprep.subr.bf16.mxu0 0
  %9793 = vmatpush1.bf16.msra.mxu0 0
  %9794 = vmatprep.subr.bf16.mxu0 0
  %9795 = vmatpush1.bf16.msra.mxu0 0
  %9796 = vmatprep.subr.bf16.mxu0 0
  %9797 = vmatpush1.bf16.msra.mxu0 0
  %9798 = vmatprep.subr.bf16.mxu0 0
  %9799 = vmatpush1.bf16.msra.mxu0 0
  %9800 = vmatprep.subr.bf16.mxu0 0
  %9801 = vmatpush1.bf16.msra.mxu0 0
  %9802 = vmatprep.subr.bf16.mxu0 0
  %9803 = vmatpush1.bf16.msra.mxu0 0
  %9804 = vmatprep.subr.bf16.mxu0 0
  %9805 = vmatpush1.bf16.msra.mxu0 0
  %9806 = vmatprep.subr.bf16.mxu0 0
  %9807 = vmatpush1.bf16.msra.mxu0 0
  %9808 = vmatprep.subr.bf16.mxu0 0
  %9809 = vmatpush1.bf16.msra.mxu0 0
  %9810 = vmatprep.subr.bf16.mxu0 0
  %9811 = vmatpush1.bf16.msra.mxu0 0
  %9812 = vmatprep.subr.bf16.mxu0 0
  %9813 = vmatpush1.bf16.msra.mxu0 0
  %9814 = vmatprep.subr.bf16.mxu0 0
  %9815 = vmatpush1.bf16.msra.mxu0 0
  %9816 = vmatprep.subr.bf16.mxu0 0
  %9817 = vmatpush1.bf16.msra.mxu0 0
  %9818 = vmatprep.subr.bf16.mxu0 0
  %9819 = vmatpush1.bf16.msra.mxu0 0
  %9820 = vmatprep.subr.bf16.mxu0 0
  %9821 = vmatpush1.bf16.msra.mxu0 0
  %9822 = vmatprep.mubr.bf16.mxu0 0
  %9823 = vmatmul.mubr.bf16.gmra.mrb[0].mxu0 %v9734
  %v9824 = vpop.f32.mrb[0].mxu0
  %v9825 = vadd.f32 0.0, %v9824
  %v9826 = vpop.f32.mrb[0].mxu0
  %v9827 = vadd.f32 0.0, %v9826
  %v9828 = vpop.f32.mrb[0].mxu0
  %v9829 = vpop.f32.mrb[0].mxu0
  %9830 = vdwg.mxu0
  %v10087 = vunpack.c.l.b16 %v9462
  %v10088 = vunpack.c.h.b16 %v9462
  %v10089 = vunpack.c.l.b16 %v9463
  %v10090 = vunpack.c.h.b16 %v9463
  %v10091 = vunpack.c.l.b16 %v9464
  %v10092 = vunpack.c.h.b16 %v9464
  %v10093 = vunpack.c.l.b16 %v9465
  %v10094 = vunpack.c.h.b16 %v9465
  %v10095 = vunpack.c.l.b16 %v9466
  %v10096 = vunpack.c.h.b16 %v9466
  %v10097 = vunpack.c.l.b16 %v9467
  %v10098 = vunpack.c.h.b16 %v9467
  %v10099 = vunpack.c.l.b16 %v9468
  %v10100 = vunpack.c.h.b16 %v9468
  %v10101 = vunpack.c.l.b16 %v9469
  %v10102 = vunpack.c.h.b16 %v9469
  %v10103 = vunpack.c.l.b16 %v9470
  %v10104 = vunpack.c.h.b16 %v9470
  %v10105 = vunpack.c.l.b16 %v9471
  %v10106 = vunpack.c.h.b16 %v9471
  %v10107 = vunpack.c.l.b16 %v9472
  %v10108 = vunpack.c.h.b16 %v9472
  %v10109 = vunpack.c.l.b16 %v9473
  %v10110 = vunpack.c.h.b16 %v9473
  %v10111 = vunpack.c.l.b16 %v9474
  %v10112 = vunpack.c.h.b16 %v9474
  %v10113 = vunpack.c.l.b16 %v9475
  %v10114 = vunpack.c.h.b16 %v9475
  %v10115 = vunpack.c.l.b16 %v9476
  %v10116 = vunpack.c.h.b16 %v9476
  %v10117 = vunpack.c.l.b16 %v9477
  %v10118 = vunpack.c.h.b16 %v9477
  %v10119 = vunpack.c.l.b16 %v9478
  %v10120 = vunpack.c.h.b16 %v9478
  %v10121 = vunpack.c.l.b16 %v9479
  %v10122 = vunpack.c.h.b16 %v9479
  %v10123 = vunpack.c.l.b16 %v9480
  %v10124 = vunpack.c.h.b16 %v9480
  %v10125 = vunpack.c.l.b16 %v9481
  %v10126 = vunpack.c.h.b16 %v9481
  %v10127 = vunpack.c.l.b16 %v9482
  %v10128 = vunpack.c.h.b16 %v9482
  %v10129 = vunpack.c.l.b16 %v9483
  %v10130 = vunpack.c.h.b16 %v9483
  %v10131 = vunpack.c.l.b16 %v9484
  %v10132 = vunpack.c.h.b16 %v9484
  %v10133 = vunpack.c.l.b16 %v9485
  %v10134 = vunpack.c.h.b16 %v9485
  %v10135 = vunpack.c.l.b16 %v9486
  %v10136 = vunpack.c.h.b16 %v9486
  %v10137 = vunpack.c.l.b16 %v9487
  %v10138 = vunpack.c.h.b16 %v9487
  %v10139 = vunpack.c.l.b16 %v9488
  %v10140 = vunpack.c.h.b16 %v9488
  %v10141 = vunpack.c.l.b16 %v9489
  %v10142 = vunpack.c.h.b16 %v9489
  %v10143 = vunpack.c.l.b16 %v9490
  %v10144 = vunpack.c.h.b16 %v9490
  %v10145 = vunpack.c.l.b16 %v9491
  %v10146 = vunpack.c.h.b16 %v9491
  %v10147 = vunpack.c.l.b16 %v9492
  %v10148 = vunpack.c.h.b16 %v9492
  %v10149 = vunpack.c.l.b16 %v9493
  %v10150 = vunpack.c.h.b16 %v9493
  %v10151 = vunpack.c.l.b16 %v9494
  %v10152 = vunpack.c.h.b16 %v9494
  %v10153 = vunpack.c.l.b16 %v9495
  %v10154 = vunpack.c.h.b16 %v9495
  %v10155 = vunpack.c.l.b16 %v9496
  %v10156 = vunpack.c.h.b16 %v9496
  %v10157 = vunpack.c.l.b16 %v9497
  %v10158 = vunpack.c.h.b16 %v9497
  %v10159 = vunpack.c.l.b16 %v9498
  %v10160 = vunpack.c.h.b16 %v9498
  %v10161 = vunpack.c.l.b16 %v9499
  %v10162 = vunpack.c.h.b16 %v9499
  %v10163 = vunpack.c.l.b16 %v9500
  %v10164 = vunpack.c.h.b16 %v9500
  %v10165 = vunpack.c.l.b16 %v9501
  %v10166 = vunpack.c.h.b16 %v9501
  %v10167 = vunpack.c.l.b16 %v9502
  %v10168 = vunpack.c.h.b16 %v9502
  %v10169 = vunpack.c.l.b16 %v9503
  %v10170 = vunpack.c.h.b16 %v9503
  %v10171 = vunpack.c.l.b16 %v9504
  %v10172 = vunpack.c.h.b16 %v9504
  %v10173 = vunpack.c.l.b16 %v9505
  %v10174 = vunpack.c.h.b16 %v9505
  %v10175 = vunpack.c.l.b16 %v9506
  %v10176 = vunpack.c.h.b16 %v9506
  %v10177 = vunpack.c.l.b16 %v9507
  %v10178 = vunpack.c.h.b16 %v9507
  %v10179 = vunpack.c.l.b16 %v9508
  %v10180 = vunpack.c.h.b16 %v9508
  %v10181 = vunpack.c.l.b16 %v9509
  %v10182 = vunpack.c.h.b16 %v9509
  %v10183 = vunpack.c.l.b16 %v9510
  %v10184 = vunpack.c.h.b16 %v9510
  %v10185 = vunpack.c.l.b16 %v9511
  %v10186 = vunpack.c.h.b16 %v9511
  %v10187 = vunpack.c.l.b16 %v9512
  %v10188 = vunpack.c.h.b16 %v9512
  %v10189 = vunpack.c.l.b16 %v9513
  %v10190 = vunpack.c.h.b16 %v9513
  %v10191 = vunpack.c.l.b16 %v9514
  %v10192 = vunpack.c.h.b16 %v9514
  %v10193 = vunpack.c.l.b16 %v9515
  %v10194 = vunpack.c.h.b16 %v9515
  %v10195 = vunpack.c.l.b16 %v9516
  %v10196 = vunpack.c.h.b16 %v9516
  %v10197 = vunpack.c.l.b16 %v9517
  %v10198 = vunpack.c.h.b16 %v9517
  %v10199 = vunpack.c.l.b16 %v9518
  %v10200 = vunpack.c.h.b16 %v9518
  %v10201 = vunpack.c.l.b16 %v9519
  %v10202 = vunpack.c.h.b16 %v9519
  %v10203 = vunpack.c.l.b16 %v9520
  %v10204 = vunpack.c.h.b16 %v9520
  %v10205 = vunpack.c.l.b16 %v9521
  %v10206 = vunpack.c.h.b16 %v9521
  %v10207 = vunpack.c.l.b16 %v9522
  %v10208 = vunpack.c.h.b16 %v9522
  %v10209 = vunpack.c.l.b16 %v9523
  %v10210 = vunpack.c.h.b16 %v9523
  %v10211 = vunpack.c.l.b16 %v9524
  %v10212 = vunpack.c.h.b16 %v9524
  %v10213 = vunpack.c.l.b16 %v9525
  %v10214 = vunpack.c.h.b16 %v9525
  %v10215 = vunpack.c.l.b16 %v9526
  %v10216 = vunpack.c.h.b16 %v9526
  %v10217 = vunpack.c.l.b16 %v9527
  %v10218 = vunpack.c.h.b16 %v9527
  %v10219 = vunpack.c.l.b16 %v9528
  %v10220 = vunpack.c.h.b16 %v9528
  %v10221 = vunpack.c.l.b16 %v9529
  %v10222 = vunpack.c.h.b16 %v9529
  %v10223 = vunpack.c.l.b16 %v9530
  %v10224 = vunpack.c.h.b16 %v9530
  %v10225 = vunpack.c.l.b16 %v9531
  %v10226 = vunpack.c.h.b16 %v9531
  %v10227 = vunpack.c.l.b16 %v9532
  %v10228 = vunpack.c.h.b16 %v9532
  %v10229 = vunpack.c.l.b16 %v9533
  %v10230 = vunpack.c.h.b16 %v9533
  %v10231 = vunpack.c.l.b16 %v9534
  %v10232 = vunpack.c.h.b16 %v9534
  %v10233 = vunpack.c.l.b16 %v9535
  %v10234 = vunpack.c.h.b16 %v9535
  %v10235 = vunpack.c.l.b16 %v9536
  %v10236 = vunpack.c.h.b16 %v9536
  %v10237 = vunpack.c.l.b16 %v9537
  %v10238 = vunpack.c.h.b16 %v9537
  %v10239 = vunpack.c.l.b16 %v9538
  %v10240 = vunpack.c.h.b16 %v9538
  %v10241 = vunpack.c.l.b16 %v9539
  %v10242 = vunpack.c.h.b16 %v9539
  %v10243 = vunpack.c.l.b16 %v9540
  %v10244 = vunpack.c.h.b16 %v9540
  %v10245 = vunpack.c.l.b16 %v9541
  %v10246 = vunpack.c.h.b16 %v9541
  %v10247 = vunpack.c.l.b16 %v9542
  %v10248 = vunpack.c.h.b16 %v9542
  %v10249 = vunpack.c.l.b16 %v9543
  %v10250 = vunpack.c.h.b16 %v9543
  %v10251 = vunpack.c.l.b16 %v9544
  %v10252 = vunpack.c.h.b16 %v9544
  %v10253 = vunpack.c.l.b16 %v9545
  %v10254 = vunpack.c.h.b16 %v9545
  %v10255 = vunpack.c.l.b16 %v9546
  %v10256 = vunpack.c.h.b16 %v9546
  %v10257 = vunpack.c.l.b16 %v9547
  %v10258 = vunpack.c.h.b16 %v9547
  %v10259 = vunpack.c.l.b16 %v9548
  %v10260 = vunpack.c.h.b16 %v9548
  %v10261 = vunpack.c.l.b16 %v9549
  %v10262 = vunpack.c.h.b16 %v9549
  %v10263 = vunpack.c.l.b16 %v9550
  %v10264 = vunpack.c.h.b16 %v9550
  %v10265 = vunpack.c.l.b16 %v9551
  %v10266 = vunpack.c.h.b16 %v9551
  %v10267 = vunpack.c.l.b16 %v9552
  %v10268 = vunpack.c.h.b16 %v9552
  %v10269 = vunpack.c.l.b16 %v9553
  %v10270 = vunpack.c.h.b16 %v9553
  %v10271 = vunpack.c.l.b16 %v9554
  %v10272 = vunpack.c.h.b16 %v9554
  %v10273 = vunpack.c.l.b16 %v9555
  %v10274 = vunpack.c.h.b16 %v9555
  %v10275 = vunpack.c.l.b16 %v9556
  %v10276 = vunpack.c.h.b16 %v9556
  %v10277 = vunpack.c.l.b16 %v9557
  %v10278 = vunpack.c.h.b16 %v9557
  %v10279 = vunpack.c.l.b16 %v9558
  %v10280 = vunpack.c.h.b16 %v9558
  %v10281 = vunpack.c.l.b16 %v9559
  %v10282 = vunpack.c.h.b16 %v9559
  %v10283 = vunpack.c.l.b16 %v9560
  %v10284 = vunpack.c.h.b16 %v9560
  %v10285 = vunpack.c.l.b16 %v9561
  %v10286 = vunpack.c.h.b16 %v9561
  %v10287 = vunpack.c.l.b16 %v9562
  %v10288 = vunpack.c.h.b16 %v9562
  %v10289 = vunpack.c.l.b16 %v9563
  %v10290 = vunpack.c.h.b16 %v9563
  %v10291 = vunpack.c.l.b16 %v9564
  %v10292 = vunpack.c.h.b16 %v9564
  %v10293 = vunpack.c.l.b16 %v9565
  %v10294 = vunpack.c.h.b16 %v9565
  %v10295 = vunpack.c.l.b16 %v9566
  %v10296 = vunpack.c.h.b16 %v9566
  %v10297 = vunpack.c.l.b16 %v9567
  %v10298 = vunpack.c.h.b16 %v9567
  %v10299 = vunpack.c.l.b16 %v9568
  %v10300 = vunpack.c.h.b16 %v9568
  %v10301 = vunpack.c.l.b16 %v9569
  %v10302 = vunpack.c.h.b16 %v9569
  %v10303 = vunpack.c.l.b16 %v9570
  %v10304 = vunpack.c.h.b16 %v9570
  %v10305 = vunpack.c.l.b16 %v9571
  %v10306 = vunpack.c.h.b16 %v9571
  %v10307 = vunpack.c.l.b16 %v9572
  %v10308 = vunpack.c.h.b16 %v9572
  %v10309 = vunpack.c.l.b16 %v9573
  %v10310 = vunpack.c.h.b16 %v9573
  %v10311 = vunpack.c.l.b16 %v9574
  %v10312 = vunpack.c.h.b16 %v9574
  %v10313 = vunpack.c.l.b16 %v9575
  %v10314 = vunpack.c.h.b16 %v9575
  %v10315 = vunpack.c.l.b16 %v9576
  %v10316 = vunpack.c.h.b16 %v9576
  %v10317 = vunpack.c.l.b16 %v9577
  %v10318 = vunpack.c.h.b16 %v9577
  %v10319 = vunpack.c.l.b16 %v9578
  %v10320 = vunpack.c.h.b16 %v9578
  %v10321 = vunpack.c.l.b16 %v9579
  %v10322 = vunpack.c.h.b16 %v9579
  %v10323 = vunpack.c.l.b16 %v9580
  %v10324 = vunpack.c.h.b16 %v9580
  %v10325 = vunpack.c.l.b16 %v9581
  %v10326 = vunpack.c.h.b16 %v9581
  %v10327 = vunpack.c.l.b16 %v9582
  %v10328 = vunpack.c.h.b16 %v9582
  %v10329 = vunpack.c.l.b16 %v9583
  %v10330 = vunpack.c.h.b16 %v9583
  %v10331 = vunpack.c.l.b16 %v9584
  %v10332 = vunpack.c.h.b16 %v9584
  %v10333 = vunpack.c.l.b16 %v9585
  %v10334 = vunpack.c.h.b16 %v9585
  %v10335 = vunpack.c.l.b16 %v9586
  %v10336 = vunpack.c.h.b16 %v9586
  %v10337 = vunpack.c.l.b16 %v9587
  %v10338 = vunpack.c.h.b16 %v9587
  %v10339 = vunpack.c.l.b16 %v9588
  %v10340 = vunpack.c.h.b16 %v9588
  %v10341 = vunpack.c.l.b16 %v9589
  %v10342 = vunpack.c.h.b16 %v9589
  %v10343 = vunpack.c.l.b16 %v9590
  %v10344 = vunpack.c.h.b16 %v9590
  %v10345 = vunpack.c.l.b16 %v9591
  %v10346 = vunpack.c.h.b16 %v9591
  %v10347 = vunpack.c.l.b16 %v9592
  %v10348 = vunpack.c.h.b16 %v9592
  %v10349 = vunpack.c.l.b16 %v9593
  %v10350 = vunpack.c.h.b16 %v9593
  %v10351 = vunpack.c.l.b16 %v9594
  %v10352 = vunpack.c.h.b16 %v9594
  %v10353 = vunpack.c.l.b16 %v9595
  %v10354 = vunpack.c.h.b16 %v9595
  %v10355 = vunpack.c.l.b16 %v9596
  %v10356 = vunpack.c.h.b16 %v9596
  %v10357 = vunpack.c.l.b16 %v9597
  %v10358 = vunpack.c.h.b16 %v9597
  %v10359 = vunpack.c.l.b16 %v9598
  %v10360 = vunpack.c.h.b16 %v9598
  %v10361 = vunpack.c.l.b16 %v9599
  %v10362 = vunpack.c.h.b16 %v9599
  %v10363 = vunpack.c.l.b16 %v9600
  %v10364 = vunpack.c.h.b16 %v9600
  %v10365 = vunpack.c.l.b16 %v9601
  %v10366 = vunpack.c.h.b16 %v9601
  %v10367 = vunpack.c.l.b16 %v9602
  %v10368 = vunpack.c.h.b16 %v9602
  %v10369 = vunpack.c.l.b16 %v9603
  %v10370 = vunpack.c.h.b16 %v9603
  %v10371 = vunpack.c.l.b16 %v9604
  %v10372 = vunpack.c.h.b16 %v9604
  %v10373 = vunpack.c.l.b16 %v9605
  %v10374 = vunpack.c.h.b16 %v9605
  %v10375 = vunpack.c.l.b16 %v9606
  %v10376 = vunpack.c.h.b16 %v9606
  %v10377 = vunpack.c.l.b16 %v9607
  %v10378 = vunpack.c.h.b16 %v9607
  %v10379 = vunpack.c.l.b16 %v9608
  %v10380 = vunpack.c.h.b16 %v9608
  %v10381 = vunpack.c.l.b16 %v9609
  %v10382 = vunpack.c.h.b16 %v9609
  %v10383 = vunpack.c.l.b16 %v9610
  %v10384 = vunpack.c.h.b16 %v9610
  %v10385 = vunpack.c.l.b16 %v9611
  %v10386 = vunpack.c.h.b16 %v9611
  %v10387 = vunpack.c.l.b16 %v9612
  %v10388 = vunpack.c.h.b16 %v9612
  %v10389 = vunpack.c.l.b16 %v9613
  %v10390 = vunpack.c.h.b16 %v9613
  %v10391 = vunpack.c.l.b16 %v9614
  %v10392 = vunpack.c.h.b16 %v9614
  %v10393 = vunpack.c.l.b16 %v9615
  %v10394 = vunpack.c.h.b16 %v9615
  %v10395 = vunpack.c.l.b16 %v9616
  %v10396 = vunpack.c.h.b16 %v9616
  %v10397 = vunpack.c.l.b16 %v9617
  %v10398 = vunpack.c.h.b16 %v9617
  %v10399 = vunpack.c.l.b16 %v9618
  %v10400 = vunpack.c.h.b16 %v9618
  %v10401 = vunpack.c.l.b16 %v9619
  %v10402 = vunpack.c.h.b16 %v9619
  %v10403 = vunpack.c.l.b16 %v9620
  %v10404 = vunpack.c.h.b16 %v9620
  %v10405 = vunpack.c.l.b16 %v9621
  %v10406 = vunpack.c.h.b16 %v9621
  %v10407 = vunpack.c.l.b16 %v9622
  %v10408 = vunpack.c.h.b16 %v9622
  %v10409 = vunpack.c.l.b16 %v9623
  %v10410 = vunpack.c.h.b16 %v9623
  %v10411 = vunpack.c.l.b16 %v9624
  %v10412 = vunpack.c.h.b16 %v9624
  %v10413 = vunpack.c.l.b16 %v9625
  %v10414 = vunpack.c.h.b16 %v9625
  %v10415 = vunpack.c.l.b16 %v9626
  %v10416 = vunpack.c.h.b16 %v9626
  %v10417 = vunpack.c.l.b16 %v9627
  %v10418 = vunpack.c.h.b16 %v9627
  %v10419 = vunpack.c.l.b16 %v9628
  %v10420 = vunpack.c.h.b16 %v9628
  %v10421 = vunpack.c.l.b16 %v9629
  %v10422 = vunpack.c.h.b16 %v9629
  %v10423 = vunpack.c.l.b16 %v9630
  %v10424 = vunpack.c.h.b16 %v9630
  %v10425 = vunpack.c.l.b16 %v9631
  %v10426 = vunpack.c.h.b16 %v9631
  %v10427 = vunpack.c.l.b16 %v9632
  %v10428 = vunpack.c.h.b16 %v9632
  %v10429 = vunpack.c.l.b16 %v9633
  %v10430 = vunpack.c.h.b16 %v9633
  %v10431 = vunpack.c.l.b16 %v9634
  %v10432 = vunpack.c.h.b16 %v9634
  %v10433 = vunpack.c.l.b16 %v9635
  %v10434 = vunpack.c.h.b16 %v9635
  %v10435 = vunpack.c.l.b16 %v9636
  %v10436 = vunpack.c.h.b16 %v9636
  %v10437 = vunpack.c.l.b16 %v9637
  %v10438 = vunpack.c.h.b16 %v9637
  %v10439 = vunpack.c.l.b16 %v9638
  %v10440 = vunpack.c.h.b16 %v9638
  %v10441 = vunpack.c.l.b16 %v9639
  %v10442 = vunpack.c.h.b16 %v9639
  %v10443 = vunpack.c.l.b16 %v9640
  %v10444 = vunpack.c.h.b16 %v9640
  %v10445 = vunpack.c.l.b16 %v9641
  %v10446 = vunpack.c.h.b16 %v9641
  %v10447 = vunpack.c.l.b16 %v9642
  %v10448 = vunpack.c.h.b16 %v9642
  %v10449 = vunpack.c.l.b16 %v9643
  %v10450 = vunpack.c.h.b16 %v9643
  %v10451 = vunpack.c.l.b16 %v9644
  %v10452 = vunpack.c.h.b16 %v9644
  %v10453 = vunpack.c.l.b16 %v9645
  %v10454 = vunpack.c.h.b16 %v9645
  %v10455 = vunpack.c.l.b16 %v9646
  %v10456 = vunpack.c.h.b16 %v9646
  %v10457 = vunpack.c.l.b16 %v9647
  %v10458 = vunpack.c.h.b16 %v9647
  %v10459 = vunpack.c.l.b16 %v9648
  %v10460 = vunpack.c.h.b16 %v9648
  %v10461 = vunpack.c.l.b16 %v9649
  %v10462 = vunpack.c.h.b16 %v9649
  %v10463 = vunpack.c.l.b16 %v9650
  %v10464 = vunpack.c.h.b16 %v9650
  %v10465 = vunpack.c.l.b16 %v9651
  %v10466 = vunpack.c.h.b16 %v9651
  %v10467 = vunpack.c.l.b16 %v9652
  %v10468 = vunpack.c.h.b16 %v9652
  %v10469 = vunpack.c.l.b16 %v9653
  %v10470 = vunpack.c.h.b16 %v9653
  %v10471 = vunpack.c.l.b16 %v9654
  %v10472 = vunpack.c.h.b16 %v9654
  %v10473 = vunpack.c.l.b16 %v9655
  %v10474 = vunpack.c.h.b16 %v9655
  %v10475 = vunpack.c.l.b16 %v9656
  %v10476 = vunpack.c.h.b16 %v9656
  %v10477 = vunpack.c.l.b16 %v9657
  %v10478 = vunpack.c.h.b16 %v9657
  %v10479 = vunpack.c.l.b16 %v9658
  %v10480 = vunpack.c.h.b16 %v9658
  %v10481 = vunpack.c.l.b16 %v9659
  %v10482 = vunpack.c.h.b16 %v9659
  %v10483 = vunpack.c.l.b16 %v9660
  %v10484 = vunpack.c.h.b16 %v9660
  %v10485 = vunpack.c.l.b16 %v9661
  %v10486 = vunpack.c.h.b16 %v9661
  %v10487 = vunpack.c.l.b16 %v9662
  %v10488 = vunpack.c.h.b16 %v9662
  %v10489 = vunpack.c.l.b16 %v9663
  %v10490 = vunpack.c.h.b16 %v9663
  %v10491 = vunpack.c.l.b16 %v9664
  %v10492 = vunpack.c.h.b16 %v9664
  %v10493 = vunpack.c.l.b16 %v9665
  %v10494 = vunpack.c.h.b16 %v9665
  %v10495 = vunpack.c.l.b16 %v9666
  %v10496 = vunpack.c.h.b16 %v9666
  %v10497 = vunpack.c.l.b16 %v9667
  %v10498 = vunpack.c.h.b16 %v9667
  %v10499 = vunpack.c.l.b16 %v9668
  %v10500 = vunpack.c.h.b16 %v9668
  %v10501 = vunpack.c.l.b16 %v9669
  %v10502 = vunpack.c.h.b16 %v9669
  %v10503 = vunpack.c.l.b16 %v9670
  %v10504 = vunpack.c.h.b16 %v9670
  %v10505 = vunpack.c.l.b16 %v9671
  %v10506 = vunpack.c.h.b16 %v9671
  %v10507 = vunpack.c.l.b16 %v9672
  %v10508 = vunpack.c.h.b16 %v9672
  %v10509 = vunpack.c.l.b16 %v9673
  %v10510 = vunpack.c.h.b16 %v9673
  %v10511 = vunpack.c.l.b16 %v9674
  %v10512 = vunpack.c.h.b16 %v9674
  %v10513 = vunpack.c.l.b16 %v9675
  %v10514 = vunpack.c.h.b16 %v9675
  %v10515 = vunpack.c.l.b16 %v9676
  %v10516 = vunpack.c.h.b16 %v9676
  %v10517 = vunpack.c.l.b16 %v9677
  %v10518 = vunpack.c.h.b16 %v9677
  %v10519 = vunpack.c.l.b16 %v9678
  %v10520 = vunpack.c.h.b16 %v9678
  %v10521 = vunpack.c.l.b16 %v9679
  %v10522 = vunpack.c.h.b16 %v9679
  %v10523 = vunpack.c.l.b16 %v9680
  %v10524 = vunpack.c.h.b16 %v9680
  %v10525 = vunpack.c.l.b16 %v9681
  %v10526 = vunpack.c.h.b16 %v9681
  %v10527 = vunpack.c.l.b16 %v9682
  %v10528 = vunpack.c.h.b16 %v9682
  %v10529 = vunpack.c.l.b16 %v9683
  %v10530 = vunpack.c.h.b16 %v9683
  %v10531 = vunpack.c.l.b16 %v9684
  %v10532 = vunpack.c.h.b16 %v9684
  %v10533 = vunpack.c.l.b16 %v9685
  %v10534 = vunpack.c.h.b16 %v9685
  %v10535 = vunpack.c.l.b16 %v9686
  %v10536 = vunpack.c.h.b16 %v9686
  %v10537 = vunpack.c.l.b16 %v9687
  %v10538 = vunpack.c.h.b16 %v9687
  %v10539 = vunpack.c.l.b16 %v9688
  %v10540 = vunpack.c.h.b16 %v9688
  %v10541 = vunpack.c.l.b16 %v9689
  %v10542 = vunpack.c.h.b16 %v9689
  %v10543 = vunpack.c.l.b16 %v9690
  %v10544 = vunpack.c.h.b16 %v9690
  %v10545 = vunpack.c.l.b16 %v9691
  %v10546 = vunpack.c.h.b16 %v9691
  %v10547 = vunpack.c.l.b16 %v9692
  %v10548 = vunpack.c.h.b16 %v9692
  %v10549 = vunpack.c.l.b16 %v9693
  %v10550 = vunpack.c.h.b16 %v9693
  %v10551 = vunpack.c.l.b16 %v9694
  %v10552 = vunpack.c.h.b16 %v9694
  %v10553 = vunpack.c.l.b16 %v9695
  %v10554 = vunpack.c.h.b16 %v9695
  %v10555 = vunpack.c.l.b16 %v9696
  %v10556 = vunpack.c.h.b16 %v9696
  %v10557 = vunpack.c.l.b16 %v9697
  %v10558 = vunpack.c.h.b16 %v9697
  %v10559 = vunpack.c.l.b16 %v9698
  %v10560 = vunpack.c.h.b16 %v9698
  %v10561 = vunpack.c.l.b16 %v9699
  %v10562 = vunpack.c.h.b16 %v9699
  %v10563 = vunpack.c.l.b16 %v9700
  %v10564 = vunpack.c.h.b16 %v9700
  %v10565 = vunpack.c.l.b16 %v9701
  %v10566 = vunpack.c.h.b16 %v9701
  %v10567 = vunpack.c.l.b16 %v9702
  %v10568 = vunpack.c.h.b16 %v9702
  %v10569 = vunpack.c.l.b16 %v9703
  %v10570 = vunpack.c.h.b16 %v9703
  %v10571 = vunpack.c.l.b16 %v9704
  %v10572 = vunpack.c.h.b16 %v9704
  %v10573 = vunpack.c.l.b16 %v9705
  %v10574 = vunpack.c.h.b16 %v9705
  %v10575 = vunpack.c.l.b16 %v9706
  %v10576 = vunpack.c.h.b16 %v9706
  %v10577 = vunpack.c.l.b16 %v9707
  %v10578 = vunpack.c.h.b16 %v9707
  %v10579 = vunpack.c.l.b16 %v9708
  %v10580 = vunpack.c.h.b16 %v9708
  %v10581 = vunpack.c.l.b16 %v9709
  %v10582 = vunpack.c.h.b16 %v9709
  %v10583 = vunpack.c.l.b16 %v9710
  %v10584 = vunpack.c.h.b16 %v9710
  %v10585 = vunpack.c.l.b16 %v9711
  %v10586 = vunpack.c.h.b16 %v9711
  %v10587 = vunpack.c.l.b16 %v9712
  %v10588 = vunpack.c.h.b16 %v9712
  %v10589 = vunpack.c.l.b16 %v9713
  %v10590 = vunpack.c.h.b16 %v9713
  %v10591 = vunpack.c.l.b16 %v9714
  %v10592 = vunpack.c.h.b16 %v9714
  %v10593 = vunpack.c.l.b16 %v9715
  %v10594 = vunpack.c.h.b16 %v9715
  %v10595 = vunpack.c.l.b16 %v9716
  %v10596 = vunpack.c.h.b16 %v9716
  %v10597 = vunpack.c.l.b16 %v9717
  %v10598 = vunpack.c.h.b16 %v9717
  %v10599 = vpack.c.b16 %v10091, %v10087
  %v10600 = vpack.c.b16 %v10092, %v10088
  %v10601 = vpack.c.b16 %v10093, %v10089
  %v10602 = vpack.c.b16 %v10094, %v10090
  %v10603 = vpack.c.b16 %v10099, %v10095
  %v10604 = vpack.c.b16 %v10100, %v10096
  %v10605 = vpack.c.b16 %v10101, %v10097
  %v10606 = vpack.c.b16 %v10102, %v10098
  %v10607 = vpack.c.b16 %v10107, %v10103
  %v10608 = vpack.c.b16 %v10108, %v10104
  %v10609 = vpack.c.b16 %v10109, %v10105
  %v10610 = vpack.c.b16 %v10110, %v10106
  %v10611 = vpack.c.b16 %v10115, %v10111
  %v10612 = vpack.c.b16 %v10116, %v10112
  %v10613 = vpack.c.b16 %v10117, %v10113
  %v10614 = vpack.c.b16 %v10118, %v10114
  %v10615 = vpack.c.b16 %v10123, %v10119
  %v10616 = vpack.c.b16 %v10124, %v10120
  %v10617 = vpack.c.b16 %v10125, %v10121
  %v10618 = vpack.c.b16 %v10126, %v10122
  %v10619 = vpack.c.b16 %v10131, %v10127
  %v10620 = vpack.c.b16 %v10132, %v10128
  %v10621 = vpack.c.b16 %v10133, %v10129
  %v10622 = vpack.c.b16 %v10134, %v10130
  %v10623 = vpack.c.b16 %v10139, %v10135
  %v10624 = vpack.c.b16 %v10140, %v10136
  %v10625 = vpack.c.b16 %v10141, %v10137
  %v10626 = vpack.c.b16 %v10142, %v10138
  %v10627 = vpack.c.b16 %v10147, %v10143
  %v10628 = vpack.c.b16 %v10148, %v10144
  %v10629 = vpack.c.b16 %v10149, %v10145
  %v10630 = vpack.c.b16 %v10150, %v10146
  %v10631 = vpack.c.b16 %v10155, %v10151
  %v10632 = vpack.c.b16 %v10156, %v10152
  %v10633 = vpack.c.b16 %v10157, %v10153
  %v10634 = vpack.c.b16 %v10158, %v10154
  %v10635 = vpack.c.b16 %v10163, %v10159
  %v10636 = vpack.c.b16 %v10164, %v10160
  %v10637 = vpack.c.b16 %v10165, %v10161
  %v10638 = vpack.c.b16 %v10166, %v10162
  %v10639 = vpack.c.b16 %v10171, %v10167
  %v10640 = vpack.c.b16 %v10172, %v10168
  %v10641 = vpack.c.b16 %v10173, %v10169
  %v10642 = vpack.c.b16 %v10174, %v10170
  %v10643 = vpack.c.b16 %v10179, %v10175
  %v10644 = vpack.c.b16 %v10180, %v10176
  %v10645 = vpack.c.b16 %v10181, %v10177
  %v10646 = vpack.c.b16 %v10182, %v10178
  %v10647 = vpack.c.b16 %v10187, %v10183
  %v10648 = vpack.c.b16 %v10188, %v10184
  %v10649 = vpack.c.b16 %v10189, %v10185
  %v10650 = vpack.c.b16 %v10190, %v10186
  %v10651 = vpack.c.b16 %v10195, %v10191
  %v10652 = vpack.c.b16 %v10196, %v10192
  %v10653 = vpack.c.b16 %v10197, %v10193
  %v10654 = vpack.c.b16 %v10198, %v10194
  %v10655 = vpack.c.b16 %v10203, %v10199
  %v10656 = vpack.c.b16 %v10204, %v10200
  %v10657 = vpack.c.b16 %v10205, %v10201
  %v10658 = vpack.c.b16 %v10206, %v10202
  %v10659 = vpack.c.b16 %v10211, %v10207
  %v10660 = vpack.c.b16 %v10212, %v10208
  %v10661 = vpack.c.b16 %v10213, %v10209
  %v10662 = vpack.c.b16 %v10214, %v10210
  %v10663 = vpack.c.b16 %v10219, %v10215
  %v10664 = vpack.c.b16 %v10220, %v10216
  %v10665 = vpack.c.b16 %v10221, %v10217
  %v10666 = vpack.c.b16 %v10222, %v10218
  %v10667 = vpack.c.b16 %v10227, %v10223
  %v10668 = vpack.c.b16 %v10228, %v10224
  %v10669 = vpack.c.b16 %v10229, %v10225
  %v10670 = vpack.c.b16 %v10230, %v10226
  %v10671 = vpack.c.b16 %v10235, %v10231
  %v10672 = vpack.c.b16 %v10236, %v10232
  %v10673 = vpack.c.b16 %v10237, %v10233
  %v10674 = vpack.c.b16 %v10238, %v10234
  %v10675 = vpack.c.b16 %v10243, %v10239
  %v10676 = vpack.c.b16 %v10244, %v10240
  %v10677 = vpack.c.b16 %v10245, %v10241
  %v10678 = vpack.c.b16 %v10246, %v10242
  %v10679 = vpack.c.b16 %v10251, %v10247
  %v10680 = vpack.c.b16 %v10252, %v10248
  %v10681 = vpack.c.b16 %v10253, %v10249
  %v10682 = vpack.c.b16 %v10254, %v10250
  %v10683 = vpack.c.b16 %v10259, %v10255
  %v10684 = vpack.c.b16 %v10260, %v10256
  %v10685 = vpack.c.b16 %v10261, %v10257
  %v10686 = vpack.c.b16 %v10262, %v10258
  %v10687 = vpack.c.b16 %v10267, %v10263
  %v10688 = vpack.c.b16 %v10268, %v10264
  %v10689 = vpack.c.b16 %v10269, %v10265
  %v10690 = vpack.c.b16 %v10270, %v10266
  %v10691 = vpack.c.b16 %v10275, %v10271
  %v10692 = vpack.c.b16 %v10276, %v10272
  %v10693 = vpack.c.b16 %v10277, %v10273
  %v10694 = vpack.c.b16 %v10278, %v10274
  %v10695 = vpack.c.b16 %v10283, %v10279
  %v10696 = vpack.c.b16 %v10284, %v10280
  %v10697 = vpack.c.b16 %v10285, %v10281
  %v10698 = vpack.c.b16 %v10286, %v10282
  %v10699 = vpack.c.b16 %v10291, %v10287
  %v10700 = vpack.c.b16 %v10292, %v10288
  %v10701 = vpack.c.b16 %v10293, %v10289
  %v10702 = vpack.c.b16 %v10294, %v10290
  %v10703 = vpack.c.b16 %v10299, %v10295
  %v10704 = vpack.c.b16 %v10300, %v10296
  %v10705 = vpack.c.b16 %v10301, %v10297
  %v10706 = vpack.c.b16 %v10302, %v10298
  %v10707 = vpack.c.b16 %v10307, %v10303
  %v10708 = vpack.c.b16 %v10308, %v10304
  %v10709 = vpack.c.b16 %v10309, %v10305
  %v10710 = vpack.c.b16 %v10310, %v10306
  %v10711 = vpack.c.b16 %v10315, %v10311
  %v10712 = vpack.c.b16 %v10316, %v10312
  %v10713 = vpack.c.b16 %v10317, %v10313
  %v10714 = vpack.c.b16 %v10318, %v10314
  %v10715 = vpack.c.b16 %v10323, %v10319
  %v10716 = vpack.c.b16 %v10324, %v10320
  %v10717 = vpack.c.b16 %v10325, %v10321
  %v10718 = vpack.c.b16 %v10326, %v10322
  %v10719 = vpack.c.b16 %v10331, %v10327
  %v10720 = vpack.c.b16 %v10332, %v10328
  %v10721 = vpack.c.b16 %v10333, %v10329
  %v10722 = vpack.c.b16 %v10334, %v10330
  %v10723 = vpack.c.b16 %v10339, %v10335
  %v10724 = vpack.c.b16 %v10340, %v10336
  %v10725 = vpack.c.b16 %v10341, %v10337
  %v10726 = vpack.c.b16 %v10342, %v10338
  %v10727 = vpack.c.b16 %v10347, %v10343
  %v10728 = vpack.c.b16 %v10348, %v10344
  %v10729 = vpack.c.b16 %v10349, %v10345
  %v10730 = vpack.c.b16 %v10350, %v10346
  %v10731 = vpack.c.b16 %v10355, %v10351
  %v10732 = vpack.c.b16 %v10356, %v10352
  %v10733 = vpack.c.b16 %v10357, %v10353
  %v10734 = vpack.c.b16 %v10358, %v10354
  %v10735 = vpack.c.b16 %v10363, %v10359
  %v10736 = vpack.c.b16 %v10364, %v10360
  %v10737 = vpack.c.b16 %v10365, %v10361
  %v10738 = vpack.c.b16 %v10366, %v10362
  %v10739 = vpack.c.b16 %v10371, %v10367
  %v10740 = vpack.c.b16 %v10372, %v10368
  %v10741 = vpack.c.b16 %v10373, %v10369
  %v10742 = vpack.c.b16 %v10374, %v10370
  %v10743 = vpack.c.b16 %v10379, %v10375
  %v10744 = vpack.c.b16 %v10380, %v10376
  %v10745 = vpack.c.b16 %v10381, %v10377
  %v10746 = vpack.c.b16 %v10382, %v10378
  %v10747 = vpack.c.b16 %v10387, %v10383
  %v10748 = vpack.c.b16 %v10388, %v10384
  %v10749 = vpack.c.b16 %v10389, %v10385
  %v10750 = vpack.c.b16 %v10390, %v10386
  %v10751 = vpack.c.b16 %v10395, %v10391
  %v10752 = vpack.c.b16 %v10396, %v10392
  %v10753 = vpack.c.b16 %v10397, %v10393
  %v10754 = vpack.c.b16 %v10398, %v10394
  %v10755 = vpack.c.b16 %v10403, %v10399
  %v10756 = vpack.c.b16 %v10404, %v10400
  %v10757 = vpack.c.b16 %v10405, %v10401
  %v10758 = vpack.c.b16 %v10406, %v10402
  %v10759 = vpack.c.b16 %v10411, %v10407
  %v10760 = vpack.c.b16 %v10412, %v10408
  %v10761 = vpack.c.b16 %v10413, %v10409
  %v10762 = vpack.c.b16 %v10414, %v10410
  %v10763 = vpack.c.b16 %v10419, %v10415
  %v10764 = vpack.c.b16 %v10420, %v10416
  %v10765 = vpack.c.b16 %v10421, %v10417
  %v10766 = vpack.c.b16 %v10422, %v10418
  %v10767 = vpack.c.b16 %v10427, %v10423
  %v10768 = vpack.c.b16 %v10428, %v10424
  %v10769 = vpack.c.b16 %v10429, %v10425
  %v10770 = vpack.c.b16 %v10430, %v10426
  %v10771 = vpack.c.b16 %v10435, %v10431
  %v10772 = vpack.c.b16 %v10436, %v10432
  %v10773 = vpack.c.b16 %v10437, %v10433
  %v10774 = vpack.c.b16 %v10438, %v10434
  %v10775 = vpack.c.b16 %v10443, %v10439
  %v10776 = vpack.c.b16 %v10444, %v10440
  %v10777 = vpack.c.b16 %v10445, %v10441
  %v10778 = vpack.c.b16 %v10446, %v10442
  %v10779 = vpack.c.b16 %v10451, %v10447
  %v10780 = vpack.c.b16 %v10452, %v10448
  %v10781 = vpack.c.b16 %v10453, %v10449
  %v10782 = vpack.c.b16 %v10454, %v10450
  %v10783 = vpack.c.b16 %v10459, %v10455
  %v10784 = vpack.c.b16 %v10460, %v10456
  %v10785 = vpack.c.b16 %v10461, %v10457
  %v10786 = vpack.c.b16 %v10462, %v10458
  %v10787 = vpack.c.b16 %v10467, %v10463
  %v10788 = vpack.c.b16 %v10468, %v10464
  %v10789 = vpack.c.b16 %v10469, %v10465
  %v10790 = vpack.c.b16 %v10470, %v10466
  %v10791 = vpack.c.b16 %v10475, %v10471
  %v10792 = vpack.c.b16 %v10476, %v10472
  %v10793 = vpack.c.b16 %v10477, %v10473
  %v10794 = vpack.c.b16 %v10478, %v10474
  %v10795 = vpack.c.b16 %v10483, %v10479
  %v10796 = vpack.c.b16 %v10484, %v10480
  %v10797 = vpack.c.b16 %v10485, %v10481
  %v10798 = vpack.c.b16 %v10486, %v10482
  %v10799 = vpack.c.b16 %v10491, %v10487
  %v10800 = vpack.c.b16 %v10492, %v10488
  %v10801 = vpack.c.b16 %v10493, %v10489
  %v10802 = vpack.c.b16 %v10494, %v10490
  %v10803 = vpack.c.b16 %v10499, %v10495
  %v10804 = vpack.c.b16 %v10500, %v10496
  %v10805 = vpack.c.b16 %v10501, %v10497
  %v10806 = vpack.c.b16 %v10502, %v10498
  %v10807 = vpack.c.b16 %v10507, %v10503
  %v10808 = vpack.c.b16 %v10508, %v10504
  %v10809 = vpack.c.b16 %v10509, %v10505
  %v10810 = vpack.c.b16 %v10510, %v10506
  %v10811 = vpack.c.b16 %v10515, %v10511
  %v10812 = vpack.c.b16 %v10516, %v10512
  %v10813 = vpack.c.b16 %v10517, %v10513
  %v10814 = vpack.c.b16 %v10518, %v10514
  %v10815 = vpack.c.b16 %v10523, %v10519
  %v10816 = vpack.c.b16 %v10524, %v10520
  %v10817 = vpack.c.b16 %v10525, %v10521
  %v10818 = vpack.c.b16 %v10526, %v10522
  %v10819 = vpack.c.b16 %v10531, %v10527
  %v10820 = vpack.c.b16 %v10532, %v10528
  %v10821 = vpack.c.b16 %v10533, %v10529
  %v10822 = vpack.c.b16 %v10534, %v10530
  %v10823 = vpack.c.b16 %v10539, %v10535
  %v10824 = vpack.c.b16 %v10540, %v10536
  %v10825 = vpack.c.b16 %v10541, %v10537
  %v10826 = vpack.c.b16 %v10542, %v10538
  %v10827 = vpack.c.b16 %v10547, %v10543
  %v10828 = vpack.c.b16 %v10548, %v10544
  %v10829 = vpack.c.b16 %v10549, %v10545
  %v10830 = vpack.c.b16 %v10550, %v10546
  %v10831 = vpack.c.b16 %v10555, %v10551
  %v10832 = vpack.c.b16 %v10556, %v10552
  %v10833 = vpack.c.b16 %v10557, %v10553
  %v10834 = vpack.c.b16 %v10558, %v10554
  %v10835 = vpack.c.b16 %v10563, %v10559
  %v10836 = vpack.c.b16 %v10564, %v10560
  %v10837 = vpack.c.b16 %v10565, %v10561
  %v10838 = vpack.c.b16 %v10566, %v10562
  %v10839 = vpack.c.b16 %v10571, %v10567
  %v10840 = vpack.c.b16 %v10572, %v10568
  %v10841 = vpack.c.b16 %v10573, %v10569
  %v10842 = vpack.c.b16 %v10574, %v10570
  %v10843 = vpack.c.b16 %v10579, %v10575
  %v10844 = vpack.c.b16 %v10580, %v10576
  %v10845 = vpack.c.b16 %v10581, %v10577
  %v10846 = vpack.c.b16 %v10582, %v10578
  %v10847 = vpack.c.b16 %v10587, %v10583
  %v10848 = vpack.c.b16 %v10588, %v10584
  %v10849 = vpack.c.b16 %v10589, %v10585
  %v10850 = vpack.c.b16 %v10590, %v10586
  %v10851 = vpack.c.b16 %v10595, %v10591
  %v10852 = vpack.c.b16 %v10596, %v10592
  %v10853 = vpack.c.b16 %v10597, %v10593
  %v10854 = vpack.c.b16 %v10598, %v10594
  %11111 = vmatprep.subr.bf16.mxu0 %v10600
  %11112 = vmatpush1.bf16.msra.mxu0 %v10599
  %11113 = vmatprep.subr.bf16.mxu0 %v10604
  %11114 = vmatpush1.bf16.msra.mxu0 %v10603
  %11115 = vmatprep.subr.bf16.mxu0 %v10608
  %11116 = vmatpush1.bf16.msra.mxu0 %v10607
  %11117 = vmatprep.subr.bf16.mxu0 %v10612
  %11118 = vmatpush1.bf16.msra.mxu0 %v10611
  %11119 = vmatprep.subr.bf16.mxu0 %v10616
  %11120 = vmatpush1.bf16.msra.mxu0 %v10615
  %11121 = vmatprep.subr.bf16.mxu0 %v10620
  %11122 = vmatpush1.bf16.msra.mxu0 %v10619
  %11123 = vmatprep.subr.bf16.mxu0 %v10624
  %11124 = vmatpush1.bf16.msra.mxu0 %v10623
  %11125 = vmatprep.subr.bf16.mxu0 %v10628
  %11126 = vmatpush1.bf16.msra.mxu0 %v10627
  %11127 = vmatprep.subr.bf16.mxu0 %v10632
  %11128 = vmatpush1.bf16.msra.mxu0 %v10631
  %11129 = vmatprep.subr.bf16.mxu0 %v10636
  %11130 = vmatpush1.bf16.msra.mxu0 %v10635
  %11131 = vmatprep.subr.bf16.mxu0 %v10640
  %11132 = vmatpush1.bf16.msra.mxu0 %v10639
  %11133 = vmatprep.subr.bf16.mxu0 %v10644
  %11134 = vmatpush1.bf16.msra.mxu0 %v10643
  %11135 = vmatprep.subr.bf16.mxu0 %v10648
  %11136 = vmatpush1.bf16.msra.mxu0 %v10647
  %11137 = vmatprep.subr.bf16.mxu0 %v10652
  %11138 = vmatpush1.bf16.msra.mxu0 %v10651
  %11139 = vmatprep.subr.bf16.mxu0 %v10656
  %11140 = vmatpush1.bf16.msra.mxu0 %v10655
  %11141 = vmatprep.subr.bf16.mxu0 %v10660
  %11142 = vmatpush1.bf16.msra.mxu0 %v10659
  %11143 = vmatprep.mubr.bf16.mxu0 %v9436
  %11144 = vmatmul.mubr.bf16.gmra.mrb[0].mxu0 %v9432
  %v11145 = vpop.f32.mrb[0].mxu0
  %v11146 = vadd.f32 %v9784, %v11145
  %v11147 = vpop.f32.mrb[0].mxu0
  %v11148 = vadd.f32 %v9786, %v11147
  %v11149 = vpop.f32.mrb[0].mxu0
  %v11150 = vpop.f32.mrb[0].mxu0
  %11151 = vdwg.mxu0
  %11152 = vmatprep.subr.bf16.mxu0 %v10664
  %11153 = vmatpush1.bf16.msra.mxu0 %v10663
  %11154 = vmatprep.subr.bf16.mxu0 %v10668
  %11155 = vmatpush1.bf16.msra.mxu0 %v10667
  %11156 = vmatprep.subr.bf16.mxu0 %v10672
  %11157 = vmatpush1.bf16.msra.mxu0 %v10671
  %11158 = vmatprep.subr.bf16.mxu0 %v10676
  %11159 = vmatpush1.bf16.msra.mxu0 %v10675
  %11160 = vmatprep.subr.bf16.mxu0 %v10680
  %11161 = vmatpush1.bf16.msra.mxu0 %v10679
  %11162 = vmatprep.subr.bf16.mxu0 %v10684
  %11163 = vmatpush1.bf16.msra.mxu0 %v10683
  %11164 = vmatprep.subr.bf16.mxu0 %v10688
  %11165 = vmatpush1.bf16.msra.mxu0 %v10687
  %11166 = vmatprep.subr.bf16.mxu0 %v10692
  %11167 = vmatpush1.bf16.msra.mxu0 %v10691
  %11168 = vmatprep.subr.bf16.mxu0 %v10696
  %11169 = vmatpush1.bf16.msra.mxu0 %v10695
  %11170 = vmatprep.subr.bf16.mxu0 %v10700
  %11171 = vmatpush1.bf16.msra.mxu0 %v10699
  %11172 = vmatprep.subr.bf16.mxu0 %v10704
  %11173 = vmatpush1.bf16.msra.mxu0 %v10703
  %11174 = vmatprep.subr.bf16.mxu0 %v10708
  %11175 = vmatpush1.bf16.msra.mxu0 %v10707
  %11176 = vmatprep.subr.bf16.mxu0 %v10712
  %11177 = vmatpush1.bf16.msra.mxu0 %v10711
  %11178 = vmatprep.subr.bf16.mxu0 %v10716
  %11179 = vmatpush1.bf16.msra.mxu0 %v10715
  %11180 = vmatprep.subr.bf16.mxu0 %v10720
  %11181 = vmatpush1.bf16.msra.mxu0 %v10719
  %11182 = vmatprep.subr.bf16.mxu0 %v10724
  %11183 = vmatpush1.bf16.msra.mxu0 %v10723
  %11184 = vmatprep.mubr.bf16.mxu0 %v9444
  %11185 = vmatmul.mubr.bf16.gmra.mrb[0].mxu0 %v9440
  %v11186 = vpop.f32.mrb[0].mxu0
  %v11187 = vadd.f32 %v11146, %v11186
  %v11188 = vpop.f32.mrb[0].mxu0
  %v11189 = vadd.f32 %v11148, %v11188
  %v11190 = vpop.f32.mrb[0].mxu0
  %v11191 = vpop.f32.mrb[0].mxu0
  %11192 = vdwg.mxu0
  %11193 = vmatprep.subr.bf16.mxu0 %v10728
  %11194 = vmatpush1.bf16.msra.mxu0 %v10727
  %11195 = vmatprep.subr.bf16.mxu0 %v10732
  %11196 = vmatpush1.bf16.msra.mxu0 %v10731
  %11197 = vmatprep.subr.bf16.mxu0 %v10736
  %11198 = vmatpush1.bf16.msra.mxu0 %v10735
  %11199 = vmatprep.subr.bf16.mxu0 %v10740
  %11200 = vmatpush1.bf16.msra.mxu0 %v10739
  %11201 = vmatprep.subr.bf16.mxu0 %v10744
  %11202 = vmatpush1.bf16.msra.mxu0 %v10743
  %11203 = vmatprep.subr.bf16.mxu0 %v10748
  %11204 = vmatpush1.bf16.msra.mxu0 %v10747
  %11205 = vmatprep.subr.bf16.mxu0 %v10752
  %11206 = vmatpush1.bf16.msra.mxu0 %v10751
  %11207 = vmatprep.subr.bf16.mxu0 %v10756
  %11208 = vmatpush1.bf16.msra.mxu0 %v10755
  %11209 = vmatprep.subr.bf16.mxu0 %v10760
  %11210 = vmatpush1.bf16.msra.mxu0 %v10759
  %11211 = vmatprep.subr.bf16.mxu0 %v10764
  %11212 = vmatpush1.bf16.msra.mxu0 %v10763
  %11213 = vmatprep.subr.bf16.mxu0 %v10768
  %11214 = vmatpush1.bf16.msra.mxu0 %v10767
  %11215 = vmatprep.subr.bf16.mxu0 %v10772
  %11216 = vmatpush1.bf16.msra.mxu0 %v10771
  %11217 = vmatprep.subr.bf16.mxu0 %v10776
  %11218 = vmatpush1.bf16.msra.mxu0 %v10775
  %11219 = vmatprep.subr.bf16.mxu0 %v10780
  %11220 = vmatpush1.bf16.msra.mxu0 %v10779
  %11221 = vmatprep.subr.bf16.mxu0 %v10784
  %11222 = vmatpush1.bf16.msra.mxu0 %v10783
  %11223 = vmatprep.subr.bf16.mxu0 %v10788
  %11224 = vmatpush1.bf16.msra.mxu0 %v10787
  %11225 = vmatprep.mubr.bf16.mxu0 %v9452
  %11226 = vmatmul.mubr.bf16.gmra.mrb[0].mxu0 %v9448
  %v11227 = vpop.f32.mrb[0].mxu0
  %v11228 = vadd.f32 %v11187, %v11227
  %v11229 = vpop.f32.mrb[0].mxu0
  %v11230 = vadd.f32 %v11189, %v11229
  %v11231 = vpop.f32.mrb[0].mxu0
  %v11232 = vpop.f32.mrb[0].mxu0
  %11233 = vdwg.mxu0
  %11234 = vmatprep.subr.bf16.mxu0 %v10792
  %11235 = vmatpush1.bf16.msra.mxu0 %v10791
  %11236 = vmatprep.subr.bf16.mxu0 %v10796
  %11237 = vmatpush1.bf16.msra.mxu0 %v10795
  %11238 = vmatprep.subr.bf16.mxu0 %v10800
  %11239 = vmatpush1.bf16.msra.mxu0 %v10799
  %11240 = vmatprep.subr.bf16.mxu0 %v10804
  %11241 = vmatpush1.bf16.msra.mxu0 %v10803
  %11242 = vmatprep.subr.bf16.mxu0 %v10808
  %11243 = vmatpush1.bf16.msra.mxu0 %v10807
  %11244 = vmatprep.subr.bf16.mxu0 %v10812
  %11245 = vmatpush1.bf16.msra.mxu0 %v10811
  %11246 = vmatprep.subr.bf16.mxu0 %v10816
  %11247 = vmatpush1.bf16.msra.mxu0 %v10815
  %11248 = vmatprep.subr.bf16.mxu0 %v10820
  %11249 = vmatpush1.bf16.msra.mxu0 %v10819
  %11250 = vmatprep.subr.bf16.mxu0 %v10824
  %11251 = vmatpush1.bf16.msra.mxu0 %v10823
  %11252 = vmatprep.subr.bf16.mxu0 %v10828
  %11253 = vmatpush1.bf16.msra.mxu0 %v10827
  %11254 = vmatprep.subr.bf16.mxu0 %v10832
  %11255 = vmatpush1.bf16.msra.mxu0 %v10831
  %11256 = vmatprep.subr.bf16.mxu0 %v10836
  %11257 = vmatpush1.bf16.msra.mxu0 %v10835
  %11258 = vmatprep.subr.bf16.mxu0 %v10840
  %11259 = vmatpush1.bf16.msra.mxu0 %v10839
  %11260 = vmatprep.subr.bf16.mxu0 %v10844
  %11261 = vmatpush1.bf16.msra.mxu0 %v10843
  %11262 = vmatprep.subr.bf16.mxu0 %v10848
  %11263 = vmatpush1.bf16.msra.mxu0 %v10847
  %11264 = vmatprep.subr.bf16.mxu0 %v10852
  %11265 = vmatpush1.bf16.msra.mxu0 %v10851
  %11266 = vmatprep.mubr.bf16.mxu0 %v9460
  %11267 = vmatmul.mubr.bf16.gmra.mrb[0].mxu0 %v9456
  %v11268 = vpop.f32.mrb[0].mxu0
  %v11269 = vadd.f32 %v11228, %v11268
  %v11270 = vpop.f32.mrb[0].mxu0
  %v11271 = vadd.f32 %v11230, %v11270
  %v11272 = vpop.f32.mrb[0].mxu0
  %v11273 = vpop.f32.mrb[0].mxu0
  %11274 = vdwg.mxu0
  %11275 = vmatprep.subr.bf16.mxu0 %v10602
  %11276 = vmatpush1.bf16.msra.mxu0 %v10601
  %11277 = vmatprep.subr.bf16.mxu0 %v10606
  %11278 = vmatpush1.bf16.msra.mxu0 %v10605
  %11279 = vmatprep.subr.bf16.mxu0 %v10610
  %11280 = vmatpush1.bf16.msra.mxu0 %v10609
  %11281 = vmatprep.subr.bf16.mxu0 %v10614
  %11282 = vmatpush1.bf16.msra.mxu0 %v10613
  %11283 = vmatprep.subr.bf16.mxu0 %v10618
  %11284 = vmatpush1.bf16.msra.mxu0 %v10617
  %11285 = vmatprep.subr.bf16.mxu0 %v10622
  %11286 = vmatpush1.bf16.msra.mxu0 %v10621
  %11287 = vmatprep.subr.bf16.mxu0 %v10626
  %11288 = vmatpush1.bf16.msra.mxu0 %v10625
  %11289 = vmatprep.subr.bf16.mxu0 %v10630
  %11290 = vmatpush1.bf16.msra.mxu0 %v10629
  %11291 = vmatprep.subr.bf16.mxu0 %v10634
  %11292 = vmatpush1.bf16.msra.mxu0 %v10633
  %11293 = vmatprep.subr.bf16.mxu0 %v10638
  %11294 = vmatpush1.bf16.msra.mxu0 %v10637
  %11295 = vmatprep.subr.bf16.mxu0 %v10642
  %11296 = vmatpush1.bf16.msra.mxu0 %v10641
  %11297 = vmatprep.subr.bf16.mxu0 %v10646
  %11298 = vmatpush1.bf16.msra.mxu0 %v10645
  %11299 = vmatprep.subr.bf16.mxu0 %v10650
  %11300 = vmatpush1.bf16.msra.mxu0 %v10649
  %11301 = vmatprep.subr.bf16.mxu0 %v10654
  %11302 = vmatpush1.bf16.msra.mxu0 %v10653
  %11303 = vmatprep.subr.bf16.mxu0 %v10658
  %11304 = vmatpush1.bf16.msra.mxu0 %v10657
  %11305 = vmatprep.subr.bf16.mxu0 %v10662
  %11306 = vmatpush1.bf16.msra.mxu0 %v10661
  %11307 = vmatprep.mubr.bf16.mxu0 %v9436
  %11308 = vmatmul.mubr.bf16.gmra.mrb[0].mxu0 %v9432
  %v11309 = vpop.f32.mrb[0].mxu0
  %v11310 = vadd.f32 %v9825, %v11309
  %v11311 = vpop.f32.mrb[0].mxu0
  %v11312 = vadd.f32 %v9827, %v11311
  %v11313 = vpop.f32.mrb[0].mxu0
  %v11314 = vpop.f32.mrb[0].mxu0
  %11315 = vdwg.mxu0
  %11316 = vmatprep.subr.bf16.mxu0 %v10666
  %11317 = vmatpush1.bf16.msra.mxu0 %v10665
  %11318 = vmatprep.subr.bf16.mxu0 %v10670
  %11319 = vmatpush1.bf16.msra.mxu0 %v10669
  %11320 = vmatprep.subr.bf16.mxu0 %v10674
  %11321 = vmatpush1.bf16.msra.mxu0 %v10673
  %11322 = vmatprep.subr.bf16.mxu0 %v10678
  %11323 = vmatpush1.bf16.msra.mxu0 %v10677
  %11324 = vmatprep.subr.bf16.mxu0 %v10682
  %11325 = vmatpush1.bf16.msra.mxu0 %v10681
  %11326 = vmatprep.subr.bf16.mxu0 %v10686
  %11327 = vmatpush1.bf16.msra.mxu0 %v10685
  %11328 = vmatprep.subr.bf16.mxu0 %v10690
  %11329 = vmatpush1.bf16.msra.mxu0 %v10689
  %11330 = vmatprep.subr.bf16.mxu0 %v10694
  %11331 = vmatpush1.bf16.msra.mxu0 %v10693
  %11332 = vmatprep.subr.bf16.mxu0 %v10698
  %11333 = vmatpush1.bf16.msra.mxu0 %v10697
  %11334 = vmatprep.subr.bf16.mxu0 %v10702
  %11335 = vmatpush1.bf16.msra.mxu0 %v10701
  %11336 = vmatprep.subr.bf16.mxu0 %v10706
  %11337 = vmatpush1.bf16.msra.mxu0 %v10705
  %11338 = vmatprep.subr.bf16.mxu0 %v10710
  %11339 = vmatpush1.bf16.msra.mxu0 %v10709
  %11340 = vmatprep.subr.bf16.mxu0 %v10714
  %11341 = vmatpush1.bf16.msra.mxu0 %v10713
  %11342 = vmatprep.subr.bf16.mxu0 %v10718
  %11343 = vmatpush1.bf16.msra.mxu0 %v10717
  %11344 = vmatprep.subr.bf16.mxu0 %v10722
  %11345 = vmatpush1.bf16.msra.mxu0 %v10721
  %11346 = vmatprep.subr.bf16.mxu0 %v10726
  %11347 = vmatpush1.bf16.msra.mxu0 %v10725
  %11348 = vmatprep.mubr.bf16.mxu0 %v9444
  %11349 = vmatmul.mubr.bf16.gmra.mrb[0].mxu0 %v9440
  %v11350 = vpop.f32.mrb[0].mxu0
  %v11351 = vadd.f32 %v11310, %v11350
  %v11352 = vpop.f32.mrb[0].mxu0
  %v11353 = vadd.f32 %v11312, %v11352
  %v11354 = vpop.f32.mrb[0].mxu0
  %v11355 = vpop.f32.mrb[0].mxu0
  %11356 = vdwg.mxu0
  %11357 = vmatprep.subr.bf16.mxu0 %v10730
  %11358 = vmatpush1.bf16.msra.mxu0 %v10729
  %11359 = vmatprep.subr.bf16.mxu0 %v10734
  %11360 = vmatpush1.bf16.msra.mxu0 %v10733
  %11361 = vmatprep.subr.bf16.mxu0 %v10738
  %11362 = vmatpush1.bf16.msra.mxu0 %v10737
  %11363 = vmatprep.subr.bf16.mxu0 %v10742
  %11364 = vmatpush1.bf16.msra.mxu0 %v10741
  %11365 = vmatprep.subr.bf16.mxu0 %v10746
  %11366 = vmatpush1.bf16.msra.mxu0 %v10745
  %11367 = vmatprep.subr.bf16.mxu0 %v10750
  %11368 = vmatpush1.bf16.msra.mxu0 %v10749
  %11369 = vmatprep.subr.bf16.mxu0 %v10754
  %11370 = vmatpush1.bf16.msra.mxu0 %v10753
  %11371 = vmatprep.subr.bf16.mxu0 %v10758
  %11372 = vmatpush1.bf16.msra.mxu0 %v10757
  %11373 = vmatprep.subr.bf16.mxu0 %v10762
  %11374 = vmatpush1.bf16.msra.mxu0 %v10761
  %11375 = vmatprep.subr.bf16.mxu0 %v10766
  %11376 = vmatpush1.bf16.msra.mxu0 %v10765
  %11377 = vmatprep.subr.bf16.mxu0 %v10770
  %11378 = vmatpush1.bf16.msra.mxu0 %v10769
  %11379 = vmatprep.subr.bf16.mxu0 %v10774
  %11380 = vmatpush1.bf16.msra.mxu0 %v10773
  %11381 = vmatprep.subr.bf16.mxu0 %v10778
  %11382 = vmatpush1.bf16.msra.mxu0 %v10777
  %11383 = vmatprep.subr.bf16.mxu0 %v10782
  %11384 = vmatpush1.bf16.msra.mxu0 %v10781
  %11385 = vmatprep.subr.bf16.mxu0 %v10786
  %11386 = vmatpush1.bf16.msra.mxu0 %v10785
  %11387 = vmatprep.subr.bf16.mxu0 %v10790
  %11388 = vmatpush1.bf16.msra.mxu0 %v10789
  %11389 = vmatprep.mubr.bf16.mxu0 %v9452
  %11390 = vmatmul.mubr.bf16.gmra.mrb[0].mxu0 %v9448
  %v11391 = vpop.f32.mrb[0].mxu0
  %v11392 = vadd.f32 %v11351, %v11391
  %v11393 = vpop.f32.mrb[0].mxu0
  %v11394 = vadd.f32 %v11353, %v11393
  %v11395 = vpop.f32.mrb[0].mxu0
  %v11396 = vpop.f32.mrb[0].mxu0
  %11397 = vdwg.mxu0
  %11398 = vmatprep.subr.bf16.mxu0 %v10794
  %11399 = vmatpush1.bf16.msra.mxu0 %v10793
  %11400 = vmatprep.subr.bf16.mxu0 %v10798
  %11401 = vmatpush1.bf16.msra.mxu0 %v10797
  %11402 = vmatprep.subr.bf16.mxu0 %v10802
  %11403 = vmatpush1.bf16.msra.mxu0 %v10801
  %11404 = vmatprep.subr.bf16.mxu0 %v10806
  %11405 = vmatpush1.bf16.msra.mxu0 %v10805
  %11406 = vmatprep.subr.bf16.mxu0 %v10810
  %11407 = vmatpush1.bf16.msra.mxu0 %v10809
  %11408 = vmatprep.subr.bf16.mxu0 %v10814
  %11409 = vmatpush1.bf16.msra.mxu0 %v10813
  %11410 = vmatprep.subr.bf16.mxu0 %v10818
  %11411 = vmatpush1.bf16.msra.mxu0 %v10817
  %11412 = vmatprep.subr.bf16.mxu0 %v10822
  %11413 = vmatpush1.bf16.msra.mxu0 %v10821
  %11414 = vmatprep.subr.bf16.mxu0 %v10826
  %11415 = vmatpush1.bf16.msra.mxu0 %v10825
  %11416 = vmatprep.subr.bf16.mxu0 %v10830
  %11417 = vmatpush1.bf16.msra.mxu0 %v10829
  %11418 = vmatprep.subr.bf16.mxu0 %v10834
  %11419 = vmatpush1.bf16.msra.mxu0 %v10833
  %11420 = vmatprep.subr.bf16.mxu0 %v10838
  %11421 = vmatpush1.bf16.msra.mxu0 %v10837
  %11422 = vmatprep.subr.bf16.mxu0 %v10842
  %11423 = vmatpush1.bf16.msra.mxu0 %v10841
  %11424 = vmatprep.subr.bf16.mxu0 %v10846
  %11425 = vmatpush1.bf16.msra.mxu0 %v10845
  %11426 = vmatprep.subr.bf16.mxu0 %v10850
  %11427 = vmatpush1.bf16.msra.mxu0 %v10849
  %11428 = vmatprep.subr.bf16.mxu0 %v10854
  %11429 = vmatpush1.bf16.msra.mxu0 %v10853
  %11430 = vmatprep.mubr.bf16.mxu0 %v9460
  %11431 = vmatmul.mubr.bf16.gmra.mrb[0].mxu0 %v9456
  %v11432 = vpop.f32.mrb[0].mxu0
  %v11433 = vadd.f32 %v11392, %v11432
  %v11434 = vpop.f32.mrb[0].mxu0
  %v11435 = vadd.f32 %v11394, %v11434
  %v11436 = vpop.f32.mrb[0].mxu0
  %v11437 = vpop.f32.mrb[0].mxu0
  %11438 = vdwg.mxu0
  %v11439 = vld [vmem:[%s12] sm:$0xf]
  %v11441 = vlaneseq
  %v11442 = vshrl.u32 %v11441, 7
  %v11443 = vsub.s32 0, %v11442
  %v11444 = vrot.slane %v11439, %v11443
  %v11445 = vlaneseq
  %v11446 = vshrl.u32 %v11445, 7
  %v11447 = vsub.s32 1, %v11446
  %v11448 = vrot.slane %v11439, %v11447
  %v11449 = vlaneseq
  %v11450 = vshrl.u32 %v11449, 7
  %v11451 = vsub.s32 2, %v11450
  %v11452 = vrot.slane %v11439, %v11451
  %v11453 = vlaneseq
  %v11454 = vshrl.u32 %v11453, 7
  %v11455 = vsub.s32 3, %v11454
  %v11456 = vrot.slane %v11439, %v11455
  %v11461 = vadd.f32 %v11269, %v11444
  %v11462 = vadd.f32 %v11271, %v11448
  %v11463 = vadd.f32 %v11433, %v11452
  %v11464 = vadd.f32 %v11435, %v11456
  %v11465 = vmax.f32 %v11461, 0.0
  %v11466 = vmax.f32 %v11462, 0.0
  %v11467 = vmax.f32 %v11463, 0.0
  %v11468 = vmax.f32 %v11464, 0.0
  %v11469 = vpack.c.bf16 %v11465, %v11465
  %v11470 = vpack.c.bf16 %v11466, %v11466
  %v11471 = vld [vmem:[%s13] sm:$0xf]
  %v11472 = vld [vmem:[%s13 + $0x4] sm:$0xf]
  %v11473 = vld [vmem:[%s13 + $0x8] sm:$0xf]
  %v11474 = vld [vmem:[%s13 + $0xc] sm:$0xf]
  %v11475 = vld [vmem:[%s13 + $0x10] sm:$0xf]
  %v11476 = vld [vmem:[%s13 + $0x14] sm:$0xf]
  %v11477 = vld [vmem:[%s13 + $0x18] sm:$0xf]
  %v11478 = vld [vmem:[%s13 + $0x1c] sm:$0xf]
  %v11479 = vld [vmem:[%s13 + $0x20] sm:$0xf]
  %v11480 = vld [vmem:[%s13 + $0x24] sm:$0xf]
  %v11481 = vld [vmem:[%s13 + $0x28] sm:$0xf]
  %v11482 = vld [vmem:[%s13 + $0x2c] sm:$0xf]
  %v11483 = vld [vmem:[%s13 + $0x30] sm:$0xf]
  %v11484 = vld [vmem:[%s13 + $0x34] sm:$0xf]
  %v11485 = vld [vmem:[%s13 + $0x38] sm:$0xf]
  %v11486 = vld [vmem:[%s13 + $0x3c] sm:$0xf]
  %v11487 = vld [vmem:[%s13 + $0x40] sm:$0xf]
  %v11488 = vld [vmem:[%s13 + $0x44] sm:$0xf]
  %v11489 = vld [vmem:[%s13 + $0x48] sm:$0xf]
  %v11490 = vld [vmem:[%s13 + $0x4c] sm:$0xf]
  %v11491 = vld [vmem:[%s13 + $0x50] sm:$0xf]
  %v11492 = vld [vmem:[%s13 + $0x54] sm:$0xf]
  %v11493 = vld [vmem:[%s13 + $0x58] sm:$0xf]
  %v11494 = vld [vmem:[%s13 + $0x5c] sm:$0xf]
  %v11495 = vld [vmem:[%s13 + $0x60] sm:$0xf]
  %v11496 = vld [vmem:[%s13 + $0x64] sm:$0xf]
  %v11497 = vld [vmem:[%s13 + $0x68] sm:$0xf]
  %v11498 = vld [vmem:[%s13 + $0x6c] sm:$0xf]
  %v11499 = vld [vmem:[%s13 + $0x70] sm:$0xf]
  %v11500 = vld [vmem:[%s13 + $0x74] sm:$0xf]
  %v11501 = vld [vmem:[%s13 + $0x78] sm:$0xf]
  %v11502 = vld [vmem:[%s13 + $0x7c] sm:$0xf]
  %v11503 = vld [vmem:[%s14] sm:$0x1]
  %v11505 = vlaneseq
  %v11506 = vshrl.u32 %v11505, 7
  %v11507 = vsub.s32 0, %v11506
  %v11508 = vrot.slane %v11503, %v11507
  %v11542 = vunpack.c.l.b16 %v11471
  %v11543 = vunpack.c.l.b16 %v11472
  %v11544 = vunpack.c.l.b16 %v11473
  %v11545 = vunpack.c.l.b16 %v11474
  %v11546 = vunpack.c.l.b16 %v11475
  %v11547 = vunpack.c.l.b16 %v11476
  %v11548 = vunpack.c.l.b16 %v11477
  %v11549 = vunpack.c.l.b16 %v11478
  %v11550 = vunpack.c.l.b16 %v11479
  %v11551 = vunpack.c.l.b16 %v11480
  %v11552 = vunpack.c.l.b16 %v11481
  %v11553 = vunpack.c.l.b16 %v11482
  %v11554 = vunpack.c.l.b16 %v11483
  %v11555 = vunpack.c.l.b16 %v11484
  %v11556 = vunpack.c.l.b16 %v11485
  %v11557 = vunpack.c.l.b16 %v11486
  %v11558 = vunpack.c.l.b16 %v11487
  %v11559 = vunpack.c.l.b16 %v11488
  %v11560 = vunpack.c.l.b16 %v11489
  %v11561 = vunpack.c.l.b16 %v11490
  %v11562 = vunpack.c.l.b16 %v11491
  %v11563 = vunpack.c.l.b16 %v11492
  %v11564 = vunpack.c.l.b16 %v11493
  %v11565 = vunpack.c.l.b16 %v11494
  %v11566 = vunpack.c.l.b16 %v11495
  %v11567 = vunpack.c.l.b16 %v11496
  %v11568 = vunpack.c.l.b16 %v11497
  %v11569 = vunpack.c.l.b16 %v11498
  %v11570 = vunpack.c.l.b16 %v11499
  %v11571 = vunpack.c.l.b16 %v11500
  %v11572 = vunpack.c.l.b16 %v11501
  %v11573 = vunpack.c.l.b16 %v11502
  %v11574 = vpack.c.b16 %v11543, %v11542
  %v11575 = vpack.c.b16 %v11545, %v11544
  %v11576 = vpack.c.b16 %v11547, %v11546
  %v11577 = vpack.c.b16 %v11549, %v11548
  %v11578 = vpack.c.b16 %v11551, %v11550
  %v11579 = vpack.c.b16 %v11553, %v11552
  %v11580 = vpack.c.b16 %v11555, %v11554
  %v11581 = vpack.c.b16 %v11557, %v11556
  %v11582 = vpack.c.b16 %v11559, %v11558
  %v11583 = vpack.c.b16 %v11561, %v11560
  %v11584 = vpack.c.b16 %v11563, %v11562
  %v11585 = vpack.c.b16 %v11565, %v11564
  %v11586 = vpack.c.b16 %v11567, %v11566
  %v11587 = vpack.c.b16 %v11569, %v11568
  %v11588 = vpack.c.b16 %v11571, %v11570
  %v11589 = vpack.c.b16 %v11573, %v11572
  %11606 = vmatprep.subr.bf16.mxu0 0
  %11607 = vmatpush1.bf16.msra.mxu0 %v11574
  %11608 = vmatprep.subr.bf16.mxu0 0
  %11609 = vmatpush1.bf16.msra.mxu0 %v11575
  %11610 = vmatprep.subr.bf16.mxu0 0
  %11611 = vmatpush1.bf16.msra.mxu0 %v11576
  %11612 = vmatprep.subr.bf16.mxu0 0
  %11613 = vmatpush1.bf16.msra.mxu0 %v11577
  %11614 = vmatprep.subr.bf16.mxu0 0
  %11615 = vmatpush1.bf16.msra.mxu0 %v11578
  %11616 = vmatprep.subr.bf16.mxu0 0
  %11617 = vmatpush1.bf16.msra.mxu0 %v11579
  %11618 = vmatprep.subr.bf16.mxu0 0
  %11619 = vmatpush1.bf16.msra.mxu0 %v11580
  %11620 = vmatprep.subr.bf16.mxu0 0
  %11621 = vmatpush1.bf16.msra.mxu0 %v11581
  %11622 = vmatprep.subr.bf16.mxu0 0
  %11623 = vmatpush1.bf16.msra.mxu0 %v11582
  %11624 = vmatprep.subr.bf16.mxu0 0
  %11625 = vmatpush1.bf16.msra.mxu0 %v11583
  %11626 = vmatprep.subr.bf16.mxu0 0
  %11627 = vmatpush1.bf16.msra.mxu0 %v11584
  %11628 = vmatprep.subr.bf16.mxu0 0
  %11629 = vmatpush1.bf16.msra.mxu0 %v11585
  %11630 = vmatprep.subr.bf16.mxu0 0
  %11631 = vmatpush1.bf16.msra.mxu0 %v11586
  %11632 = vmatprep.subr.bf16.mxu0 0
  %11633 = vmatpush1.bf16.msra.mxu0 %v11587
  %11634 = vmatprep.subr.bf16.mxu0 0
  %11635 = vmatpush1.bf16.msra.mxu0 %v11588
  %11636 = vmatprep.subr.bf16.mxu0 0
  %11637 = vmatpush1.bf16.msra.mxu0 %v11589
  %11638 = vmatprep.mubr.bf16.mxu0 %v11470
  %11639 = vmatmul.mubr.bf16.gmra.mrb[0].mxu0 %v11469
  %v11640 = vpop.f32.mrb[0].mxu0
  %v11641 = vadd.f32 %v11508, %v11640
  %v11642 = vpop.f32.mrb[0].mxu0
  %v11643 = vpop.f32.mrb[0].mxu0
  %v11644 = vpop.f32.mrb[0].mxu0
  %11645 = vdwg.mxu0
  %v11646 = vmax.f32 %v11641, 0.0
  %v11647 = vpack.c.bf16 %v11467, %v11467
  %v11648 = vpack.c.bf16 %v11468, %v11468
  %v11649 = vld [vmem:[%s15] sm:$0xf]
  %v11650 = vld [vmem:[%s15 + $0x4] sm:$0xf]
  %v11651 = vld [vmem:[%s15 + $0x8] sm:$0xf]
  %v11652 = vld [vmem:[%s15 + $0xc] sm:$0xf]
  %v11653 = vld [vmem:[%s15 + $0x10] sm:$0xf]
  %v11654 = vld [vmem:[%s15 + $0x14] sm:$0xf]
  %v11655 = vld [vmem:[%s15 + $0x18] sm:$0xf]
  %v11656 = vld [vmem:[%s15 + $0x1c] sm:$0xf]
  %v11657 = vld [vmem:[%s15 + $0x20] sm:$0xf]
  %v11658 = vld [vmem:[%s15 + $0x24] sm:$0xf]
  %v11659 = vld [vmem:[%s15 + $0x28] sm:$0xf]
  %v11660 = vld [vmem:[%s15 + $0x2c] sm:$0xf]
  %v11661 = vld [vmem:[%s15 + $0x30] sm:$0xf]
  %v11662 = vld [vmem:[%s15 + $0x34] sm:$0xf]
  %v11663 = vld [vmem:[%s15 + $0x38] sm:$0xf]
  %v11664 = vld [vmem:[%s15 + $0x3c] sm:$0xf]
  %v11665 = vld [vmem:[%s15 + $0x40] sm:$0xf]
  %v11666 = vld [vmem:[%s15 + $0x44] sm:$0xf]
  %v11667 = vld [vmem:[%s15 + $0x48] sm:$0xf]
  %v11668 = vld [vmem:[%s15 + $0x4c] sm:$0xf]
  %v11669 = vld [vmem:[%s15 + $0x50] sm:$0xf]
  %v11670 = vld [vmem:[%s15 + $0x54] sm:$0xf]
  %v11671 = vld [vmem:[%s15 + $0x58] sm:$0xf]
  %v11672 = vld [vmem:[%s15 + $0x5c] sm:$0xf]
  %v11673 = vld [vmem:[%s15 + $0x60] sm:$0xf]
  %v11674 = vld [vmem:[%s15 + $0x64] sm:$0xf]
  %v11675 = vld [vmem:[%s15 + $0x68] sm:$0xf]
  %v11676 = vld [vmem:[%s15 + $0x6c] sm:$0xf]
  %v11677 = vld [vmem:[%s15 + $0x70] sm:$0xf]
  %v11678 = vld [vmem:[%s15 + $0x74] sm:$0xf]
  %v11679 = vld [vmem:[%s15 + $0x78] sm:$0xf]
  %v11680 = vld [vmem:[%s15 + $0x7c] sm:$0xf]
  %v11681 = vld [vmem:[%s16] sm:$0x1]
  %v11683 = vlaneseq
  %v11684 = vshrl.u32 %v11683, 7
  %v11685 = vsub.s32 0, %v11684
  %v11686 = vrot.slane %v11681, %v11685
  %v11720 = vunpack.c.l.b16 %v11649
  %v11721 = vunpack.c.l.b16 %v11650
  %v11722 = vunpack.c.l.b16 %v11651
  %v11723 = vunpack.c.l.b16 %v11652
  %v11724 = vunpack.c.l.b16 %v11653
  %v11725 = vunpack.c.l.b16 %v11654
  %v11726 = vunpack.c.l.b16 %v11655
  %v11727 = vunpack.c.l.b16 %v11656
  %v11728 = vunpack.c.l.b16 %v11657
  %v11729 = vunpack.c.l.b16 %v11658
  %v11730 = vunpack.c.l.b16 %v11659
  %v11731 = vunpack.c.l.b16 %v11660
  %v11732 = vunpack.c.l.b16 %v11661
  %v11733 = vunpack.c.l.b16 %v11662
  %v11734 = vunpack.c.l.b16 %v11663
  %v11735 = vunpack.c.l.b16 %v11664
  %v11736 = vunpack.c.l.b16 %v11665
  %v11737 = vunpack.c.l.b16 %v11666
  %v11738 = vunpack.c.l.b16 %v11667
  %v11739 = vunpack.c.l.b16 %v11668
  %v11740 = vunpack.c.l.b16 %v11669
  %v11741 = vunpack.c.l.b16 %v11670
  %v11742 = vunpack.c.l.b16 %v11671
  %v11743 = vunpack.c.l.b16 %v11672
  %v11744 = vunpack.c.l.b16 %v11673
  %v11745 = vunpack.c.l.b16 %v11674
  %v11746 = vunpack.c.l.b16 %v11675
  %v11747 = vunpack.c.l.b16 %v11676
  %v11748 = vunpack.c.l.b16 %v11677
  %v11749 = vunpack.c.l.b16 %v11678
  %v11750 = vunpack.c.l.b16 %v11679
  %v11751 = vunpack.c.l.b16 %v11680
  %v11752 = vpack.c.b16 %v11721, %v11720
  %v11753 = vpack.c.b16 %v11723, %v11722
  %v11754 = vpack.c.b16 %v11725, %v11724
  %v11755 = vpack.c.b16 %v11727, %v11726
  %v11756 = vpack.c.b16 %v11729, %v11728
  %v11757 = vpack.c.b16 %v11731, %v11730
  %v11758 = vpack.c.b16 %v11733, %v11732
  %v11759 = vpack.c.b16 %v11735, %v11734
  %v11760 = vpack.c.b16 %v11737, %v11736
  %v11761 = vpack.c.b16 %v11739, %v11738
  %v11762 = vpack.c.b16 %v11741, %v11740
  %v11763 = vpack.c.b16 %v11743, %v11742
  %v11764 = vpack.c.b16 %v11745, %v11744
  %v11765 = vpack.c.b16 %v11747, %v11746
  %v11766 = vpack.c.b16 %v11749, %v11748
  %v11767 = vpack.c.b16 %v11751, %v11750
  %11784 = vmatprep.subr.bf16.mxu0 0
  %11785 = vmatpush1.bf16.msra.mxu0 %v11752
  %11786 = vmatprep.subr.bf16.mxu0 0
  %11787 = vmatpush1.bf16.msra.mxu0 %v11753
  %11788 = vmatprep.subr.bf16.mxu0 0
  %11789 = vmatpush1.bf16.msra.mxu0 %v11754
  %11790 = vmatprep.subr.bf16.mxu0 0
  %11791 = vmatpush1.bf16.msra.mxu0 %v11755
  %11792 = vmatprep.subr.bf16.mxu0 0
  %11793 = vmatpush1.bf16.msra.mxu0 %v11756
  %11794 = vmatprep.subr.bf16.mxu0 0
  %11795 = vmatpush1.bf16.msra.mxu0 %v11757
  %11796 = vmatprep.subr.bf16.mxu0 0
  %11797 = vmatpush1.bf16.msra.mxu0 %v11758
  %11798 = vmatprep.subr.bf16.mxu0 0
  %11799 = vmatpush1.bf16.msra.mxu0 %v11759
  %11800 = vmatprep.subr.bf16.mxu0 0
  %11801 = vmatpush1.bf16.msra.mxu0 %v11760
  %11802 = vmatprep.subr.bf16.mxu0 0
  %11803 = vmatpush1.bf16.msra.mxu0 %v11761
  %11804 = vmatprep.subr.bf16.mxu0 0
  %11805 = vmatpush1.bf16.msra.mxu0 %v11762
  %11806 = vmatprep.subr.bf16.mxu0 0
  %11807 = vmatpush1.bf16.msra.mxu0 %v11763
  %11808 = vmatprep.subr.bf16.mxu0 0
  %11809 = vmatpush1.bf16.msra.mxu0 %v11764
  %11810 = vmatprep.subr.bf16.mxu0 0
  %11811 = vmatpush1.bf16.msra.mxu0 %v11765
  %11812 = vmatprep.subr.bf16.mxu0 0
  %11813 = vmatpush1.bf16.msra.mxu0 %v11766
  %11814 = vmatprep.subr.bf16.mxu0 0
  %11815 = vmatpush1.bf16.msra.mxu0 %v11767
  %11816 = vmatprep.mubr.bf16.mxu0 %v11648
  %11817 = vmatmul.mubr.bf16.gmra.mrb[0].mxu0 %v11647
  %v11818 = vpop.f32.mrb[0].mxu0
  %v11819 = vadd.f32 %v11686, %v11818
  %v11820 = vpop.f32.mrb[0].mxu0
  %v11821 = vpop.f32.mrb[0].mxu0
  %v11822 = vpop.f32.mrb[0].mxu0
  %11823 = vdwg.mxu0
  %v11824 = vmax.f32 %v11819, 0.0
  %v11825 = vadd.f32 %v11824, %v11646
  %vm11826 = vcmask 56320
  %v11827 = vsel %vm11826, %v11646, 0.0
  %11828 = vadd.xlane.f32.xlu0 %v11827
  %v11829 = vpop.xlane.xlu0 %11828
  %v11830 = vrcp.pop 7.0
  %v11831 = vmul.f32 %v11829, %v11830
  %v11832 = vsub.f32 %v11825, %v11831
  %11833 = vst.msk [vmem:[%s17] sm:$0xff] %vm11826, %v11832
  // Predicated region
  $region70: #{dqn_forward.1} parent=0 // pred_check
    _
  $region71: #{dqn_forward.1} parent=0 // pred_check_branch
    %11835 = sbr.rel (0) target = $region73
  $region72: #{dqn_forward.1} parent=0 // pred_region
    _
  $region73: #{dqn_forward.1} parent=0 // pred_fallthru
    _
  // Predicated region
  $region74: #{dqn_forward.1} parent=0 // pred_check
    _
  $region75: #{dqn_forward.1} parent=0 // pred_check_branch
    %11837 = sbr.rel (0) target = $region77
  $region76: #{dqn_forward.1} parent=0 // pred_region
    _
  $region77: #{dqn_forward.1} parent=0 // pred_fallthru
    _

</llo_original>
